<compile_context>
chip_gen: v5e
topology: v5e:2x2
jax: 0.10.0
libtpu: 0.0.40
codegen_flags: <defaults>
</compile_context>

<pallas_src>
import jax
import jax.numpy as jnp
from jax.experimental import pallas as pl
from jax.experimental.pallas import tpu as pltpu

# ---------------- configuration (stands in for `config`) ----------------
RADIUS = 1.0                        # config.radius
N_FREQ = 4                          # xyz_encoding_config: frequency encoding, 4 octaves
TRIG_ROWS = 2 * 3 * N_FREQ          # 24 = sin(12) + cos(12) phase rows
ENC_ROWS = 8 + TRIG_ROWS            # 32 rows: [p(3), 1, 0,0,0,0, sin(12), cos(12)]
ENC_DIM = 3 + TRIG_ROWS             # 27 logical encoding channels (reference)
HIDDEN = 32                         # mlp_network_config hidden dim
FEATURE_DIM = 16                    # config.feature_dim  (n_output_dims)
MAX_TN = 8192                       # max points per grid step (lane axis)
LANE_ALIGN = 512                    # pad granule for small inputs

_PREC = jax.lax.Precision.HIGHEST   # explicit: do not depend on the global flag


def volume_sdf_kernel(pts_ref, const_ref, feat_ref, enc_ref):
    """pts_ref: (3, TN) raw points; const_ref: (4, 32, 33) packed constants."""
    tn = pts_ref.shape[1]
    p = pts_ref[...]                                             # (3, TN)

    # ---- unpack the single packed-constants operand (tiny, ~17 KB) ----
    c_all = const_ref[...]                                       # (4, 32, 33)
    sfo = c_all[0, 0:TRIG_ROWS, 0:3]                             # (24, 3) phase matrix
    foff = c_all[0, 0:TRIG_ROWS, 3:4]                            # (24, 1) phase offsets
    w0 = c_all[1, :, 0:ENC_ROWS]                                 # (32, 32), col 3 = folded b0
    w1 = c_all[2, :, 0:HIDDEN]                                   # (32, 32)
    b1 = c_all[2, :, HIDDEN:HIDDEN + 1]                          # (32, 1)
    w2 = c_all[3, 0:FEATURE_DIM, 0:HIDDEN]                       # (16, 32)
    b2 = c_all[3, 0:FEATURE_DIM, HIDDEN:HIDDEN + 1]              # (16, 1)

    # ---- fused frequency encoding: one phase matmul, ONE sin (cos = sin(x+pi/2)) ----
    ph = jnp.dot(sfo, p, preferred_element_type=jnp.float32, precision=_PREC) + foff
    trig = jnp.sin(ph)                                           # (24, TN)

    # ---- assemble the 32-row encoding in VMEM scratch ----
    #   rows 0:3 = raw p, row 3 = 1 (bias channel; cols 4:8 of w0 are zero),
    #   rows 8:32 = sin/cos octaves (8-row aligned segment).
    enc_ref[0:3, :] = p
    enc_ref[3:8, :] = jnp.ones((5, tn), jnp.float32)
    enc_ref[8:ENC_ROWS, :] = trig

    # ---- MLP: single K=32 layer-0 matmul, then 2 more hidden/output matmuls ----
    h = jnp.dot(w0, enc_ref[...], preferred_element_type=jnp.float32, precision=_PREC)
    h = jnp.maximum(h, 0.0)
    h = jnp.dot(w1, h, preferred_element_type=jnp.float32, precision=_PREC) + b1
    h = jnp.maximum(h, 0.0)
    out = jnp.dot(w2, h, preferred_element_type=jnp.float32, precision=_PREC) + b2

    feat_ref[...] = out                                          # (FEATURE_DIM, TN) lane-dense


def _pick_tile(n):
    """Largest lane-aligned tile (<= MAX_TN); no shrinking for single-TC chips."""
    n_small = -(-n // LANE_ALIGN) * LANE_ALIGN
    if n_small <= MAX_TN:
        return n_small, n_small                  # one grid step
    n_pad = -(-n // MAX_TN) * MAX_TN
    return MAX_TN, n_pad


def _prepare_constants(params, radius):
    """Fold the (-R,R)->(0,1) rescale + b0 into the weights and pack everything
    into a single (4, HIDDEN, HIDDEN+1) constants tensor."""
    w0, b0, w1, b1, w2, b2 = params
    a = 1.0 / (2.0 * radius)                 # scale of the affine rescale
    c0 = 0.5                                 # offset of the affine rescale

    freqs = (2.0 ** jnp.arange(N_FREQ, dtype=jnp.float32)) * jnp.pi        # (NF,)
    s_half = jnp.kron((freqs * a)[:, None], jnp.eye(3, dtype=jnp.float32))  # (12, 3)
    sfo = jnp.concatenate([s_half, s_half], axis=0)                         # (24, 3)
    foff_sin = jnp.repeat(freqs * c0, 3)                                    # (12,)
    foff = jnp.concatenate([foff_sin, foff_sin + 0.5 * jnp.pi])             # (24,)

    w0p = w0[0:3, :]                          # identity-channel rows
    w0s = w0[3:3 + 3 * N_FREQ, :]             # sin rows
    w0c = w0[3 + 3 * N_FREQ:, :]              # cos rows

    w0_eff = jnp.zeros((HIDDEN, ENC_ROWS), jnp.float32)
    w0_eff = w0_eff.at[:, 0:3].set((a * w0p).T)
    w0_eff = w0_eff.at[:, 3].set(b0.reshape(-1) + c0 * jnp.sum(w0p, axis=0))
    w0_eff = w0_eff.at[:, 8:8 + 3 * N_FREQ].set(w0s.T)
    w0_eff = w0_eff.at[:, 8 + 3 * N_FREQ:ENC_ROWS].set(w0c.T)

    consts = jnp.zeros((4, HIDDEN, HIDDEN + 1), jnp.float32)
    consts = consts.at[0, 0:TRIG_ROWS, 0:3].set(sfo)
    consts = consts.at[0, 0:TRIG_ROWS, 3].set(foff)
    consts = consts.at[1, :, 0:ENC_ROWS].set(w0_eff)
    consts = consts.at[2, :, 0:HIDDEN].set(w1.T)
    consts = consts.at[2, :, HIDDEN].set(b1.reshape(-1))
    consts = consts.at[3, 0:FEATURE_DIM, 0:HIDDEN].set(w2.T)
    consts = consts.at[3, 0:FEATURE_DIM, HIDDEN].set(b2.reshape(-1))
    return consts


def volume_sdf_forward(points, params, radius=RADIUS, channel_major_feature=False):
    """points: (..., 3) float32.
    Returns (sdf (...,), feature (..., FEATURE_DIM)).
    With channel_major_feature=True, feature is returned as (FEATURE_DIM, ...)
    (transpose-free fast path for consumers that accept channel-major)."""
    batch_shape = points.shape[:-1]
    pts = points.reshape(-1, 3).astype(jnp.float32)
    n = pts.shape[0]
    tn, n_pad = _pick_tile(n)

    # Single fused pad+transpose into the (3, N) lane-dense layout the kernel wants.
    pts_t = jnp.pad(pts, ((0, n_pad - n), (0, 0))).T                # (3, n_pad)
    consts = _prepare_constants(params, radius)

    feat_cm = pl.pallas_call(
        volume_sdf_kernel,
        out_shape=jax.ShapeDtypeStruct((FEATURE_DIM, n_pad), jnp.float32),
        grid_spec=pltpu.PrefetchScalarGridSpec(
            num_scalar_prefetch=0,
            grid=(n_pad // tn,),
            in_specs=[
                pl.BlockSpec((3, tn), lambda i: (0, i)),                      # points block
                pl.BlockSpec((4, HIDDEN, HIDDEN + 1), lambda i: (0, 0, 0)),   # packed consts
            ],
            out_specs=pl.BlockSpec((FEATURE_DIM, tn), lambda i: (0, i)),
            scratch_shapes=[pltpu.VMEM((ENC_ROWS, tn), jnp.float32)],         # enc scratch
        ),
        compiler_params=pltpu.CompilerParams(
            dimension_semantics=("parallel",),
            vmem_limit_bytes=32 * 1024 * 1024,
        ),
    )(pts_t, consts)

    # sdf never needs a transpose: it is row 0 of the channel-major output.
    sdf = feat_cm[0, :n].reshape(batch_shape)
    if channel_major_feature:
        feature = feat_cm[:, :n].reshape((FEATURE_DIM,) + batch_shape)
        return sdf, feature
    # Default path keeps the module's (..., feature_dim) layout; the transpose
    # lives here (deferred to the wrapper) so callers that can consume
    # channel-major skip it entirely via channel_major_feature=True.
    feature = feat_cm[:, :n].T.reshape(*batch_shape, FEATURE_DIM)
    return sdf, feature


def _reference_forward(points, params, radius=RADIUS):
    """Pure-JAX reference (original module math) for a sanity check."""
    w0, b0, w1, b1, w2, b2 = params
    batch_shape = points.shape[:-1]
    p = points.reshape(-1, 3).astype(jnp.float32)
    p = (p + radius) / (2.0 * radius)                       # scale_anything
    freqs = (2.0 ** jnp.arange(N_FREQ, dtype=jnp.float32)) * jnp.pi
    ph = (p[:, None, :] * freqs[None, :, None]).reshape(p.shape[0], 3 * N_FREQ)
    enc = jnp.concatenate([p, jnp.sin(ph), jnp.cos(ph)], axis=-1)   # (N, ENC_DIM)
    h = jnp.maximum(enc @ w0 + b0, 0.0)
    h = jnp.maximum(h @ w1 + b1, 0.0)
    out = h @ w2 + b2
    return out[:, 0].reshape(batch_shape), out.reshape(*batch_shape, FEATURE_DIM)


def init_params(key):
    k0, k1, k2 = jax.random.split(key, 3)
    w0 = jax.random.normal(k0, (ENC_DIM, HIDDEN), jnp.float32) * (1.0 / jnp.sqrt(ENC_DIM))
    b0 = jnp.zeros((1, HIDDEN), jnp.float32)
    w1 = jax.random.normal(k1, (HIDDEN, HIDDEN), jnp.float32) * (1.0 / jnp.sqrt(HIDDEN))
    b1 = jnp.zeros((1, HIDDEN), jnp.float32)
    w2 = jax.random.normal(k2, (HIDDEN, FEATURE_DIM), jnp.float32) * (1.0 / jnp.sqrt(HIDDEN))
    b2 = jnp.zeros((1, FEATURE_DIM), jnp.float32)
    return (w0, b0, w1, b1, w2, b2)


if __name__ == "__main__":
    # Only the *reference* matmuls rely on this flag (full-f32 baseline for the
    # 1e-4 check); the kernel's dots are explicitly Precision.HIGHEST.
    jax.config.update("jax_default_matmul_precision", "highest")

    key = jax.random.PRNGKey(0)
    pkey, pkey2, pkey3, wkey = jax.random.split(key, 4)
    params = init_params(wkey)

    # Case 1: (2, 512, 3) -> 1024 points, single 1024-wide grid step.
    points = jax.random.uniform(
        pkey, (2, 512, 3), jnp.float32, minval=-RADIUS, maxval=RADIUS)
    sdf, feature = volume_sdf_forward(points, params)
    jax.block_until_ready((sdf, feature))
    sdf_ref, feat_ref = _reference_forward(points, params)
    assert sdf.shape == points.shape[:-1]
    assert feature.shape == points.shape[:-1] + (FEATURE_DIM,)
    assert jnp.allclose(sdf, sdf_ref, atol=1e-4, rtol=1e-4)
    assert jnp.allclose(feature, feat_ref, atol=1e-4, rtol=1e-4)

    # Case 2: ragged point count (300 points) -> exercises the padding path.
    points2 = jax.random.uniform(
        pkey2, (3, 100, 3), jnp.float32, minval=-RADIUS, maxval=RADIUS)
    sdf2, feature2 = volume_sdf_forward(points2, params)
    jax.block_until_ready((sdf2, feature2))
    sdf2_ref, feat2_ref = _reference_forward(points2, params)
    assert sdf2.shape == points2.shape[:-1]
    assert feature2.shape == points2.shape[:-1] + (FEATURE_DIM,)
    assert jnp.allclose(sdf2, sdf2_ref, atol=1e-4, rtol=1e-4)
    assert jnp.allclose(feature2, feat2_ref, atol=1e-4, rtol=1e-4)

    # Case 3: 16384 points -> two 8192-point grid steps (multi-step / megacore
    # path), exercised via the transpose-free channel-major fast path.
    points3 = jax.random.uniform(
        pkey3, (2, 8192, 3), jnp.float32, minval=-RADIUS, maxval=RADIUS)
    sdf3, feat3_cm = volume_sdf_forward(points3, params, channel_major_feature=True)
    jax.block_until_ready((sdf3, feat3_cm))
    sdf3_ref, feat3_ref = _reference_forward(points3, params)
    assert sdf3.shape == points3.shape[:-1]
    assert feat3_cm.shape == (FEATURE_DIM,) + points3.shape[:-1]
    assert jnp.allclose(sdf3, sdf3_ref, atol=1e-4, rtol=1e-4)
    assert jnp.allclose(jnp.moveaxis(feat3_cm, 0, -1), feat3_ref, atol=1e-4, rtol=1e-4)

    print("KERNEL_OK")
</pallas_src>

<mosaic_0001>
module attributes {stable_mosaic.version = 11 : i64} {
  func.func @volume_sdf_kernel(%arg0: i32, %arg1: memref<3x1024xf32, #tpu.memory_space<vmem>>, %arg2: memref<4x32x33xf32, #tpu.memory_space<vmem>>, %arg3: memref<16x1024xf32, #tpu.memory_space<vmem>>, %arg4: memref<32x1024xf32, #tpu.memory_space<vmem>>) attributes {dimension_semantics = [#tpu.dimension_semantics<parallel>], iteration_bounds = array<i64: 1>, scalar_prefetch = 0 : i64, scratch_operands = 1 : i64, tpu.core_type = #tpu.core_type<tc>, window_params = [{transform_indices = @transform_0, window_bounds = array<i64: 3, 1024>}, {pipeline_mode = #tpu.pipeline_mode<synchronous>, transform_indices = @transform_1, window_bounds = array<i64: 4, 32, 33>}, {transform_indices = @transform_2, window_bounds = array<i64: 16, 1024>}]} {
    %c0 = arith.constant 0 : index
    %c0_0 = arith.constant 0 : index
    %0 = vector.load %arg1[%c0, %c0_0] : memref<3x1024xf32, #tpu.memory_space<vmem>>, vector<3x1024xf32>
    %c0_1 = arith.constant 0 : index
    %c0_2 = arith.constant 0 : index
    %c0_3 = arith.constant 0 : index
    %1 = vector.load %arg2[%c0_1, %c0_2, %c0_3] : memref<4x32x33xf32, #tpu.memory_space<vmem>>, vector<4x32x33xf32>
    %2 = vector.extract_strided_slice %1 {offsets = [0, 0, 0], sizes = [1, 24, 3], strides = [1, 1, 1]} : vector<4x32x33xf32> to vector<1x24x3xf32>
    %3 = vector.shape_cast %2 : vector<1x24x3xf32> to vector<24x3xf32>
    %4 = vector.extract_strided_slice %1 {offsets = [0, 0, 3], sizes = [1, 24, 1], strides = [1, 1, 1]} : vector<4x32x33xf32> to vector<1x24x1xf32>
    %5 = vector.shape_cast %4 : vector<1x24x1xf32> to vector<24x1xf32>
    %6 = vector.extract_strided_slice %1 {offsets = [1, 0, 0], sizes = [1, 32, 32], strides = [1, 1, 1]} : vector<4x32x33xf32> to vector<1x32x32xf32>
    %7 = vector.shape_cast %6 : vector<1x32x32xf32> to vector<32x32xf32>
    %8 = vector.extract_strided_slice %1 {offsets = [2, 0, 0], sizes = [1, 32, 32], strides = [1, 1, 1]} : vector<4x32x33xf32> to vector<1x32x32xf32>
    %9 = vector.shape_cast %8 : vector<1x32x32xf32> to vector<32x32xf32>
    %10 = vector.extract_strided_slice %1 {offsets = [2, 0, 32], sizes = [1, 32, 1], strides = [1, 1, 1]} : vector<4x32x33xf32> to vector<1x32x1xf32>
    %11 = vector.shape_cast %10 : vector<1x32x1xf32> to vector<32x1xf32>
    %12 = vector.extract_strided_slice %1 {offsets = [3, 0, 0], sizes = [1, 16, 32], strides = [1, 1, 1]} : vector<4x32x33xf32> to vector<1x16x32xf32>
    %13 = vector.shape_cast %12 : vector<1x16x32xf32> to vector<16x32xf32>
    %14 = vector.extract_strided_slice %1 {offsets = [3, 0, 32], sizes = [1, 16, 1], strides = [1, 1, 1]} : vector<4x32x33xf32> to vector<1x16x1xf32>
    %15 = vector.shape_cast %14 : vector<1x16x1xf32> to vector<16x1xf32>
    %cst = arith.constant dense<0.000000e+00> : vector<24x1024xf32>
    %16 = tpu.matmul %3, %0, %cst {dimension_numbers = #tpu.dot_dimension_numbers<[1], [0], [0], [1], [0, 0, 1, 1], [], []>, precision = #tpu.contract_precision<fp32>} : vector<24x3xf32>, vector<3x1024xf32>, vector<24x1024xf32> -> vector<24x1024xf32>
    %17 = vector.broadcast %5 : vector<24x1xf32> to vector<24x1024xf32>
    %18 = arith.addf %16, %17 : vector<24x1024xf32>
    %19 = math.sin %18 : vector<24x1024xf32>
    %c0_4 = arith.constant 0 : index
    %c0_5 = arith.constant 0 : index
    %20 = vector.load %arg4[%c0_4, %c0_5] : memref<32x1024xf32, #tpu.memory_space<vmem>>, vector<3x1024xf32>
    tpu.vector_store %arg4[%c0_4, %c0_5], %0 {strides = array<i32>} : memref<32x1024xf32, #tpu.memory_space<vmem>>, vector<3x1024xf32>,
    %cst_6 = arith.constant 1.000000e+00 : f32
    %21 = vector.broadcast %cst_6 : f32 to vector<5x1024xf32>
    %c3 = arith.constant 3 : index
    %c0_7 = arith.constant 0 : index
    %22 = vector.load %arg4[%c3, %c0_7] : memref<32x1024xf32, #tpu.memory_space<vmem>>, vector<5x1024xf32>
    tpu.vector_store %arg4[%c3, %c0_7], %21 {strides = array<i32>} : memref<32x1024xf32, #tpu.memory_space<vmem>>, vector<5x1024xf32>,
    %c8 = arith.constant 8 : index
    %c0_8 = arith.constant 0 : index
    %23 = vector.load %arg4[%c8, %c0_8] : memref<32x1024xf32, #tpu.memory_space<vmem>>, vector<24x1024xf32>
    tpu.vector_store %arg4[%c8, %c0_8], %19 {strides = array<i32>} : memref<32x1024xf32, #tpu.memory_space<vmem>>, vector<24x1024xf32>,
    %c0_9 = arith.constant 0 : index
    %c0_10 = arith.constant 0 : index
    %24 = vector.load %arg4[%c0_9, %c0_10] : memref<32x1024xf32, #tpu.memory_space<vmem>>, vector<32x1024xf32>
    %cst_11 = arith.constant dense<0.000000e+00> : vector<32x1024xf32>
    %25 = tpu.matmul %7, %24, %cst_11 {dimension_numbers = #tpu.dot_dimension_numbers<[1], [0], [0], [1], [0, 0, 1, 1], [], []>, precision = #tpu.contract_precision<fp32>} : vector<32x32xf32>, vector<32x1024xf32>, vector<32x1024xf32> -> vector<32x1024xf32>
    %cst_12 = arith.constant 0.000000e+00 : f32
    %26 = vector.broadcast %cst_12 : f32 to vector<32x1024xf32>
    %27 = arith.maximumf %25, %26 : vector<32x1024xf32>
    %cst_13 = arith.constant dense<0.000000e+00> : vector<32x1024xf32>
    %28 = tpu.matmul %9, %27, %cst_13 {dimension_numbers = #tpu.dot_dimension_numbers<[1], [0], [0], [1], [0, 0, 1, 1], [], []>, precision = #tpu.contract_precision<fp32>} : vector<32x32xf32>, vector<32x1024xf32>, vector<32x1024xf32> -> vector<32x1024xf32>
    %29 = vector.broadcast %11 : vector<32x1xf32> to vector<32x1024xf32>
    %30 = arith.addf %28, %29 : vector<32x1024xf32>
    %cst_14 = arith.constant 0.000000e+00 : f32
    %31 = vector.broadcast %cst_14 : f32 to vector<32x1024xf32>
    %32 = arith.maximumf %30, %31 : vector<32x1024xf32>
    %cst_15 = arith.constant dense<0.000000e+00> : vector<16x1024xf32>
    %33 = tpu.matmul %13, %32, %cst_15 {dimension_numbers = #tpu.dot_dimension_numbers<[1], [0], [0], [1], [0, 0, 1, 1], [], []>, precision = #tpu.contract_precision<fp32>} : vector<16x32xf32>, vector<32x1024xf32>, vector<16x1024xf32> -> vector<16x1024xf32>
    %34 = vector.broadcast %15 : vector<16x1xf32> to vector<16x1024xf32>
    %35 = arith.addf %33, %34 : vector<16x1024xf32>
    %c0_16 = arith.constant 0 : index
    %c0_17 = arith.constant 0 : index
    %36 = vector.load %arg3[%c0_16, %c0_17] : memref<16x1024xf32, #tpu.memory_space<vmem>>, vector<16x1024xf32>
    tpu.vector_store %arg3[%c0_16, %c0_17], %35 {strides = array<i32>} : memref<16x1024xf32, #tpu.memory_space<vmem>>, vector<16x1024xf32>,
    return
  }
  func.func @transform_0(%arg0: i32) -> (i32, i32) {
    %c0_i32 = arith.constant 0 : i32
    %c0_i32_0 = arith.constant 0 : i32
    return %c0_i32, %arg0 : i32, i32
  }
  func.func @transform_1(%arg0: i32) -> (i32, i32, i32) {
    %c0_i32 = arith.constant 0 : i32
    %c0_i32_0 = arith.constant 0 : i32
    %c0_i32_1 = arith.constant 0 : i32
    %c0_i32_2 = arith.constant 0 : i32
    return %c0_i32, %c0_i32_0, %c0_i32_1 : i32, i32, i32
  }
  func.func @transform_2(%arg0: i32) -> (i32, i32) {
    %c0_i32 = arith.constant 0 : i32
    %c0_i32_0 = arith.constant 0 : i32
    return %c0_i32, %arg0 : i32, i32
  }
}

</mosaic_0001>

<llo_original>
// kernel: tpu_custom_call.1
$region0: #{tpu_custom_call.1}
  #allocation0 [shape = 'u32[]', space=smem, size = 0x4, offset = 0x4, fixed_abs, tag = 'smem constant byte address 0x4 - core index']
  #allocation1 [shape = 'u32[72,128]{1,0:T(1,128)}', space=vmem, size = 0x9000, scoped, tag = 'internal scratch']
  #allocation2 [shape = 'f32[32,1024]{1,0:T(8,128)}', space=vmem, size = 0x20000, scoped, tag = 'scratch operand']
  %s0 = inlined_call_operand.hbm [shape: f32[3,1024], index: 0, kind: input, shape index: {}]
  %s1 = inlined_call_operand.hbm [shape: f32[4,32,33], index: 1, kind: input, shape index: {}]
  %s2 = inlined_call_operand.hbm [shape: f32[16,1024], index: 2, kind: output, shape index: {}]
  %s3 = sld [smem:[#allocation0]]
  $region26: #{tpu_custom_call.1} parent=0
    _
  %s5 = ssub.s32 1, %s3
  %s6 = scalar_select 0, %s5, %s3
  $region1: #{tpu_custom_call.1} parent=0
    #allocation3 [shape = 'u8[16384]{0}', space=vmem, size = 0x4000, scoped, tag = 'input window, operand 0, single buffered']
    #allocation4 [shape = 's32[1]{0}', space=sflag, size = 0x4, scoped, tag = 'scoped memory for tpu_custom_call.1']
    #allocation5 [shape = 's32[1]{0}', space=sflag, size = 0x4, scoped, tag = 'scoped memory for tpu_custom_call.1']
    #allocation6 [shape = 'u8[65536]{0}', space=vmem, size = 0x10000, scoped, tag = 'input window, operand 1, single buffered']
    #allocation7 [shape = 's32[1]{0}', space=sflag, size = 0x4, scoped, tag = 'scoped memory for tpu_custom_call.1']
    #allocation8 [shape = 'u8[65536]{0}', space=vmem, size = 0x10000, scoped, tag = 'output window, operand 0, single buffered']
    %7 = vsyncpa [#allocation4], 0
    %8 = vsyncpa [#allocation7], 0
    %9 = vsyncpa [#allocation5], 0
    // Predicated region
    $region2: #{tpu_custom_call.1} parent=1 // pred_check
      _
    $region3: #{tpu_custom_call.1} parent=1 // pred_check_branch
      %11 = sbr.rel (0) target = $region5
    $region4: #{tpu_custom_call.1} parent=1 // pred_region
      %13 = vsyncadd [#allocation4], 0
      %s15 = sshll.u32 %s0, 4
      %s16 = int_to_ptr.hbm [resolvable:$true] %s15
      %s17 = sshll.u32 [#allocation3], 4
      %s18 = int_to_ptr.vmem [resolvable:$true] %s17
      %20 = dma.hbm_to_vmem [thread:$0]  %s16, 512, %s18, [#allocation4]
    $region5: #{tpu_custom_call.1} parent=1 // pred_fallthru
      _
    // Predicated region
    $region6: #{tpu_custom_call.1} parent=1 // pred_check
      _
    $region7: #{tpu_custom_call.1} parent=1 // pred_check_branch
      %22 = sbr.rel (0) target = $region9
    $region8: #{tpu_custom_call.1} parent=1 // pred_region
      %24 = vsyncadd [#allocation7], 0
      %s25 = sshll.u32 %s1, 4
      %s26 = int_to_ptr.hbm [resolvable:$true] %s25
      %s27 = sshll.u32 [#allocation6], 4
      %s28 = int_to_ptr.vmem [resolvable:$true] %s27
      %33 = dma.hbm_to_vmem [thread:$0]  %s26, 2048, %s28, [#allocation7], 128, 128, 8
    $region9: #{tpu_custom_call.1} parent=1 // pred_fallthru
      _
    // Predicated region
    $region10: #{tpu_custom_call.1} parent=1 // pred_check
      _
    $region11: #{tpu_custom_call.1} parent=1 // pred_check_branch
      %35 = sbr.rel (0) target = $region13
    $region12: #{tpu_custom_call.1} parent=1 // pred_region
      %37 = dma.done [#allocation4], 512
    $region13: #{tpu_custom_call.1} parent=1 // pred_fallthru
      _
    // Predicated region
    $region14: #{tpu_custom_call.1} parent=1 // pred_check
      _
    $region15: #{tpu_custom_call.1} parent=1 // pred_check_branch
      %39 = sbr.rel (0) target = $region17
    $region16: #{tpu_custom_call.1} parent=1 // pred_region
      %41 = dma.done [#allocation7], 2048
    $region17: #{tpu_custom_call.1} parent=1 // pred_fallthru
      _
    %v42 = vld [vmem:[#allocation3] sm:$0x77]
    %v43 = vld [vmem:[#allocation3 + $0x8] sm:$0x77]
    %v44 = vld [vmem:[#allocation3 + $0x10] sm:$0x77]
    %v45 = vld [vmem:[#allocation3 + $0x18] sm:$0x77]
    %v46 = vld [vmem:[#allocation6] sm:$0xff]
    %v47 = vld [vmem:[#allocation6 + $0x8] sm:$0xff]
    %v48 = vld [vmem:[#allocation6 + $0x10] sm:$0xff]
    %v49 = vld [vmem:[#allocation6 + $0x20] sm:$0xff]
    %v50 = vld [vmem:[#allocation6 + $0x28] sm:$0xff]
    %v51 = vld [vmem:[#allocation6 + $0x30] sm:$0xff]
    %v52 = vld [vmem:[#allocation6 + $0x38] sm:$0xff]
    %v53 = vld [vmem:[#allocation6 + $0x40] sm:$0xff]
    %v54 = vld [vmem:[#allocation6 + $0x48] sm:$0xff]
    %v55 = vld [vmem:[#allocation6 + $0x50] sm:$0xff]
    %v56 = vld [vmem:[#allocation6 + $0x58] sm:$0xff]
    %v57 = vld [vmem:[#allocation6 + $0x60] sm:$0xff]
    %v58 = vld [vmem:[#allocation6 + $0x68] sm:$0xff]
    %60 = vset.pattern.permute.xlu0 3
    %61 = vperm.xlu0 %60, %v46
    %v62 = vpop.permute.xlu0 %61
    %65 = vset.pattern.permute.xlu0 3
    %66 = vperm.xlu0 %65, %v47
    %v67 = vpop.permute.xlu0 %66
    %70 = vset.pattern.permute.xlu0 3
    %71 = vperm.xlu0 %70, %v48
    %v72 = vpop.permute.xlu0 %71
    %78 = vst [vmem:[#allocation1] ss:$2 sm:$0xff] %v42
    %s79 = scalar_lea.vmem [#allocation1], 16
    %80 = vst [vmem:[%s79] ss:$2 sm:$0xff] %v43
    %s81 = scalar_lea.vmem [#allocation1], 32
    %82 = vst [vmem:[%s81] ss:$2 sm:$0xff] %v44
    %s83 = scalar_lea.vmem [#allocation1], 48
    %84 = vst [vmem:[%s83] ss:$2 sm:$0xff] %v45
    %v85 = vld.sshfl [vmem:[#allocation1] sm:$0xff pattern:$0x75316420]
    %v86 = vld.sshfl [vmem:[#allocation1 + $0x8] sm:$0xff pattern:$0x75316420]
    %v87 = vld.sshfl [vmem:[#allocation1 + $0x10] sm:$0xff pattern:$0x75316420]
    %v88 = vld.sshfl [vmem:[#allocation1 + $0x18] sm:$0xff pattern:$0x75316420]
    %v89 = vld.sshfl [vmem:[#allocation1 + $0x20] sm:$0xff pattern:$0x75316420]
    %v90 = vld.sshfl [vmem:[#allocation1 + $0x28] sm:$0xff pattern:$0x75316420]
    %v91 = vld.sshfl [vmem:[#allocation1 + $0x30] sm:$0xff pattern:$0x75316420]
    %v92 = vld.sshfl [vmem:[#allocation1 + $0x38] sm:$0xff pattern:$0x75316420]
    %vm93 = vcmask 23552
    %v94 = vsel %vm93, %v46, 0
    %v96 = vsel %vm93, %v47, 0
    %v98 = vsel %vm93, %v48, 0
    %vm100 = vcmask 1042432
    %v101 = vsel %vm100, %v85, 0
    %v103 = vsel %vm100, %v86, 0
    %v105 = vsel %vm100, %v87, 0
    %v107 = vsel %vm100, %v88, 0
    %v109 = vsel %vm100, %v89, 0
    %v111 = vsel %vm100, %v90, 0
    %v113 = vsel %vm100, %v91, 0
    %v115 = vsel %vm100, %v92, 0
    %117 = vmatpush.msra.mxu0 0.0
    %118 = vmatpush.msra.mxu0 0.0
    %119 = vmatpush.msra.mxu0 0.0
    %120 = vmatpush.msra.mxu0 0.0
    %121 = vmatpush.msra.mxu0 0.0
    %122 = vmatpush.msra.mxu0 0.0
    %123 = vmatpush.msra.mxu0 0.0
    %124 = vmatpush.msra.mxu0 0.0
    %125 = vmatpush.msra.mxu0 0.0
    %126 = vmatpush.msra.mxu0 0.0
    %127 = vmatpush.msra.mxu0 0.0
    %128 = vmatpush.msra.mxu0 0.0
    %129 = vmatpush.msra.mxu0 0.0
    %130 = vmatpush.msra.mxu0 0.0
    %131 = vmatpush.msra.mxu0 0.0
    %v132 = vand.u32 %v101, 4294901760
    %133 = vmatpush.msra.mxu0 %v132
    %v134 = vand.u32 %v94, 4294901760
    %v135 = vsub.f32 %v94, %v134
    %v136 = vand.u32 %v135, 4294901760
    %v137 = vsub.f32 %v135, %v136
    %v138 = vand.u32 %v137, 4294901760
    %139 = vmatmul.f32.gmra.mxu0 %v138
    %v140 = vpop.f32.mrf.mxu0
    %v141 = vadd.f32 %v62, %v140
    %v142 = vand.u32 %v96, 4294901760
    %v143 = vsub.f32 %v96, %v142
    %v144 = vand.u32 %v143, 4294901760
    %v145 = vsub.f32 %v143, %v144
    %v146 = vand.u32 %v145, 4294901760
    %147 = vmatmul.f32.gmra.mxu0 %v146
    %v148 = vpop.f32.mrf.mxu0
    %v149 = vadd.f32 %v67, %v148
    %v150 = vand.u32 %v98, 4294901760
    %v151 = vsub.f32 %v98, %v150
    %v152 = vand.u32 %v151, 4294901760
    %v153 = vsub.f32 %v151, %v152
    %v154 = vand.u32 %v153, 4294901760
    %155 = vmatmul.f32.gmra.mxu0 %v154
    %v156 = vpop.f32.mrf.mxu0
    %v157 = vadd.f32 %v72, %v156
    %158 = vdwg.mxu0
    %159 = vmatpush.msra.mxu0 0.0
    %160 = vmatpush.msra.mxu0 0.0
    %161 = vmatpush.msra.mxu0 0.0
    %162 = vmatpush.msra.mxu0 0.0
    %163 = vmatpush.msra.mxu0 0.0
    %164 = vmatpush.msra.mxu0 0.0
    %165 = vmatpush.msra.mxu0 0.0
    %166 = vmatpush.msra.mxu0 0.0
    %167 = vmatpush.msra.mxu0 0.0
    %168 = vmatpush.msra.mxu0 0.0
    %169 = vmatpush.msra.mxu0 0.0
    %170 = vmatpush.msra.mxu0 0.0
    %171 = vmatpush.msra.mxu0 0.0
    %172 = vmatpush.msra.mxu0 0.0
    %173 = vmatpush.msra.mxu0 0.0
    %v174 = vand.u32 %v101, 4294901760
    %v175 = vsub.f32 %v101, %v174
    %v176 = vand.u32 %v175, 4294901760
    %v177 = vsub.f32 %v175, %v176
    %v178 = vand.u32 %v177, 4294901760
    %179 = vmatpush.msra.mxu0 %v178
    %v180 = vand.u32 %v94, 4294901760
    %181 = vmatmul.f32.gmra.mxu0 %v180
    %v182 = vpop.f32.mrf.mxu0
    %v183 = vadd.f32 %v141, %v182
    %v184 = vand.u32 %v96, 4294901760
    %185 = vmatmul.f32.gmra.mxu0 %v184
    %v186 = vpop.f32.mrf.mxu0
    %v187 = vadd.f32 %v149, %v186
    %v188 = vand.u32 %v98, 4294901760
    %189 = vmatmul.f32.gmra.mxu0 %v188
    %v190 = vpop.f32.mrf.mxu0
    %v191 = vadd.f32 %v157, %v190
    %192 = vdwg.mxu0
    %193 = vmatpush.msra.mxu0 0.0
    %194 = vmatpush.msra.mxu0 0.0
    %195 = vmatpush.msra.mxu0 0.0
    %196 = vmatpush.msra.mxu0 0.0
    %197 = vmatpush.msra.mxu0 0.0
    %198 = vmatpush.msra.mxu0 0.0
    %199 = vmatpush.msra.mxu0 0.0
    %200 = vmatpush.msra.mxu0 0.0
    %201 = vmatpush.msra.mxu0 0.0
    %202 = vmatpush.msra.mxu0 0.0
    %203 = vmatpush.msra.mxu0 0.0
    %204 = vmatpush.msra.mxu0 0.0
    %205 = vmatpush.msra.mxu0 0.0
    %206 = vmatpush.msra.mxu0 0.0
    %207 = vmatpush.msra.mxu0 0.0
    %v208 = vand.u32 %v101, 4294901760
    %v209 = vsub.f32 %v101, %v208
    %210 = vmatpush.msra.mxu0 %v209
    %v211 = vand.u32 %v94, 4294901760
    %v212 = vsub.f32 %v94, %v211
    %213 = vmatmul.f32.gmra.mxu0 %v212
    %v214 = vpop.f32.mrf.mxu0
    %v215 = vadd.f32 %v183, %v214
    %v216 = vand.u32 %v96, 4294901760
    %v217 = vsub.f32 %v96, %v216
    %218 = vmatmul.f32.gmra.mxu0 %v217
    %v219 = vpop.f32.mrf.mxu0
    %v220 = vadd.f32 %v187, %v219
    %v221 = vand.u32 %v98, 4294901760
    %v222 = vsub.f32 %v98, %v221
    %223 = vmatmul.f32.gmra.mxu0 %v222
    %v224 = vpop.f32.mrf.mxu0
    %v225 = vadd.f32 %v191, %v224
    %226 = vdwg.mxu0
    %227 = vmatpush.msra.mxu0 0.0
    %228 = vmatpush.msra.mxu0 0.0
    %229 = vmatpush.msra.mxu0 0.0
    %230 = vmatpush.msra.mxu0 0.0
    %231 = vmatpush.msra.mxu0 0.0
    %232 = vmatpush.msra.mxu0 0.0
    %233 = vmatpush.msra.mxu0 0.0
    %234 = vmatpush.msra.mxu0 0.0
    %235 = vmatpush.msra.mxu0 0.0
    %236 = vmatpush.msra.mxu0 0.0
    %237 = vmatpush.msra.mxu0 0.0
    %238 = vmatpush.msra.mxu0 0.0
    %239 = vmatpush.msra.mxu0 0.0
    %240 = vmatpush.msra.mxu0 0.0
    %241 = vmatpush.msra.mxu0 0.0
    %v242 = vand.u32 %v101, 4294901760
    %243 = vmatpush.msra.mxu0 %v242
    %v244 = vand.u32 %v94, 4294901760
    %v245 = vsub.f32 %v94, %v244
    %v246 = vand.u32 %v245, 4294901760
    %247 = vmatmul.f32.gmra.mxu0 %v246
    %v248 = vpop.f32.mrf.mxu0
    %v249 = vadd.f32 %v215, %v248
    %v250 = vand.u32 %v96, 4294901760
    %v251 = vsub.f32 %v96, %v250
    %v252 = vand.u32 %v251, 4294901760
    %253 = vmatmul.f32.gmra.mxu0 %v252
    %v254 = vpop.f32.mrf.mxu0
    %v255 = vadd.f32 %v220, %v254
    %v256 = vand.u32 %v98, 4294901760
    %v257 = vsub.f32 %v98, %v256
    %v258 = vand.u32 %v257, 4294901760
    %259 = vmatmul.f32.gmra.mxu0 %v258
    %v260 = vpop.f32.mrf.mxu0
    %v261 = vadd.f32 %v225, %v260
    %262 = vdwg.mxu0
    %263 = vmatpush.msra.mxu0 0.0
    %264 = vmatpush.msra.mxu0 0.0
    %265 = vmatpush.msra.mxu0 0.0
    %266 = vmatpush.msra.mxu0 0.0
    %267 = vmatpush.msra.mxu0 0.0
    %268 = vmatpush.msra.mxu0 0.0
    %269 = vmatpush.msra.mxu0 0.0
    %270 = vmatpush.msra.mxu0 0.0
    %271 = vmatpush.msra.mxu0 0.0
    %272 = vmatpush.msra.mxu0 0.0
    %273 = vmatpush.msra.mxu0 0.0
    %274 = vmatpush.msra.mxu0 0.0
    %275 = vmatpush.msra.mxu0 0.0
    %276 = vmatpush.msra.mxu0 0.0
    %277 = vmatpush.msra.mxu0 0.0
    %v278 = vand.u32 %v101, 4294901760
    %v279 = vsub.f32 %v101, %v278
    %v280 = vand.u32 %v279, 4294901760
    %281 = vmatpush.msra.mxu0 %v280
    %v282 = vand.u32 %v94, 4294901760
    %283 = vmatmul.f32.gmra.mxu0 %v282
    %v284 = vpop.f32.mrf.mxu0
    %v285 = vadd.f32 %v249, %v284
    %v286 = vand.u32 %v96, 4294901760
    %287 = vmatmul.f32.gmra.mxu0 %v286
    %v288 = vpop.f32.mrf.mxu0
    %v289 = vadd.f32 %v255, %v288
    %v290 = vand.u32 %v98, 4294901760
    %291 = vmatmul.f32.gmra.mxu0 %v290
    %v292 = vpop.f32.mrf.mxu0
    %v293 = vadd.f32 %v261, %v292
    %294 = vdwg.mxu0
    %295 = vmatpush.msra.mxu0 0.0
    %296 = vmatpush.msra.mxu0 0.0
    %297 = vmatpush.msra.mxu0 0.0
    %298 = vmatpush.msra.mxu0 0.0
    %299 = vmatpush.msra.mxu0 0.0
    %300 = vmatpush.msra.mxu0 0.0
    %301 = vmatpush.msra.mxu0 0.0
    %302 = vmatpush.msra.mxu0 0.0
    %303 = vmatpush.msra.mxu0 0.0
    %304 = vmatpush.msra.mxu0 0.0
    %305 = vmatpush.msra.mxu0 0.0
    %306 = vmatpush.msra.mxu0 0.0
    %307 = vmatpush.msra.mxu0 0.0
    %308 = vmatpush.msra.mxu0 0.0
    %309 = vmatpush.msra.mxu0 0.0
    %v310 = vand.u32 %v101, 4294901760
    %311 = vmatpush.msra.mxu0 %v310
    %v312 = vand.u32 %v94, 4294901760
    %313 = vmatmul.f32.gmra.mxu0 %v312
    %v314 = vpop.f32.mrf.mxu0
    %v315 = vadd.f32 %v285, %v314
    %v316 = vand.u32 %v96, 4294901760
    %317 = vmatmul.f32.gmra.mxu0 %v316
    %v318 = vpop.f32.mrf.mxu0
    %v319 = vadd.f32 %v289, %v318
    %v320 = vand.u32 %v98, 4294901760
    %321 = vmatmul.f32.gmra.mxu0 %v320
    %v322 = vpop.f32.mrf.mxu0
    %v323 = vadd.f32 %v293, %v322
    %324 = vdwg.mxu0
    %325 = vmatpush.msra.mxu0 0.0
    %326 = vmatpush.msra.mxu0 0.0
    %327 = vmatpush.msra.mxu0 0.0
    %328 = vmatpush.msra.mxu0 0.0
    %329 = vmatpush.msra.mxu0 0.0
    %330 = vmatpush.msra.mxu0 0.0
    %331 = vmatpush.msra.mxu0 0.0
    %332 = vmatpush.msra.mxu0 0.0
    %333 = vmatpush.msra.mxu0 0.0
    %334 = vmatpush.msra.mxu0 0.0
    %335 = vmatpush.msra.mxu0 0.0
    %336 = vmatpush.msra.mxu0 0.0
    %337 = vmatpush.msra.mxu0 0.0
    %338 = vmatpush.msra.mxu0 0.0
    %339 = vmatpush.msra.mxu0 0.0
    %v340 = vand.u32 %v103, 4294901760
    %341 = vmatpush.msra.mxu0 %v340
    %v342 = vand.u32 %v94, 4294901760
    %v343 = vsub.f32 %v94, %v342
    %v344 = vand.u32 %v343, 4294901760
    %v345 = vsub.f32 %v343, %v344
    %v346 = vand.u32 %v345, 4294901760
    %347 = vmatmul.f32.gmra.mxu0 %v346
    %v348 = vpop.f32.mrf.mxu0
    %v349 = vadd.f32 %v62, %v348
    %v350 = vand.u32 %v96, 4294901760
    %v351 = vsub.f32 %v96, %v350
    %v352 = vand.u32 %v351, 4294901760
    %v353 = vsub.f32 %v351, %v352
    %v354 = vand.u32 %v353, 4294901760
    %355 = vmatmul.f32.gmra.mxu0 %v354
    %v356 = vpop.f32.mrf.mxu0
    %v357 = vadd.f32 %v67, %v356
    %v358 = vand.u32 %v98, 4294901760
    %v359 = vsub.f32 %v98, %v358
    %v360 = vand.u32 %v359, 4294901760
    %v361 = vsub.f32 %v359, %v360
    %v362 = vand.u32 %v361, 4294901760
    %363 = vmatmul.f32.gmra.mxu0 %v362
    %v364 = vpop.f32.mrf.mxu0
    %v365 = vadd.f32 %v72, %v364
    %366 = vdwg.mxu0
    %367 = vmatpush.msra.mxu0 0.0
    %368 = vmatpush.msra.mxu0 0.0
    %369 = vmatpush.msra.mxu0 0.0
    %370 = vmatpush.msra.mxu0 0.0
    %371 = vmatpush.msra.mxu0 0.0
    %372 = vmatpush.msra.mxu0 0.0
    %373 = vmatpush.msra.mxu0 0.0
    %374 = vmatpush.msra.mxu0 0.0
    %375 = vmatpush.msra.mxu0 0.0
    %376 = vmatpush.msra.mxu0 0.0
    %377 = vmatpush.msra.mxu0 0.0
    %378 = vmatpush.msra.mxu0 0.0
    %379 = vmatpush.msra.mxu0 0.0
    %380 = vmatpush.msra.mxu0 0.0
    %381 = vmatpush.msra.mxu0 0.0
    %v382 = vand.u32 %v103, 4294901760
    %v383 = vsub.f32 %v103, %v382
    %v384 = vand.u32 %v383, 4294901760
    %v385 = vsub.f32 %v383, %v384
    %v386 = vand.u32 %v385, 4294901760
    %387 = vmatpush.msra.mxu0 %v386
    %v388 = vand.u32 %v94, 4294901760
    %389 = vmatmul.f32.gmra.mxu0 %v388
    %v390 = vpop.f32.mrf.mxu0
    %v391 = vadd.f32 %v349, %v390
    %v392 = vand.u32 %v96, 4294901760
    %393 = vmatmul.f32.gmra.mxu0 %v392
    %v394 = vpop.f32.mrf.mxu0
    %v395 = vadd.f32 %v357, %v394
    %v396 = vand.u32 %v98, 4294901760
    %397 = vmatmul.f32.gmra.mxu0 %v396
    %v398 = vpop.f32.mrf.mxu0
    %v399 = vadd.f32 %v365, %v398
    %400 = vdwg.mxu0
    %401 = vmatpush.msra.mxu0 0.0
    %402 = vmatpush.msra.mxu0 0.0
    %403 = vmatpush.msra.mxu0 0.0
    %404 = vmatpush.msra.mxu0 0.0
    %405 = vmatpush.msra.mxu0 0.0
    %406 = vmatpush.msra.mxu0 0.0
    %407 = vmatpush.msra.mxu0 0.0
    %408 = vmatpush.msra.mxu0 0.0
    %409 = vmatpush.msra.mxu0 0.0
    %410 = vmatpush.msra.mxu0 0.0
    %411 = vmatpush.msra.mxu0 0.0
    %412 = vmatpush.msra.mxu0 0.0
    %413 = vmatpush.msra.mxu0 0.0
    %414 = vmatpush.msra.mxu0 0.0
    %415 = vmatpush.msra.mxu0 0.0
    %v416 = vand.u32 %v103, 4294901760
    %v417 = vsub.f32 %v103, %v416
    %418 = vmatpush.msra.mxu0 %v417
    %v419 = vand.u32 %v94, 4294901760
    %v420 = vsub.f32 %v94, %v419
    %421 = vmatmul.f32.gmra.mxu0 %v420
    %v422 = vpop.f32.mrf.mxu0
    %v423 = vadd.f32 %v391, %v422
    %v424 = vand.u32 %v96, 4294901760
    %v425 = vsub.f32 %v96, %v424
    %426 = vmatmul.f32.gmra.mxu0 %v425
    %v427 = vpop.f32.mrf.mxu0
    %v428 = vadd.f32 %v395, %v427
    %v429 = vand.u32 %v98, 4294901760
    %v430 = vsub.f32 %v98, %v429
    %431 = vmatmul.f32.gmra.mxu0 %v430
    %v432 = vpop.f32.mrf.mxu0
    %v433 = vadd.f32 %v399, %v432
    %434 = vdwg.mxu0
    %435 = vmatpush.msra.mxu0 0.0
    %436 = vmatpush.msra.mxu0 0.0
    %437 = vmatpush.msra.mxu0 0.0
    %438 = vmatpush.msra.mxu0 0.0
    %439 = vmatpush.msra.mxu0 0.0
    %440 = vmatpush.msra.mxu0 0.0
    %441 = vmatpush.msra.mxu0 0.0
    %442 = vmatpush.msra.mxu0 0.0
    %443 = vmatpush.msra.mxu0 0.0
    %444 = vmatpush.msra.mxu0 0.0
    %445 = vmatpush.msra.mxu0 0.0
    %446 = vmatpush.msra.mxu0 0.0
    %447 = vmatpush.msra.mxu0 0.0
    %448 = vmatpush.msra.mxu0 0.0
    %449 = vmatpush.msra.mxu0 0.0
    %v450 = vand.u32 %v103, 4294901760
    %451 = vmatpush.msra.mxu0 %v450
    %v452 = vand.u32 %v94, 4294901760
    %v453 = vsub.f32 %v94, %v452
    %v454 = vand.u32 %v453, 4294901760
    %455 = vmatmul.f32.gmra.mxu0 %v454
    %v456 = vpop.f32.mrf.mxu0
    %v457 = vadd.f32 %v423, %v456
    %v458 = vand.u32 %v96, 4294901760
    %v459 = vsub.f32 %v96, %v458
    %v460 = vand.u32 %v459, 4294901760
    %461 = vmatmul.f32.gmra.mxu0 %v460
    %v462 = vpop.f32.mrf.mxu0
    %v463 = vadd.f32 %v428, %v462
    %v464 = vand.u32 %v98, 4294901760
    %v465 = vsub.f32 %v98, %v464
    %v466 = vand.u32 %v465, 4294901760
    %467 = vmatmul.f32.gmra.mxu0 %v466
    %v468 = vpop.f32.mrf.mxu0
    %v469 = vadd.f32 %v433, %v468
    %470 = vdwg.mxu0
    %471 = vmatpush.msra.mxu0 0.0
    %472 = vmatpush.msra.mxu0 0.0
    %473 = vmatpush.msra.mxu0 0.0
    %474 = vmatpush.msra.mxu0 0.0
    %475 = vmatpush.msra.mxu0 0.0
    %476 = vmatpush.msra.mxu0 0.0
    %477 = vmatpush.msra.mxu0 0.0
    %478 = vmatpush.msra.mxu0 0.0
    %479 = vmatpush.msra.mxu0 0.0
    %480 = vmatpush.msra.mxu0 0.0
    %481 = vmatpush.msra.mxu0 0.0
    %482 = vmatpush.msra.mxu0 0.0
    %483 = vmatpush.msra.mxu0 0.0
    %484 = vmatpush.msra.mxu0 0.0
    %485 = vmatpush.msra.mxu0 0.0
    %v486 = vand.u32 %v103, 4294901760
    %v487 = vsub.f32 %v103, %v486
    %v488 = vand.u32 %v487, 4294901760
    %489 = vmatpush.msra.mxu0 %v488
    %v490 = vand.u32 %v94, 4294901760
    %491 = vmatmul.f32.gmra.mxu0 %v490
    %v492 = vpop.f32.mrf.mxu0
    %v493 = vadd.f32 %v457, %v492
    %v494 = vand.u32 %v96, 4294901760
    %495 = vmatmul.f32.gmra.mxu0 %v494
    %v496 = vpop.f32.mrf.mxu0
    %v497 = vadd.f32 %v463, %v496
    %v498 = vand.u32 %v98, 4294901760
    %499 = vmatmul.f32.gmra.mxu0 %v498
    %v500 = vpop.f32.mrf.mxu0
    %v501 = vadd.f32 %v469, %v500
    %502 = vdwg.mxu0
    %503 = vmatpush.msra.mxu0 0.0
    %504 = vmatpush.msra.mxu0 0.0
    %505 = vmatpush.msra.mxu0 0.0
    %506 = vmatpush.msra.mxu0 0.0
    %507 = vmatpush.msra.mxu0 0.0
    %508 = vmatpush.msra.mxu0 0.0
    %509 = vmatpush.msra.mxu0 0.0
    %510 = vmatpush.msra.mxu0 0.0
    %511 = vmatpush.msra.mxu0 0.0
    %512 = vmatpush.msra.mxu0 0.0
    %513 = vmatpush.msra.mxu0 0.0
    %514 = vmatpush.msra.mxu0 0.0
    %515 = vmatpush.msra.mxu0 0.0
    %516 = vmatpush.msra.mxu0 0.0
    %517 = vmatpush.msra.mxu0 0.0
    %v518 = vand.u32 %v103, 4294901760
    %519 = vmatpush.msra.mxu0 %v518
    %v520 = vand.u32 %v94, 4294901760
    %521 = vmatmul.f32.gmra.mxu0 %v520
    %v522 = vpop.f32.mrf.mxu0
    %v523 = vadd.f32 %v493, %v522
    %v524 = vand.u32 %v96, 4294901760
    %525 = vmatmul.f32.gmra.mxu0 %v524
    %v526 = vpop.f32.mrf.mxu0
    %v527 = vadd.f32 %v497, %v526
    %v528 = vand.u32 %v98, 4294901760
    %529 = vmatmul.f32.gmra.mxu0 %v528
    %v530 = vpop.f32.mrf.mxu0
    %v531 = vadd.f32 %v501, %v530
    %532 = vdwg.mxu0
    %533 = vmatpush.msra.mxu0 0.0
    %534 = vmatpush.msra.mxu0 0.0
    %535 = vmatpush.msra.mxu0 0.0
    %536 = vmatpush.msra.mxu0 0.0
    %537 = vmatpush.msra.mxu0 0.0
    %538 = vmatpush.msra.mxu0 0.0
    %539 = vmatpush.msra.mxu0 0.0
    %540 = vmatpush.msra.mxu0 0.0
    %541 = vmatpush.msra.mxu0 0.0
    %542 = vmatpush.msra.mxu0 0.0
    %543 = vmatpush.msra.mxu0 0.0
    %544 = vmatpush.msra.mxu0 0.0
    %545 = vmatpush.msra.mxu0 0.0
    %546 = vmatpush.msra.mxu0 0.0
    %547 = vmatpush.msra.mxu0 0.0
    %v548 = vand.u32 %v105, 4294901760
    %549 = vmatpush.msra.mxu0 %v548
    %v550 = vand.u32 %v94, 4294901760
    %v551 = vsub.f32 %v94, %v550
    %v552 = vand.u32 %v551, 4294901760
    %v553 = vsub.f32 %v551, %v552
    %v554 = vand.u32 %v553, 4294901760
    %555 = vmatmul.f32.gmra.mxu0 %v554
    %v556 = vpop.f32.mrf.mxu0
    %v557 = vadd.f32 %v62, %v556
    %v558 = vand.u32 %v96, 4294901760
    %v559 = vsub.f32 %v96, %v558
    %v560 = vand.u32 %v559, 4294901760
    %v561 = vsub.f32 %v559, %v560
    %v562 = vand.u32 %v561, 4294901760
    %563 = vmatmul.f32.gmra.mxu0 %v562
    %v564 = vpop.f32.mrf.mxu0
    %v565 = vadd.f32 %v67, %v564
    %v566 = vand.u32 %v98, 4294901760
    %v567 = vsub.f32 %v98, %v566
    %v568 = vand.u32 %v567, 4294901760
    %v569 = vsub.f32 %v567, %v568
    %v570 = vand.u32 %v569, 4294901760
    %571 = vmatmul.f32.gmra.mxu0 %v570
    %v572 = vpop.f32.mrf.mxu0
    %v573 = vadd.f32 %v72, %v572
    %574 = vdwg.mxu0
    %575 = vmatpush.msra.mxu0 0.0
    %576 = vmatpush.msra.mxu0 0.0
    %577 = vmatpush.msra.mxu0 0.0
    %578 = vmatpush.msra.mxu0 0.0
    %579 = vmatpush.msra.mxu0 0.0
    %580 = vmatpush.msra.mxu0 0.0
    %581 = vmatpush.msra.mxu0 0.0
    %582 = vmatpush.msra.mxu0 0.0
    %583 = vmatpush.msra.mxu0 0.0
    %584 = vmatpush.msra.mxu0 0.0
    %585 = vmatpush.msra.mxu0 0.0
    %586 = vmatpush.msra.mxu0 0.0
    %587 = vmatpush.msra.mxu0 0.0
    %588 = vmatpush.msra.mxu0 0.0
    %589 = vmatpush.msra.mxu0 0.0
    %v590 = vand.u32 %v105, 4294901760
    %v591 = vsub.f32 %v105, %v590
    %v592 = vand.u32 %v591, 4294901760
    %v593 = vsub.f32 %v591, %v592
    %v594 = vand.u32 %v593, 4294901760
    %595 = vmatpush.msra.mxu0 %v594
    %v596 = vand.u32 %v94, 4294901760
    %597 = vmatmul.f32.gmra.mxu0 %v596
    %v598 = vpop.f32.mrf.mxu0
    %v599 = vadd.f32 %v557, %v598
    %v600 = vand.u32 %v96, 4294901760
    %601 = vmatmul.f32.gmra.mxu0 %v600
    %v602 = vpop.f32.mrf.mxu0
    %v603 = vadd.f32 %v565, %v602
    %v604 = vand.u32 %v98, 4294901760
    %605 = vmatmul.f32.gmra.mxu0 %v604
    %v606 = vpop.f32.mrf.mxu0
    %v607 = vadd.f32 %v573, %v606
    %608 = vdwg.mxu0
    %609 = vmatpush.msra.mxu0 0.0
    %610 = vmatpush.msra.mxu0 0.0
    %611 = vmatpush.msra.mxu0 0.0
    %612 = vmatpush.msra.mxu0 0.0
    %613 = vmatpush.msra.mxu0 0.0
    %614 = vmatpush.msra.mxu0 0.0
    %615 = vmatpush.msra.mxu0 0.0
    %616 = vmatpush.msra.mxu0 0.0
    %617 = vmatpush.msra.mxu0 0.0
    %618 = vmatpush.msra.mxu0 0.0
    %619 = vmatpush.msra.mxu0 0.0
    %620 = vmatpush.msra.mxu0 0.0
    %621 = vmatpush.msra.mxu0 0.0
    %622 = vmatpush.msra.mxu0 0.0
    %623 = vmatpush.msra.mxu0 0.0
    %v624 = vand.u32 %v105, 4294901760
    %v625 = vsub.f32 %v105, %v624
    %626 = vmatpush.msra.mxu0 %v625
    %v627 = vand.u32 %v94, 4294901760
    %v628 = vsub.f32 %v94, %v627
    %629 = vmatmul.f32.gmra.mxu0 %v628
    %v630 = vpop.f32.mrf.mxu0
    %v631 = vadd.f32 %v599, %v630
    %v632 = vand.u32 %v96, 4294901760
    %v633 = vsub.f32 %v96, %v632
    %634 = vmatmul.f32.gmra.mxu0 %v633
    %v635 = vpop.f32.mrf.mxu0
    %v636 = vadd.f32 %v603, %v635
    %v637 = vand.u32 %v98, 4294901760
    %v638 = vsub.f32 %v98, %v637
    %639 = vmatmul.f32.gmra.mxu0 %v638
    %v640 = vpop.f32.mrf.mxu0
    %v641 = vadd.f32 %v607, %v640
    %642 = vdwg.mxu0
    %643 = vmatpush.msra.mxu0 0.0
    %644 = vmatpush.msra.mxu0 0.0
    %645 = vmatpush.msra.mxu0 0.0
    %646 = vmatpush.msra.mxu0 0.0
    %647 = vmatpush.msra.mxu0 0.0
    %648 = vmatpush.msra.mxu0 0.0
    %649 = vmatpush.msra.mxu0 0.0
    %650 = vmatpush.msra.mxu0 0.0
    %651 = vmatpush.msra.mxu0 0.0
    %652 = vmatpush.msra.mxu0 0.0
    %653 = vmatpush.msra.mxu0 0.0
    %654 = vmatpush.msra.mxu0 0.0
    %655 = vmatpush.msra.mxu0 0.0
    %656 = vmatpush.msra.mxu0 0.0
    %657 = vmatpush.msra.mxu0 0.0
    %v658 = vand.u32 %v105, 4294901760
    %659 = vmatpush.msra.mxu0 %v658
    %v660 = vand.u32 %v94, 4294901760
    %v661 = vsub.f32 %v94, %v660
    %v662 = vand.u32 %v661, 4294901760
    %663 = vmatmul.f32.gmra.mxu0 %v662
    %v664 = vpop.f32.mrf.mxu0
    %v665 = vadd.f32 %v631, %v664
    %v666 = vand.u32 %v96, 4294901760
    %v667 = vsub.f32 %v96, %v666
    %v668 = vand.u32 %v667, 4294901760
    %669 = vmatmul.f32.gmra.mxu0 %v668
    %v670 = vpop.f32.mrf.mxu0
    %v671 = vadd.f32 %v636, %v670
    %v672 = vand.u32 %v98, 4294901760
    %v673 = vsub.f32 %v98, %v672
    %v674 = vand.u32 %v673, 4294901760
    %675 = vmatmul.f32.gmra.mxu0 %v674
    %v676 = vpop.f32.mrf.mxu0
    %v677 = vadd.f32 %v641, %v676
    %678 = vdwg.mxu0
    %679 = vmatpush.msra.mxu0 0.0
    %680 = vmatpush.msra.mxu0 0.0
    %681 = vmatpush.msra.mxu0 0.0
    %682 = vmatpush.msra.mxu0 0.0
    %683 = vmatpush.msra.mxu0 0.0
    %684 = vmatpush.msra.mxu0 0.0
    %685 = vmatpush.msra.mxu0 0.0
    %686 = vmatpush.msra.mxu0 0.0
    %687 = vmatpush.msra.mxu0 0.0
    %688 = vmatpush.msra.mxu0 0.0
    %689 = vmatpush.msra.mxu0 0.0
    %690 = vmatpush.msra.mxu0 0.0
    %691 = vmatpush.msra.mxu0 0.0
    %692 = vmatpush.msra.mxu0 0.0
    %693 = vmatpush.msra.mxu0 0.0
    %v694 = vand.u32 %v105, 4294901760
    %v695 = vsub.f32 %v105, %v694
    %v696 = vand.u32 %v695, 4294901760
    %697 = vmatpush.msra.mxu0 %v696
    %v698 = vand.u32 %v94, 4294901760
    %699 = vmatmul.f32.gmra.mxu0 %v698
    %v700 = vpop.f32.mrf.mxu0
    %v701 = vadd.f32 %v665, %v700
    %v702 = vand.u32 %v96, 4294901760
    %703 = vmatmul.f32.gmra.mxu0 %v702
    %v704 = vpop.f32.mrf.mxu0
    %v705 = vadd.f32 %v671, %v704
    %v706 = vand.u32 %v98, 4294901760
    %707 = vmatmul.f32.gmra.mxu0 %v706
    %v708 = vpop.f32.mrf.mxu0
    %v709 = vadd.f32 %v677, %v708
    %710 = vdwg.mxu0
    %711 = vmatpush.msra.mxu0 0.0
    %712 = vmatpush.msra.mxu0 0.0
    %713 = vmatpush.msra.mxu0 0.0
    %714 = vmatpush.msra.mxu0 0.0
    %715 = vmatpush.msra.mxu0 0.0
    %716 = vmatpush.msra.mxu0 0.0
    %717 = vmatpush.msra.mxu0 0.0
    %718 = vmatpush.msra.mxu0 0.0
    %719 = vmatpush.msra.mxu0 0.0
    %720 = vmatpush.msra.mxu0 0.0
    %721 = vmatpush.msra.mxu0 0.0
    %722 = vmatpush.msra.mxu0 0.0
    %723 = vmatpush.msra.mxu0 0.0
    %724 = vmatpush.msra.mxu0 0.0
    %725 = vmatpush.msra.mxu0 0.0
    %v726 = vand.u32 %v105, 4294901760
    %727 = vmatpush.msra.mxu0 %v726
    %v728 = vand.u32 %v94, 4294901760
    %729 = vmatmul.f32.gmra.mxu0 %v728
    %v730 = vpop.f32.mrf.mxu0
    %v731 = vadd.f32 %v701, %v730
    %v732 = vand.u32 %v96, 4294901760
    %733 = vmatmul.f32.gmra.mxu0 %v732
    %v734 = vpop.f32.mrf.mxu0
    %v735 = vadd.f32 %v705, %v734
    %v736 = vand.u32 %v98, 4294901760
    %737 = vmatmul.f32.gmra.mxu0 %v736
    %v738 = vpop.f32.mrf.mxu0
    %v739 = vadd.f32 %v709, %v738
    %740 = vdwg.mxu0
    %741 = vmatpush.msra.mxu0 0.0
    %742 = vmatpush.msra.mxu0 0.0
    %743 = vmatpush.msra.mxu0 0.0
    %744 = vmatpush.msra.mxu0 0.0
    %745 = vmatpush.msra.mxu0 0.0
    %746 = vmatpush.msra.mxu0 0.0
    %747 = vmatpush.msra.mxu0 0.0
    %748 = vmatpush.msra.mxu0 0.0
    %749 = vmatpush.msra.mxu0 0.0
    %750 = vmatpush.msra.mxu0 0.0
    %751 = vmatpush.msra.mxu0 0.0
    %752 = vmatpush.msra.mxu0 0.0
    %753 = vmatpush.msra.mxu0 0.0
    %754 = vmatpush.msra.mxu0 0.0
    %755 = vmatpush.msra.mxu0 0.0
    %v756 = vand.u32 %v107, 4294901760
    %757 = vmatpush.msra.mxu0 %v756
    %v758 = vand.u32 %v94, 4294901760
    %v759 = vsub.f32 %v94, %v758
    %v760 = vand.u32 %v759, 4294901760
    %v761 = vsub.f32 %v759, %v760
    %v762 = vand.u32 %v761, 4294901760
    %763 = vmatmul.f32.gmra.mxu0 %v762
    %v764 = vpop.f32.mrf.mxu0
    %v765 = vadd.f32 %v62, %v764
    %v766 = vand.u32 %v96, 4294901760
    %v767 = vsub.f32 %v96, %v766
    %v768 = vand.u32 %v767, 4294901760
    %v769 = vsub.f32 %v767, %v768
    %v770 = vand.u32 %v769, 4294901760
    %771 = vmatmul.f32.gmra.mxu0 %v770
    %v772 = vpop.f32.mrf.mxu0
    %v773 = vadd.f32 %v67, %v772
    %v774 = vand.u32 %v98, 4294901760
    %v775 = vsub.f32 %v98, %v774
    %v776 = vand.u32 %v775, 4294901760
    %v777 = vsub.f32 %v775, %v776
    %v778 = vand.u32 %v777, 4294901760
    %779 = vmatmul.f32.gmra.mxu0 %v778
    %v780 = vpop.f32.mrf.mxu0
    %v781 = vadd.f32 %v72, %v780
    %782 = vdwg.mxu0
    %783 = vmatpush.msra.mxu0 0.0
    %784 = vmatpush.msra.mxu0 0.0
    %785 = vmatpush.msra.mxu0 0.0
    %786 = vmatpush.msra.mxu0 0.0
    %787 = vmatpush.msra.mxu0 0.0
    %788 = vmatpush.msra.mxu0 0.0
    %789 = vmatpush.msra.mxu0 0.0
    %790 = vmatpush.msra.mxu0 0.0
    %791 = vmatpush.msra.mxu0 0.0
    %792 = vmatpush.msra.mxu0 0.0
    %793 = vmatpush.msra.mxu0 0.0
    %794 = vmatpush.msra.mxu0 0.0
    %795 = vmatpush.msra.mxu0 0.0
    %796 = vmatpush.msra.mxu0 0.0
    %797 = vmatpush.msra.mxu0 0.0
    %v798 = vand.u32 %v107, 4294901760
    %v799 = vsub.f32 %v107, %v798
    %v800 = vand.u32 %v799, 4294901760
    %v801 = vsub.f32 %v799, %v800
    %v802 = vand.u32 %v801, 4294901760
    %803 = vmatpush.msra.mxu0 %v802
    %v804 = vand.u32 %v94, 4294901760
    %805 = vmatmul.f32.gmra.mxu0 %v804
    %v806 = vpop.f32.mrf.mxu0
    %v807 = vadd.f32 %v765, %v806
    %v808 = vand.u32 %v96, 4294901760
    %809 = vmatmul.f32.gmra.mxu0 %v808
    %v810 = vpop.f32.mrf.mxu0
    %v811 = vadd.f32 %v773, %v810
    %v812 = vand.u32 %v98, 4294901760
    %813 = vmatmul.f32.gmra.mxu0 %v812
    %v814 = vpop.f32.mrf.mxu0
    %v815 = vadd.f32 %v781, %v814
    %816 = vdwg.mxu0
    %817 = vmatpush.msra.mxu0 0.0
    %818 = vmatpush.msra.mxu0 0.0
    %819 = vmatpush.msra.mxu0 0.0
    %820 = vmatpush.msra.mxu0 0.0
    %821 = vmatpush.msra.mxu0 0.0
    %822 = vmatpush.msra.mxu0 0.0
    %823 = vmatpush.msra.mxu0 0.0
    %824 = vmatpush.msra.mxu0 0.0
    %825 = vmatpush.msra.mxu0 0.0
    %826 = vmatpush.msra.mxu0 0.0
    %827 = vmatpush.msra.mxu0 0.0
    %828 = vmatpush.msra.mxu0 0.0
    %829 = vmatpush.msra.mxu0 0.0
    %830 = vmatpush.msra.mxu0 0.0
    %831 = vmatpush.msra.mxu0 0.0
    %v832 = vand.u32 %v107, 4294901760
    %v833 = vsub.f32 %v107, %v832
    %834 = vmatpush.msra.mxu0 %v833
    %v835 = vand.u32 %v94, 4294901760
    %v836 = vsub.f32 %v94, %v835
    %837 = vmatmul.f32.gmra.mxu0 %v836
    %v838 = vpop.f32.mrf.mxu0
    %v839 = vadd.f32 %v807, %v838
    %v840 = vand.u32 %v96, 4294901760
    %v841 = vsub.f32 %v96, %v840
    %842 = vmatmul.f32.gmra.mxu0 %v841
    %v843 = vpop.f32.mrf.mxu0
    %v844 = vadd.f32 %v811, %v843
    %v845 = vand.u32 %v98, 4294901760
    %v846 = vsub.f32 %v98, %v845
    %847 = vmatmul.f32.gmra.mxu0 %v846
    %v848 = vpop.f32.mrf.mxu0
    %v849 = vadd.f32 %v815, %v848
    %850 = vdwg.mxu0
    %851 = vmatpush.msra.mxu0 0.0
    %852 = vmatpush.msra.mxu0 0.0
    %853 = vmatpush.msra.mxu0 0.0
    %854 = vmatpush.msra.mxu0 0.0
    %855 = vmatpush.msra.mxu0 0.0
    %856 = vmatpush.msra.mxu0 0.0
    %857 = vmatpush.msra.mxu0 0.0
    %858 = vmatpush.msra.mxu0 0.0
    %859 = vmatpush.msra.mxu0 0.0
    %860 = vmatpush.msra.mxu0 0.0
    %861 = vmatpush.msra.mxu0 0.0
    %862 = vmatpush.msra.mxu0 0.0
    %863 = vmatpush.msra.mxu0 0.0
    %864 = vmatpush.msra.mxu0 0.0
    %865 = vmatpush.msra.mxu0 0.0
    %v866 = vand.u32 %v107, 4294901760
    %867 = vmatpush.msra.mxu0 %v866
    %v868 = vand.u32 %v94, 4294901760
    %v869 = vsub.f32 %v94, %v868
    %v870 = vand.u32 %v869, 4294901760
    %871 = vmatmul.f32.gmra.mxu0 %v870
    %v872 = vpop.f32.mrf.mxu0
    %v873 = vadd.f32 %v839, %v872
    %v874 = vand.u32 %v96, 4294901760
    %v875 = vsub.f32 %v96, %v874
    %v876 = vand.u32 %v875, 4294901760
    %877 = vmatmul.f32.gmra.mxu0 %v876
    %v878 = vpop.f32.mrf.mxu0
    %v879 = vadd.f32 %v844, %v878
    %v880 = vand.u32 %v98, 4294901760
    %v881 = vsub.f32 %v98, %v880
    %v882 = vand.u32 %v881, 4294901760
    %883 = vmatmul.f32.gmra.mxu0 %v882
    %v884 = vpop.f32.mrf.mxu0
    %v885 = vadd.f32 %v849, %v884
    %886 = vdwg.mxu0
    %887 = vmatpush.msra.mxu0 0.0
    %888 = vmatpush.msra.mxu0 0.0
    %889 = vmatpush.msra.mxu0 0.0
    %890 = vmatpush.msra.mxu0 0.0
    %891 = vmatpush.msra.mxu0 0.0
    %892 = vmatpush.msra.mxu0 0.0
    %893 = vmatpush.msra.mxu0 0.0
    %894 = vmatpush.msra.mxu0 0.0
    %895 = vmatpush.msra.mxu0 0.0
    %896 = vmatpush.msra.mxu0 0.0
    %897 = vmatpush.msra.mxu0 0.0
    %898 = vmatpush.msra.mxu0 0.0
    %899 = vmatpush.msra.mxu0 0.0
    %900 = vmatpush.msra.mxu0 0.0
    %901 = vmatpush.msra.mxu0 0.0
    %v902 = vand.u32 %v107, 4294901760
    %v903 = vsub.f32 %v107, %v902
    %v904 = vand.u32 %v903, 4294901760
    %905 = vmatpush.msra.mxu0 %v904
    %v906 = vand.u32 %v94, 4294901760
    %907 = vmatmul.f32.gmra.mxu0 %v906
    %v908 = vpop.f32.mrf.mxu0
    %v909 = vadd.f32 %v873, %v908
    %v910 = vand.u32 %v96, 4294901760
    %911 = vmatmul.f32.gmra.mxu0 %v910
    %v912 = vpop.f32.mrf.mxu0
    %v913 = vadd.f32 %v879, %v912
    %v914 = vand.u32 %v98, 4294901760
    %915 = vmatmul.f32.gmra.mxu0 %v914
    %v916 = vpop.f32.mrf.mxu0
    %v917 = vadd.f32 %v885, %v916
    %918 = vdwg.mxu0
    %919 = vmatpush.msra.mxu0 0.0
    %920 = vmatpush.msra.mxu0 0.0
    %921 = vmatpush.msra.mxu0 0.0
    %922 = vmatpush.msra.mxu0 0.0
    %923 = vmatpush.msra.mxu0 0.0
    %924 = vmatpush.msra.mxu0 0.0
    %925 = vmatpush.msra.mxu0 0.0
    %926 = vmatpush.msra.mxu0 0.0
    %927 = vmatpush.msra.mxu0 0.0
    %928 = vmatpush.msra.mxu0 0.0
    %929 = vmatpush.msra.mxu0 0.0
    %930 = vmatpush.msra.mxu0 0.0
    %931 = vmatpush.msra.mxu0 0.0
    %932 = vmatpush.msra.mxu0 0.0
    %933 = vmatpush.msra.mxu0 0.0
    %v934 = vand.u32 %v107, 4294901760
    %935 = vmatpush.msra.mxu0 %v934
    %v936 = vand.u32 %v94, 4294901760
    %937 = vmatmul.f32.gmra.mxu0 %v936
    %v938 = vpop.f32.mrf.mxu0
    %v939 = vadd.f32 %v909, %v938
    %v940 = vand.u32 %v96, 4294901760
    %941 = vmatmul.f32.gmra.mxu0 %v940
    %v942 = vpop.f32.mrf.mxu0
    %v943 = vadd.f32 %v913, %v942
    %v944 = vand.u32 %v98, 4294901760
    %945 = vmatmul.f32.gmra.mxu0 %v944
    %v946 = vpop.f32.mrf.mxu0
    %v947 = vadd.f32 %v917, %v946
    %948 = vdwg.mxu0
    %949 = vmatpush.msra.mxu0 0.0
    %950 = vmatpush.msra.mxu0 0.0
    %951 = vmatpush.msra.mxu0 0.0
    %952 = vmatpush.msra.mxu0 0.0
    %953 = vmatpush.msra.mxu0 0.0
    %954 = vmatpush.msra.mxu0 0.0
    %955 = vmatpush.msra.mxu0 0.0
    %956 = vmatpush.msra.mxu0 0.0
    %957 = vmatpush.msra.mxu0 0.0
    %958 = vmatpush.msra.mxu0 0.0
    %959 = vmatpush.msra.mxu0 0.0
    %960 = vmatpush.msra.mxu0 0.0
    %961 = vmatpush.msra.mxu0 0.0
    %962 = vmatpush.msra.mxu0 0.0
    %963 = vmatpush.msra.mxu0 0.0
    %v964 = vand.u32 %v109, 4294901760
    %965 = vmatpush.msra.mxu0 %v964
    %v966 = vand.u32 %v94, 4294901760
    %v967 = vsub.f32 %v94, %v966
    %v968 = vand.u32 %v967, 4294901760
    %v969 = vsub.f32 %v967, %v968
    %v970 = vand.u32 %v969, 4294901760
    %971 = vmatmul.f32.gmra.mxu0 %v970
    %v972 = vpop.f32.mrf.mxu0
    %v973 = vadd.f32 %v62, %v972
    %v974 = vand.u32 %v96, 4294901760
    %v975 = vsub.f32 %v96, %v974
    %v976 = vand.u32 %v975, 4294901760
    %v977 = vsub.f32 %v975, %v976
    %v978 = vand.u32 %v977, 4294901760
    %979 = vmatmul.f32.gmra.mxu0 %v978
    %v980 = vpop.f32.mrf.mxu0
    %v981 = vadd.f32 %v67, %v980
    %v982 = vand.u32 %v98, 4294901760
    %v983 = vsub.f32 %v98, %v982
    %v984 = vand.u32 %v983, 4294901760
    %v985 = vsub.f32 %v983, %v984
    %v986 = vand.u32 %v985, 4294901760
    %987 = vmatmul.f32.gmra.mxu0 %v986
    %v988 = vpop.f32.mrf.mxu0
    %v989 = vadd.f32 %v72, %v988
    %990 = vdwg.mxu0
    %991 = vmatpush.msra.mxu0 0.0
    %992 = vmatpush.msra.mxu0 0.0
    %993 = vmatpush.msra.mxu0 0.0
    %994 = vmatpush.msra.mxu0 0.0
    %995 = vmatpush.msra.mxu0 0.0
    %996 = vmatpush.msra.mxu0 0.0
    %997 = vmatpush.msra.mxu0 0.0
    %998 = vmatpush.msra.mxu0 0.0
    %999 = vmatpush.msra.mxu0 0.0
    %1000 = vmatpush.msra.mxu0 0.0
    %1001 = vmatpush.msra.mxu0 0.0
    %1002 = vmatpush.msra.mxu0 0.0
    %1003 = vmatpush.msra.mxu0 0.0
    %1004 = vmatpush.msra.mxu0 0.0
    %1005 = vmatpush.msra.mxu0 0.0
    %v1006 = vand.u32 %v109, 4294901760
    %v1007 = vsub.f32 %v109, %v1006
    %v1008 = vand.u32 %v1007, 4294901760
    %v1009 = vsub.f32 %v1007, %v1008
    %v1010 = vand.u32 %v1009, 4294901760
    %1011 = vmatpush.msra.mxu0 %v1010
    %v1012 = vand.u32 %v94, 4294901760
    %1013 = vmatmul.f32.gmra.mxu0 %v1012
    %v1014 = vpop.f32.mrf.mxu0
    %v1015 = vadd.f32 %v973, %v1014
    %v1016 = vand.u32 %v96, 4294901760
    %1017 = vmatmul.f32.gmra.mxu0 %v1016
    %v1018 = vpop.f32.mrf.mxu0
    %v1019 = vadd.f32 %v981, %v1018
    %v1020 = vand.u32 %v98, 4294901760
    %1021 = vmatmul.f32.gmra.mxu0 %v1020
    %v1022 = vpop.f32.mrf.mxu0
    %v1023 = vadd.f32 %v989, %v1022
    %1024 = vdwg.mxu0
    %1025 = vmatpush.msra.mxu0 0.0
    %1026 = vmatpush.msra.mxu0 0.0
    %1027 = vmatpush.msra.mxu0 0.0
    %1028 = vmatpush.msra.mxu0 0.0
    %1029 = vmatpush.msra.mxu0 0.0
    %1030 = vmatpush.msra.mxu0 0.0
    %1031 = vmatpush.msra.mxu0 0.0
    %1032 = vmatpush.msra.mxu0 0.0
    %1033 = vmatpush.msra.mxu0 0.0
    %1034 = vmatpush.msra.mxu0 0.0
    %1035 = vmatpush.msra.mxu0 0.0
    %1036 = vmatpush.msra.mxu0 0.0
    %1037 = vmatpush.msra.mxu0 0.0
    %1038 = vmatpush.msra.mxu0 0.0
    %1039 = vmatpush.msra.mxu0 0.0
    %v1040 = vand.u32 %v109, 4294901760
    %v1041 = vsub.f32 %v109, %v1040
    %1042 = vmatpush.msra.mxu0 %v1041
    %v1043 = vand.u32 %v94, 4294901760
    %v1044 = vsub.f32 %v94, %v1043
    %1045 = vmatmul.f32.gmra.mxu0 %v1044
    %v1046 = vpop.f32.mrf.mxu0
    %v1047 = vadd.f32 %v1015, %v1046
    %v1048 = vand.u32 %v96, 4294901760
    %v1049 = vsub.f32 %v96, %v1048
    %1050 = vmatmul.f32.gmra.mxu0 %v1049
    %v1051 = vpop.f32.mrf.mxu0
    %v1052 = vadd.f32 %v1019, %v1051
    %v1053 = vand.u32 %v98, 4294901760
    %v1054 = vsub.f32 %v98, %v1053
    %1055 = vmatmul.f32.gmra.mxu0 %v1054
    %v1056 = vpop.f32.mrf.mxu0
    %v1057 = vadd.f32 %v1023, %v1056
    %1058 = vdwg.mxu0
    %1059 = vmatpush.msra.mxu0 0.0
    %1060 = vmatpush.msra.mxu0 0.0
    %1061 = vmatpush.msra.mxu0 0.0
    %1062 = vmatpush.msra.mxu0 0.0
    %1063 = vmatpush.msra.mxu0 0.0
    %1064 = vmatpush.msra.mxu0 0.0
    %1065 = vmatpush.msra.mxu0 0.0
    %1066 = vmatpush.msra.mxu0 0.0
    %1067 = vmatpush.msra.mxu0 0.0
    %1068 = vmatpush.msra.mxu0 0.0
    %1069 = vmatpush.msra.mxu0 0.0
    %1070 = vmatpush.msra.mxu0 0.0
    %1071 = vmatpush.msra.mxu0 0.0
    %1072 = vmatpush.msra.mxu0 0.0
    %1073 = vmatpush.msra.mxu0 0.0
    %v1074 = vand.u32 %v109, 4294901760
    %1075 = vmatpush.msra.mxu0 %v1074
    %v1076 = vand.u32 %v94, 4294901760
    %v1077 = vsub.f32 %v94, %v1076
    %v1078 = vand.u32 %v1077, 4294901760
    %1079 = vmatmul.f32.gmra.mxu0 %v1078
    %v1080 = vpop.f32.mrf.mxu0
    %v1081 = vadd.f32 %v1047, %v1080
    %v1082 = vand.u32 %v96, 4294901760
    %v1083 = vsub.f32 %v96, %v1082
    %v1084 = vand.u32 %v1083, 4294901760
    %1085 = vmatmul.f32.gmra.mxu0 %v1084
    %v1086 = vpop.f32.mrf.mxu0
    %v1087 = vadd.f32 %v1052, %v1086
    %v1088 = vand.u32 %v98, 4294901760
    %v1089 = vsub.f32 %v98, %v1088
    %v1090 = vand.u32 %v1089, 4294901760
    %1091 = vmatmul.f32.gmra.mxu0 %v1090
    %v1092 = vpop.f32.mrf.mxu0
    %v1093 = vadd.f32 %v1057, %v1092
    %1094 = vdwg.mxu0
    %1095 = vmatpush.msra.mxu0 0.0
    %1096 = vmatpush.msra.mxu0 0.0
    %1097 = vmatpush.msra.mxu0 0.0
    %1098 = vmatpush.msra.mxu0 0.0
    %1099 = vmatpush.msra.mxu0 0.0
    %1100 = vmatpush.msra.mxu0 0.0
    %1101 = vmatpush.msra.mxu0 0.0
    %1102 = vmatpush.msra.mxu0 0.0
    %1103 = vmatpush.msra.mxu0 0.0
    %1104 = vmatpush.msra.mxu0 0.0
    %1105 = vmatpush.msra.mxu0 0.0
    %1106 = vmatpush.msra.mxu0 0.0
    %1107 = vmatpush.msra.mxu0 0.0
    %1108 = vmatpush.msra.mxu0 0.0
    %1109 = vmatpush.msra.mxu0 0.0
    %v1110 = vand.u32 %v109, 4294901760
    %v1111 = vsub.f32 %v109, %v1110
    %v1112 = vand.u32 %v1111, 4294901760
    %1113 = vmatpush.msra.mxu0 %v1112
    %v1114 = vand.u32 %v94, 4294901760
    %1115 = vmatmul.f32.gmra.mxu0 %v1114
    %v1116 = vpop.f32.mrf.mxu0
    %v1117 = vadd.f32 %v1081, %v1116
    %v1118 = vand.u32 %v96, 4294901760
    %1119 = vmatmul.f32.gmra.mxu0 %v1118
    %v1120 = vpop.f32.mrf.mxu0
    %v1121 = vadd.f32 %v1087, %v1120
    %v1122 = vand.u32 %v98, 4294901760
    %1123 = vmatmul.f32.gmra.mxu0 %v1122
    %v1124 = vpop.f32.mrf.mxu0
    %v1125 = vadd.f32 %v1093, %v1124
    %1126 = vdwg.mxu0
    %1127 = vmatpush.msra.mxu0 0.0
    %1128 = vmatpush.msra.mxu0 0.0
    %1129 = vmatpush.msra.mxu0 0.0
    %1130 = vmatpush.msra.mxu0 0.0
    %1131 = vmatpush.msra.mxu0 0.0
    %1132 = vmatpush.msra.mxu0 0.0
    %1133 = vmatpush.msra.mxu0 0.0
    %1134 = vmatpush.msra.mxu0 0.0
    %1135 = vmatpush.msra.mxu0 0.0
    %1136 = vmatpush.msra.mxu0 0.0
    %1137 = vmatpush.msra.mxu0 0.0
    %1138 = vmatpush.msra.mxu0 0.0
    %1139 = vmatpush.msra.mxu0 0.0
    %1140 = vmatpush.msra.mxu0 0.0
    %1141 = vmatpush.msra.mxu0 0.0
    %v1142 = vand.u32 %v109, 4294901760
    %1143 = vmatpush.msra.mxu0 %v1142
    %v1144 = vand.u32 %v94, 4294901760
    %1145 = vmatmul.f32.gmra.mxu0 %v1144
    %v1146 = vpop.f32.mrf.mxu0
    %v1147 = vadd.f32 %v1117, %v1146
    %v1148 = vand.u32 %v96, 4294901760
    %1149 = vmatmul.f32.gmra.mxu0 %v1148
    %v1150 = vpop.f32.mrf.mxu0
    %v1151 = vadd.f32 %v1121, %v1150
    %v1152 = vand.u32 %v98, 4294901760
    %1153 = vmatmul.f32.gmra.mxu0 %v1152
    %v1154 = vpop.f32.mrf.mxu0
    %v1155 = vadd.f32 %v1125, %v1154
    %1156 = vdwg.mxu0
    %1157 = vmatpush.msra.mxu0 0.0
    %1158 = vmatpush.msra.mxu0 0.0
    %1159 = vmatpush.msra.mxu0 0.0
    %1160 = vmatpush.msra.mxu0 0.0
    %1161 = vmatpush.msra.mxu0 0.0
    %1162 = vmatpush.msra.mxu0 0.0
    %1163 = vmatpush.msra.mxu0 0.0
    %1164 = vmatpush.msra.mxu0 0.0
    %1165 = vmatpush.msra.mxu0 0.0
    %1166 = vmatpush.msra.mxu0 0.0
    %1167 = vmatpush.msra.mxu0 0.0
    %1168 = vmatpush.msra.mxu0 0.0
    %1169 = vmatpush.msra.mxu0 0.0
    %1170 = vmatpush.msra.mxu0 0.0
    %1171 = vmatpush.msra.mxu0 0.0
    %v1172 = vand.u32 %v111, 4294901760
    %1173 = vmatpush.msra.mxu0 %v1172
    %v1174 = vand.u32 %v94, 4294901760
    %v1175 = vsub.f32 %v94, %v1174
    %v1176 = vand.u32 %v1175, 4294901760
    %v1177 = vsub.f32 %v1175, %v1176
    %v1178 = vand.u32 %v1177, 4294901760
    %1179 = vmatmul.f32.gmra.mxu0 %v1178
    %v1180 = vpop.f32.mrf.mxu0
    %v1181 = vadd.f32 %v62, %v1180
    %v1182 = vand.u32 %v96, 4294901760
    %v1183 = vsub.f32 %v96, %v1182
    %v1184 = vand.u32 %v1183, 4294901760
    %v1185 = vsub.f32 %v1183, %v1184
    %v1186 = vand.u32 %v1185, 4294901760
    %1187 = vmatmul.f32.gmra.mxu0 %v1186
    %v1188 = vpop.f32.mrf.mxu0
    %v1189 = vadd.f32 %v67, %v1188
    %v1190 = vand.u32 %v98, 4294901760
    %v1191 = vsub.f32 %v98, %v1190
    %v1192 = vand.u32 %v1191, 4294901760
    %v1193 = vsub.f32 %v1191, %v1192
    %v1194 = vand.u32 %v1193, 4294901760
    %1195 = vmatmul.f32.gmra.mxu0 %v1194
    %v1196 = vpop.f32.mrf.mxu0
    %v1197 = vadd.f32 %v72, %v1196
    %1198 = vdwg.mxu0
    %1199 = vmatpush.msra.mxu0 0.0
    %1200 = vmatpush.msra.mxu0 0.0
    %1201 = vmatpush.msra.mxu0 0.0
    %1202 = vmatpush.msra.mxu0 0.0
    %1203 = vmatpush.msra.mxu0 0.0
    %1204 = vmatpush.msra.mxu0 0.0
    %1205 = vmatpush.msra.mxu0 0.0
    %1206 = vmatpush.msra.mxu0 0.0
    %1207 = vmatpush.msra.mxu0 0.0
    %1208 = vmatpush.msra.mxu0 0.0
    %1209 = vmatpush.msra.mxu0 0.0
    %1210 = vmatpush.msra.mxu0 0.0
    %1211 = vmatpush.msra.mxu0 0.0
    %1212 = vmatpush.msra.mxu0 0.0
    %1213 = vmatpush.msra.mxu0 0.0
    %v1214 = vand.u32 %v111, 4294901760
    %v1215 = vsub.f32 %v111, %v1214
    %v1216 = vand.u32 %v1215, 4294901760
    %v1217 = vsub.f32 %v1215, %v1216
    %v1218 = vand.u32 %v1217, 4294901760
    %1219 = vmatpush.msra.mxu0 %v1218
    %v1220 = vand.u32 %v94, 4294901760
    %1221 = vmatmul.f32.gmra.mxu0 %v1220
    %v1222 = vpop.f32.mrf.mxu0
    %v1223 = vadd.f32 %v1181, %v1222
    %v1224 = vand.u32 %v96, 4294901760
    %1225 = vmatmul.f32.gmra.mxu0 %v1224
    %v1226 = vpop.f32.mrf.mxu0
    %v1227 = vadd.f32 %v1189, %v1226
    %v1228 = vand.u32 %v98, 4294901760
    %1229 = vmatmul.f32.gmra.mxu0 %v1228
    %v1230 = vpop.f32.mrf.mxu0
    %v1231 = vadd.f32 %v1197, %v1230
    %1232 = vdwg.mxu0
    %1233 = vmatpush.msra.mxu0 0.0
    %1234 = vmatpush.msra.mxu0 0.0
    %1235 = vmatpush.msra.mxu0 0.0
    %1236 = vmatpush.msra.mxu0 0.0
    %1237 = vmatpush.msra.mxu0 0.0
    %1238 = vmatpush.msra.mxu0 0.0
    %1239 = vmatpush.msra.mxu0 0.0
    %1240 = vmatpush.msra.mxu0 0.0
    %1241 = vmatpush.msra.mxu0 0.0
    %1242 = vmatpush.msra.mxu0 0.0
    %1243 = vmatpush.msra.mxu0 0.0
    %1244 = vmatpush.msra.mxu0 0.0
    %1245 = vmatpush.msra.mxu0 0.0
    %1246 = vmatpush.msra.mxu0 0.0
    %1247 = vmatpush.msra.mxu0 0.0
    %v1248 = vand.u32 %v111, 4294901760
    %v1249 = vsub.f32 %v111, %v1248
    %1250 = vmatpush.msra.mxu0 %v1249
    %v1251 = vand.u32 %v94, 4294901760
    %v1252 = vsub.f32 %v94, %v1251
    %1253 = vmatmul.f32.gmra.mxu0 %v1252
    %v1254 = vpop.f32.mrf.mxu0
    %v1255 = vadd.f32 %v1223, %v1254
    %v1256 = vand.u32 %v96, 4294901760
    %v1257 = vsub.f32 %v96, %v1256
    %1258 = vmatmul.f32.gmra.mxu0 %v1257
    %v1259 = vpop.f32.mrf.mxu0
    %v1260 = vadd.f32 %v1227, %v1259
    %v1261 = vand.u32 %v98, 4294901760
    %v1262 = vsub.f32 %v98, %v1261
    %1263 = vmatmul.f32.gmra.mxu0 %v1262
    %v1264 = vpop.f32.mrf.mxu0
    %v1265 = vadd.f32 %v1231, %v1264
    %1266 = vdwg.mxu0
    %1267 = vmatpush.msra.mxu0 0.0
    %1268 = vmatpush.msra.mxu0 0.0
    %1269 = vmatpush.msra.mxu0 0.0
    %1270 = vmatpush.msra.mxu0 0.0
    %1271 = vmatpush.msra.mxu0 0.0
    %1272 = vmatpush.msra.mxu0 0.0
    %1273 = vmatpush.msra.mxu0 0.0
    %1274 = vmatpush.msra.mxu0 0.0
    %1275 = vmatpush.msra.mxu0 0.0
    %1276 = vmatpush.msra.mxu0 0.0
    %1277 = vmatpush.msra.mxu0 0.0
    %1278 = vmatpush.msra.mxu0 0.0
    %1279 = vmatpush.msra.mxu0 0.0
    %1280 = vmatpush.msra.mxu0 0.0
    %1281 = vmatpush.msra.mxu0 0.0
    %v1282 = vand.u32 %v111, 4294901760
    %1283 = vmatpush.msra.mxu0 %v1282
    %v1284 = vand.u32 %v94, 4294901760
    %v1285 = vsub.f32 %v94, %v1284
    %v1286 = vand.u32 %v1285, 4294901760
    %1287 = vmatmul.f32.gmra.mxu0 %v1286
    %v1288 = vpop.f32.mrf.mxu0
    %v1289 = vadd.f32 %v1255, %v1288
    %v1290 = vand.u32 %v96, 4294901760
    %v1291 = vsub.f32 %v96, %v1290
    %v1292 = vand.u32 %v1291, 4294901760
    %1293 = vmatmul.f32.gmra.mxu0 %v1292
    %v1294 = vpop.f32.mrf.mxu0
    %v1295 = vadd.f32 %v1260, %v1294
    %v1296 = vand.u32 %v98, 4294901760
    %v1297 = vsub.f32 %v98, %v1296
    %v1298 = vand.u32 %v1297, 4294901760
    %1299 = vmatmul.f32.gmra.mxu0 %v1298
    %v1300 = vpop.f32.mrf.mxu0
    %v1301 = vadd.f32 %v1265, %v1300
    %1302 = vdwg.mxu0
    %1303 = vmatpush.msra.mxu0 0.0
    %1304 = vmatpush.msra.mxu0 0.0
    %1305 = vmatpush.msra.mxu0 0.0
    %1306 = vmatpush.msra.mxu0 0.0
    %1307 = vmatpush.msra.mxu0 0.0
    %1308 = vmatpush.msra.mxu0 0.0
    %1309 = vmatpush.msra.mxu0 0.0
    %1310 = vmatpush.msra.mxu0 0.0
    %1311 = vmatpush.msra.mxu0 0.0
    %1312 = vmatpush.msra.mxu0 0.0
    %1313 = vmatpush.msra.mxu0 0.0
    %1314 = vmatpush.msra.mxu0 0.0
    %1315 = vmatpush.msra.mxu0 0.0
    %1316 = vmatpush.msra.mxu0 0.0
    %1317 = vmatpush.msra.mxu0 0.0
    %v1318 = vand.u32 %v111, 4294901760
    %v1319 = vsub.f32 %v111, %v1318
    %v1320 = vand.u32 %v1319, 4294901760
    %1321 = vmatpush.msra.mxu0 %v1320
    %v1322 = vand.u32 %v94, 4294901760
    %1323 = vmatmul.f32.gmra.mxu0 %v1322
    %v1324 = vpop.f32.mrf.mxu0
    %v1325 = vadd.f32 %v1289, %v1324
    %v1326 = vand.u32 %v96, 4294901760
    %1327 = vmatmul.f32.gmra.mxu0 %v1326
    %v1328 = vpop.f32.mrf.mxu0
    %v1329 = vadd.f32 %v1295, %v1328
    %v1330 = vand.u32 %v98, 4294901760
    %1331 = vmatmul.f32.gmra.mxu0 %v1330
    %v1332 = vpop.f32.mrf.mxu0
    %v1333 = vadd.f32 %v1301, %v1332
    %1334 = vdwg.mxu0
    %1335 = vmatpush.msra.mxu0 0.0
    %1336 = vmatpush.msra.mxu0 0.0
    %1337 = vmatpush.msra.mxu0 0.0
    %1338 = vmatpush.msra.mxu0 0.0
    %1339 = vmatpush.msra.mxu0 0.0
    %1340 = vmatpush.msra.mxu0 0.0
    %1341 = vmatpush.msra.mxu0 0.0
    %1342 = vmatpush.msra.mxu0 0.0
    %1343 = vmatpush.msra.mxu0 0.0
    %1344 = vmatpush.msra.mxu0 0.0
    %1345 = vmatpush.msra.mxu0 0.0
    %1346 = vmatpush.msra.mxu0 0.0
    %1347 = vmatpush.msra.mxu0 0.0
    %1348 = vmatpush.msra.mxu0 0.0
    %1349 = vmatpush.msra.mxu0 0.0
    %v1350 = vand.u32 %v111, 4294901760
    %1351 = vmatpush.msra.mxu0 %v1350
    %v1352 = vand.u32 %v94, 4294901760
    %1353 = vmatmul.f32.gmra.mxu0 %v1352
    %v1354 = vpop.f32.mrf.mxu0
    %v1355 = vadd.f32 %v1325, %v1354
    %v1356 = vand.u32 %v96, 4294901760
    %1357 = vmatmul.f32.gmra.mxu0 %v1356
    %v1358 = vpop.f32.mrf.mxu0
    %v1359 = vadd.f32 %v1329, %v1358
    %v1360 = vand.u32 %v98, 4294901760
    %1361 = vmatmul.f32.gmra.mxu0 %v1360
    %v1362 = vpop.f32.mrf.mxu0
    %v1363 = vadd.f32 %v1333, %v1362
    %1364 = vdwg.mxu0
    %1365 = vmatpush.msra.mxu0 0.0
    %1366 = vmatpush.msra.mxu0 0.0
    %1367 = vmatpush.msra.mxu0 0.0
    %1368 = vmatpush.msra.mxu0 0.0
    %1369 = vmatpush.msra.mxu0 0.0
    %1370 = vmatpush.msra.mxu0 0.0
    %1371 = vmatpush.msra.mxu0 0.0
    %1372 = vmatpush.msra.mxu0 0.0
    %1373 = vmatpush.msra.mxu0 0.0
    %1374 = vmatpush.msra.mxu0 0.0
    %1375 = vmatpush.msra.mxu0 0.0
    %1376 = vmatpush.msra.mxu0 0.0
    %1377 = vmatpush.msra.mxu0 0.0
    %1378 = vmatpush.msra.mxu0 0.0
    %1379 = vmatpush.msra.mxu0 0.0
    %v1380 = vand.u32 %v113, 4294901760
    %1381 = vmatpush.msra.mxu0 %v1380
    %v1382 = vand.u32 %v94, 4294901760
    %v1383 = vsub.f32 %v94, %v1382
    %v1384 = vand.u32 %v1383, 4294901760
    %v1385 = vsub.f32 %v1383, %v1384
    %v1386 = vand.u32 %v1385, 4294901760
    %1387 = vmatmul.f32.gmra.mxu0 %v1386
    %v1388 = vpop.f32.mrf.mxu0
    %v1389 = vadd.f32 %v62, %v1388
    %v1390 = vand.u32 %v96, 4294901760
    %v1391 = vsub.f32 %v96, %v1390
    %v1392 = vand.u32 %v1391, 4294901760
    %v1393 = vsub.f32 %v1391, %v1392
    %v1394 = vand.u32 %v1393, 4294901760
    %1395 = vmatmul.f32.gmra.mxu0 %v1394
    %v1396 = vpop.f32.mrf.mxu0
    %v1397 = vadd.f32 %v67, %v1396
    %v1398 = vand.u32 %v98, 4294901760
    %v1399 = vsub.f32 %v98, %v1398
    %v1400 = vand.u32 %v1399, 4294901760
    %v1401 = vsub.f32 %v1399, %v1400
    %v1402 = vand.u32 %v1401, 4294901760
    %1403 = vmatmul.f32.gmra.mxu0 %v1402
    %v1404 = vpop.f32.mrf.mxu0
    %v1405 = vadd.f32 %v72, %v1404
    %1406 = vdwg.mxu0
    %1407 = vmatpush.msra.mxu0 0.0
    %1408 = vmatpush.msra.mxu0 0.0
    %1409 = vmatpush.msra.mxu0 0.0
    %1410 = vmatpush.msra.mxu0 0.0
    %1411 = vmatpush.msra.mxu0 0.0
    %1412 = vmatpush.msra.mxu0 0.0
    %1413 = vmatpush.msra.mxu0 0.0
    %1414 = vmatpush.msra.mxu0 0.0
    %1415 = vmatpush.msra.mxu0 0.0
    %1416 = vmatpush.msra.mxu0 0.0
    %1417 = vmatpush.msra.mxu0 0.0
    %1418 = vmatpush.msra.mxu0 0.0
    %1419 = vmatpush.msra.mxu0 0.0
    %1420 = vmatpush.msra.mxu0 0.0
    %1421 = vmatpush.msra.mxu0 0.0
    %v1422 = vand.u32 %v113, 4294901760
    %v1423 = vsub.f32 %v113, %v1422
    %v1424 = vand.u32 %v1423, 4294901760
    %v1425 = vsub.f32 %v1423, %v1424
    %v1426 = vand.u32 %v1425, 4294901760
    %1427 = vmatpush.msra.mxu0 %v1426
    %v1428 = vand.u32 %v94, 4294901760
    %1429 = vmatmul.f32.gmra.mxu0 %v1428
    %v1430 = vpop.f32.mrf.mxu0
    %v1431 = vadd.f32 %v1389, %v1430
    %v1432 = vand.u32 %v96, 4294901760
    %1433 = vmatmul.f32.gmra.mxu0 %v1432
    %v1434 = vpop.f32.mrf.mxu0
    %v1435 = vadd.f32 %v1397, %v1434
    %v1436 = vand.u32 %v98, 4294901760
    %1437 = vmatmul.f32.gmra.mxu0 %v1436
    %v1438 = vpop.f32.mrf.mxu0
    %v1439 = vadd.f32 %v1405, %v1438
    %1440 = vdwg.mxu0
    %1441 = vmatpush.msra.mxu0 0.0
    %1442 = vmatpush.msra.mxu0 0.0
    %1443 = vmatpush.msra.mxu0 0.0
    %1444 = vmatpush.msra.mxu0 0.0
    %1445 = vmatpush.msra.mxu0 0.0
    %1446 = vmatpush.msra.mxu0 0.0
    %1447 = vmatpush.msra.mxu0 0.0
    %1448 = vmatpush.msra.mxu0 0.0
    %1449 = vmatpush.msra.mxu0 0.0
    %1450 = vmatpush.msra.mxu0 0.0
    %1451 = vmatpush.msra.mxu0 0.0
    %1452 = vmatpush.msra.mxu0 0.0
    %1453 = vmatpush.msra.mxu0 0.0
    %1454 = vmatpush.msra.mxu0 0.0
    %1455 = vmatpush.msra.mxu0 0.0
    %v1456 = vand.u32 %v113, 4294901760
    %v1457 = vsub.f32 %v113, %v1456
    %1458 = vmatpush.msra.mxu0 %v1457
    %v1459 = vand.u32 %v94, 4294901760
    %v1460 = vsub.f32 %v94, %v1459
    %1461 = vmatmul.f32.gmra.mxu0 %v1460
    %v1462 = vpop.f32.mrf.mxu0
    %v1463 = vadd.f32 %v1431, %v1462
    %v1464 = vand.u32 %v96, 4294901760
    %v1465 = vsub.f32 %v96, %v1464
    %1466 = vmatmul.f32.gmra.mxu0 %v1465
    %v1467 = vpop.f32.mrf.mxu0
    %v1468 = vadd.f32 %v1435, %v1467
    %v1469 = vand.u32 %v98, 4294901760
    %v1470 = vsub.f32 %v98, %v1469
    %1471 = vmatmul.f32.gmra.mxu0 %v1470
    %v1472 = vpop.f32.mrf.mxu0
    %v1473 = vadd.f32 %v1439, %v1472
    %1474 = vdwg.mxu0
    %1475 = vmatpush.msra.mxu0 0.0
    %1476 = vmatpush.msra.mxu0 0.0
    %1477 = vmatpush.msra.mxu0 0.0
    %1478 = vmatpush.msra.mxu0 0.0
    %1479 = vmatpush.msra.mxu0 0.0
    %1480 = vmatpush.msra.mxu0 0.0
    %1481 = vmatpush.msra.mxu0 0.0
    %1482 = vmatpush.msra.mxu0 0.0
    %1483 = vmatpush.msra.mxu0 0.0
    %1484 = vmatpush.msra.mxu0 0.0
    %1485 = vmatpush.msra.mxu0 0.0
    %1486 = vmatpush.msra.mxu0 0.0
    %1487 = vmatpush.msra.mxu0 0.0
    %1488 = vmatpush.msra.mxu0 0.0
    %1489 = vmatpush.msra.mxu0 0.0
    %v1490 = vand.u32 %v113, 4294901760
    %1491 = vmatpush.msra.mxu0 %v1490
    %v1492 = vand.u32 %v94, 4294901760
    %v1493 = vsub.f32 %v94, %v1492
    %v1494 = vand.u32 %v1493, 4294901760
    %1495 = vmatmul.f32.gmra.mxu0 %v1494
    %v1496 = vpop.f32.mrf.mxu0
    %v1497 = vadd.f32 %v1463, %v1496
    %v1498 = vand.u32 %v96, 4294901760
    %v1499 = vsub.f32 %v96, %v1498
    %v1500 = vand.u32 %v1499, 4294901760
    %1501 = vmatmul.f32.gmra.mxu0 %v1500
    %v1502 = vpop.f32.mrf.mxu0
    %v1503 = vadd.f32 %v1468, %v1502
    %v1504 = vand.u32 %v98, 4294901760
    %v1505 = vsub.f32 %v98, %v1504
    %v1506 = vand.u32 %v1505, 4294901760
    %1507 = vmatmul.f32.gmra.mxu0 %v1506
    %v1508 = vpop.f32.mrf.mxu0
    %v1509 = vadd.f32 %v1473, %v1508
    %1510 = vdwg.mxu0
    %1511 = vmatpush.msra.mxu0 0.0
    %1512 = vmatpush.msra.mxu0 0.0
    %1513 = vmatpush.msra.mxu0 0.0
    %1514 = vmatpush.msra.mxu0 0.0
    %1515 = vmatpush.msra.mxu0 0.0
    %1516 = vmatpush.msra.mxu0 0.0
    %1517 = vmatpush.msra.mxu0 0.0
    %1518 = vmatpush.msra.mxu0 0.0
    %1519 = vmatpush.msra.mxu0 0.0
    %1520 = vmatpush.msra.mxu0 0.0
    %1521 = vmatpush.msra.mxu0 0.0
    %1522 = vmatpush.msra.mxu0 0.0
    %1523 = vmatpush.msra.mxu0 0.0
    %1524 = vmatpush.msra.mxu0 0.0
    %1525 = vmatpush.msra.mxu0 0.0
    %v1526 = vand.u32 %v113, 4294901760
    %v1527 = vsub.f32 %v113, %v1526
    %v1528 = vand.u32 %v1527, 4294901760
    %1529 = vmatpush.msra.mxu0 %v1528
    %v1530 = vand.u32 %v94, 4294901760
    %1531 = vmatmul.f32.gmra.mxu0 %v1530
    %v1532 = vpop.f32.mrf.mxu0
    %v1533 = vadd.f32 %v1497, %v1532
    %v1534 = vand.u32 %v96, 4294901760
    %1535 = vmatmul.f32.gmra.mxu0 %v1534
    %v1536 = vpop.f32.mrf.mxu0
    %v1537 = vadd.f32 %v1503, %v1536
    %v1538 = vand.u32 %v98, 4294901760
    %1539 = vmatmul.f32.gmra.mxu0 %v1538
    %v1540 = vpop.f32.mrf.mxu0
    %v1541 = vadd.f32 %v1509, %v1540
    %1542 = vdwg.mxu0
    %1543 = vmatpush.msra.mxu0 0.0
    %1544 = vmatpush.msra.mxu0 0.0
    %1545 = vmatpush.msra.mxu0 0.0
    %1546 = vmatpush.msra.mxu0 0.0
    %1547 = vmatpush.msra.mxu0 0.0
    %1548 = vmatpush.msra.mxu0 0.0
    %1549 = vmatpush.msra.mxu0 0.0
    %1550 = vmatpush.msra.mxu0 0.0
    %1551 = vmatpush.msra.mxu0 0.0
    %1552 = vmatpush.msra.mxu0 0.0
    %1553 = vmatpush.msra.mxu0 0.0
    %1554 = vmatpush.msra.mxu0 0.0
    %1555 = vmatpush.msra.mxu0 0.0
    %1556 = vmatpush.msra.mxu0 0.0
    %1557 = vmatpush.msra.mxu0 0.0
    %v1558 = vand.u32 %v113, 4294901760
    %1559 = vmatpush.msra.mxu0 %v1558
    %v1560 = vand.u32 %v94, 4294901760
    %1561 = vmatmul.f32.gmra.mxu0 %v1560
    %v1562 = vpop.f32.mrf.mxu0
    %v1563 = vadd.f32 %v1533, %v1562
    %v1564 = vand.u32 %v96, 4294901760
    %1565 = vmatmul.f32.gmra.mxu0 %v1564
    %v1566 = vpop.f32.mrf.mxu0
    %v1567 = vadd.f32 %v1537, %v1566
    %v1568 = vand.u32 %v98, 4294901760
    %1569 = vmatmul.f32.gmra.mxu0 %v1568
    %v1570 = vpop.f32.mrf.mxu0
    %v1571 = vadd.f32 %v1541, %v1570
    %1572 = vdwg.mxu0
    %1573 = vmatpush.msra.mxu0 0.0
    %1574 = vmatpush.msra.mxu0 0.0
    %1575 = vmatpush.msra.mxu0 0.0
    %1576 = vmatpush.msra.mxu0 0.0
    %1577 = vmatpush.msra.mxu0 0.0
    %1578 = vmatpush.msra.mxu0 0.0
    %1579 = vmatpush.msra.mxu0 0.0
    %1580 = vmatpush.msra.mxu0 0.0
    %1581 = vmatpush.msra.mxu0 0.0
    %1582 = vmatpush.msra.mxu0 0.0
    %1583 = vmatpush.msra.mxu0 0.0
    %1584 = vmatpush.msra.mxu0 0.0
    %1585 = vmatpush.msra.mxu0 0.0
    %1586 = vmatpush.msra.mxu0 0.0
    %1587 = vmatpush.msra.mxu0 0.0
    %v1588 = vand.u32 %v115, 4294901760
    %1589 = vmatpush.msra.mxu0 %v1588
    %v1590 = vand.u32 %v94, 4294901760
    %v1591 = vsub.f32 %v94, %v1590
    %v1592 = vand.u32 %v1591, 4294901760
    %v1593 = vsub.f32 %v1591, %v1592
    %v1594 = vand.u32 %v1593, 4294901760
    %1595 = vmatmul.f32.gmra.mxu0 %v1594
    %v1596 = vpop.f32.mrf.mxu0
    %v1597 = vadd.f32 %v62, %v1596
    %v1598 = vand.u32 %v96, 4294901760
    %v1599 = vsub.f32 %v96, %v1598
    %v1600 = vand.u32 %v1599, 4294901760
    %v1601 = vsub.f32 %v1599, %v1600
    %v1602 = vand.u32 %v1601, 4294901760
    %1603 = vmatmul.f32.gmra.mxu0 %v1602
    %v1604 = vpop.f32.mrf.mxu0
    %v1605 = vadd.f32 %v67, %v1604
    %v1606 = vand.u32 %v98, 4294901760
    %v1607 = vsub.f32 %v98, %v1606
    %v1608 = vand.u32 %v1607, 4294901760
    %v1609 = vsub.f32 %v1607, %v1608
    %v1610 = vand.u32 %v1609, 4294901760
    %1611 = vmatmul.f32.gmra.mxu0 %v1610
    %v1612 = vpop.f32.mrf.mxu0
    %v1613 = vadd.f32 %v72, %v1612
    %1614 = vdwg.mxu0
    %1615 = vmatpush.msra.mxu0 0.0
    %1616 = vmatpush.msra.mxu0 0.0
    %1617 = vmatpush.msra.mxu0 0.0
    %1618 = vmatpush.msra.mxu0 0.0
    %1619 = vmatpush.msra.mxu0 0.0
    %1620 = vmatpush.msra.mxu0 0.0
    %1621 = vmatpush.msra.mxu0 0.0
    %1622 = vmatpush.msra.mxu0 0.0
    %1623 = vmatpush.msra.mxu0 0.0
    %1624 = vmatpush.msra.mxu0 0.0
    %1625 = vmatpush.msra.mxu0 0.0
    %1626 = vmatpush.msra.mxu0 0.0
    %1627 = vmatpush.msra.mxu0 0.0
    %1628 = vmatpush.msra.mxu0 0.0
    %1629 = vmatpush.msra.mxu0 0.0
    %v1630 = vand.u32 %v115, 4294901760
    %v1631 = vsub.f32 %v115, %v1630
    %v1632 = vand.u32 %v1631, 4294901760
    %v1633 = vsub.f32 %v1631, %v1632
    %v1634 = vand.u32 %v1633, 4294901760
    %1635 = vmatpush.msra.mxu0 %v1634
    %v1636 = vand.u32 %v94, 4294901760
    %1637 = vmatmul.f32.gmra.mxu0 %v1636
    %v1638 = vpop.f32.mrf.mxu0
    %v1639 = vadd.f32 %v1597, %v1638
    %v1640 = vand.u32 %v96, 4294901760
    %1641 = vmatmul.f32.gmra.mxu0 %v1640
    %v1642 = vpop.f32.mrf.mxu0
    %v1643 = vadd.f32 %v1605, %v1642
    %v1644 = vand.u32 %v98, 4294901760
    %1645 = vmatmul.f32.gmra.mxu0 %v1644
    %v1646 = vpop.f32.mrf.mxu0
    %v1647 = vadd.f32 %v1613, %v1646
    %1648 = vdwg.mxu0
    %1649 = vmatpush.msra.mxu0 0.0
    %1650 = vmatpush.msra.mxu0 0.0
    %1651 = vmatpush.msra.mxu0 0.0
    %1652 = vmatpush.msra.mxu0 0.0
    %1653 = vmatpush.msra.mxu0 0.0
    %1654 = vmatpush.msra.mxu0 0.0
    %1655 = vmatpush.msra.mxu0 0.0
    %1656 = vmatpush.msra.mxu0 0.0
    %1657 = vmatpush.msra.mxu0 0.0
    %1658 = vmatpush.msra.mxu0 0.0
    %1659 = vmatpush.msra.mxu0 0.0
    %1660 = vmatpush.msra.mxu0 0.0
    %1661 = vmatpush.msra.mxu0 0.0
    %1662 = vmatpush.msra.mxu0 0.0
    %1663 = vmatpush.msra.mxu0 0.0
    %v1664 = vand.u32 %v115, 4294901760
    %v1665 = vsub.f32 %v115, %v1664
    %1666 = vmatpush.msra.mxu0 %v1665
    %v1667 = vand.u32 %v94, 4294901760
    %v1668 = vsub.f32 %v94, %v1667
    %1669 = vmatmul.f32.gmra.mxu0 %v1668
    %v1670 = vpop.f32.mrf.mxu0
    %v1671 = vadd.f32 %v1639, %v1670
    %v1672 = vand.u32 %v96, 4294901760
    %v1673 = vsub.f32 %v96, %v1672
    %1674 = vmatmul.f32.gmra.mxu0 %v1673
    %v1675 = vpop.f32.mrf.mxu0
    %v1676 = vadd.f32 %v1643, %v1675
    %v1677 = vand.u32 %v98, 4294901760
    %v1678 = vsub.f32 %v98, %v1677
    %1679 = vmatmul.f32.gmra.mxu0 %v1678
    %v1680 = vpop.f32.mrf.mxu0
    %v1681 = vadd.f32 %v1647, %v1680
    %1682 = vdwg.mxu0
    %1683 = vmatpush.msra.mxu0 0.0
    %1684 = vmatpush.msra.mxu0 0.0
    %1685 = vmatpush.msra.mxu0 0.0
    %1686 = vmatpush.msra.mxu0 0.0
    %1687 = vmatpush.msra.mxu0 0.0
    %1688 = vmatpush.msra.mxu0 0.0
    %1689 = vmatpush.msra.mxu0 0.0
    %1690 = vmatpush.msra.mxu0 0.0
    %1691 = vmatpush.msra.mxu0 0.0
    %1692 = vmatpush.msra.mxu0 0.0
    %1693 = vmatpush.msra.mxu0 0.0
    %1694 = vmatpush.msra.mxu0 0.0
    %1695 = vmatpush.msra.mxu0 0.0
    %1696 = vmatpush.msra.mxu0 0.0
    %1697 = vmatpush.msra.mxu0 0.0
    %v1698 = vand.u32 %v115, 4294901760
    %1699 = vmatpush.msra.mxu0 %v1698
    %v1700 = vand.u32 %v94, 4294901760
    %v1701 = vsub.f32 %v94, %v1700
    %v1702 = vand.u32 %v1701, 4294901760
    %1703 = vmatmul.f32.gmra.mxu0 %v1702
    %v1704 = vpop.f32.mrf.mxu0
    %v1705 = vadd.f32 %v1671, %v1704
    %v1706 = vand.u32 %v96, 4294901760
    %v1707 = vsub.f32 %v96, %v1706
    %v1708 = vand.u32 %v1707, 4294901760
    %1709 = vmatmul.f32.gmra.mxu0 %v1708
    %v1710 = vpop.f32.mrf.mxu0
    %v1711 = vadd.f32 %v1676, %v1710
    %v1712 = vand.u32 %v98, 4294901760
    %v1713 = vsub.f32 %v98, %v1712
    %v1714 = vand.u32 %v1713, 4294901760
    %1715 = vmatmul.f32.gmra.mxu0 %v1714
    %v1716 = vpop.f32.mrf.mxu0
    %v1717 = vadd.f32 %v1681, %v1716
    %1718 = vdwg.mxu0
    %1719 = vmatpush.msra.mxu0 0.0
    %1720 = vmatpush.msra.mxu0 0.0
    %1721 = vmatpush.msra.mxu0 0.0
    %1722 = vmatpush.msra.mxu0 0.0
    %1723 = vmatpush.msra.mxu0 0.0
    %1724 = vmatpush.msra.mxu0 0.0
    %1725 = vmatpush.msra.mxu0 0.0
    %1726 = vmatpush.msra.mxu0 0.0
    %1727 = vmatpush.msra.mxu0 0.0
    %1728 = vmatpush.msra.mxu0 0.0
    %1729 = vmatpush.msra.mxu0 0.0
    %1730 = vmatpush.msra.mxu0 0.0
    %1731 = vmatpush.msra.mxu0 0.0
    %1732 = vmatpush.msra.mxu0 0.0
    %1733 = vmatpush.msra.mxu0 0.0
    %v1734 = vand.u32 %v115, 4294901760
    %v1735 = vsub.f32 %v115, %v1734
    %v1736 = vand.u32 %v1735, 4294901760
    %1737 = vmatpush.msra.mxu0 %v1736
    %v1738 = vand.u32 %v94, 4294901760
    %1739 = vmatmul.f32.gmra.mxu0 %v1738
    %v1740 = vpop.f32.mrf.mxu0
    %v1741 = vadd.f32 %v1705, %v1740
    %v1742 = vand.u32 %v96, 4294901760
    %1743 = vmatmul.f32.gmra.mxu0 %v1742
    %v1744 = vpop.f32.mrf.mxu0
    %v1745 = vadd.f32 %v1711, %v1744
    %v1746 = vand.u32 %v98, 4294901760
    %1747 = vmatmul.f32.gmra.mxu0 %v1746
    %v1748 = vpop.f32.mrf.mxu0
    %v1749 = vadd.f32 %v1717, %v1748
    %1750 = vdwg.mxu0
    %1751 = vmatpush.msra.mxu0 0.0
    %1752 = vmatpush.msra.mxu0 0.0
    %1753 = vmatpush.msra.mxu0 0.0
    %1754 = vmatpush.msra.mxu0 0.0
    %1755 = vmatpush.msra.mxu0 0.0
    %1756 = vmatpush.msra.mxu0 0.0
    %1757 = vmatpush.msra.mxu0 0.0
    %1758 = vmatpush.msra.mxu0 0.0
    %1759 = vmatpush.msra.mxu0 0.0
    %1760 = vmatpush.msra.mxu0 0.0
    %1761 = vmatpush.msra.mxu0 0.0
    %1762 = vmatpush.msra.mxu0 0.0
    %1763 = vmatpush.msra.mxu0 0.0
    %1764 = vmatpush.msra.mxu0 0.0
    %1765 = vmatpush.msra.mxu0 0.0
    %v1766 = vand.u32 %v115, 4294901760
    %1767 = vmatpush.msra.mxu0 %v1766
    %v1768 = vand.u32 %v94, 4294901760
    %1769 = vmatmul.f32.gmra.mxu0 %v1768
    %v1770 = vpop.f32.mrf.mxu0
    %v1771 = vadd.f32 %v1741, %v1770
    %v1772 = vand.u32 %v96, 4294901760
    %1773 = vmatmul.f32.gmra.mxu0 %v1772
    %v1774 = vpop.f32.mrf.mxu0
    %v1775 = vadd.f32 %v1745, %v1774
    %v1776 = vand.u32 %v98, 4294901760
    %1777 = vmatmul.f32.gmra.mxu0 %v1776
    %v1778 = vpop.f32.mrf.mxu0
    %v1779 = vadd.f32 %v1749, %v1778
    %1780 = vdwg.mxu0
    %v1781 = vand.u32 2147483647, %v315
    %vm1782 = vcmp.le.f32.partialorder %v1781, 0.7853982
    %vm1783 = vcmp.lt.s32.totalorder %v315, 0
    %v1784 = vand.u32 %v315, 2139095040
    %v1785 = vshrl.u32 %v1784, 23
    %v1786 = vsub.s32 %v1785, 127
    %v1787 = vand.u32 2147483647, %v315
    %v1788 = vand.u32 %v1787, 8388607
    %v1789 = vor.u32 %v1788, 8388608
    %v1790 = vsub.s32 0, %v1789
    %v1791 = vadd.s32 %v1786, 1
    %vm1792 = vcmp.gt.s32.totalorder %v1791, 0
    %v1793 = vsel %vm1792, %v1791, 0
    %v1794 = vshrl.u32 %v1793, 5
    %v1795 = vand.u32 %v1793, 31
    %v1796 = vsub.s32 32, %v1795
    %v1797 = vshrl.u32 683565275, %v1796
    %v1798 = vshll.u32 683565275, %v1795
    %v1799 = vshrl.u32 2475754826, %v1796
    %v1800 = vor.u32 %v1798, %v1799
    %v1801 = vshll.u32 2475754826, %v1795
    %v1802 = vshrl.u32 2131351028, %v1796
    %v1803 = vor.u32 %v1801, %v1802
    %v1804 = vshll.u32 2131351028, %v1795
    %v1805 = vshrl.u32 2102212464, %v1796
    %v1806 = vor.u32 %v1804, %v1805
    %v1807 = vshll.u32 2102212464, %v1795
    %v1808 = vshrl.u32 920167782, %v1796
    %v1809 = vor.u32 %v1807, %v1808
    %v1810 = vshll.u32 920167782, %v1795
    %v1811 = vshrl.u32 1326507024, %v1796
    %v1812 = vor.u32 %v1810, %v1811
    %vm1813 = vcmp.lt.s32.totalorder %v1794, 1
    %vm1814 = vcmp.lt.s32.totalorder %v1794, 2
    %vm1815 = vcmp.lt.s32.totalorder %v1794, 3
    %vm1816 = vcmp.lt.s32.totalorder %v1794, 4
    %v1817 = vsel %vm1813, %v1797, %v1800
    %v1818 = vsel %vm1816, %v1806, 2102212464
    %v1819 = vsel %vm1815, %v1803, %v1818
    %v1820 = vsel %vm1814, %v1817, %v1819
    %v1821 = vsel %vm1813, %v1800, %v1803
    %v1822 = vsel %vm1816, %v1809, 920167782
    %v1823 = vsel %vm1815, %v1806, %v1822
    %v1824 = vsel %vm1814, %v1821, %v1823
    %v1825 = vsel %vm1813, %v1803, %v1806
    %v1826 = vsel %vm1816, %v1812, 1326507024
    %v1827 = vsel %vm1815, %v1809, %v1826
    %v1828 = vsel %vm1814, %v1825, %v1827
    %v1829 = vshll.u32 %v1789, 8
    %v1830 = vand.u32 %v1829, 65535
    %v1831 = vshrl.u32 %v1829, 16
    %v1832 = vand.u32 %v1828, 65535
    %v1833 = vshrl.u32 %v1828, 16
    %v1834 = vmul.u32 %v1830, %v1832
    %v1835 = vmul.u32 %v1830, %v1833
    %v1836 = vmul.u32 %v1831, %v1832
    %v1837 = vmul.u32 %v1831, %v1833
    %v1838 = vshll.u32 %v1835, 16
    %v1839 = vshrl.u32 %v1835, 16
    %v1840 = vshll.u32 %v1836, 16
    %v1841 = vshrl.u32 %v1836, 16
    %vm1842 = vc.u32 %v1834, %v1838
    %v1843 = vsel %vm1842, 1, 0
    %v1844 = vadd.s32 %v1834, %v1838
    %v1845 = vadd.s32 %v1837, %v1843
    %vm1846 = vc.u32 %v1844, %v1840
    %v1847 = vsel %vm1846, 1, 0
    %v1848 = vadd.s32 %v1844, %v1840
    %v1849 = vadd.s32 %v1845, %v1847
    %v1850 = vadd.s32 %v1849, %v1839
    %v1851 = vadd.s32 %v1850, %v1841
    %v1852 = vand.u32 %v1829, 65535
    %v1853 = vshrl.u32 %v1829, 16
    %v1854 = vand.u32 %v1824, 65535
    %v1855 = vshrl.u32 %v1824, 16
    %v1856 = vmul.u32 %v1852, %v1854
    %v1857 = vmul.u32 %v1852, %v1855
    %v1858 = vmul.u32 %v1853, %v1854
    %v1859 = vmul.u32 %v1853, %v1855
    %v1860 = vshll.u32 %v1857, 16
    %v1861 = vshrl.u32 %v1857, 16
    %v1862 = vshll.u32 %v1858, 16
    %v1863 = vshrl.u32 %v1858, 16
    %vm1864 = vc.u32 %v1856, %v1860
    %v1865 = vsel %vm1864, 1, 0
    %v1866 = vadd.s32 %v1856, %v1860
    %v1867 = vadd.s32 %v1859, %v1865
    %vm1868 = vc.u32 %v1866, %v1862
    %v1869 = vsel %vm1868, 1, 0
    %v1870 = vadd.s32 %v1866, %v1862
    %v1871 = vadd.s32 %v1867, %v1869
    %v1872 = vadd.s32 %v1871, %v1861
    %v1873 = vadd.s32 %v1872, %v1863
    %v1874 = vmul.u32 %v1829, %v1820
    %v1875 = vadd.s32 %v1851, %v1870
    %vm1876 = vc.u32 %v1851, %v1870
    %v1877 = vadd.s32 %v1873, 1
    %v1878 = vsel %vm1876, %v1877, %v1873
    %v1879 = vadd.s32 %v1874, %v1878
    %v1880 = vadd.s32 %v1879, 536870912
    %v1881 = vshrl.u32 %v1880, 30
    %v1882 = vshll.u32 %v1881, 30
    %v1883 = vsub.s32 %v1879, %v1882
    %vm1884 = vcmp.lt.s32.totalorder %v1883, 0
    %v1885 = vsub.s32 0, %v1883
    %v1886 = vsel %vm1884, %v1885, %v1883
    %v1887 = vclz %v1886
    %v1888 = vsub.s32 %v1887, 2
    %vm1889 = vcmp.gt.s32.totalorder 0, %v1888
    %v1890 = vsel %vm1889, 0, %v1888
    %v1891 = vsub.s32 32, %v1890
    %v1892 = vshll.u32 %v1883, %v1890
    %v1893 = vshrl.u32 %v1875, %v1891
    %v1894 = vor.u32 %v1892, %v1893
    %v1895 = vsub.s32 4294967266, %v1890
    %v1896 = vadd.s32 %v1895, 127
    %v1897 = vshll.u32 %v1896, 23
    %v1898 = vor.u32 4788187, %v1897
    %v1899 = vand.u32 2147483647, %v1898
    %v1901 = vcvt.s32.f32 %v1894
    %v1902 = vmul.f32 %v1901, %v1899
    %v1903 = vxor.u32 %v1902, 2147483648
    %v1904 = vsel %vm1783, %v1903, %v1902
    %v1905 = vsub.s32 4, %v1881
    %v1906 = vsel %vm1783, %v1905, %v1881
    %v1907 = vsel %vm1782, %v315, %v1904
    %v1908 = vsel %vm1782, 0, %v1906
    %v1909 = vmul.f32 %v1907, %v1907
    %v1910 = vmul.f32 %v1909, -0.001358992
    %v1911 = vadd.f32 %v1910, 0.041655596
    %v1912 = vmul.f32 %v1909, %v1911
    %v1913 = vadd.f32 %v1912, -0.4999988
    %v1914 = vmul.f32 %v1909, %v1913
    %v1915 = vadd.f32 1.0, %v1914
    %v1916 = vmul.f32 %v1907, %v1907
    %v1917 = vmul.f32 %v1916, -0.00019511016
    %v1918 = vadd.f32 %v1917, 0.008332121
    %v1919 = vmul.f32 %v1916, %v1918
    %v1920 = vadd.f32 %v1919, -0.16666654
    %v1921 = vmul.f32 %v1916, %v1920
    %v1922 = vadd.f32 %v1921, 1.0
    %v1923 = vmul.f32 %v1922, %v1907
    %vm1924 = vweird.f32 %v315
    %v1925 = vadd.s32 %v1908, 3
    %v1926 = vand.u32 %v1925, 3
    %vm1927 = vcmp.lt.s32.totalorder %v1926, 2
    %vm1928 = vcmp.eq.s32.totalorder %v1926, 0
    %v1929 = vxor.u32 %v1923, 2147483648
    %v1930 = vsel %vm1928, %v1915, %v1929
    %vm1931 = vcmp.eq.s32.totalorder %v1926, 2
    %v1932 = vxor.u32 %v1915, 2147483648
    %v1933 = vsel %vm1931, %v1932, %v1923
    %v1934 = vsel %vm1927, %v1930, %v1933
    %v1935 = vsel %vm1924, nan, %v1934
    %v1936 = vand.u32 2147483647, %v523
    %vm1937 = vcmp.le.f32.partialorder %v1936, 0.7853982
    %vm1938 = vcmp.lt.s32.totalorder %v523, 0
    %v1939 = vand.u32 %v523, 2139095040
    %v1940 = vshrl.u32 %v1939, 23
    %v1941 = vsub.s32 %v1940, 127
    %v1942 = vand.u32 2147483647, %v523
    %v1943 = vand.u32 %v1942, 8388607
    %v1944 = vor.u32 %v1943, 8388608
    %v1945 = vsub.s32 0, %v1944
    %v1946 = vadd.s32 %v1941, 1
    %vm1947 = vcmp.gt.s32.totalorder %v1946, 0
    %v1948 = vsel %vm1947, %v1946, 0
    %v1949 = vshrl.u32 %v1948, 5
    %v1950 = vand.u32 %v1948, 31
    %v1951 = vsub.s32 32, %v1950
    %v1952 = vshrl.u32 683565275, %v1951
    %v1953 = vshll.u32 683565275, %v1950
    %v1954 = vshrl.u32 2475754826, %v1951
    %v1955 = vor.u32 %v1953, %v1954
    %v1956 = vshll.u32 2475754826, %v1950
    %v1957 = vshrl.u32 2131351028, %v1951
    %v1958 = vor.u32 %v1956, %v1957
    %v1959 = vshll.u32 2131351028, %v1950
    %v1960 = vshrl.u32 2102212464, %v1951
    %v1961 = vor.u32 %v1959, %v1960
    %v1962 = vshll.u32 2102212464, %v1950
    %v1963 = vshrl.u32 920167782, %v1951
    %v1964 = vor.u32 %v1962, %v1963
    %v1965 = vshll.u32 920167782, %v1950
    %v1966 = vshrl.u32 1326507024, %v1951
    %v1967 = vor.u32 %v1965, %v1966
    %vm1968 = vcmp.lt.s32.totalorder %v1949, 1
    %vm1969 = vcmp.lt.s32.totalorder %v1949, 2
    %vm1970 = vcmp.lt.s32.totalorder %v1949, 3
    %vm1971 = vcmp.lt.s32.totalorder %v1949, 4
    %v1972 = vsel %vm1968, %v1952, %v1955
    %v1973 = vsel %vm1971, %v1961, 2102212464
    %v1974 = vsel %vm1970, %v1958, %v1973
    %v1975 = vsel %vm1969, %v1972, %v1974
    %v1976 = vsel %vm1968, %v1955, %v1958
    %v1977 = vsel %vm1971, %v1964, 920167782
    %v1978 = vsel %vm1970, %v1961, %v1977
    %v1979 = vsel %vm1969, %v1976, %v1978
    %v1980 = vsel %vm1968, %v1958, %v1961
    %v1981 = vsel %vm1971, %v1967, 1326507024
    %v1982 = vsel %vm1970, %v1964, %v1981
    %v1983 = vsel %vm1969, %v1980, %v1982
    %v1984 = vshll.u32 %v1944, 8
    %v1985 = vand.u32 %v1984, 65535
    %v1986 = vshrl.u32 %v1984, 16
    %v1987 = vand.u32 %v1983, 65535
    %v1988 = vshrl.u32 %v1983, 16
    %v1989 = vmul.u32 %v1985, %v1987
    %v1990 = vmul.u32 %v1985, %v1988
    %v1991 = vmul.u32 %v1986, %v1987
    %v1992 = vmul.u32 %v1986, %v1988
    %v1993 = vshll.u32 %v1990, 16
    %v1994 = vshrl.u32 %v1990, 16
    %v1995 = vshll.u32 %v1991, 16
    %v1996 = vshrl.u32 %v1991, 16
    %vm1997 = vc.u32 %v1989, %v1993
    %v1998 = vsel %vm1997, 1, 0
    %v1999 = vadd.s32 %v1989, %v1993
    %v2000 = vadd.s32 %v1992, %v1998
    %vm2001 = vc.u32 %v1999, %v1995
    %v2002 = vsel %vm2001, 1, 0
    %v2003 = vadd.s32 %v1999, %v1995
    %v2004 = vadd.s32 %v2000, %v2002
    %v2005 = vadd.s32 %v2004, %v1994
    %v2006 = vadd.s32 %v2005, %v1996
    %v2007 = vand.u32 %v1984, 65535
    %v2008 = vshrl.u32 %v1984, 16
    %v2009 = vand.u32 %v1979, 65535
    %v2010 = vshrl.u32 %v1979, 16
    %v2011 = vmul.u32 %v2007, %v2009
    %v2012 = vmul.u32 %v2007, %v2010
    %v2013 = vmul.u32 %v2008, %v2009
    %v2014 = vmul.u32 %v2008, %v2010
    %v2015 = vshll.u32 %v2012, 16
    %v2016 = vshrl.u32 %v2012, 16
    %v2017 = vshll.u32 %v2013, 16
    %v2018 = vshrl.u32 %v2013, 16
    %vm2019 = vc.u32 %v2011, %v2015
    %v2020 = vsel %vm2019, 1, 0
    %v2021 = vadd.s32 %v2011, %v2015
    %v2022 = vadd.s32 %v2014, %v2020
    %vm2023 = vc.u32 %v2021, %v2017
    %v2024 = vsel %vm2023, 1, 0
    %v2025 = vadd.s32 %v2021, %v2017
    %v2026 = vadd.s32 %v2022, %v2024
    %v2027 = vadd.s32 %v2026, %v2016
    %v2028 = vadd.s32 %v2027, %v2018
    %v2029 = vmul.u32 %v1984, %v1975
    %v2030 = vadd.s32 %v2006, %v2025
    %vm2031 = vc.u32 %v2006, %v2025
    %v2032 = vadd.s32 %v2028, 1
    %v2033 = vsel %vm2031, %v2032, %v2028
    %v2034 = vadd.s32 %v2029, %v2033
    %v2035 = vadd.s32 %v2034, 536870912
    %v2036 = vshrl.u32 %v2035, 30
    %v2037 = vshll.u32 %v2036, 30
    %v2038 = vsub.s32 %v2034, %v2037
    %vm2039 = vcmp.lt.s32.totalorder %v2038, 0
    %v2040 = vsub.s32 0, %v2038
    %v2041 = vsel %vm2039, %v2040, %v2038
    %v2042 = vclz %v2041
    %v2043 = vsub.s32 %v2042, 2
    %vm2044 = vcmp.gt.s32.totalorder 0, %v2043
    %v2045 = vsel %vm2044, 0, %v2043
    %v2046 = vsub.s32 32, %v2045
    %v2047 = vshll.u32 %v2038, %v2045
    %v2048 = vshrl.u32 %v2030, %v2046
    %v2049 = vor.u32 %v2047, %v2048
    %v2050 = vsub.s32 4294967266, %v2045
    %v2051 = vadd.s32 %v2050, 127
    %v2052 = vshll.u32 %v2051, 23
    %v2053 = vor.u32 4788187, %v2052
    %v2054 = vand.u32 2147483647, %v2053
    %v2056 = vcvt.s32.f32 %v2049
    %v2057 = vmul.f32 %v2056, %v2054
    %v2058 = vxor.u32 %v2057, 2147483648
    %v2059 = vsel %vm1938, %v2058, %v2057
    %v2060 = vsub.s32 4, %v2036
    %v2061 = vsel %vm1938, %v2060, %v2036
    %v2062 = vsel %vm1937, %v523, %v2059
    %v2063 = vsel %vm1937, 0, %v2061
    %v2064 = vmul.f32 %v2062, %v2062
    %v2065 = vmul.f32 %v2064, -0.001358992
    %v2066 = vadd.f32 %v2065, 0.041655596
    %v2067 = vmul.f32 %v2064, %v2066
    %v2068 = vadd.f32 %v2067, -0.4999988
    %v2069 = vmul.f32 %v2064, %v2068
    %v2070 = vadd.f32 1.0, %v2069
    %v2071 = vmul.f32 %v2062, %v2062
    %v2072 = vmul.f32 %v2071, -0.00019511016
    %v2073 = vadd.f32 %v2072, 0.008332121
    %v2074 = vmul.f32 %v2071, %v2073
    %v2075 = vadd.f32 %v2074, -0.16666654
    %v2076 = vmul.f32 %v2071, %v2075
    %v2077 = vadd.f32 %v2076, 1.0
    %v2078 = vmul.f32 %v2077, %v2062
    %vm2079 = vweird.f32 %v523
    %v2080 = vadd.s32 %v2063, 3
    %v2081 = vand.u32 %v2080, 3
    %vm2082 = vcmp.lt.s32.totalorder %v2081, 2
    %vm2083 = vcmp.eq.s32.totalorder %v2081, 0
    %v2084 = vxor.u32 %v2078, 2147483648
    %v2085 = vsel %vm2083, %v2070, %v2084
    %vm2086 = vcmp.eq.s32.totalorder %v2081, 2
    %v2087 = vxor.u32 %v2070, 2147483648
    %v2088 = vsel %vm2086, %v2087, %v2078
    %v2089 = vsel %vm2082, %v2085, %v2088
    %v2090 = vsel %vm2079, nan, %v2089
    %v2091 = vand.u32 2147483647, %v731
    %vm2092 = vcmp.le.f32.partialorder %v2091, 0.7853982
    %vm2093 = vcmp.lt.s32.totalorder %v731, 0
    %v2094 = vand.u32 %v731, 2139095040
    %v2095 = vshrl.u32 %v2094, 23
    %v2096 = vsub.s32 %v2095, 127
    %v2097 = vand.u32 2147483647, %v731
    %v2098 = vand.u32 %v2097, 8388607
    %v2099 = vor.u32 %v2098, 8388608
    %v2100 = vsub.s32 0, %v2099
    %v2101 = vadd.s32 %v2096, 1
    %vm2102 = vcmp.gt.s32.totalorder %v2101, 0
    %v2103 = vsel %vm2102, %v2101, 0
    %v2104 = vshrl.u32 %v2103, 5
    %v2105 = vand.u32 %v2103, 31
    %v2106 = vsub.s32 32, %v2105
    %v2107 = vshrl.u32 683565275, %v2106
    %v2108 = vshll.u32 683565275, %v2105
    %v2109 = vshrl.u32 2475754826, %v2106
    %v2110 = vor.u32 %v2108, %v2109
    %v2111 = vshll.u32 2475754826, %v2105
    %v2112 = vshrl.u32 2131351028, %v2106
    %v2113 = vor.u32 %v2111, %v2112
    %v2114 = vshll.u32 2131351028, %v2105
    %v2115 = vshrl.u32 2102212464, %v2106
    %v2116 = vor.u32 %v2114, %v2115
    %v2117 = vshll.u32 2102212464, %v2105
    %v2118 = vshrl.u32 920167782, %v2106
    %v2119 = vor.u32 %v2117, %v2118
    %v2120 = vshll.u32 920167782, %v2105
    %v2121 = vshrl.u32 1326507024, %v2106
    %v2122 = vor.u32 %v2120, %v2121
    %vm2123 = vcmp.lt.s32.totalorder %v2104, 1
    %vm2124 = vcmp.lt.s32.totalorder %v2104, 2
    %vm2125 = vcmp.lt.s32.totalorder %v2104, 3
    %vm2126 = vcmp.lt.s32.totalorder %v2104, 4
    %v2127 = vsel %vm2123, %v2107, %v2110
    %v2128 = vsel %vm2126, %v2116, 2102212464
    %v2129 = vsel %vm2125, %v2113, %v2128
    %v2130 = vsel %vm2124, %v2127, %v2129
    %v2131 = vsel %vm2123, %v2110, %v2113
    %v2132 = vsel %vm2126, %v2119, 920167782
    %v2133 = vsel %vm2125, %v2116, %v2132
    %v2134 = vsel %vm2124, %v2131, %v2133
    %v2135 = vsel %vm2123, %v2113, %v2116
    %v2136 = vsel %vm2126, %v2122, 1326507024
    %v2137 = vsel %vm2125, %v2119, %v2136
    %v2138 = vsel %vm2124, %v2135, %v2137
    %v2139 = vshll.u32 %v2099, 8
    %v2140 = vand.u32 %v2139, 65535
    %v2141 = vshrl.u32 %v2139, 16
    %v2142 = vand.u32 %v2138, 65535
    %v2143 = vshrl.u32 %v2138, 16
    %v2144 = vmul.u32 %v2140, %v2142
    %v2145 = vmul.u32 %v2140, %v2143
    %v2146 = vmul.u32 %v2141, %v2142
    %v2147 = vmul.u32 %v2141, %v2143
    %v2148 = vshll.u32 %v2145, 16
    %v2149 = vshrl.u32 %v2145, 16
    %v2150 = vshll.u32 %v2146, 16
    %v2151 = vshrl.u32 %v2146, 16
    %vm2152 = vc.u32 %v2144, %v2148
    %v2153 = vsel %vm2152, 1, 0
    %v2154 = vadd.s32 %v2144, %v2148
    %v2155 = vadd.s32 %v2147, %v2153
    %vm2156 = vc.u32 %v2154, %v2150
    %v2157 = vsel %vm2156, 1, 0
    %v2158 = vadd.s32 %v2154, %v2150
    %v2159 = vadd.s32 %v2155, %v2157
    %v2160 = vadd.s32 %v2159, %v2149
    %v2161 = vadd.s32 %v2160, %v2151
    %v2162 = vand.u32 %v2139, 65535
    %v2163 = vshrl.u32 %v2139, 16
    %v2164 = vand.u32 %v2134, 65535
    %v2165 = vshrl.u32 %v2134, 16
    %v2166 = vmul.u32 %v2162, %v2164
    %v2167 = vmul.u32 %v2162, %v2165
    %v2168 = vmul.u32 %v2163, %v2164
    %v2169 = vmul.u32 %v2163, %v2165
    %v2170 = vshll.u32 %v2167, 16
    %v2171 = vshrl.u32 %v2167, 16
    %v2172 = vshll.u32 %v2168, 16
    %v2173 = vshrl.u32 %v2168, 16
    %vm2174 = vc.u32 %v2166, %v2170
    %v2175 = vsel %vm2174, 1, 0
    %v2176 = vadd.s32 %v2166, %v2170
    %v2177 = vadd.s32 %v2169, %v2175
    %vm2178 = vc.u32 %v2176, %v2172
    %v2179 = vsel %vm2178, 1, 0
    %v2180 = vadd.s32 %v2176, %v2172
    %v2181 = vadd.s32 %v2177, %v2179
    %v2182 = vadd.s32 %v2181, %v2171
    %v2183 = vadd.s32 %v2182, %v2173
    %v2184 = vmul.u32 %v2139, %v2130
    %v2185 = vadd.s32 %v2161, %v2180
    %vm2186 = vc.u32 %v2161, %v2180
    %v2187 = vadd.s32 %v2183, 1
    %v2188 = vsel %vm2186, %v2187, %v2183
    %v2189 = vadd.s32 %v2184, %v2188
    %v2190 = vadd.s32 %v2189, 536870912
    %v2191 = vshrl.u32 %v2190, 30
    %v2192 = vshll.u32 %v2191, 30
    %v2193 = vsub.s32 %v2189, %v2192
    %vm2194 = vcmp.lt.s32.totalorder %v2193, 0
    %v2195 = vsub.s32 0, %v2193
    %v2196 = vsel %vm2194, %v2195, %v2193
    %v2197 = vclz %v2196
    %v2198 = vsub.s32 %v2197, 2
    %vm2199 = vcmp.gt.s32.totalorder 0, %v2198
    %v2200 = vsel %vm2199, 0, %v2198
    %v2201 = vsub.s32 32, %v2200
    %v2202 = vshll.u32 %v2193, %v2200
    %v2203 = vshrl.u32 %v2185, %v2201
    %v2204 = vor.u32 %v2202, %v2203
    %v2205 = vsub.s32 4294967266, %v2200
    %v2206 = vadd.s32 %v2205, 127
    %v2207 = vshll.u32 %v2206, 23
    %v2208 = vor.u32 4788187, %v2207
    %v2209 = vand.u32 2147483647, %v2208
    %v2211 = vcvt.s32.f32 %v2204
    %v2212 = vmul.f32 %v2211, %v2209
    %v2213 = vxor.u32 %v2212, 2147483648
    %v2214 = vsel %vm2093, %v2213, %v2212
    %v2215 = vsub.s32 4, %v2191
    %v2216 = vsel %vm2093, %v2215, %v2191
    %v2217 = vsel %vm2092, %v731, %v2214
    %v2218 = vsel %vm2092, 0, %v2216
    %v2219 = vmul.f32 %v2217, %v2217
    %v2220 = vmul.f32 %v2219, -0.001358992
    %v2221 = vadd.f32 %v2220, 0.041655596
    %v2222 = vmul.f32 %v2219, %v2221
    %v2223 = vadd.f32 %v2222, -0.4999988
    %v2224 = vmul.f32 %v2219, %v2223
    %v2225 = vadd.f32 1.0, %v2224
    %v2226 = vmul.f32 %v2217, %v2217
    %v2227 = vmul.f32 %v2226, -0.00019511016
    %v2228 = vadd.f32 %v2227, 0.008332121
    %v2229 = vmul.f32 %v2226, %v2228
    %v2230 = vadd.f32 %v2229, -0.16666654
    %v2231 = vmul.f32 %v2226, %v2230
    %v2232 = vadd.f32 %v2231, 1.0
    %v2233 = vmul.f32 %v2232, %v2217
    %vm2234 = vweird.f32 %v731
    %v2235 = vadd.s32 %v2218, 3
    %v2236 = vand.u32 %v2235, 3
    %vm2237 = vcmp.lt.s32.totalorder %v2236, 2
    %vm2238 = vcmp.eq.s32.totalorder %v2236, 0
    %v2239 = vxor.u32 %v2233, 2147483648
    %v2240 = vsel %vm2238, %v2225, %v2239
    %vm2241 = vcmp.eq.s32.totalorder %v2236, 2
    %v2242 = vxor.u32 %v2225, 2147483648
    %v2243 = vsel %vm2241, %v2242, %v2233
    %v2244 = vsel %vm2237, %v2240, %v2243
    %v2245 = vsel %vm2234, nan, %v2244
    %v2246 = vand.u32 2147483647, %v939
    %vm2247 = vcmp.le.f32.partialorder %v2246, 0.7853982
    %vm2248 = vcmp.lt.s32.totalorder %v939, 0
    %v2249 = vand.u32 %v939, 2139095040
    %v2250 = vshrl.u32 %v2249, 23
    %v2251 = vsub.s32 %v2250, 127
    %v2252 = vand.u32 2147483647, %v939
    %v2253 = vand.u32 %v2252, 8388607
    %v2254 = vor.u32 %v2253, 8388608
    %v2255 = vsub.s32 0, %v2254
    %v2256 = vadd.s32 %v2251, 1
    %vm2257 = vcmp.gt.s32.totalorder %v2256, 0
    %v2258 = vsel %vm2257, %v2256, 0
    %v2259 = vshrl.u32 %v2258, 5
    %v2260 = vand.u32 %v2258, 31
    %v2261 = vsub.s32 32, %v2260
    %v2262 = vshrl.u32 683565275, %v2261
    %v2263 = vshll.u32 683565275, %v2260
    %v2264 = vshrl.u32 2475754826, %v2261
    %v2265 = vor.u32 %v2263, %v2264
    %v2266 = vshll.u32 2475754826, %v2260
    %v2267 = vshrl.u32 2131351028, %v2261
    %v2268 = vor.u32 %v2266, %v2267
    %v2269 = vshll.u32 2131351028, %v2260
    %v2270 = vshrl.u32 2102212464, %v2261
    %v2271 = vor.u32 %v2269, %v2270
    %v2272 = vshll.u32 2102212464, %v2260
    %v2273 = vshrl.u32 920167782, %v2261
    %v2274 = vor.u32 %v2272, %v2273
    %v2275 = vshll.u32 920167782, %v2260
    %v2276 = vshrl.u32 1326507024, %v2261
    %v2277 = vor.u32 %v2275, %v2276
    %vm2278 = vcmp.lt.s32.totalorder %v2259, 1
    %vm2279 = vcmp.lt.s32.totalorder %v2259, 2
    %vm2280 = vcmp.lt.s32.totalorder %v2259, 3
    %vm2281 = vcmp.lt.s32.totalorder %v2259, 4
    %v2282 = vsel %vm2278, %v2262, %v2265
    %v2283 = vsel %vm2281, %v2271, 2102212464
    %v2284 = vsel %vm2280, %v2268, %v2283
    %v2285 = vsel %vm2279, %v2282, %v2284
    %v2286 = vsel %vm2278, %v2265, %v2268
    %v2287 = vsel %vm2281, %v2274, 920167782
    %v2288 = vsel %vm2280, %v2271, %v2287
    %v2289 = vsel %vm2279, %v2286, %v2288
    %v2290 = vsel %vm2278, %v2268, %v2271
    %v2291 = vsel %vm2281, %v2277, 1326507024
    %v2292 = vsel %vm2280, %v2274, %v2291
    %v2293 = vsel %vm2279, %v2290, %v2292
    %v2294 = vshll.u32 %v2254, 8
    %v2295 = vand.u32 %v2294, 65535
    %v2296 = vshrl.u32 %v2294, 16
    %v2297 = vand.u32 %v2293, 65535
    %v2298 = vshrl.u32 %v2293, 16
    %v2299 = vmul.u32 %v2295, %v2297
    %v2300 = vmul.u32 %v2295, %v2298
    %v2301 = vmul.u32 %v2296, %v2297
    %v2302 = vmul.u32 %v2296, %v2298
    %v2303 = vshll.u32 %v2300, 16
    %v2304 = vshrl.u32 %v2300, 16
    %v2305 = vshll.u32 %v2301, 16
    %v2306 = vshrl.u32 %v2301, 16
    %vm2307 = vc.u32 %v2299, %v2303
    %v2308 = vsel %vm2307, 1, 0
    %v2309 = vadd.s32 %v2299, %v2303
    %v2310 = vadd.s32 %v2302, %v2308
    %vm2311 = vc.u32 %v2309, %v2305
    %v2312 = vsel %vm2311, 1, 0
    %v2313 = vadd.s32 %v2309, %v2305
    %v2314 = vadd.s32 %v2310, %v2312
    %v2315 = vadd.s32 %v2314, %v2304
    %v2316 = vadd.s32 %v2315, %v2306
    %v2317 = vand.u32 %v2294, 65535
    %v2318 = vshrl.u32 %v2294, 16
    %v2319 = vand.u32 %v2289, 65535
    %v2320 = vshrl.u32 %v2289, 16
    %v2321 = vmul.u32 %v2317, %v2319
    %v2322 = vmul.u32 %v2317, %v2320
    %v2323 = vmul.u32 %v2318, %v2319
    %v2324 = vmul.u32 %v2318, %v2320
    %v2325 = vshll.u32 %v2322, 16
    %v2326 = vshrl.u32 %v2322, 16
    %v2327 = vshll.u32 %v2323, 16
    %v2328 = vshrl.u32 %v2323, 16
    %vm2329 = vc.u32 %v2321, %v2325
    %v2330 = vsel %vm2329, 1, 0
    %v2331 = vadd.s32 %v2321, %v2325
    %v2332 = vadd.s32 %v2324, %v2330
    %vm2333 = vc.u32 %v2331, %v2327
    %v2334 = vsel %vm2333, 1, 0
    %v2335 = vadd.s32 %v2331, %v2327
    %v2336 = vadd.s32 %v2332, %v2334
    %v2337 = vadd.s32 %v2336, %v2326
    %v2338 = vadd.s32 %v2337, %v2328
    %v2339 = vmul.u32 %v2294, %v2285
    %v2340 = vadd.s32 %v2316, %v2335
    %vm2341 = vc.u32 %v2316, %v2335
    %v2342 = vadd.s32 %v2338, 1
    %v2343 = vsel %vm2341, %v2342, %v2338
    %v2344 = vadd.s32 %v2339, %v2343
    %v2345 = vadd.s32 %v2344, 536870912
    %v2346 = vshrl.u32 %v2345, 30
    %v2347 = vshll.u32 %v2346, 30
    %v2348 = vsub.s32 %v2344, %v2347
    %vm2349 = vcmp.lt.s32.totalorder %v2348, 0
    %v2350 = vsub.s32 0, %v2348
    %v2351 = vsel %vm2349, %v2350, %v2348
    %v2352 = vclz %v2351
    %v2353 = vsub.s32 %v2352, 2
    %vm2354 = vcmp.gt.s32.totalorder 0, %v2353
    %v2355 = vsel %vm2354, 0, %v2353
    %v2356 = vsub.s32 32, %v2355
    %v2357 = vshll.u32 %v2348, %v2355
    %v2358 = vshrl.u32 %v2340, %v2356
    %v2359 = vor.u32 %v2357, %v2358
    %v2360 = vsub.s32 4294967266, %v2355
    %v2361 = vadd.s32 %v2360, 127
    %v2362 = vshll.u32 %v2361, 23
    %v2363 = vor.u32 4788187, %v2362
    %v2364 = vand.u32 2147483647, %v2363
    %v2366 = vcvt.s32.f32 %v2359
    %v2367 = vmul.f32 %v2366, %v2364
    %v2368 = vxor.u32 %v2367, 2147483648
    %v2369 = vsel %vm2248, %v2368, %v2367
    %v2370 = vsub.s32 4, %v2346
    %v2371 = vsel %vm2248, %v2370, %v2346
    %v2372 = vsel %vm2247, %v939, %v2369
    %v2373 = vsel %vm2247, 0, %v2371
    %v2374 = vmul.f32 %v2372, %v2372
    %v2375 = vmul.f32 %v2374, -0.001358992
    %v2376 = vadd.f32 %v2375, 0.041655596
    %v2377 = vmul.f32 %v2374, %v2376
    %v2378 = vadd.f32 %v2377, -0.4999988
    %v2379 = vmul.f32 %v2374, %v2378
    %v2380 = vadd.f32 1.0, %v2379
    %v2381 = vmul.f32 %v2372, %v2372
    %v2382 = vmul.f32 %v2381, -0.00019511016
    %v2383 = vadd.f32 %v2382, 0.008332121
    %v2384 = vmul.f32 %v2381, %v2383
    %v2385 = vadd.f32 %v2384, -0.16666654
    %v2386 = vmul.f32 %v2381, %v2385
    %v2387 = vadd.f32 %v2386, 1.0
    %v2388 = vmul.f32 %v2387, %v2372
    %vm2389 = vweird.f32 %v939
    %v2390 = vadd.s32 %v2373, 3
    %v2391 = vand.u32 %v2390, 3
    %vm2392 = vcmp.lt.s32.totalorder %v2391, 2
    %vm2393 = vcmp.eq.s32.totalorder %v2391, 0
    %v2394 = vxor.u32 %v2388, 2147483648
    %v2395 = vsel %vm2393, %v2380, %v2394
    %vm2396 = vcmp.eq.s32.totalorder %v2391, 2
    %v2397 = vxor.u32 %v2380, 2147483648
    %v2398 = vsel %vm2396, %v2397, %v2388
    %v2399 = vsel %vm2392, %v2395, %v2398
    %v2400 = vsel %vm2389, nan, %v2399
    %v2401 = vand.u32 2147483647, %v1147
    %vm2402 = vcmp.le.f32.partialorder %v2401, 0.7853982
    %vm2403 = vcmp.lt.s32.totalorder %v1147, 0
    %v2404 = vand.u32 %v1147, 2139095040
    %v2405 = vshrl.u32 %v2404, 23
    %v2406 = vsub.s32 %v2405, 127
    %v2407 = vand.u32 2147483647, %v1147
    %v2408 = vand.u32 %v2407, 8388607
    %v2409 = vor.u32 %v2408, 8388608
    %v2410 = vsub.s32 0, %v2409
    %v2411 = vadd.s32 %v2406, 1
    %vm2412 = vcmp.gt.s32.totalorder %v2411, 0
    %v2413 = vsel %vm2412, %v2411, 0
    %v2414 = vshrl.u32 %v2413, 5
    %v2415 = vand.u32 %v2413, 31
    %v2416 = vsub.s32 32, %v2415
    %v2417 = vshrl.u32 683565275, %v2416
    %v2418 = vshll.u32 683565275, %v2415
    %v2419 = vshrl.u32 2475754826, %v2416
    %v2420 = vor.u32 %v2418, %v2419
    %v2421 = vshll.u32 2475754826, %v2415
    %v2422 = vshrl.u32 2131351028, %v2416
    %v2423 = vor.u32 %v2421, %v2422
    %v2424 = vshll.u32 2131351028, %v2415
    %v2425 = vshrl.u32 2102212464, %v2416
    %v2426 = vor.u32 %v2424, %v2425
    %v2427 = vshll.u32 2102212464, %v2415
    %v2428 = vshrl.u32 920167782, %v2416
    %v2429 = vor.u32 %v2427, %v2428
    %v2430 = vshll.u32 920167782, %v2415
    %v2431 = vshrl.u32 1326507024, %v2416
    %v2432 = vor.u32 %v2430, %v2431
    %vm2433 = vcmp.lt.s32.totalorder %v2414, 1
    %vm2434 = vcmp.lt.s32.totalorder %v2414, 2
    %vm2435 = vcmp.lt.s32.totalorder %v2414, 3
    %vm2436 = vcmp.lt.s32.totalorder %v2414, 4
    %v2437 = vsel %vm2433, %v2417, %v2420
    %v2438 = vsel %vm2436, %v2426, 2102212464
    %v2439 = vsel %vm2435, %v2423, %v2438
    %v2440 = vsel %vm2434, %v2437, %v2439
    %v2441 = vsel %vm2433, %v2420, %v2423
    %v2442 = vsel %vm2436, %v2429, 920167782
    %v2443 = vsel %vm2435, %v2426, %v2442
    %v2444 = vsel %vm2434, %v2441, %v2443
    %v2445 = vsel %vm2433, %v2423, %v2426
    %v2446 = vsel %vm2436, %v2432, 1326507024
    %v2447 = vsel %vm2435, %v2429, %v2446
    %v2448 = vsel %vm2434, %v2445, %v2447
    %v2449 = vshll.u32 %v2409, 8
    %v2450 = vand.u32 %v2449, 65535
    %v2451 = vshrl.u32 %v2449, 16
    %v2452 = vand.u32 %v2448, 65535
    %v2453 = vshrl.u32 %v2448, 16
    %v2454 = vmul.u32 %v2450, %v2452
    %v2455 = vmul.u32 %v2450, %v2453
    %v2456 = vmul.u32 %v2451, %v2452
    %v2457 = vmul.u32 %v2451, %v2453
    %v2458 = vshll.u32 %v2455, 16
    %v2459 = vshrl.u32 %v2455, 16
    %v2460 = vshll.u32 %v2456, 16
    %v2461 = vshrl.u32 %v2456, 16
    %vm2462 = vc.u32 %v2454, %v2458
    %v2463 = vsel %vm2462, 1, 0
    %v2464 = vadd.s32 %v2454, %v2458
    %v2465 = vadd.s32 %v2457, %v2463
    %vm2466 = vc.u32 %v2464, %v2460
    %v2467 = vsel %vm2466, 1, 0
    %v2468 = vadd.s32 %v2464, %v2460
    %v2469 = vadd.s32 %v2465, %v2467
    %v2470 = vadd.s32 %v2469, %v2459
    %v2471 = vadd.s32 %v2470, %v2461
    %v2472 = vand.u32 %v2449, 65535
    %v2473 = vshrl.u32 %v2449, 16
    %v2474 = vand.u32 %v2444, 65535
    %v2475 = vshrl.u32 %v2444, 16
    %v2476 = vmul.u32 %v2472, %v2474
    %v2477 = vmul.u32 %v2472, %v2475
    %v2478 = vmul.u32 %v2473, %v2474
    %v2479 = vmul.u32 %v2473, %v2475
    %v2480 = vshll.u32 %v2477, 16
    %v2481 = vshrl.u32 %v2477, 16
    %v2482 = vshll.u32 %v2478, 16
    %v2483 = vshrl.u32 %v2478, 16
    %vm2484 = vc.u32 %v2476, %v2480
    %v2485 = vsel %vm2484, 1, 0
    %v2486 = vadd.s32 %v2476, %v2480
    %v2487 = vadd.s32 %v2479, %v2485
    %vm2488 = vc.u32 %v2486, %v2482
    %v2489 = vsel %vm2488, 1, 0
    %v2490 = vadd.s32 %v2486, %v2482
    %v2491 = vadd.s32 %v2487, %v2489
    %v2492 = vadd.s32 %v2491, %v2481
    %v2493 = vadd.s32 %v2492, %v2483
    %v2494 = vmul.u32 %v2449, %v2440
    %v2495 = vadd.s32 %v2471, %v2490
    %vm2496 = vc.u32 %v2471, %v2490
    %v2497 = vadd.s32 %v2493, 1
    %v2498 = vsel %vm2496, %v2497, %v2493
    %v2499 = vadd.s32 %v2494, %v2498
    %v2500 = vadd.s32 %v2499, 536870912
    %v2501 = vshrl.u32 %v2500, 30
    %v2502 = vshll.u32 %v2501, 30
    %v2503 = vsub.s32 %v2499, %v2502
    %vm2504 = vcmp.lt.s32.totalorder %v2503, 0
    %v2505 = vsub.s32 0, %v2503
    %v2506 = vsel %vm2504, %v2505, %v2503
    %v2507 = vclz %v2506
    %v2508 = vsub.s32 %v2507, 2
    %vm2509 = vcmp.gt.s32.totalorder 0, %v2508
    %v2510 = vsel %vm2509, 0, %v2508
    %v2511 = vsub.s32 32, %v2510
    %v2512 = vshll.u32 %v2503, %v2510
    %v2513 = vshrl.u32 %v2495, %v2511
    %v2514 = vor.u32 %v2512, %v2513
    %v2515 = vsub.s32 4294967266, %v2510
    %v2516 = vadd.s32 %v2515, 127
    %v2517 = vshll.u32 %v2516, 23
    %v2518 = vor.u32 4788187, %v2517
    %v2519 = vand.u32 2147483647, %v2518
    %v2521 = vcvt.s32.f32 %v2514
    %v2522 = vmul.f32 %v2521, %v2519
    %v2523 = vxor.u32 %v2522, 2147483648
    %v2524 = vsel %vm2403, %v2523, %v2522
    %v2525 = vsub.s32 4, %v2501
    %v2526 = vsel %vm2403, %v2525, %v2501
    %v2527 = vsel %vm2402, %v1147, %v2524
    %v2528 = vsel %vm2402, 0, %v2526
    %v2529 = vmul.f32 %v2527, %v2527
    %v2530 = vmul.f32 %v2529, -0.001358992
    %v2531 = vadd.f32 %v2530, 0.041655596
    %v2532 = vmul.f32 %v2529, %v2531
    %v2533 = vadd.f32 %v2532, -0.4999988
    %v2534 = vmul.f32 %v2529, %v2533
    %v2535 = vadd.f32 1.0, %v2534
    %v2536 = vmul.f32 %v2527, %v2527
    %v2537 = vmul.f32 %v2536, -0.00019511016
    %v2538 = vadd.f32 %v2537, 0.008332121
    %v2539 = vmul.f32 %v2536, %v2538
    %v2540 = vadd.f32 %v2539, -0.16666654
    %v2541 = vmul.f32 %v2536, %v2540
    %v2542 = vadd.f32 %v2541, 1.0
    %v2543 = vmul.f32 %v2542, %v2527
    %vm2544 = vweird.f32 %v1147
    %v2545 = vadd.s32 %v2528, 3
    %v2546 = vand.u32 %v2545, 3
    %vm2547 = vcmp.lt.s32.totalorder %v2546, 2
    %vm2548 = vcmp.eq.s32.totalorder %v2546, 0
    %v2549 = vxor.u32 %v2543, 2147483648
    %v2550 = vsel %vm2548, %v2535, %v2549
    %vm2551 = vcmp.eq.s32.totalorder %v2546, 2
    %v2552 = vxor.u32 %v2535, 2147483648
    %v2553 = vsel %vm2551, %v2552, %v2543
    %v2554 = vsel %vm2547, %v2550, %v2553
    %v2555 = vsel %vm2544, nan, %v2554
    %v2556 = vand.u32 2147483647, %v1355
    %vm2557 = vcmp.le.f32.partialorder %v2556, 0.7853982
    %vm2558 = vcmp.lt.s32.totalorder %v1355, 0
    %v2559 = vand.u32 %v1355, 2139095040
    %v2560 = vshrl.u32 %v2559, 23
    %v2561 = vsub.s32 %v2560, 127
    %v2562 = vand.u32 2147483647, %v1355
    %v2563 = vand.u32 %v2562, 8388607
    %v2564 = vor.u32 %v2563, 8388608
    %v2565 = vsub.s32 0, %v2564
    %v2566 = vadd.s32 %v2561, 1
    %vm2567 = vcmp.gt.s32.totalorder %v2566, 0
    %v2568 = vsel %vm2567, %v2566, 0
    %v2569 = vshrl.u32 %v2568, 5
    %v2570 = vand.u32 %v2568, 31
    %v2571 = vsub.s32 32, %v2570
    %v2572 = vshrl.u32 683565275, %v2571
    %v2573 = vshll.u32 683565275, %v2570
    %v2574 = vshrl.u32 2475754826, %v2571
    %v2575 = vor.u32 %v2573, %v2574
    %v2576 = vshll.u32 2475754826, %v2570
    %v2577 = vshrl.u32 2131351028, %v2571
    %v2578 = vor.u32 %v2576, %v2577
    %v2579 = vshll.u32 2131351028, %v2570
    %v2580 = vshrl.u32 2102212464, %v2571
    %v2581 = vor.u32 %v2579, %v2580
    %v2582 = vshll.u32 2102212464, %v2570
    %v2583 = vshrl.u32 920167782, %v2571
    %v2584 = vor.u32 %v2582, %v2583
    %v2585 = vshll.u32 920167782, %v2570
    %v2586 = vshrl.u32 1326507024, %v2571
    %v2587 = vor.u32 %v2585, %v2586
    %vm2588 = vcmp.lt.s32.totalorder %v2569, 1
    %vm2589 = vcmp.lt.s32.totalorder %v2569, 2
    %vm2590 = vcmp.lt.s32.totalorder %v2569, 3
    %vm2591 = vcmp.lt.s32.totalorder %v2569, 4
    %v2592 = vsel %vm2588, %v2572, %v2575
    %v2593 = vsel %vm2591, %v2581, 2102212464
    %v2594 = vsel %vm2590, %v2578, %v2593
    %v2595 = vsel %vm2589, %v2592, %v2594
    %v2596 = vsel %vm2588, %v2575, %v2578
    %v2597 = vsel %vm2591, %v2584, 920167782
    %v2598 = vsel %vm2590, %v2581, %v2597
    %v2599 = vsel %vm2589, %v2596, %v2598
    %v2600 = vsel %vm2588, %v2578, %v2581
    %v2601 = vsel %vm2591, %v2587, 1326507024
    %v2602 = vsel %vm2590, %v2584, %v2601
    %v2603 = vsel %vm2589, %v2600, %v2602
    %v2604 = vshll.u32 %v2564, 8
    %v2605 = vand.u32 %v2604, 65535
    %v2606 = vshrl.u32 %v2604, 16
    %v2607 = vand.u32 %v2603, 65535
    %v2608 = vshrl.u32 %v2603, 16
    %v2609 = vmul.u32 %v2605, %v2607
    %v2610 = vmul.u32 %v2605, %v2608
    %v2611 = vmul.u32 %v2606, %v2607
    %v2612 = vmul.u32 %v2606, %v2608
    %v2613 = vshll.u32 %v2610, 16
    %v2614 = vshrl.u32 %v2610, 16
    %v2615 = vshll.u32 %v2611, 16
    %v2616 = vshrl.u32 %v2611, 16
    %vm2617 = vc.u32 %v2609, %v2613
    %v2618 = vsel %vm2617, 1, 0
    %v2619 = vadd.s32 %v2609, %v2613
    %v2620 = vadd.s32 %v2612, %v2618
    %vm2621 = vc.u32 %v2619, %v2615
    %v2622 = vsel %vm2621, 1, 0
    %v2623 = vadd.s32 %v2619, %v2615
    %v2624 = vadd.s32 %v2620, %v2622
    %v2625 = vadd.s32 %v2624, %v2614
    %v2626 = vadd.s32 %v2625, %v2616
    %v2627 = vand.u32 %v2604, 65535
    %v2628 = vshrl.u32 %v2604, 16
    %v2629 = vand.u32 %v2599, 65535
    %v2630 = vshrl.u32 %v2599, 16
    %v2631 = vmul.u32 %v2627, %v2629
    %v2632 = vmul.u32 %v2627, %v2630
    %v2633 = vmul.u32 %v2628, %v2629
    %v2634 = vmul.u32 %v2628, %v2630
    %v2635 = vshll.u32 %v2632, 16
    %v2636 = vshrl.u32 %v2632, 16
    %v2637 = vshll.u32 %v2633, 16
    %v2638 = vshrl.u32 %v2633, 16
    %vm2639 = vc.u32 %v2631, %v2635
    %v2640 = vsel %vm2639, 1, 0
    %v2641 = vadd.s32 %v2631, %v2635
    %v2642 = vadd.s32 %v2634, %v2640
    %vm2643 = vc.u32 %v2641, %v2637
    %v2644 = vsel %vm2643, 1, 0
    %v2645 = vadd.s32 %v2641, %v2637
    %v2646 = vadd.s32 %v2642, %v2644
    %v2647 = vadd.s32 %v2646, %v2636
    %v2648 = vadd.s32 %v2647, %v2638
    %v2649 = vmul.u32 %v2604, %v2595
    %v2650 = vadd.s32 %v2626, %v2645
    %vm2651 = vc.u32 %v2626, %v2645
    %v2652 = vadd.s32 %v2648, 1
    %v2653 = vsel %vm2651, %v2652, %v2648
    %v2654 = vadd.s32 %v2649, %v2653
    %v2655 = vadd.s32 %v2654, 536870912
    %v2656 = vshrl.u32 %v2655, 30
    %v2657 = vshll.u32 %v2656, 30
    %v2658 = vsub.s32 %v2654, %v2657
    %vm2659 = vcmp.lt.s32.totalorder %v2658, 0
    %v2660 = vsub.s32 0, %v2658
    %v2661 = vsel %vm2659, %v2660, %v2658
    %v2662 = vclz %v2661
    %v2663 = vsub.s32 %v2662, 2
    %vm2664 = vcmp.gt.s32.totalorder 0, %v2663
    %v2665 = vsel %vm2664, 0, %v2663
    %v2666 = vsub.s32 32, %v2665
    %v2667 = vshll.u32 %v2658, %v2665
    %v2668 = vshrl.u32 %v2650, %v2666
    %v2669 = vor.u32 %v2667, %v2668
    %v2670 = vsub.s32 4294967266, %v2665
    %v2671 = vadd.s32 %v2670, 127
    %v2672 = vshll.u32 %v2671, 23
    %v2673 = vor.u32 4788187, %v2672
    %v2674 = vand.u32 2147483647, %v2673
    %v2676 = vcvt.s32.f32 %v2669
    %v2677 = vmul.f32 %v2676, %v2674
    %v2678 = vxor.u32 %v2677, 2147483648
    %v2679 = vsel %vm2558, %v2678, %v2677
    %v2680 = vsub.s32 4, %v2656
    %v2681 = vsel %vm2558, %v2680, %v2656
    %v2682 = vsel %vm2557, %v1355, %v2679
    %v2683 = vsel %vm2557, 0, %v2681
    %v2684 = vmul.f32 %v2682, %v2682
    %v2685 = vmul.f32 %v2684, -0.001358992
    %v2686 = vadd.f32 %v2685, 0.041655596
    %v2687 = vmul.f32 %v2684, %v2686
    %v2688 = vadd.f32 %v2687, -0.4999988
    %v2689 = vmul.f32 %v2684, %v2688
    %v2690 = vadd.f32 1.0, %v2689
    %v2691 = vmul.f32 %v2682, %v2682
    %v2692 = vmul.f32 %v2691, -0.00019511016
    %v2693 = vadd.f32 %v2692, 0.008332121
    %v2694 = vmul.f32 %v2691, %v2693
    %v2695 = vadd.f32 %v2694, -0.16666654
    %v2696 = vmul.f32 %v2691, %v2695
    %v2697 = vadd.f32 %v2696, 1.0
    %v2698 = vmul.f32 %v2697, %v2682
    %vm2699 = vweird.f32 %v1355
    %v2700 = vadd.s32 %v2683, 3
    %v2701 = vand.u32 %v2700, 3
    %vm2702 = vcmp.lt.s32.totalorder %v2701, 2
    %vm2703 = vcmp.eq.s32.totalorder %v2701, 0
    %v2704 = vxor.u32 %v2698, 2147483648
    %v2705 = vsel %vm2703, %v2690, %v2704
    %vm2706 = vcmp.eq.s32.totalorder %v2701, 2
    %v2707 = vxor.u32 %v2690, 2147483648
    %v2708 = vsel %vm2706, %v2707, %v2698
    %v2709 = vsel %vm2702, %v2705, %v2708
    %v2710 = vsel %vm2699, nan, %v2709
    %v2711 = vand.u32 2147483647, %v1563
    %vm2712 = vcmp.le.f32.partialorder %v2711, 0.7853982
    %vm2713 = vcmp.lt.s32.totalorder %v1563, 0
    %v2714 = vand.u32 %v1563, 2139095040
    %v2715 = vshrl.u32 %v2714, 23
    %v2716 = vsub.s32 %v2715, 127
    %v2717 = vand.u32 2147483647, %v1563
    %v2718 = vand.u32 %v2717, 8388607
    %v2719 = vor.u32 %v2718, 8388608
    %v2720 = vsub.s32 0, %v2719
    %v2721 = vadd.s32 %v2716, 1
    %vm2722 = vcmp.gt.s32.totalorder %v2721, 0
    %v2723 = vsel %vm2722, %v2721, 0
    %v2724 = vshrl.u32 %v2723, 5
    %v2725 = vand.u32 %v2723, 31
    %v2726 = vsub.s32 32, %v2725
    %v2727 = vshrl.u32 683565275, %v2726
    %v2728 = vshll.u32 683565275, %v2725
    %v2729 = vshrl.u32 2475754826, %v2726
    %v2730 = vor.u32 %v2728, %v2729
    %v2731 = vshll.u32 2475754826, %v2725
    %v2732 = vshrl.u32 2131351028, %v2726
    %v2733 = vor.u32 %v2731, %v2732
    %v2734 = vshll.u32 2131351028, %v2725
    %v2735 = vshrl.u32 2102212464, %v2726
    %v2736 = vor.u32 %v2734, %v2735
    %v2737 = vshll.u32 2102212464, %v2725
    %v2738 = vshrl.u32 920167782, %v2726
    %v2739 = vor.u32 %v2737, %v2738
    %v2740 = vshll.u32 920167782, %v2725
    %v2741 = vshrl.u32 1326507024, %v2726
    %v2742 = vor.u32 %v2740, %v2741
    %vm2743 = vcmp.lt.s32.totalorder %v2724, 1
    %vm2744 = vcmp.lt.s32.totalorder %v2724, 2
    %vm2745 = vcmp.lt.s32.totalorder %v2724, 3
    %vm2746 = vcmp.lt.s32.totalorder %v2724, 4
    %v2747 = vsel %vm2743, %v2727, %v2730
    %v2748 = vsel %vm2746, %v2736, 2102212464
    %v2749 = vsel %vm2745, %v2733, %v2748
    %v2750 = vsel %vm2744, %v2747, %v2749
    %v2751 = vsel %vm2743, %v2730, %v2733
    %v2752 = vsel %vm2746, %v2739, 920167782
    %v2753 = vsel %vm2745, %v2736, %v2752
    %v2754 = vsel %vm2744, %v2751, %v2753
    %v2755 = vsel %vm2743, %v2733, %v2736
    %v2756 = vsel %vm2746, %v2742, 1326507024
    %v2757 = vsel %vm2745, %v2739, %v2756
    %v2758 = vsel %vm2744, %v2755, %v2757
    %v2759 = vshll.u32 %v2719, 8
    %v2760 = vand.u32 %v2759, 65535
    %v2761 = vshrl.u32 %v2759, 16
    %v2762 = vand.u32 %v2758, 65535
    %v2763 = vshrl.u32 %v2758, 16
    %v2764 = vmul.u32 %v2760, %v2762
    %v2765 = vmul.u32 %v2760, %v2763
    %v2766 = vmul.u32 %v2761, %v2762
    %v2767 = vmul.u32 %v2761, %v2763
    %v2768 = vshll.u32 %v2765, 16
    %v2769 = vshrl.u32 %v2765, 16
    %v2770 = vshll.u32 %v2766, 16
    %v2771 = vshrl.u32 %v2766, 16
    %vm2772 = vc.u32 %v2764, %v2768
    %v2773 = vsel %vm2772, 1, 0
    %v2774 = vadd.s32 %v2764, %v2768
    %v2775 = vadd.s32 %v2767, %v2773
    %vm2776 = vc.u32 %v2774, %v2770
    %v2777 = vsel %vm2776, 1, 0
    %v2778 = vadd.s32 %v2774, %v2770
    %v2779 = vadd.s32 %v2775, %v2777
    %v2780 = vadd.s32 %v2779, %v2769
    %v2781 = vadd.s32 %v2780, %v2771
    %v2782 = vand.u32 %v2759, 65535
    %v2783 = vshrl.u32 %v2759, 16
    %v2784 = vand.u32 %v2754, 65535
    %v2785 = vshrl.u32 %v2754, 16
    %v2786 = vmul.u32 %v2782, %v2784
    %v2787 = vmul.u32 %v2782, %v2785
    %v2788 = vmul.u32 %v2783, %v2784
    %v2789 = vmul.u32 %v2783, %v2785
    %v2790 = vshll.u32 %v2787, 16
    %v2791 = vshrl.u32 %v2787, 16
    %v2792 = vshll.u32 %v2788, 16
    %v2793 = vshrl.u32 %v2788, 16
    %vm2794 = vc.u32 %v2786, %v2790
    %v2795 = vsel %vm2794, 1, 0
    %v2796 = vadd.s32 %v2786, %v2790
    %v2797 = vadd.s32 %v2789, %v2795
    %vm2798 = vc.u32 %v2796, %v2792
    %v2799 = vsel %vm2798, 1, 0
    %v2800 = vadd.s32 %v2796, %v2792
    %v2801 = vadd.s32 %v2797, %v2799
    %v2802 = vadd.s32 %v2801, %v2791
    %v2803 = vadd.s32 %v2802, %v2793
    %v2804 = vmul.u32 %v2759, %v2750
    %v2805 = vadd.s32 %v2781, %v2800
    %vm2806 = vc.u32 %v2781, %v2800
    %v2807 = vadd.s32 %v2803, 1
    %v2808 = vsel %vm2806, %v2807, %v2803
    %v2809 = vadd.s32 %v2804, %v2808
    %v2810 = vadd.s32 %v2809, 536870912
    %v2811 = vshrl.u32 %v2810, 30
    %v2812 = vshll.u32 %v2811, 30
    %v2813 = vsub.s32 %v2809, %v2812
    %vm2814 = vcmp.lt.s32.totalorder %v2813, 0
    %v2815 = vsub.s32 0, %v2813
    %v2816 = vsel %vm2814, %v2815, %v2813
    %v2817 = vclz %v2816
    %v2818 = vsub.s32 %v2817, 2
    %vm2819 = vcmp.gt.s32.totalorder 0, %v2818
    %v2820 = vsel %vm2819, 0, %v2818
    %v2821 = vsub.s32 32, %v2820
    %v2822 = vshll.u32 %v2813, %v2820
    %v2823 = vshrl.u32 %v2805, %v2821
    %v2824 = vor.u32 %v2822, %v2823
    %v2825 = vsub.s32 4294967266, %v2820
    %v2826 = vadd.s32 %v2825, 127
    %v2827 = vshll.u32 %v2826, 23
    %v2828 = vor.u32 4788187, %v2827
    %v2829 = vand.u32 2147483647, %v2828
    %v2831 = vcvt.s32.f32 %v2824
    %v2832 = vmul.f32 %v2831, %v2829
    %v2833 = vxor.u32 %v2832, 2147483648
    %v2834 = vsel %vm2713, %v2833, %v2832
    %v2835 = vsub.s32 4, %v2811
    %v2836 = vsel %vm2713, %v2835, %v2811
    %v2837 = vsel %vm2712, %v1563, %v2834
    %v2838 = vsel %vm2712, 0, %v2836
    %v2839 = vmul.f32 %v2837, %v2837
    %v2840 = vmul.f32 %v2839, -0.001358992
    %v2841 = vadd.f32 %v2840, 0.041655596
    %v2842 = vmul.f32 %v2839, %v2841
    %v2843 = vadd.f32 %v2842, -0.4999988
    %v2844 = vmul.f32 %v2839, %v2843
    %v2845 = vadd.f32 1.0, %v2844
    %v2846 = vmul.f32 %v2837, %v2837
    %v2847 = vmul.f32 %v2846, -0.00019511016
    %v2848 = vadd.f32 %v2847, 0.008332121
    %v2849 = vmul.f32 %v2846, %v2848
    %v2850 = vadd.f32 %v2849, -0.16666654
    %v2851 = vmul.f32 %v2846, %v2850
    %v2852 = vadd.f32 %v2851, 1.0
    %v2853 = vmul.f32 %v2852, %v2837
    %vm2854 = vweird.f32 %v1563
    %v2855 = vadd.s32 %v2838, 3
    %v2856 = vand.u32 %v2855, 3
    %vm2857 = vcmp.lt.s32.totalorder %v2856, 2
    %vm2858 = vcmp.eq.s32.totalorder %v2856, 0
    %v2859 = vxor.u32 %v2853, 2147483648
    %v2860 = vsel %vm2858, %v2845, %v2859
    %vm2861 = vcmp.eq.s32.totalorder %v2856, 2
    %v2862 = vxor.u32 %v2845, 2147483648
    %v2863 = vsel %vm2861, %v2862, %v2853
    %v2864 = vsel %vm2857, %v2860, %v2863
    %v2865 = vsel %vm2854, nan, %v2864
    %v2866 = vand.u32 2147483647, %v1771
    %vm2867 = vcmp.le.f32.partialorder %v2866, 0.7853982
    %vm2868 = vcmp.lt.s32.totalorder %v1771, 0
    %v2869 = vand.u32 %v1771, 2139095040
    %v2870 = vshrl.u32 %v2869, 23
    %v2871 = vsub.s32 %v2870, 127
    %v2872 = vand.u32 2147483647, %v1771
    %v2873 = vand.u32 %v2872, 8388607
    %v2874 = vor.u32 %v2873, 8388608
    %v2875 = vsub.s32 0, %v2874
    %v2876 = vadd.s32 %v2871, 1
    %vm2877 = vcmp.gt.s32.totalorder %v2876, 0
    %v2878 = vsel %vm2877, %v2876, 0
    %v2879 = vshrl.u32 %v2878, 5
    %v2880 = vand.u32 %v2878, 31
    %v2881 = vsub.s32 32, %v2880
    %v2882 = vshrl.u32 683565275, %v2881
    %v2883 = vshll.u32 683565275, %v2880
    %v2884 = vshrl.u32 2475754826, %v2881
    %v2885 = vor.u32 %v2883, %v2884
    %v2886 = vshll.u32 2475754826, %v2880
    %v2887 = vshrl.u32 2131351028, %v2881
    %v2888 = vor.u32 %v2886, %v2887
    %v2889 = vshll.u32 2131351028, %v2880
    %v2890 = vshrl.u32 2102212464, %v2881
    %v2891 = vor.u32 %v2889, %v2890
    %v2892 = vshll.u32 2102212464, %v2880
    %v2893 = vshrl.u32 920167782, %v2881
    %v2894 = vor.u32 %v2892, %v2893
    %v2895 = vshll.u32 920167782, %v2880
    %v2896 = vshrl.u32 1326507024, %v2881
    %v2897 = vor.u32 %v2895, %v2896
    %vm2898 = vcmp.lt.s32.totalorder %v2879, 1
    %vm2899 = vcmp.lt.s32.totalorder %v2879, 2
    %vm2900 = vcmp.lt.s32.totalorder %v2879, 3
    %vm2901 = vcmp.lt.s32.totalorder %v2879, 4
    %v2902 = vsel %vm2898, %v2882, %v2885
    %v2903 = vsel %vm2901, %v2891, 2102212464
    %v2904 = vsel %vm2900, %v2888, %v2903
    %v2905 = vsel %vm2899, %v2902, %v2904
    %v2906 = vsel %vm2898, %v2885, %v2888
    %v2907 = vsel %vm2901, %v2894, 920167782
    %v2908 = vsel %vm2900, %v2891, %v2907
    %v2909 = vsel %vm2899, %v2906, %v2908
    %v2910 = vsel %vm2898, %v2888, %v2891
    %v2911 = vsel %vm2901, %v2897, 1326507024
    %v2912 = vsel %vm2900, %v2894, %v2911
    %v2913 = vsel %vm2899, %v2910, %v2912
    %v2914 = vshll.u32 %v2874, 8
    %v2915 = vand.u32 %v2914, 65535
    %v2916 = vshrl.u32 %v2914, 16
    %v2917 = vand.u32 %v2913, 65535
    %v2918 = vshrl.u32 %v2913, 16
    %v2919 = vmul.u32 %v2915, %v2917
    %v2920 = vmul.u32 %v2915, %v2918
    %v2921 = vmul.u32 %v2916, %v2917
    %v2922 = vmul.u32 %v2916, %v2918
    %v2923 = vshll.u32 %v2920, 16
    %v2924 = vshrl.u32 %v2920, 16
    %v2925 = vshll.u32 %v2921, 16
    %v2926 = vshrl.u32 %v2921, 16
    %vm2927 = vc.u32 %v2919, %v2923
    %v2928 = vsel %vm2927, 1, 0
    %v2929 = vadd.s32 %v2919, %v2923
    %v2930 = vadd.s32 %v2922, %v2928
    %vm2931 = vc.u32 %v2929, %v2925
    %v2932 = vsel %vm2931, 1, 0
    %v2933 = vadd.s32 %v2929, %v2925
    %v2934 = vadd.s32 %v2930, %v2932
    %v2935 = vadd.s32 %v2934, %v2924
    %v2936 = vadd.s32 %v2935, %v2926
    %v2937 = vand.u32 %v2914, 65535
    %v2938 = vshrl.u32 %v2914, 16
    %v2939 = vand.u32 %v2909, 65535
    %v2940 = vshrl.u32 %v2909, 16
    %v2941 = vmul.u32 %v2937, %v2939
    %v2942 = vmul.u32 %v2937, %v2940
    %v2943 = vmul.u32 %v2938, %v2939
    %v2944 = vmul.u32 %v2938, %v2940
    %v2945 = vshll.u32 %v2942, 16
    %v2946 = vshrl.u32 %v2942, 16
    %v2947 = vshll.u32 %v2943, 16
    %v2948 = vshrl.u32 %v2943, 16
    %vm2949 = vc.u32 %v2941, %v2945
    %v2950 = vsel %vm2949, 1, 0
    %v2951 = vadd.s32 %v2941, %v2945
    %v2952 = vadd.s32 %v2944, %v2950
    %vm2953 = vc.u32 %v2951, %v2947
    %v2954 = vsel %vm2953, 1, 0
    %v2955 = vadd.s32 %v2951, %v2947
    %v2956 = vadd.s32 %v2952, %v2954
    %v2957 = vadd.s32 %v2956, %v2946
    %v2958 = vadd.s32 %v2957, %v2948
    %v2959 = vmul.u32 %v2914, %v2905
    %v2960 = vadd.s32 %v2936, %v2955
    %vm2961 = vc.u32 %v2936, %v2955
    %v2962 = vadd.s32 %v2958, 1
    %v2963 = vsel %vm2961, %v2962, %v2958
    %v2964 = vadd.s32 %v2959, %v2963
    %v2965 = vadd.s32 %v2964, 536870912
    %v2966 = vshrl.u32 %v2965, 30
    %v2967 = vshll.u32 %v2966, 30
    %v2968 = vsub.s32 %v2964, %v2967
    %vm2969 = vcmp.lt.s32.totalorder %v2968, 0
    %v2970 = vsub.s32 0, %v2968
    %v2971 = vsel %vm2969, %v2970, %v2968
    %v2972 = vclz %v2971
    %v2973 = vsub.s32 %v2972, 2
    %vm2974 = vcmp.gt.s32.totalorder 0, %v2973
    %v2975 = vsel %vm2974, 0, %v2973
    %v2976 = vsub.s32 32, %v2975
    %v2977 = vshll.u32 %v2968, %v2975
    %v2978 = vshrl.u32 %v2960, %v2976
    %v2979 = vor.u32 %v2977, %v2978
    %v2980 = vsub.s32 4294967266, %v2975
    %v2981 = vadd.s32 %v2980, 127
    %v2982 = vshll.u32 %v2981, 23
    %v2983 = vor.u32 4788187, %v2982
    %v2984 = vand.u32 2147483647, %v2983
    %v2986 = vcvt.s32.f32 %v2979
    %v2987 = vmul.f32 %v2986, %v2984
    %v2988 = vxor.u32 %v2987, 2147483648
    %v2989 = vsel %vm2868, %v2988, %v2987
    %v2990 = vsub.s32 4, %v2966
    %v2991 = vsel %vm2868, %v2990, %v2966
    %v2992 = vsel %vm2867, %v1771, %v2989
    %v2993 = vsel %vm2867, 0, %v2991
    %v2994 = vmul.f32 %v2992, %v2992
    %v2995 = vmul.f32 %v2994, -0.001358992
    %v2996 = vadd.f32 %v2995, 0.041655596
    %v2997 = vmul.f32 %v2994, %v2996
    %v2998 = vadd.f32 %v2997, -0.4999988
    %v2999 = vmul.f32 %v2994, %v2998
    %v3000 = vadd.f32 1.0, %v2999
    %v3001 = vmul.f32 %v2992, %v2992
    %v3002 = vmul.f32 %v3001, -0.00019511016
    %v3003 = vadd.f32 %v3002, 0.008332121
    %v3004 = vmul.f32 %v3001, %v3003
    %v3005 = vadd.f32 %v3004, -0.16666654
    %v3006 = vmul.f32 %v3001, %v3005
    %v3007 = vadd.f32 %v3006, 1.0
    %v3008 = vmul.f32 %v3007, %v2992
    %vm3009 = vweird.f32 %v1771
    %v3010 = vadd.s32 %v2993, 3
    %v3011 = vand.u32 %v3010, 3
    %vm3012 = vcmp.lt.s32.totalorder %v3011, 2
    %vm3013 = vcmp.eq.s32.totalorder %v3011, 0
    %v3014 = vxor.u32 %v3008, 2147483648
    %v3015 = vsel %vm3013, %v3000, %v3014
    %vm3016 = vcmp.eq.s32.totalorder %v3011, 2
    %v3017 = vxor.u32 %v3000, 2147483648
    %v3018 = vsel %vm3016, %v3017, %v3008
    %v3019 = vsel %vm3012, %v3015, %v3018
    %v3020 = vsel %vm3009, nan, %v3019
    %v3021 = vand.u32 2147483647, %v319
    %vm3022 = vcmp.le.f32.partialorder %v3021, 0.7853982
    %vm3023 = vcmp.lt.s32.totalorder %v319, 0
    %v3024 = vand.u32 %v319, 2139095040
    %v3025 = vshrl.u32 %v3024, 23
    %v3026 = vsub.s32 %v3025, 127
    %v3027 = vand.u32 2147483647, %v319
    %v3028 = vand.u32 %v3027, 8388607
    %v3029 = vor.u32 %v3028, 8388608
    %v3030 = vsub.s32 0, %v3029
    %v3031 = vadd.s32 %v3026, 1
    %vm3032 = vcmp.gt.s32.totalorder %v3031, 0
    %v3033 = vsel %vm3032, %v3031, 0
    %v3034 = vshrl.u32 %v3033, 5
    %v3035 = vand.u32 %v3033, 31
    %v3036 = vsub.s32 32, %v3035
    %v3037 = vshrl.u32 683565275, %v3036
    %v3038 = vshll.u32 683565275, %v3035
    %v3039 = vshrl.u32 2475754826, %v3036
    %v3040 = vor.u32 %v3038, %v3039
    %v3041 = vshll.u32 2475754826, %v3035
    %v3042 = vshrl.u32 2131351028, %v3036
    %v3043 = vor.u32 %v3041, %v3042
    %v3044 = vshll.u32 2131351028, %v3035
    %v3045 = vshrl.u32 2102212464, %v3036
    %v3046 = vor.u32 %v3044, %v3045
    %v3047 = vshll.u32 2102212464, %v3035
    %v3048 = vshrl.u32 920167782, %v3036
    %v3049 = vor.u32 %v3047, %v3048
    %v3050 = vshll.u32 920167782, %v3035
    %v3051 = vshrl.u32 1326507024, %v3036
    %v3052 = vor.u32 %v3050, %v3051
    %vm3053 = vcmp.lt.s32.totalorder %v3034, 1
    %vm3054 = vcmp.lt.s32.totalorder %v3034, 2
    %vm3055 = vcmp.lt.s32.totalorder %v3034, 3
    %vm3056 = vcmp.lt.s32.totalorder %v3034, 4
    %v3057 = vsel %vm3053, %v3037, %v3040
    %v3058 = vsel %vm3056, %v3046, 2102212464
    %v3059 = vsel %vm3055, %v3043, %v3058
    %v3060 = vsel %vm3054, %v3057, %v3059
    %v3061 = vsel %vm3053, %v3040, %v3043
    %v3062 = vsel %vm3056, %v3049, 920167782
    %v3063 = vsel %vm3055, %v3046, %v3062
    %v3064 = vsel %vm3054, %v3061, %v3063
    %v3065 = vsel %vm3053, %v3043, %v3046
    %v3066 = vsel %vm3056, %v3052, 1326507024
    %v3067 = vsel %vm3055, %v3049, %v3066
    %v3068 = vsel %vm3054, %v3065, %v3067
    %v3069 = vshll.u32 %v3029, 8
    %v3070 = vand.u32 %v3069, 65535
    %v3071 = vshrl.u32 %v3069, 16
    %v3072 = vand.u32 %v3068, 65535
    %v3073 = vshrl.u32 %v3068, 16
    %v3074 = vmul.u32 %v3070, %v3072
    %v3075 = vmul.u32 %v3070, %v3073
    %v3076 = vmul.u32 %v3071, %v3072
    %v3077 = vmul.u32 %v3071, %v3073
    %v3078 = vshll.u32 %v3075, 16
    %v3079 = vshrl.u32 %v3075, 16
    %v3080 = vshll.u32 %v3076, 16
    %v3081 = vshrl.u32 %v3076, 16
    %vm3082 = vc.u32 %v3074, %v3078
    %v3083 = vsel %vm3082, 1, 0
    %v3084 = vadd.s32 %v3074, %v3078
    %v3085 = vadd.s32 %v3077, %v3083
    %vm3086 = vc.u32 %v3084, %v3080
    %v3087 = vsel %vm3086, 1, 0
    %v3088 = vadd.s32 %v3084, %v3080
    %v3089 = vadd.s32 %v3085, %v3087
    %v3090 = vadd.s32 %v3089, %v3079
    %v3091 = vadd.s32 %v3090, %v3081
    %v3092 = vand.u32 %v3069, 65535
    %v3093 = vshrl.u32 %v3069, 16
    %v3094 = vand.u32 %v3064, 65535
    %v3095 = vshrl.u32 %v3064, 16
    %v3096 = vmul.u32 %v3092, %v3094
    %v3097 = vmul.u32 %v3092, %v3095
    %v3098 = vmul.u32 %v3093, %v3094
    %v3099 = vmul.u32 %v3093, %v3095
    %v3100 = vshll.u32 %v3097, 16
    %v3101 = vshrl.u32 %v3097, 16
    %v3102 = vshll.u32 %v3098, 16
    %v3103 = vshrl.u32 %v3098, 16
    %vm3104 = vc.u32 %v3096, %v3100
    %v3105 = vsel %vm3104, 1, 0
    %v3106 = vadd.s32 %v3096, %v3100
    %v3107 = vadd.s32 %v3099, %v3105
    %vm3108 = vc.u32 %v3106, %v3102
    %v3109 = vsel %vm3108, 1, 0
    %v3110 = vadd.s32 %v3106, %v3102
    %v3111 = vadd.s32 %v3107, %v3109
    %v3112 = vadd.s32 %v3111, %v3101
    %v3113 = vadd.s32 %v3112, %v3103
    %v3114 = vmul.u32 %v3069, %v3060
    %v3115 = vadd.s32 %v3091, %v3110
    %vm3116 = vc.u32 %v3091, %v3110
    %v3117 = vadd.s32 %v3113, 1
    %v3118 = vsel %vm3116, %v3117, %v3113
    %v3119 = vadd.s32 %v3114, %v3118
    %v3120 = vadd.s32 %v3119, 536870912
    %v3121 = vshrl.u32 %v3120, 30
    %v3122 = vshll.u32 %v3121, 30
    %v3123 = vsub.s32 %v3119, %v3122
    %vm3124 = vcmp.lt.s32.totalorder %v3123, 0
    %v3125 = vsub.s32 0, %v3123
    %v3126 = vsel %vm3124, %v3125, %v3123
    %v3127 = vclz %v3126
    %v3128 = vsub.s32 %v3127, 2
    %vm3129 = vcmp.gt.s32.totalorder 0, %v3128
    %v3130 = vsel %vm3129, 0, %v3128
    %v3131 = vsub.s32 32, %v3130
    %v3132 = vshll.u32 %v3123, %v3130
    %v3133 = vshrl.u32 %v3115, %v3131
    %v3134 = vor.u32 %v3132, %v3133
    %v3135 = vsub.s32 4294967266, %v3130
    %v3136 = vadd.s32 %v3135, 127
    %v3137 = vshll.u32 %v3136, 23
    %v3138 = vor.u32 4788187, %v3137
    %v3139 = vand.u32 2147483647, %v3138
    %v3141 = vcvt.s32.f32 %v3134
    %v3142 = vmul.f32 %v3141, %v3139
    %v3143 = vxor.u32 %v3142, 2147483648
    %v3144 = vsel %vm3023, %v3143, %v3142
    %v3145 = vsub.s32 4, %v3121
    %v3146 = vsel %vm3023, %v3145, %v3121
    %v3147 = vsel %vm3022, %v319, %v3144
    %v3148 = vsel %vm3022, 0, %v3146
    %v3149 = vmul.f32 %v3147, %v3147
    %v3150 = vmul.f32 %v3149, -0.001358992
    %v3151 = vadd.f32 %v3150, 0.041655596
    %v3152 = vmul.f32 %v3149, %v3151
    %v3153 = vadd.f32 %v3152, -0.4999988
    %v3154 = vmul.f32 %v3149, %v3153
    %v3155 = vadd.f32 1.0, %v3154
    %v3156 = vmul.f32 %v3147, %v3147
    %v3157 = vmul.f32 %v3156, -0.00019511016
    %v3158 = vadd.f32 %v3157, 0.008332121
    %v3159 = vmul.f32 %v3156, %v3158
    %v3160 = vadd.f32 %v3159, -0.16666654
    %v3161 = vmul.f32 %v3156, %v3160
    %v3162 = vadd.f32 %v3161, 1.0
    %v3163 = vmul.f32 %v3162, %v3147
    %vm3164 = vweird.f32 %v319
    %v3165 = vadd.s32 %v3148, 3
    %v3166 = vand.u32 %v3165, 3
    %vm3167 = vcmp.lt.s32.totalorder %v3166, 2
    %vm3168 = vcmp.eq.s32.totalorder %v3166, 0
    %v3169 = vxor.u32 %v3163, 2147483648
    %v3170 = vsel %vm3168, %v3155, %v3169
    %vm3171 = vcmp.eq.s32.totalorder %v3166, 2
    %v3172 = vxor.u32 %v3155, 2147483648
    %v3173 = vsel %vm3171, %v3172, %v3163
    %v3174 = vsel %vm3167, %v3170, %v3173
    %v3175 = vsel %vm3164, nan, %v3174
    %v3176 = vand.u32 2147483647, %v527
    %vm3177 = vcmp.le.f32.partialorder %v3176, 0.7853982
    %vm3178 = vcmp.lt.s32.totalorder %v527, 0
    %v3179 = vand.u32 %v527, 2139095040
    %v3180 = vshrl.u32 %v3179, 23
    %v3181 = vsub.s32 %v3180, 127
    %v3182 = vand.u32 2147483647, %v527
    %v3183 = vand.u32 %v3182, 8388607
    %v3184 = vor.u32 %v3183, 8388608
    %v3185 = vsub.s32 0, %v3184
    %v3186 = vadd.s32 %v3181, 1
    %vm3187 = vcmp.gt.s32.totalorder %v3186, 0
    %v3188 = vsel %vm3187, %v3186, 0
    %v3189 = vshrl.u32 %v3188, 5
    %v3190 = vand.u32 %v3188, 31
    %v3191 = vsub.s32 32, %v3190
    %v3192 = vshrl.u32 683565275, %v3191
    %v3193 = vshll.u32 683565275, %v3190
    %v3194 = vshrl.u32 2475754826, %v3191
    %v3195 = vor.u32 %v3193, %v3194
    %v3196 = vshll.u32 2475754826, %v3190
    %v3197 = vshrl.u32 2131351028, %v3191
    %v3198 = vor.u32 %v3196, %v3197
    %v3199 = vshll.u32 2131351028, %v3190
    %v3200 = vshrl.u32 2102212464, %v3191
    %v3201 = vor.u32 %v3199, %v3200
    %v3202 = vshll.u32 2102212464, %v3190
    %v3203 = vshrl.u32 920167782, %v3191
    %v3204 = vor.u32 %v3202, %v3203
    %v3205 = vshll.u32 920167782, %v3190
    %v3206 = vshrl.u32 1326507024, %v3191
    %v3207 = vor.u32 %v3205, %v3206
    %vm3208 = vcmp.lt.s32.totalorder %v3189, 1
    %vm3209 = vcmp.lt.s32.totalorder %v3189, 2
    %vm3210 = vcmp.lt.s32.totalorder %v3189, 3
    %vm3211 = vcmp.lt.s32.totalorder %v3189, 4
    %v3212 = vsel %vm3208, %v3192, %v3195
    %v3213 = vsel %vm3211, %v3201, 2102212464
    %v3214 = vsel %vm3210, %v3198, %v3213
    %v3215 = vsel %vm3209, %v3212, %v3214
    %v3216 = vsel %vm3208, %v3195, %v3198
    %v3217 = vsel %vm3211, %v3204, 920167782
    %v3218 = vsel %vm3210, %v3201, %v3217
    %v3219 = vsel %vm3209, %v3216, %v3218
    %v3220 = vsel %vm3208, %v3198, %v3201
    %v3221 = vsel %vm3211, %v3207, 1326507024
    %v3222 = vsel %vm3210, %v3204, %v3221
    %v3223 = vsel %vm3209, %v3220, %v3222
    %v3224 = vshll.u32 %v3184, 8
    %v3225 = vand.u32 %v3224, 65535
    %v3226 = vshrl.u32 %v3224, 16
    %v3227 = vand.u32 %v3223, 65535
    %v3228 = vshrl.u32 %v3223, 16
    %v3229 = vmul.u32 %v3225, %v3227
    %v3230 = vmul.u32 %v3225, %v3228
    %v3231 = vmul.u32 %v3226, %v3227
    %v3232 = vmul.u32 %v3226, %v3228
    %v3233 = vshll.u32 %v3230, 16
    %v3234 = vshrl.u32 %v3230, 16
    %v3235 = vshll.u32 %v3231, 16
    %v3236 = vshrl.u32 %v3231, 16
    %vm3237 = vc.u32 %v3229, %v3233
    %v3238 = vsel %vm3237, 1, 0
    %v3239 = vadd.s32 %v3229, %v3233
    %v3240 = vadd.s32 %v3232, %v3238
    %vm3241 = vc.u32 %v3239, %v3235
    %v3242 = vsel %vm3241, 1, 0
    %v3243 = vadd.s32 %v3239, %v3235
    %v3244 = vadd.s32 %v3240, %v3242
    %v3245 = vadd.s32 %v3244, %v3234
    %v3246 = vadd.s32 %v3245, %v3236
    %v3247 = vand.u32 %v3224, 65535
    %v3248 = vshrl.u32 %v3224, 16
    %v3249 = vand.u32 %v3219, 65535
    %v3250 = vshrl.u32 %v3219, 16
    %v3251 = vmul.u32 %v3247, %v3249
    %v3252 = vmul.u32 %v3247, %v3250
    %v3253 = vmul.u32 %v3248, %v3249
    %v3254 = vmul.u32 %v3248, %v3250
    %v3255 = vshll.u32 %v3252, 16
    %v3256 = vshrl.u32 %v3252, 16
    %v3257 = vshll.u32 %v3253, 16
    %v3258 = vshrl.u32 %v3253, 16
    %vm3259 = vc.u32 %v3251, %v3255
    %v3260 = vsel %vm3259, 1, 0
    %v3261 = vadd.s32 %v3251, %v3255
    %v3262 = vadd.s32 %v3254, %v3260
    %vm3263 = vc.u32 %v3261, %v3257
    %v3264 = vsel %vm3263, 1, 0
    %v3265 = vadd.s32 %v3261, %v3257
    %v3266 = vadd.s32 %v3262, %v3264
    %v3267 = vadd.s32 %v3266, %v3256
    %v3268 = vadd.s32 %v3267, %v3258
    %v3269 = vmul.u32 %v3224, %v3215
    %v3270 = vadd.s32 %v3246, %v3265
    %vm3271 = vc.u32 %v3246, %v3265
    %v3272 = vadd.s32 %v3268, 1
    %v3273 = vsel %vm3271, %v3272, %v3268
    %v3274 = vadd.s32 %v3269, %v3273
    %v3275 = vadd.s32 %v3274, 536870912
    %v3276 = vshrl.u32 %v3275, 30
    %v3277 = vshll.u32 %v3276, 30
    %v3278 = vsub.s32 %v3274, %v3277
    %vm3279 = vcmp.lt.s32.totalorder %v3278, 0
    %v3280 = vsub.s32 0, %v3278
    %v3281 = vsel %vm3279, %v3280, %v3278
    %v3282 = vclz %v3281
    %v3283 = vsub.s32 %v3282, 2
    %vm3284 = vcmp.gt.s32.totalorder 0, %v3283
    %v3285 = vsel %vm3284, 0, %v3283
    %v3286 = vsub.s32 32, %v3285
    %v3287 = vshll.u32 %v3278, %v3285
    %v3288 = vshrl.u32 %v3270, %v3286
    %v3289 = vor.u32 %v3287, %v3288
    %v3290 = vsub.s32 4294967266, %v3285
    %v3291 = vadd.s32 %v3290, 127
    %v3292 = vshll.u32 %v3291, 23
    %v3293 = vor.u32 4788187, %v3292
    %v3294 = vand.u32 2147483647, %v3293
    %v3296 = vcvt.s32.f32 %v3289
    %v3297 = vmul.f32 %v3296, %v3294
    %v3298 = vxor.u32 %v3297, 2147483648
    %v3299 = vsel %vm3178, %v3298, %v3297
    %v3300 = vsub.s32 4, %v3276
    %v3301 = vsel %vm3178, %v3300, %v3276
    %v3302 = vsel %vm3177, %v527, %v3299
    %v3303 = vsel %vm3177, 0, %v3301
    %v3304 = vmul.f32 %v3302, %v3302
    %v3305 = vmul.f32 %v3304, -0.001358992
    %v3306 = vadd.f32 %v3305, 0.041655596
    %v3307 = vmul.f32 %v3304, %v3306
    %v3308 = vadd.f32 %v3307, -0.4999988
    %v3309 = vmul.f32 %v3304, %v3308
    %v3310 = vadd.f32 1.0, %v3309
    %v3311 = vmul.f32 %v3302, %v3302
    %v3312 = vmul.f32 %v3311, -0.00019511016
    %v3313 = vadd.f32 %v3312, 0.008332121
    %v3314 = vmul.f32 %v3311, %v3313
    %v3315 = vadd.f32 %v3314, -0.16666654
    %v3316 = vmul.f32 %v3311, %v3315
    %v3317 = vadd.f32 %v3316, 1.0
    %v3318 = vmul.f32 %v3317, %v3302
    %vm3319 = vweird.f32 %v527
    %v3320 = vadd.s32 %v3303, 3
    %v3321 = vand.u32 %v3320, 3
    %vm3322 = vcmp.lt.s32.totalorder %v3321, 2
    %vm3323 = vcmp.eq.s32.totalorder %v3321, 0
    %v3324 = vxor.u32 %v3318, 2147483648
    %v3325 = vsel %vm3323, %v3310, %v3324
    %vm3326 = vcmp.eq.s32.totalorder %v3321, 2
    %v3327 = vxor.u32 %v3310, 2147483648
    %v3328 = vsel %vm3326, %v3327, %v3318
    %v3329 = vsel %vm3322, %v3325, %v3328
    %v3330 = vsel %vm3319, nan, %v3329
    %v3331 = vand.u32 2147483647, %v735
    %vm3332 = vcmp.le.f32.partialorder %v3331, 0.7853982
    %vm3333 = vcmp.lt.s32.totalorder %v735, 0
    %v3334 = vand.u32 %v735, 2139095040
    %v3335 = vshrl.u32 %v3334, 23
    %v3336 = vsub.s32 %v3335, 127
    %v3337 = vand.u32 2147483647, %v735
    %v3338 = vand.u32 %v3337, 8388607
    %v3339 = vor.u32 %v3338, 8388608
    %v3340 = vsub.s32 0, %v3339
    %v3341 = vadd.s32 %v3336, 1
    %vm3342 = vcmp.gt.s32.totalorder %v3341, 0
    %v3343 = vsel %vm3342, %v3341, 0
    %v3344 = vshrl.u32 %v3343, 5
    %v3345 = vand.u32 %v3343, 31
    %v3346 = vsub.s32 32, %v3345
    %v3347 = vshrl.u32 683565275, %v3346
    %v3348 = vshll.u32 683565275, %v3345
    %v3349 = vshrl.u32 2475754826, %v3346
    %v3350 = vor.u32 %v3348, %v3349
    %v3351 = vshll.u32 2475754826, %v3345
    %v3352 = vshrl.u32 2131351028, %v3346
    %v3353 = vor.u32 %v3351, %v3352
    %v3354 = vshll.u32 2131351028, %v3345
    %v3355 = vshrl.u32 2102212464, %v3346
    %v3356 = vor.u32 %v3354, %v3355
    %v3357 = vshll.u32 2102212464, %v3345
    %v3358 = vshrl.u32 920167782, %v3346
    %v3359 = vor.u32 %v3357, %v3358
    %v3360 = vshll.u32 920167782, %v3345
    %v3361 = vshrl.u32 1326507024, %v3346
    %v3362 = vor.u32 %v3360, %v3361
    %vm3363 = vcmp.lt.s32.totalorder %v3344, 1
    %vm3364 = vcmp.lt.s32.totalorder %v3344, 2
    %vm3365 = vcmp.lt.s32.totalorder %v3344, 3
    %vm3366 = vcmp.lt.s32.totalorder %v3344, 4
    %v3367 = vsel %vm3363, %v3347, %v3350
    %v3368 = vsel %vm3366, %v3356, 2102212464
    %v3369 = vsel %vm3365, %v3353, %v3368
    %v3370 = vsel %vm3364, %v3367, %v3369
    %v3371 = vsel %vm3363, %v3350, %v3353
    %v3372 = vsel %vm3366, %v3359, 920167782
    %v3373 = vsel %vm3365, %v3356, %v3372
    %v3374 = vsel %vm3364, %v3371, %v3373
    %v3375 = vsel %vm3363, %v3353, %v3356
    %v3376 = vsel %vm3366, %v3362, 1326507024
    %v3377 = vsel %vm3365, %v3359, %v3376
    %v3378 = vsel %vm3364, %v3375, %v3377
    %v3379 = vshll.u32 %v3339, 8
    %v3380 = vand.u32 %v3379, 65535
    %v3381 = vshrl.u32 %v3379, 16
    %v3382 = vand.u32 %v3378, 65535
    %v3383 = vshrl.u32 %v3378, 16
    %v3384 = vmul.u32 %v3380, %v3382
    %v3385 = vmul.u32 %v3380, %v3383
    %v3386 = vmul.u32 %v3381, %v3382
    %v3387 = vmul.u32 %v3381, %v3383
    %v3388 = vshll.u32 %v3385, 16
    %v3389 = vshrl.u32 %v3385, 16
    %v3390 = vshll.u32 %v3386, 16
    %v3391 = vshrl.u32 %v3386, 16
    %vm3392 = vc.u32 %v3384, %v3388
    %v3393 = vsel %vm3392, 1, 0
    %v3394 = vadd.s32 %v3384, %v3388
    %v3395 = vadd.s32 %v3387, %v3393
    %vm3396 = vc.u32 %v3394, %v3390
    %v3397 = vsel %vm3396, 1, 0
    %v3398 = vadd.s32 %v3394, %v3390
    %v3399 = vadd.s32 %v3395, %v3397
    %v3400 = vadd.s32 %v3399, %v3389
    %v3401 = vadd.s32 %v3400, %v3391
    %v3402 = vand.u32 %v3379, 65535
    %v3403 = vshrl.u32 %v3379, 16
    %v3404 = vand.u32 %v3374, 65535
    %v3405 = vshrl.u32 %v3374, 16
    %v3406 = vmul.u32 %v3402, %v3404
    %v3407 = vmul.u32 %v3402, %v3405
    %v3408 = vmul.u32 %v3403, %v3404
    %v3409 = vmul.u32 %v3403, %v3405
    %v3410 = vshll.u32 %v3407, 16
    %v3411 = vshrl.u32 %v3407, 16
    %v3412 = vshll.u32 %v3408, 16
    %v3413 = vshrl.u32 %v3408, 16
    %vm3414 = vc.u32 %v3406, %v3410
    %v3415 = vsel %vm3414, 1, 0
    %v3416 = vadd.s32 %v3406, %v3410
    %v3417 = vadd.s32 %v3409, %v3415
    %vm3418 = vc.u32 %v3416, %v3412
    %v3419 = vsel %vm3418, 1, 0
    %v3420 = vadd.s32 %v3416, %v3412
    %v3421 = vadd.s32 %v3417, %v3419
    %v3422 = vadd.s32 %v3421, %v3411
    %v3423 = vadd.s32 %v3422, %v3413
    %v3424 = vmul.u32 %v3379, %v3370
    %v3425 = vadd.s32 %v3401, %v3420
    %vm3426 = vc.u32 %v3401, %v3420
    %v3427 = vadd.s32 %v3423, 1
    %v3428 = vsel %vm3426, %v3427, %v3423
    %v3429 = vadd.s32 %v3424, %v3428
    %v3430 = vadd.s32 %v3429, 536870912
    %v3431 = vshrl.u32 %v3430, 30
    %v3432 = vshll.u32 %v3431, 30
    %v3433 = vsub.s32 %v3429, %v3432
    %vm3434 = vcmp.lt.s32.totalorder %v3433, 0
    %v3435 = vsub.s32 0, %v3433
    %v3436 = vsel %vm3434, %v3435, %v3433
    %v3437 = vclz %v3436
    %v3438 = vsub.s32 %v3437, 2
    %vm3439 = vcmp.gt.s32.totalorder 0, %v3438
    %v3440 = vsel %vm3439, 0, %v3438
    %v3441 = vsub.s32 32, %v3440
    %v3442 = vshll.u32 %v3433, %v3440
    %v3443 = vshrl.u32 %v3425, %v3441
    %v3444 = vor.u32 %v3442, %v3443
    %v3445 = vsub.s32 4294967266, %v3440
    %v3446 = vadd.s32 %v3445, 127
    %v3447 = vshll.u32 %v3446, 23
    %v3448 = vor.u32 4788187, %v3447
    %v3449 = vand.u32 2147483647, %v3448
    %v3451 = vcvt.s32.f32 %v3444
    %v3452 = vmul.f32 %v3451, %v3449
    %v3453 = vxor.u32 %v3452, 2147483648
    %v3454 = vsel %vm3333, %v3453, %v3452
    %v3455 = vsub.s32 4, %v3431
    %v3456 = vsel %vm3333, %v3455, %v3431
    %v3457 = vsel %vm3332, %v735, %v3454
    %v3458 = vsel %vm3332, 0, %v3456
    %v3459 = vmul.f32 %v3457, %v3457
    %v3460 = vmul.f32 %v3459, -0.001358992
    %v3461 = vadd.f32 %v3460, 0.041655596
    %v3462 = vmul.f32 %v3459, %v3461
    %v3463 = vadd.f32 %v3462, -0.4999988
    %v3464 = vmul.f32 %v3459, %v3463
    %v3465 = vadd.f32 1.0, %v3464
    %v3466 = vmul.f32 %v3457, %v3457
    %v3467 = vmul.f32 %v3466, -0.00019511016
    %v3468 = vadd.f32 %v3467, 0.008332121
    %v3469 = vmul.f32 %v3466, %v3468
    %v3470 = vadd.f32 %v3469, -0.16666654
    %v3471 = vmul.f32 %v3466, %v3470
    %v3472 = vadd.f32 %v3471, 1.0
    %v3473 = vmul.f32 %v3472, %v3457
    %vm3474 = vweird.f32 %v735
    %v3475 = vadd.s32 %v3458, 3
    %v3476 = vand.u32 %v3475, 3
    %vm3477 = vcmp.lt.s32.totalorder %v3476, 2
    %vm3478 = vcmp.eq.s32.totalorder %v3476, 0
    %v3479 = vxor.u32 %v3473, 2147483648
    %v3480 = vsel %vm3478, %v3465, %v3479
    %vm3481 = vcmp.eq.s32.totalorder %v3476, 2
    %v3482 = vxor.u32 %v3465, 2147483648
    %v3483 = vsel %vm3481, %v3482, %v3473
    %v3484 = vsel %vm3477, %v3480, %v3483
    %v3485 = vsel %vm3474, nan, %v3484
    %v3486 = vand.u32 2147483647, %v943
    %vm3487 = vcmp.le.f32.partialorder %v3486, 0.7853982
    %vm3488 = vcmp.lt.s32.totalorder %v943, 0
    %v3489 = vand.u32 %v943, 2139095040
    %v3490 = vshrl.u32 %v3489, 23
    %v3491 = vsub.s32 %v3490, 127
    %v3492 = vand.u32 2147483647, %v943
    %v3493 = vand.u32 %v3492, 8388607
    %v3494 = vor.u32 %v3493, 8388608
    %v3495 = vsub.s32 0, %v3494
    %v3496 = vadd.s32 %v3491, 1
    %vm3497 = vcmp.gt.s32.totalorder %v3496, 0
    %v3498 = vsel %vm3497, %v3496, 0
    %v3499 = vshrl.u32 %v3498, 5
    %v3500 = vand.u32 %v3498, 31
    %v3501 = vsub.s32 32, %v3500
    %v3502 = vshrl.u32 683565275, %v3501
    %v3503 = vshll.u32 683565275, %v3500
    %v3504 = vshrl.u32 2475754826, %v3501
    %v3505 = vor.u32 %v3503, %v3504
    %v3506 = vshll.u32 2475754826, %v3500
    %v3507 = vshrl.u32 2131351028, %v3501
    %v3508 = vor.u32 %v3506, %v3507
    %v3509 = vshll.u32 2131351028, %v3500
    %v3510 = vshrl.u32 2102212464, %v3501
    %v3511 = vor.u32 %v3509, %v3510
    %v3512 = vshll.u32 2102212464, %v3500
    %v3513 = vshrl.u32 920167782, %v3501
    %v3514 = vor.u32 %v3512, %v3513
    %v3515 = vshll.u32 920167782, %v3500
    %v3516 = vshrl.u32 1326507024, %v3501
    %v3517 = vor.u32 %v3515, %v3516
    %vm3518 = vcmp.lt.s32.totalorder %v3499, 1
    %vm3519 = vcmp.lt.s32.totalorder %v3499, 2
    %vm3520 = vcmp.lt.s32.totalorder %v3499, 3
    %vm3521 = vcmp.lt.s32.totalorder %v3499, 4
    %v3522 = vsel %vm3518, %v3502, %v3505
    %v3523 = vsel %vm3521, %v3511, 2102212464
    %v3524 = vsel %vm3520, %v3508, %v3523
    %v3525 = vsel %vm3519, %v3522, %v3524
    %v3526 = vsel %vm3518, %v3505, %v3508
    %v3527 = vsel %vm3521, %v3514, 920167782
    %v3528 = vsel %vm3520, %v3511, %v3527
    %v3529 = vsel %vm3519, %v3526, %v3528
    %v3530 = vsel %vm3518, %v3508, %v3511
    %v3531 = vsel %vm3521, %v3517, 1326507024
    %v3532 = vsel %vm3520, %v3514, %v3531
    %v3533 = vsel %vm3519, %v3530, %v3532
    %v3534 = vshll.u32 %v3494, 8
    %v3535 = vand.u32 %v3534, 65535
    %v3536 = vshrl.u32 %v3534, 16
    %v3537 = vand.u32 %v3533, 65535
    %v3538 = vshrl.u32 %v3533, 16
    %v3539 = vmul.u32 %v3535, %v3537
    %v3540 = vmul.u32 %v3535, %v3538
    %v3541 = vmul.u32 %v3536, %v3537
    %v3542 = vmul.u32 %v3536, %v3538
    %v3543 = vshll.u32 %v3540, 16
    %v3544 = vshrl.u32 %v3540, 16
    %v3545 = vshll.u32 %v3541, 16
    %v3546 = vshrl.u32 %v3541, 16
    %vm3547 = vc.u32 %v3539, %v3543
    %v3548 = vsel %vm3547, 1, 0
    %v3549 = vadd.s32 %v3539, %v3543
    %v3550 = vadd.s32 %v3542, %v3548
    %vm3551 = vc.u32 %v3549, %v3545
    %v3552 = vsel %vm3551, 1, 0
    %v3553 = vadd.s32 %v3549, %v3545
    %v3554 = vadd.s32 %v3550, %v3552
    %v3555 = vadd.s32 %v3554, %v3544
    %v3556 = vadd.s32 %v3555, %v3546
    %v3557 = vand.u32 %v3534, 65535
    %v3558 = vshrl.u32 %v3534, 16
    %v3559 = vand.u32 %v3529, 65535
    %v3560 = vshrl.u32 %v3529, 16
    %v3561 = vmul.u32 %v3557, %v3559
    %v3562 = vmul.u32 %v3557, %v3560
    %v3563 = vmul.u32 %v3558, %v3559
    %v3564 = vmul.u32 %v3558, %v3560
    %v3565 = vshll.u32 %v3562, 16
    %v3566 = vshrl.u32 %v3562, 16
    %v3567 = vshll.u32 %v3563, 16
    %v3568 = vshrl.u32 %v3563, 16
    %vm3569 = vc.u32 %v3561, %v3565
    %v3570 = vsel %vm3569, 1, 0
    %v3571 = vadd.s32 %v3561, %v3565
    %v3572 = vadd.s32 %v3564, %v3570
    %vm3573 = vc.u32 %v3571, %v3567
    %v3574 = vsel %vm3573, 1, 0
    %v3575 = vadd.s32 %v3571, %v3567
    %v3576 = vadd.s32 %v3572, %v3574
    %v3577 = vadd.s32 %v3576, %v3566
    %v3578 = vadd.s32 %v3577, %v3568
    %v3579 = vmul.u32 %v3534, %v3525
    %v3580 = vadd.s32 %v3556, %v3575
    %vm3581 = vc.u32 %v3556, %v3575
    %v3582 = vadd.s32 %v3578, 1
    %v3583 = vsel %vm3581, %v3582, %v3578
    %v3584 = vadd.s32 %v3579, %v3583
    %v3585 = vadd.s32 %v3584, 536870912
    %v3586 = vshrl.u32 %v3585, 30
    %v3587 = vshll.u32 %v3586, 30
    %v3588 = vsub.s32 %v3584, %v3587
    %vm3589 = vcmp.lt.s32.totalorder %v3588, 0
    %v3590 = vsub.s32 0, %v3588
    %v3591 = vsel %vm3589, %v3590, %v3588
    %v3592 = vclz %v3591
    %v3593 = vsub.s32 %v3592, 2
    %vm3594 = vcmp.gt.s32.totalorder 0, %v3593
    %v3595 = vsel %vm3594, 0, %v3593
    %v3596 = vsub.s32 32, %v3595
    %v3597 = vshll.u32 %v3588, %v3595
    %v3598 = vshrl.u32 %v3580, %v3596
    %v3599 = vor.u32 %v3597, %v3598
    %v3600 = vsub.s32 4294967266, %v3595
    %v3601 = vadd.s32 %v3600, 127
    %v3602 = vshll.u32 %v3601, 23
    %v3603 = vor.u32 4788187, %v3602
    %v3604 = vand.u32 2147483647, %v3603
    %v3606 = vcvt.s32.f32 %v3599
    %v3607 = vmul.f32 %v3606, %v3604
    %v3608 = vxor.u32 %v3607, 2147483648
    %v3609 = vsel %vm3488, %v3608, %v3607
    %v3610 = vsub.s32 4, %v3586
    %v3611 = vsel %vm3488, %v3610, %v3586
    %v3612 = vsel %vm3487, %v943, %v3609
    %v3613 = vsel %vm3487, 0, %v3611
    %v3614 = vmul.f32 %v3612, %v3612
    %v3615 = vmul.f32 %v3614, -0.001358992
    %v3616 = vadd.f32 %v3615, 0.041655596
    %v3617 = vmul.f32 %v3614, %v3616
    %v3618 = vadd.f32 %v3617, -0.4999988
    %v3619 = vmul.f32 %v3614, %v3618
    %v3620 = vadd.f32 1.0, %v3619
    %v3621 = vmul.f32 %v3612, %v3612
    %v3622 = vmul.f32 %v3621, -0.00019511016
    %v3623 = vadd.f32 %v3622, 0.008332121
    %v3624 = vmul.f32 %v3621, %v3623
    %v3625 = vadd.f32 %v3624, -0.16666654
    %v3626 = vmul.f32 %v3621, %v3625
    %v3627 = vadd.f32 %v3626, 1.0
    %v3628 = vmul.f32 %v3627, %v3612
    %vm3629 = vweird.f32 %v943
    %v3630 = vadd.s32 %v3613, 3
    %v3631 = vand.u32 %v3630, 3
    %vm3632 = vcmp.lt.s32.totalorder %v3631, 2
    %vm3633 = vcmp.eq.s32.totalorder %v3631, 0
    %v3634 = vxor.u32 %v3628, 2147483648
    %v3635 = vsel %vm3633, %v3620, %v3634
    %vm3636 = vcmp.eq.s32.totalorder %v3631, 2
    %v3637 = vxor.u32 %v3620, 2147483648
    %v3638 = vsel %vm3636, %v3637, %v3628
    %v3639 = vsel %vm3632, %v3635, %v3638
    %v3640 = vsel %vm3629, nan, %v3639
    %v3641 = vand.u32 2147483647, %v1151
    %vm3642 = vcmp.le.f32.partialorder %v3641, 0.7853982
    %vm3643 = vcmp.lt.s32.totalorder %v1151, 0
    %v3644 = vand.u32 %v1151, 2139095040
    %v3645 = vshrl.u32 %v3644, 23
    %v3646 = vsub.s32 %v3645, 127
    %v3647 = vand.u32 2147483647, %v1151
    %v3648 = vand.u32 %v3647, 8388607
    %v3649 = vor.u32 %v3648, 8388608
    %v3650 = vsub.s32 0, %v3649
    %v3651 = vadd.s32 %v3646, 1
    %vm3652 = vcmp.gt.s32.totalorder %v3651, 0
    %v3653 = vsel %vm3652, %v3651, 0
    %v3654 = vshrl.u32 %v3653, 5
    %v3655 = vand.u32 %v3653, 31
    %v3656 = vsub.s32 32, %v3655
    %v3657 = vshrl.u32 683565275, %v3656
    %v3658 = vshll.u32 683565275, %v3655
    %v3659 = vshrl.u32 2475754826, %v3656
    %v3660 = vor.u32 %v3658, %v3659
    %v3661 = vshll.u32 2475754826, %v3655
    %v3662 = vshrl.u32 2131351028, %v3656
    %v3663 = vor.u32 %v3661, %v3662
    %v3664 = vshll.u32 2131351028, %v3655
    %v3665 = vshrl.u32 2102212464, %v3656
    %v3666 = vor.u32 %v3664, %v3665
    %v3667 = vshll.u32 2102212464, %v3655
    %v3668 = vshrl.u32 920167782, %v3656
    %v3669 = vor.u32 %v3667, %v3668
    %v3670 = vshll.u32 920167782, %v3655
    %v3671 = vshrl.u32 1326507024, %v3656
    %v3672 = vor.u32 %v3670, %v3671
    %vm3673 = vcmp.lt.s32.totalorder %v3654, 1
    %vm3674 = vcmp.lt.s32.totalorder %v3654, 2
    %vm3675 = vcmp.lt.s32.totalorder %v3654, 3
    %vm3676 = vcmp.lt.s32.totalorder %v3654, 4
    %v3677 = vsel %vm3673, %v3657, %v3660
    %v3678 = vsel %vm3676, %v3666, 2102212464
    %v3679 = vsel %vm3675, %v3663, %v3678
    %v3680 = vsel %vm3674, %v3677, %v3679
    %v3681 = vsel %vm3673, %v3660, %v3663
    %v3682 = vsel %vm3676, %v3669, 920167782
    %v3683 = vsel %vm3675, %v3666, %v3682
    %v3684 = vsel %vm3674, %v3681, %v3683
    %v3685 = vsel %vm3673, %v3663, %v3666
    %v3686 = vsel %vm3676, %v3672, 1326507024
    %v3687 = vsel %vm3675, %v3669, %v3686
    %v3688 = vsel %vm3674, %v3685, %v3687
    %v3689 = vshll.u32 %v3649, 8
    %v3690 = vand.u32 %v3689, 65535
    %v3691 = vshrl.u32 %v3689, 16
    %v3692 = vand.u32 %v3688, 65535
    %v3693 = vshrl.u32 %v3688, 16
    %v3694 = vmul.u32 %v3690, %v3692
    %v3695 = vmul.u32 %v3690, %v3693
    %v3696 = vmul.u32 %v3691, %v3692
    %v3697 = vmul.u32 %v3691, %v3693
    %v3698 = vshll.u32 %v3695, 16
    %v3699 = vshrl.u32 %v3695, 16
    %v3700 = vshll.u32 %v3696, 16
    %v3701 = vshrl.u32 %v3696, 16
    %vm3702 = vc.u32 %v3694, %v3698
    %v3703 = vsel %vm3702, 1, 0
    %v3704 = vadd.s32 %v3694, %v3698
    %v3705 = vadd.s32 %v3697, %v3703
    %vm3706 = vc.u32 %v3704, %v3700
    %v3707 = vsel %vm3706, 1, 0
    %v3708 = vadd.s32 %v3704, %v3700
    %v3709 = vadd.s32 %v3705, %v3707
    %v3710 = vadd.s32 %v3709, %v3699
    %v3711 = vadd.s32 %v3710, %v3701
    %v3712 = vand.u32 %v3689, 65535
    %v3713 = vshrl.u32 %v3689, 16
    %v3714 = vand.u32 %v3684, 65535
    %v3715 = vshrl.u32 %v3684, 16
    %v3716 = vmul.u32 %v3712, %v3714
    %v3717 = vmul.u32 %v3712, %v3715
    %v3718 = vmul.u32 %v3713, %v3714
    %v3719 = vmul.u32 %v3713, %v3715
    %v3720 = vshll.u32 %v3717, 16
    %v3721 = vshrl.u32 %v3717, 16
    %v3722 = vshll.u32 %v3718, 16
    %v3723 = vshrl.u32 %v3718, 16
    %vm3724 = vc.u32 %v3716, %v3720
    %v3725 = vsel %vm3724, 1, 0
    %v3726 = vadd.s32 %v3716, %v3720
    %v3727 = vadd.s32 %v3719, %v3725
    %vm3728 = vc.u32 %v3726, %v3722
    %v3729 = vsel %vm3728, 1, 0
    %v3730 = vadd.s32 %v3726, %v3722
    %v3731 = vadd.s32 %v3727, %v3729
    %v3732 = vadd.s32 %v3731, %v3721
    %v3733 = vadd.s32 %v3732, %v3723
    %v3734 = vmul.u32 %v3689, %v3680
    %v3735 = vadd.s32 %v3711, %v3730
    %vm3736 = vc.u32 %v3711, %v3730
    %v3737 = vadd.s32 %v3733, 1
    %v3738 = vsel %vm3736, %v3737, %v3733
    %v3739 = vadd.s32 %v3734, %v3738
    %v3740 = vadd.s32 %v3739, 536870912
    %v3741 = vshrl.u32 %v3740, 30
    %v3742 = vshll.u32 %v3741, 30
    %v3743 = vsub.s32 %v3739, %v3742
    %vm3744 = vcmp.lt.s32.totalorder %v3743, 0
    %v3745 = vsub.s32 0, %v3743
    %v3746 = vsel %vm3744, %v3745, %v3743
    %v3747 = vclz %v3746
    %v3748 = vsub.s32 %v3747, 2
    %vm3749 = vcmp.gt.s32.totalorder 0, %v3748
    %v3750 = vsel %vm3749, 0, %v3748
    %v3751 = vsub.s32 32, %v3750
    %v3752 = vshll.u32 %v3743, %v3750
    %v3753 = vshrl.u32 %v3735, %v3751
    %v3754 = vor.u32 %v3752, %v3753
    %v3755 = vsub.s32 4294967266, %v3750
    %v3756 = vadd.s32 %v3755, 127
    %v3757 = vshll.u32 %v3756, 23
    %v3758 = vor.u32 4788187, %v3757
    %v3759 = vand.u32 2147483647, %v3758
    %v3761 = vcvt.s32.f32 %v3754
    %v3762 = vmul.f32 %v3761, %v3759
    %v3763 = vxor.u32 %v3762, 2147483648
    %v3764 = vsel %vm3643, %v3763, %v3762
    %v3765 = vsub.s32 4, %v3741
    %v3766 = vsel %vm3643, %v3765, %v3741
    %v3767 = vsel %vm3642, %v1151, %v3764
    %v3768 = vsel %vm3642, 0, %v3766
    %v3769 = vmul.f32 %v3767, %v3767
    %v3770 = vmul.f32 %v3769, -0.001358992
    %v3771 = vadd.f32 %v3770, 0.041655596
    %v3772 = vmul.f32 %v3769, %v3771
    %v3773 = vadd.f32 %v3772, -0.4999988
    %v3774 = vmul.f32 %v3769, %v3773
    %v3775 = vadd.f32 1.0, %v3774
    %v3776 = vmul.f32 %v3767, %v3767
    %v3777 = vmul.f32 %v3776, -0.00019511016
    %v3778 = vadd.f32 %v3777, 0.008332121
    %v3779 = vmul.f32 %v3776, %v3778
    %v3780 = vadd.f32 %v3779, -0.16666654
    %v3781 = vmul.f32 %v3776, %v3780
    %v3782 = vadd.f32 %v3781, 1.0
    %v3783 = vmul.f32 %v3782, %v3767
    %vm3784 = vweird.f32 %v1151
    %v3785 = vadd.s32 %v3768, 3
    %v3786 = vand.u32 %v3785, 3
    %vm3787 = vcmp.lt.s32.totalorder %v3786, 2
    %vm3788 = vcmp.eq.s32.totalorder %v3786, 0
    %v3789 = vxor.u32 %v3783, 2147483648
    %v3790 = vsel %vm3788, %v3775, %v3789
    %vm3791 = vcmp.eq.s32.totalorder %v3786, 2
    %v3792 = vxor.u32 %v3775, 2147483648
    %v3793 = vsel %vm3791, %v3792, %v3783
    %v3794 = vsel %vm3787, %v3790, %v3793
    %v3795 = vsel %vm3784, nan, %v3794
    %v3796 = vand.u32 2147483647, %v1359
    %vm3797 = vcmp.le.f32.partialorder %v3796, 0.7853982
    %vm3798 = vcmp.lt.s32.totalorder %v1359, 0
    %v3799 = vand.u32 %v1359, 2139095040
    %v3800 = vshrl.u32 %v3799, 23
    %v3801 = vsub.s32 %v3800, 127
    %v3802 = vand.u32 2147483647, %v1359
    %v3803 = vand.u32 %v3802, 8388607
    %v3804 = vor.u32 %v3803, 8388608
    %v3805 = vsub.s32 0, %v3804
    %v3806 = vadd.s32 %v3801, 1
    %vm3807 = vcmp.gt.s32.totalorder %v3806, 0
    %v3808 = vsel %vm3807, %v3806, 0
    %v3809 = vshrl.u32 %v3808, 5
    %v3810 = vand.u32 %v3808, 31
    %v3811 = vsub.s32 32, %v3810
    %v3812 = vshrl.u32 683565275, %v3811
    %v3813 = vshll.u32 683565275, %v3810
    %v3814 = vshrl.u32 2475754826, %v3811
    %v3815 = vor.u32 %v3813, %v3814
    %v3816 = vshll.u32 2475754826, %v3810
    %v3817 = vshrl.u32 2131351028, %v3811
    %v3818 = vor.u32 %v3816, %v3817
    %v3819 = vshll.u32 2131351028, %v3810
    %v3820 = vshrl.u32 2102212464, %v3811
    %v3821 = vor.u32 %v3819, %v3820
    %v3822 = vshll.u32 2102212464, %v3810
    %v3823 = vshrl.u32 920167782, %v3811
    %v3824 = vor.u32 %v3822, %v3823
    %v3825 = vshll.u32 920167782, %v3810
    %v3826 = vshrl.u32 1326507024, %v3811
    %v3827 = vor.u32 %v3825, %v3826
    %vm3828 = vcmp.lt.s32.totalorder %v3809, 1
    %vm3829 = vcmp.lt.s32.totalorder %v3809, 2
    %vm3830 = vcmp.lt.s32.totalorder %v3809, 3
    %vm3831 = vcmp.lt.s32.totalorder %v3809, 4
    %v3832 = vsel %vm3828, %v3812, %v3815
    %v3833 = vsel %vm3831, %v3821, 2102212464
    %v3834 = vsel %vm3830, %v3818, %v3833
    %v3835 = vsel %vm3829, %v3832, %v3834
    %v3836 = vsel %vm3828, %v3815, %v3818
    %v3837 = vsel %vm3831, %v3824, 920167782
    %v3838 = vsel %vm3830, %v3821, %v3837
    %v3839 = vsel %vm3829, %v3836, %v3838
    %v3840 = vsel %vm3828, %v3818, %v3821
    %v3841 = vsel %vm3831, %v3827, 1326507024
    %v3842 = vsel %vm3830, %v3824, %v3841
    %v3843 = vsel %vm3829, %v3840, %v3842
    %v3844 = vshll.u32 %v3804, 8
    %v3845 = vand.u32 %v3844, 65535
    %v3846 = vshrl.u32 %v3844, 16
    %v3847 = vand.u32 %v3843, 65535
    %v3848 = vshrl.u32 %v3843, 16
    %v3849 = vmul.u32 %v3845, %v3847
    %v3850 = vmul.u32 %v3845, %v3848
    %v3851 = vmul.u32 %v3846, %v3847
    %v3852 = vmul.u32 %v3846, %v3848
    %v3853 = vshll.u32 %v3850, 16
    %v3854 = vshrl.u32 %v3850, 16
    %v3855 = vshll.u32 %v3851, 16
    %v3856 = vshrl.u32 %v3851, 16
    %vm3857 = vc.u32 %v3849, %v3853
    %v3858 = vsel %vm3857, 1, 0
    %v3859 = vadd.s32 %v3849, %v3853
    %v3860 = vadd.s32 %v3852, %v3858
    %vm3861 = vc.u32 %v3859, %v3855
    %v3862 = vsel %vm3861, 1, 0
    %v3863 = vadd.s32 %v3859, %v3855
    %v3864 = vadd.s32 %v3860, %v3862
    %v3865 = vadd.s32 %v3864, %v3854
    %v3866 = vadd.s32 %v3865, %v3856
    %v3867 = vand.u32 %v3844, 65535
    %v3868 = vshrl.u32 %v3844, 16
    %v3869 = vand.u32 %v3839, 65535
    %v3870 = vshrl.u32 %v3839, 16
    %v3871 = vmul.u32 %v3867, %v3869
    %v3872 = vmul.u32 %v3867, %v3870
    %v3873 = vmul.u32 %v3868, %v3869
    %v3874 = vmul.u32 %v3868, %v3870
    %v3875 = vshll.u32 %v3872, 16
    %v3876 = vshrl.u32 %v3872, 16
    %v3877 = vshll.u32 %v3873, 16
    %v3878 = vshrl.u32 %v3873, 16
    %vm3879 = vc.u32 %v3871, %v3875
    %v3880 = vsel %vm3879, 1, 0
    %v3881 = vadd.s32 %v3871, %v3875
    %v3882 = vadd.s32 %v3874, %v3880
    %vm3883 = vc.u32 %v3881, %v3877
    %v3884 = vsel %vm3883, 1, 0
    %v3885 = vadd.s32 %v3881, %v3877
    %v3886 = vadd.s32 %v3882, %v3884
    %v3887 = vadd.s32 %v3886, %v3876
    %v3888 = vadd.s32 %v3887, %v3878
    %v3889 = vmul.u32 %v3844, %v3835
    %v3890 = vadd.s32 %v3866, %v3885
    %vm3891 = vc.u32 %v3866, %v3885
    %v3892 = vadd.s32 %v3888, 1
    %v3893 = vsel %vm3891, %v3892, %v3888
    %v3894 = vadd.s32 %v3889, %v3893
    %v3895 = vadd.s32 %v3894, 536870912
    %v3896 = vshrl.u32 %v3895, 30
    %v3897 = vshll.u32 %v3896, 30
    %v3898 = vsub.s32 %v3894, %v3897
    %vm3899 = vcmp.lt.s32.totalorder %v3898, 0
    %v3900 = vsub.s32 0, %v3898
    %v3901 = vsel %vm3899, %v3900, %v3898
    %v3902 = vclz %v3901
    %v3903 = vsub.s32 %v3902, 2
    %vm3904 = vcmp.gt.s32.totalorder 0, %v3903
    %v3905 = vsel %vm3904, 0, %v3903
    %v3906 = vsub.s32 32, %v3905
    %v3907 = vshll.u32 %v3898, %v3905
    %v3908 = vshrl.u32 %v3890, %v3906
    %v3909 = vor.u32 %v3907, %v3908
    %v3910 = vsub.s32 4294967266, %v3905
    %v3911 = vadd.s32 %v3910, 127
    %v3912 = vshll.u32 %v3911, 23
    %v3913 = vor.u32 4788187, %v3912
    %v3914 = vand.u32 2147483647, %v3913
    %v3916 = vcvt.s32.f32 %v3909
    %v3917 = vmul.f32 %v3916, %v3914
    %v3918 = vxor.u32 %v3917, 2147483648
    %v3919 = vsel %vm3798, %v3918, %v3917
    %v3920 = vsub.s32 4, %v3896
    %v3921 = vsel %vm3798, %v3920, %v3896
    %v3922 = vsel %vm3797, %v1359, %v3919
    %v3923 = vsel %vm3797, 0, %v3921
    %v3924 = vmul.f32 %v3922, %v3922
    %v3925 = vmul.f32 %v3924, -0.001358992
    %v3926 = vadd.f32 %v3925, 0.041655596
    %v3927 = vmul.f32 %v3924, %v3926
    %v3928 = vadd.f32 %v3927, -0.4999988
    %v3929 = vmul.f32 %v3924, %v3928
    %v3930 = vadd.f32 1.0, %v3929
    %v3931 = vmul.f32 %v3922, %v3922
    %v3932 = vmul.f32 %v3931, -0.00019511016
    %v3933 = vadd.f32 %v3932, 0.008332121
    %v3934 = vmul.f32 %v3931, %v3933
    %v3935 = vadd.f32 %v3934, -0.16666654
    %v3936 = vmul.f32 %v3931, %v3935
    %v3937 = vadd.f32 %v3936, 1.0
    %v3938 = vmul.f32 %v3937, %v3922
    %vm3939 = vweird.f32 %v1359
    %v3940 = vadd.s32 %v3923, 3
    %v3941 = vand.u32 %v3940, 3
    %vm3942 = vcmp.lt.s32.totalorder %v3941, 2
    %vm3943 = vcmp.eq.s32.totalorder %v3941, 0
    %v3944 = vxor.u32 %v3938, 2147483648
    %v3945 = vsel %vm3943, %v3930, %v3944
    %vm3946 = vcmp.eq.s32.totalorder %v3941, 2
    %v3947 = vxor.u32 %v3930, 2147483648
    %v3948 = vsel %vm3946, %v3947, %v3938
    %v3949 = vsel %vm3942, %v3945, %v3948
    %v3950 = vsel %vm3939, nan, %v3949
    %v3951 = vand.u32 2147483647, %v1567
    %vm3952 = vcmp.le.f32.partialorder %v3951, 0.7853982
    %vm3953 = vcmp.lt.s32.totalorder %v1567, 0
    %v3954 = vand.u32 %v1567, 2139095040
    %v3955 = vshrl.u32 %v3954, 23
    %v3956 = vsub.s32 %v3955, 127
    %v3957 = vand.u32 2147483647, %v1567
    %v3958 = vand.u32 %v3957, 8388607
    %v3959 = vor.u32 %v3958, 8388608
    %v3960 = vsub.s32 0, %v3959
    %v3961 = vadd.s32 %v3956, 1
    %vm3962 = vcmp.gt.s32.totalorder %v3961, 0
    %v3963 = vsel %vm3962, %v3961, 0
    %v3964 = vshrl.u32 %v3963, 5
    %v3965 = vand.u32 %v3963, 31
    %v3966 = vsub.s32 32, %v3965
    %v3967 = vshrl.u32 683565275, %v3966
    %v3968 = vshll.u32 683565275, %v3965
    %v3969 = vshrl.u32 2475754826, %v3966
    %v3970 = vor.u32 %v3968, %v3969
    %v3971 = vshll.u32 2475754826, %v3965
    %v3972 = vshrl.u32 2131351028, %v3966
    %v3973 = vor.u32 %v3971, %v3972
    %v3974 = vshll.u32 2131351028, %v3965
    %v3975 = vshrl.u32 2102212464, %v3966
    %v3976 = vor.u32 %v3974, %v3975
    %v3977 = vshll.u32 2102212464, %v3965
    %v3978 = vshrl.u32 920167782, %v3966
    %v3979 = vor.u32 %v3977, %v3978
    %v3980 = vshll.u32 920167782, %v3965
    %v3981 = vshrl.u32 1326507024, %v3966
    %v3982 = vor.u32 %v3980, %v3981
    %vm3983 = vcmp.lt.s32.totalorder %v3964, 1
    %vm3984 = vcmp.lt.s32.totalorder %v3964, 2
    %vm3985 = vcmp.lt.s32.totalorder %v3964, 3
    %vm3986 = vcmp.lt.s32.totalorder %v3964, 4
    %v3987 = vsel %vm3983, %v3967, %v3970
    %v3988 = vsel %vm3986, %v3976, 2102212464
    %v3989 = vsel %vm3985, %v3973, %v3988
    %v3990 = vsel %vm3984, %v3987, %v3989
    %v3991 = vsel %vm3983, %v3970, %v3973
    %v3992 = vsel %vm3986, %v3979, 920167782
    %v3993 = vsel %vm3985, %v3976, %v3992
    %v3994 = vsel %vm3984, %v3991, %v3993
    %v3995 = vsel %vm3983, %v3973, %v3976
    %v3996 = vsel %vm3986, %v3982, 1326507024
    %v3997 = vsel %vm3985, %v3979, %v3996
    %v3998 = vsel %vm3984, %v3995, %v3997
    %v3999 = vshll.u32 %v3959, 8
    %v4000 = vand.u32 %v3999, 65535
    %v4001 = vshrl.u32 %v3999, 16
    %v4002 = vand.u32 %v3998, 65535
    %v4003 = vshrl.u32 %v3998, 16
    %v4004 = vmul.u32 %v4000, %v4002
    %v4005 = vmul.u32 %v4000, %v4003
    %v4006 = vmul.u32 %v4001, %v4002
    %v4007 = vmul.u32 %v4001, %v4003
    %v4008 = vshll.u32 %v4005, 16
    %v4009 = vshrl.u32 %v4005, 16
    %v4010 = vshll.u32 %v4006, 16
    %v4011 = vshrl.u32 %v4006, 16
    %vm4012 = vc.u32 %v4004, %v4008
    %v4013 = vsel %vm4012, 1, 0
    %v4014 = vadd.s32 %v4004, %v4008
    %v4015 = vadd.s32 %v4007, %v4013
    %vm4016 = vc.u32 %v4014, %v4010
    %v4017 = vsel %vm4016, 1, 0
    %v4018 = vadd.s32 %v4014, %v4010
    %v4019 = vadd.s32 %v4015, %v4017
    %v4020 = vadd.s32 %v4019, %v4009
    %v4021 = vadd.s32 %v4020, %v4011
    %v4022 = vand.u32 %v3999, 65535
    %v4023 = vshrl.u32 %v3999, 16
    %v4024 = vand.u32 %v3994, 65535
    %v4025 = vshrl.u32 %v3994, 16
    %v4026 = vmul.u32 %v4022, %v4024
    %v4027 = vmul.u32 %v4022, %v4025
    %v4028 = vmul.u32 %v4023, %v4024
    %v4029 = vmul.u32 %v4023, %v4025
    %v4030 = vshll.u32 %v4027, 16
    %v4031 = vshrl.u32 %v4027, 16
    %v4032 = vshll.u32 %v4028, 16
    %v4033 = vshrl.u32 %v4028, 16
    %vm4034 = vc.u32 %v4026, %v4030
    %v4035 = vsel %vm4034, 1, 0
    %v4036 = vadd.s32 %v4026, %v4030
    %v4037 = vadd.s32 %v4029, %v4035
    %vm4038 = vc.u32 %v4036, %v4032
    %v4039 = vsel %vm4038, 1, 0
    %v4040 = vadd.s32 %v4036, %v4032
    %v4041 = vadd.s32 %v4037, %v4039
    %v4042 = vadd.s32 %v4041, %v4031
    %v4043 = vadd.s32 %v4042, %v4033
    %v4044 = vmul.u32 %v3999, %v3990
    %v4045 = vadd.s32 %v4021, %v4040
    %vm4046 = vc.u32 %v4021, %v4040
    %v4047 = vadd.s32 %v4043, 1
    %v4048 = vsel %vm4046, %v4047, %v4043
    %v4049 = vadd.s32 %v4044, %v4048
    %v4050 = vadd.s32 %v4049, 536870912
    %v4051 = vshrl.u32 %v4050, 30
    %v4052 = vshll.u32 %v4051, 30
    %v4053 = vsub.s32 %v4049, %v4052
    %vm4054 = vcmp.lt.s32.totalorder %v4053, 0
    %v4055 = vsub.s32 0, %v4053
    %v4056 = vsel %vm4054, %v4055, %v4053
    %v4057 = vclz %v4056
    %v4058 = vsub.s32 %v4057, 2
    %vm4059 = vcmp.gt.s32.totalorder 0, %v4058
    %v4060 = vsel %vm4059, 0, %v4058
    %v4061 = vsub.s32 32, %v4060
    %v4062 = vshll.u32 %v4053, %v4060
    %v4063 = vshrl.u32 %v4045, %v4061
    %v4064 = vor.u32 %v4062, %v4063
    %v4065 = vsub.s32 4294967266, %v4060
    %v4066 = vadd.s32 %v4065, 127
    %v4067 = vshll.u32 %v4066, 23
    %v4068 = vor.u32 4788187, %v4067
    %v4069 = vand.u32 2147483647, %v4068
    %v4071 = vcvt.s32.f32 %v4064
    %v4072 = vmul.f32 %v4071, %v4069
    %v4073 = vxor.u32 %v4072, 2147483648
    %v4074 = vsel %vm3953, %v4073, %v4072
    %v4075 = vsub.s32 4, %v4051
    %v4076 = vsel %vm3953, %v4075, %v4051
    %v4077 = vsel %vm3952, %v1567, %v4074
    %v4078 = vsel %vm3952, 0, %v4076
    %v4079 = vmul.f32 %v4077, %v4077
    %v4080 = vmul.f32 %v4079, -0.001358992
    %v4081 = vadd.f32 %v4080, 0.041655596
    %v4082 = vmul.f32 %v4079, %v4081
    %v4083 = vadd.f32 %v4082, -0.4999988
    %v4084 = vmul.f32 %v4079, %v4083
    %v4085 = vadd.f32 1.0, %v4084
    %v4086 = vmul.f32 %v4077, %v4077
    %v4087 = vmul.f32 %v4086, -0.00019511016
    %v4088 = vadd.f32 %v4087, 0.008332121
    %v4089 = vmul.f32 %v4086, %v4088
    %v4090 = vadd.f32 %v4089, -0.16666654
    %v4091 = vmul.f32 %v4086, %v4090
    %v4092 = vadd.f32 %v4091, 1.0
    %v4093 = vmul.f32 %v4092, %v4077
    %vm4094 = vweird.f32 %v1567
    %v4095 = vadd.s32 %v4078, 3
    %v4096 = vand.u32 %v4095, 3
    %vm4097 = vcmp.lt.s32.totalorder %v4096, 2
    %vm4098 = vcmp.eq.s32.totalorder %v4096, 0
    %v4099 = vxor.u32 %v4093, 2147483648
    %v4100 = vsel %vm4098, %v4085, %v4099
    %vm4101 = vcmp.eq.s32.totalorder %v4096, 2
    %v4102 = vxor.u32 %v4085, 2147483648
    %v4103 = vsel %vm4101, %v4102, %v4093
    %v4104 = vsel %vm4097, %v4100, %v4103
    %v4105 = vsel %vm4094, nan, %v4104
    %v4106 = vand.u32 2147483647, %v1775
    %vm4107 = vcmp.le.f32.partialorder %v4106, 0.7853982
    %vm4108 = vcmp.lt.s32.totalorder %v1775, 0
    %v4109 = vand.u32 %v1775, 2139095040
    %v4110 = vshrl.u32 %v4109, 23
    %v4111 = vsub.s32 %v4110, 127
    %v4112 = vand.u32 2147483647, %v1775
    %v4113 = vand.u32 %v4112, 8388607
    %v4114 = vor.u32 %v4113, 8388608
    %v4115 = vsub.s32 0, %v4114
    %v4116 = vadd.s32 %v4111, 1
    %vm4117 = vcmp.gt.s32.totalorder %v4116, 0
    %v4118 = vsel %vm4117, %v4116, 0
    %v4119 = vshrl.u32 %v4118, 5
    %v4120 = vand.u32 %v4118, 31
    %v4121 = vsub.s32 32, %v4120
    %v4122 = vshrl.u32 683565275, %v4121
    %v4123 = vshll.u32 683565275, %v4120
    %v4124 = vshrl.u32 2475754826, %v4121
    %v4125 = vor.u32 %v4123, %v4124
    %v4126 = vshll.u32 2475754826, %v4120
    %v4127 = vshrl.u32 2131351028, %v4121
    %v4128 = vor.u32 %v4126, %v4127
    %v4129 = vshll.u32 2131351028, %v4120
    %v4130 = vshrl.u32 2102212464, %v4121
    %v4131 = vor.u32 %v4129, %v4130
    %v4132 = vshll.u32 2102212464, %v4120
    %v4133 = vshrl.u32 920167782, %v4121
    %v4134 = vor.u32 %v4132, %v4133
    %v4135 = vshll.u32 920167782, %v4120
    %v4136 = vshrl.u32 1326507024, %v4121
    %v4137 = vor.u32 %v4135, %v4136
    %vm4138 = vcmp.lt.s32.totalorder %v4119, 1
    %vm4139 = vcmp.lt.s32.totalorder %v4119, 2
    %vm4140 = vcmp.lt.s32.totalorder %v4119, 3
    %vm4141 = vcmp.lt.s32.totalorder %v4119, 4
    %v4142 = vsel %vm4138, %v4122, %v4125
    %v4143 = vsel %vm4141, %v4131, 2102212464
    %v4144 = vsel %vm4140, %v4128, %v4143
    %v4145 = vsel %vm4139, %v4142, %v4144
    %v4146 = vsel %vm4138, %v4125, %v4128
    %v4147 = vsel %vm4141, %v4134, 920167782
    %v4148 = vsel %vm4140, %v4131, %v4147
    %v4149 = vsel %vm4139, %v4146, %v4148
    %v4150 = vsel %vm4138, %v4128, %v4131
    %v4151 = vsel %vm4141, %v4137, 1326507024
    %v4152 = vsel %vm4140, %v4134, %v4151
    %v4153 = vsel %vm4139, %v4150, %v4152
    %v4154 = vshll.u32 %v4114, 8
    %v4155 = vand.u32 %v4154, 65535
    %v4156 = vshrl.u32 %v4154, 16
    %v4157 = vand.u32 %v4153, 65535
    %v4158 = vshrl.u32 %v4153, 16
    %v4159 = vmul.u32 %v4155, %v4157
    %v4160 = vmul.u32 %v4155, %v4158
    %v4161 = vmul.u32 %v4156, %v4157
    %v4162 = vmul.u32 %v4156, %v4158
    %v4163 = vshll.u32 %v4160, 16
    %v4164 = vshrl.u32 %v4160, 16
    %v4165 = vshll.u32 %v4161, 16
    %v4166 = vshrl.u32 %v4161, 16
    %vm4167 = vc.u32 %v4159, %v4163
    %v4168 = vsel %vm4167, 1, 0
    %v4169 = vadd.s32 %v4159, %v4163
    %v4170 = vadd.s32 %v4162, %v4168
    %vm4171 = vc.u32 %v4169, %v4165
    %v4172 = vsel %vm4171, 1, 0
    %v4173 = vadd.s32 %v4169, %v4165
    %v4174 = vadd.s32 %v4170, %v4172
    %v4175 = vadd.s32 %v4174, %v4164
    %v4176 = vadd.s32 %v4175, %v4166
    %v4177 = vand.u32 %v4154, 65535
    %v4178 = vshrl.u32 %v4154, 16
    %v4179 = vand.u32 %v4149, 65535
    %v4180 = vshrl.u32 %v4149, 16
    %v4181 = vmul.u32 %v4177, %v4179
    %v4182 = vmul.u32 %v4177, %v4180
    %v4183 = vmul.u32 %v4178, %v4179
    %v4184 = vmul.u32 %v4178, %v4180
    %v4185 = vshll.u32 %v4182, 16
    %v4186 = vshrl.u32 %v4182, 16
    %v4187 = vshll.u32 %v4183, 16
    %v4188 = vshrl.u32 %v4183, 16
    %vm4189 = vc.u32 %v4181, %v4185
    %v4190 = vsel %vm4189, 1, 0
    %v4191 = vadd.s32 %v4181, %v4185
    %v4192 = vadd.s32 %v4184, %v4190
    %vm4193 = vc.u32 %v4191, %v4187
    %v4194 = vsel %vm4193, 1, 0
    %v4195 = vadd.s32 %v4191, %v4187
    %v4196 = vadd.s32 %v4192, %v4194
    %v4197 = vadd.s32 %v4196, %v4186
    %v4198 = vadd.s32 %v4197, %v4188
    %v4199 = vmul.u32 %v4154, %v4145
    %v4200 = vadd.s32 %v4176, %v4195
    %vm4201 = vc.u32 %v4176, %v4195
    %v4202 = vadd.s32 %v4198, 1
    %v4203 = vsel %vm4201, %v4202, %v4198
    %v4204 = vadd.s32 %v4199, %v4203
    %v4205 = vadd.s32 %v4204, 536870912
    %v4206 = vshrl.u32 %v4205, 30
    %v4207 = vshll.u32 %v4206, 30
    %v4208 = vsub.s32 %v4204, %v4207
    %vm4209 = vcmp.lt.s32.totalorder %v4208, 0
    %v4210 = vsub.s32 0, %v4208
    %v4211 = vsel %vm4209, %v4210, %v4208
    %v4212 = vclz %v4211
    %v4213 = vsub.s32 %v4212, 2
    %vm4214 = vcmp.gt.s32.totalorder 0, %v4213
    %v4215 = vsel %vm4214, 0, %v4213
    %v4216 = vsub.s32 32, %v4215
    %v4217 = vshll.u32 %v4208, %v4215
    %v4218 = vshrl.u32 %v4200, %v4216
    %v4219 = vor.u32 %v4217, %v4218
    %v4220 = vsub.s32 4294967266, %v4215
    %v4221 = vadd.s32 %v4220, 127
    %v4222 = vshll.u32 %v4221, 23
    %v4223 = vor.u32 4788187, %v4222
    %v4224 = vand.u32 2147483647, %v4223
    %v4226 = vcvt.s32.f32 %v4219
    %v4227 = vmul.f32 %v4226, %v4224
    %v4228 = vxor.u32 %v4227, 2147483648
    %v4229 = vsel %vm4108, %v4228, %v4227
    %v4230 = vsub.s32 4, %v4206
    %v4231 = vsel %vm4108, %v4230, %v4206
    %v4232 = vsel %vm4107, %v1775, %v4229
    %v4233 = vsel %vm4107, 0, %v4231
    %v4234 = vmul.f32 %v4232, %v4232
    %v4235 = vmul.f32 %v4234, -0.001358992
    %v4236 = vadd.f32 %v4235, 0.041655596
    %v4237 = vmul.f32 %v4234, %v4236
    %v4238 = vadd.f32 %v4237, -0.4999988
    %v4239 = vmul.f32 %v4234, %v4238
    %v4240 = vadd.f32 1.0, %v4239
    %v4241 = vmul.f32 %v4232, %v4232
    %v4242 = vmul.f32 %v4241, -0.00019511016
    %v4243 = vadd.f32 %v4242, 0.008332121
    %v4244 = vmul.f32 %v4241, %v4243
    %v4245 = vadd.f32 %v4244, -0.16666654
    %v4246 = vmul.f32 %v4241, %v4245
    %v4247 = vadd.f32 %v4246, 1.0
    %v4248 = vmul.f32 %v4247, %v4232
    %vm4249 = vweird.f32 %v1775
    %v4250 = vadd.s32 %v4233, 3
    %v4251 = vand.u32 %v4250, 3
    %vm4252 = vcmp.lt.s32.totalorder %v4251, 2
    %vm4253 = vcmp.eq.s32.totalorder %v4251, 0
    %v4254 = vxor.u32 %v4248, 2147483648
    %v4255 = vsel %vm4253, %v4240, %v4254
    %vm4256 = vcmp.eq.s32.totalorder %v4251, 2
    %v4257 = vxor.u32 %v4240, 2147483648
    %v4258 = vsel %vm4256, %v4257, %v4248
    %v4259 = vsel %vm4252, %v4255, %v4258
    %v4260 = vsel %vm4249, nan, %v4259
    %v4261 = vand.u32 2147483647, %v323
    %vm4262 = vcmp.le.f32.partialorder %v4261, 0.7853982
    %vm4263 = vcmp.lt.s32.totalorder %v323, 0
    %v4264 = vand.u32 %v323, 2139095040
    %v4265 = vshrl.u32 %v4264, 23
    %v4266 = vsub.s32 %v4265, 127
    %v4267 = vand.u32 2147483647, %v323
    %v4268 = vand.u32 %v4267, 8388607
    %v4269 = vor.u32 %v4268, 8388608
    %v4270 = vsub.s32 0, %v4269
    %v4271 = vadd.s32 %v4266, 1
    %vm4272 = vcmp.gt.s32.totalorder %v4271, 0
    %v4273 = vsel %vm4272, %v4271, 0
    %v4274 = vshrl.u32 %v4273, 5
    %v4275 = vand.u32 %v4273, 31
    %v4276 = vsub.s32 32, %v4275
    %v4277 = vshrl.u32 683565275, %v4276
    %v4278 = vshll.u32 683565275, %v4275
    %v4279 = vshrl.u32 2475754826, %v4276
    %v4280 = vor.u32 %v4278, %v4279
    %v4281 = vshll.u32 2475754826, %v4275
    %v4282 = vshrl.u32 2131351028, %v4276
    %v4283 = vor.u32 %v4281, %v4282
    %v4284 = vshll.u32 2131351028, %v4275
    %v4285 = vshrl.u32 2102212464, %v4276
    %v4286 = vor.u32 %v4284, %v4285
    %v4287 = vshll.u32 2102212464, %v4275
    %v4288 = vshrl.u32 920167782, %v4276
    %v4289 = vor.u32 %v4287, %v4288
    %v4290 = vshll.u32 920167782, %v4275
    %v4291 = vshrl.u32 1326507024, %v4276
    %v4292 = vor.u32 %v4290, %v4291
    %vm4293 = vcmp.lt.s32.totalorder %v4274, 1
    %vm4294 = vcmp.lt.s32.totalorder %v4274, 2
    %vm4295 = vcmp.lt.s32.totalorder %v4274, 3
    %vm4296 = vcmp.lt.s32.totalorder %v4274, 4
    %v4297 = vsel %vm4293, %v4277, %v4280
    %v4298 = vsel %vm4296, %v4286, 2102212464
    %v4299 = vsel %vm4295, %v4283, %v4298
    %v4300 = vsel %vm4294, %v4297, %v4299
    %v4301 = vsel %vm4293, %v4280, %v4283
    %v4302 = vsel %vm4296, %v4289, 920167782
    %v4303 = vsel %vm4295, %v4286, %v4302
    %v4304 = vsel %vm4294, %v4301, %v4303
    %v4305 = vsel %vm4293, %v4283, %v4286
    %v4306 = vsel %vm4296, %v4292, 1326507024
    %v4307 = vsel %vm4295, %v4289, %v4306
    %v4308 = vsel %vm4294, %v4305, %v4307
    %v4309 = vshll.u32 %v4269, 8
    %v4310 = vand.u32 %v4309, 65535
    %v4311 = vshrl.u32 %v4309, 16
    %v4312 = vand.u32 %v4308, 65535
    %v4313 = vshrl.u32 %v4308, 16
    %v4314 = vmul.u32 %v4310, %v4312
    %v4315 = vmul.u32 %v4310, %v4313
    %v4316 = vmul.u32 %v4311, %v4312
    %v4317 = vmul.u32 %v4311, %v4313
    %v4318 = vshll.u32 %v4315, 16
    %v4319 = vshrl.u32 %v4315, 16
    %v4320 = vshll.u32 %v4316, 16
    %v4321 = vshrl.u32 %v4316, 16
    %vm4322 = vc.u32 %v4314, %v4318
    %v4323 = vsel %vm4322, 1, 0
    %v4324 = vadd.s32 %v4314, %v4318
    %v4325 = vadd.s32 %v4317, %v4323
    %vm4326 = vc.u32 %v4324, %v4320
    %v4327 = vsel %vm4326, 1, 0
    %v4328 = vadd.s32 %v4324, %v4320
    %v4329 = vadd.s32 %v4325, %v4327
    %v4330 = vadd.s32 %v4329, %v4319
    %v4331 = vadd.s32 %v4330, %v4321
    %v4332 = vand.u32 %v4309, 65535
    %v4333 = vshrl.u32 %v4309, 16
    %v4334 = vand.u32 %v4304, 65535
    %v4335 = vshrl.u32 %v4304, 16
    %v4336 = vmul.u32 %v4332, %v4334
    %v4337 = vmul.u32 %v4332, %v4335
    %v4338 = vmul.u32 %v4333, %v4334
    %v4339 = vmul.u32 %v4333, %v4335
    %v4340 = vshll.u32 %v4337, 16
    %v4341 = vshrl.u32 %v4337, 16
    %v4342 = vshll.u32 %v4338, 16
    %v4343 = vshrl.u32 %v4338, 16
    %vm4344 = vc.u32 %v4336, %v4340
    %v4345 = vsel %vm4344, 1, 0
    %v4346 = vadd.s32 %v4336, %v4340
    %v4347 = vadd.s32 %v4339, %v4345
    %vm4348 = vc.u32 %v4346, %v4342
    %v4349 = vsel %vm4348, 1, 0
    %v4350 = vadd.s32 %v4346, %v4342
    %v4351 = vadd.s32 %v4347, %v4349
    %v4352 = vadd.s32 %v4351, %v4341
    %v4353 = vadd.s32 %v4352, %v4343
    %v4354 = vmul.u32 %v4309, %v4300
    %v4355 = vadd.s32 %v4331, %v4350
    %vm4356 = vc.u32 %v4331, %v4350
    %v4357 = vadd.s32 %v4353, 1
    %v4358 = vsel %vm4356, %v4357, %v4353
    %v4359 = vadd.s32 %v4354, %v4358
    %v4360 = vadd.s32 %v4359, 536870912
    %v4361 = vshrl.u32 %v4360, 30
    %v4362 = vshll.u32 %v4361, 30
    %v4363 = vsub.s32 %v4359, %v4362
    %vm4364 = vcmp.lt.s32.totalorder %v4363, 0
    %v4365 = vsub.s32 0, %v4363
    %v4366 = vsel %vm4364, %v4365, %v4363
    %v4367 = vclz %v4366
    %v4368 = vsub.s32 %v4367, 2
    %vm4369 = vcmp.gt.s32.totalorder 0, %v4368
    %v4370 = vsel %vm4369, 0, %v4368
    %v4371 = vsub.s32 32, %v4370
    %v4372 = vshll.u32 %v4363, %v4370
    %v4373 = vshrl.u32 %v4355, %v4371
    %v4374 = vor.u32 %v4372, %v4373
    %v4375 = vsub.s32 4294967266, %v4370
    %v4376 = vadd.s32 %v4375, 127
    %v4377 = vshll.u32 %v4376, 23
    %v4378 = vor.u32 4788187, %v4377
    %v4379 = vand.u32 2147483647, %v4378
    %v4381 = vcvt.s32.f32 %v4374
    %v4382 = vmul.f32 %v4381, %v4379
    %v4383 = vxor.u32 %v4382, 2147483648
    %v4384 = vsel %vm4263, %v4383, %v4382
    %v4385 = vsub.s32 4, %v4361
    %v4386 = vsel %vm4263, %v4385, %v4361
    %v4387 = vsel %vm4262, %v323, %v4384
    %v4388 = vsel %vm4262, 0, %v4386
    %v4389 = vmul.f32 %v4387, %v4387
    %v4390 = vmul.f32 %v4389, -0.001358992
    %v4391 = vadd.f32 %v4390, 0.041655596
    %v4392 = vmul.f32 %v4389, %v4391
    %v4393 = vadd.f32 %v4392, -0.4999988
    %v4394 = vmul.f32 %v4389, %v4393
    %v4395 = vadd.f32 1.0, %v4394
    %v4396 = vmul.f32 %v4387, %v4387
    %v4397 = vmul.f32 %v4396, -0.00019511016
    %v4398 = vadd.f32 %v4397, 0.008332121
    %v4399 = vmul.f32 %v4396, %v4398
    %v4400 = vadd.f32 %v4399, -0.16666654
    %v4401 = vmul.f32 %v4396, %v4400
    %v4402 = vadd.f32 %v4401, 1.0
    %v4403 = vmul.f32 %v4402, %v4387
    %vm4404 = vweird.f32 %v323
    %v4405 = vadd.s32 %v4388, 3
    %v4406 = vand.u32 %v4405, 3
    %vm4407 = vcmp.lt.s32.totalorder %v4406, 2
    %vm4408 = vcmp.eq.s32.totalorder %v4406, 0
    %v4409 = vxor.u32 %v4403, 2147483648
    %v4410 = vsel %vm4408, %v4395, %v4409
    %vm4411 = vcmp.eq.s32.totalorder %v4406, 2
    %v4412 = vxor.u32 %v4395, 2147483648
    %v4413 = vsel %vm4411, %v4412, %v4403
    %v4414 = vsel %vm4407, %v4410, %v4413
    %v4415 = vsel %vm4404, nan, %v4414
    %v4416 = vand.u32 2147483647, %v531
    %vm4417 = vcmp.le.f32.partialorder %v4416, 0.7853982
    %vm4418 = vcmp.lt.s32.totalorder %v531, 0
    %v4419 = vand.u32 %v531, 2139095040
    %v4420 = vshrl.u32 %v4419, 23
    %v4421 = vsub.s32 %v4420, 127
    %v4422 = vand.u32 2147483647, %v531
    %v4423 = vand.u32 %v4422, 8388607
    %v4424 = vor.u32 %v4423, 8388608
    %v4425 = vsub.s32 0, %v4424
    %v4426 = vadd.s32 %v4421, 1
    %vm4427 = vcmp.gt.s32.totalorder %v4426, 0
    %v4428 = vsel %vm4427, %v4426, 0
    %v4429 = vshrl.u32 %v4428, 5
    %v4430 = vand.u32 %v4428, 31
    %v4431 = vsub.s32 32, %v4430
    %v4432 = vshrl.u32 683565275, %v4431
    %v4433 = vshll.u32 683565275, %v4430
    %v4434 = vshrl.u32 2475754826, %v4431
    %v4435 = vor.u32 %v4433, %v4434
    %v4436 = vshll.u32 2475754826, %v4430
    %v4437 = vshrl.u32 2131351028, %v4431
    %v4438 = vor.u32 %v4436, %v4437
    %v4439 = vshll.u32 2131351028, %v4430
    %v4440 = vshrl.u32 2102212464, %v4431
    %v4441 = vor.u32 %v4439, %v4440
    %v4442 = vshll.u32 2102212464, %v4430
    %v4443 = vshrl.u32 920167782, %v4431
    %v4444 = vor.u32 %v4442, %v4443
    %v4445 = vshll.u32 920167782, %v4430
    %v4446 = vshrl.u32 1326507024, %v4431
    %v4447 = vor.u32 %v4445, %v4446
    %vm4448 = vcmp.lt.s32.totalorder %v4429, 1
    %vm4449 = vcmp.lt.s32.totalorder %v4429, 2
    %vm4450 = vcmp.lt.s32.totalorder %v4429, 3
    %vm4451 = vcmp.lt.s32.totalorder %v4429, 4
    %v4452 = vsel %vm4448, %v4432, %v4435
    %v4453 = vsel %vm4451, %v4441, 2102212464
    %v4454 = vsel %vm4450, %v4438, %v4453
    %v4455 = vsel %vm4449, %v4452, %v4454
    %v4456 = vsel %vm4448, %v4435, %v4438
    %v4457 = vsel %vm4451, %v4444, 920167782
    %v4458 = vsel %vm4450, %v4441, %v4457
    %v4459 = vsel %vm4449, %v4456, %v4458
    %v4460 = vsel %vm4448, %v4438, %v4441
    %v4461 = vsel %vm4451, %v4447, 1326507024
    %v4462 = vsel %vm4450, %v4444, %v4461
    %v4463 = vsel %vm4449, %v4460, %v4462
    %v4464 = vshll.u32 %v4424, 8
    %v4465 = vand.u32 %v4464, 65535
    %v4466 = vshrl.u32 %v4464, 16
    %v4467 = vand.u32 %v4463, 65535
    %v4468 = vshrl.u32 %v4463, 16
    %v4469 = vmul.u32 %v4465, %v4467
    %v4470 = vmul.u32 %v4465, %v4468
    %v4471 = vmul.u32 %v4466, %v4467
    %v4472 = vmul.u32 %v4466, %v4468
    %v4473 = vshll.u32 %v4470, 16
    %v4474 = vshrl.u32 %v4470, 16
    %v4475 = vshll.u32 %v4471, 16
    %v4476 = vshrl.u32 %v4471, 16
    %vm4477 = vc.u32 %v4469, %v4473
    %v4478 = vsel %vm4477, 1, 0
    %v4479 = vadd.s32 %v4469, %v4473
    %v4480 = vadd.s32 %v4472, %v4478
    %vm4481 = vc.u32 %v4479, %v4475
    %v4482 = vsel %vm4481, 1, 0
    %v4483 = vadd.s32 %v4479, %v4475
    %v4484 = vadd.s32 %v4480, %v4482
    %v4485 = vadd.s32 %v4484, %v4474
    %v4486 = vadd.s32 %v4485, %v4476
    %v4487 = vand.u32 %v4464, 65535
    %v4488 = vshrl.u32 %v4464, 16
    %v4489 = vand.u32 %v4459, 65535
    %v4490 = vshrl.u32 %v4459, 16
    %v4491 = vmul.u32 %v4487, %v4489
    %v4492 = vmul.u32 %v4487, %v4490
    %v4493 = vmul.u32 %v4488, %v4489
    %v4494 = vmul.u32 %v4488, %v4490
    %v4495 = vshll.u32 %v4492, 16
    %v4496 = vshrl.u32 %v4492, 16
    %v4497 = vshll.u32 %v4493, 16
    %v4498 = vshrl.u32 %v4493, 16
    %vm4499 = vc.u32 %v4491, %v4495
    %v4500 = vsel %vm4499, 1, 0
    %v4501 = vadd.s32 %v4491, %v4495
    %v4502 = vadd.s32 %v4494, %v4500
    %vm4503 = vc.u32 %v4501, %v4497
    %v4504 = vsel %vm4503, 1, 0
    %v4505 = vadd.s32 %v4501, %v4497
    %v4506 = vadd.s32 %v4502, %v4504
    %v4507 = vadd.s32 %v4506, %v4496
    %v4508 = vadd.s32 %v4507, %v4498
    %v4509 = vmul.u32 %v4464, %v4455
    %v4510 = vadd.s32 %v4486, %v4505
    %vm4511 = vc.u32 %v4486, %v4505
    %v4512 = vadd.s32 %v4508, 1
    %v4513 = vsel %vm4511, %v4512, %v4508
    %v4514 = vadd.s32 %v4509, %v4513
    %v4515 = vadd.s32 %v4514, 536870912
    %v4516 = vshrl.u32 %v4515, 30
    %v4517 = vshll.u32 %v4516, 30
    %v4518 = vsub.s32 %v4514, %v4517
    %vm4519 = vcmp.lt.s32.totalorder %v4518, 0
    %v4520 = vsub.s32 0, %v4518
    %v4521 = vsel %vm4519, %v4520, %v4518
    %v4522 = vclz %v4521
    %v4523 = vsub.s32 %v4522, 2
    %vm4524 = vcmp.gt.s32.totalorder 0, %v4523
    %v4525 = vsel %vm4524, 0, %v4523
    %v4526 = vsub.s32 32, %v4525
    %v4527 = vshll.u32 %v4518, %v4525
    %v4528 = vshrl.u32 %v4510, %v4526
    %v4529 = vor.u32 %v4527, %v4528
    %v4530 = vsub.s32 4294967266, %v4525
    %v4531 = vadd.s32 %v4530, 127
    %v4532 = vshll.u32 %v4531, 23
    %v4533 = vor.u32 4788187, %v4532
    %v4534 = vand.u32 2147483647, %v4533
    %v4536 = vcvt.s32.f32 %v4529
    %v4537 = vmul.f32 %v4536, %v4534
    %v4538 = vxor.u32 %v4537, 2147483648
    %v4539 = vsel %vm4418, %v4538, %v4537
    %v4540 = vsub.s32 4, %v4516
    %v4541 = vsel %vm4418, %v4540, %v4516
    %v4542 = vsel %vm4417, %v531, %v4539
    %v4543 = vsel %vm4417, 0, %v4541
    %v4544 = vmul.f32 %v4542, %v4542
    %v4545 = vmul.f32 %v4544, -0.001358992
    %v4546 = vadd.f32 %v4545, 0.041655596
    %v4547 = vmul.f32 %v4544, %v4546
    %v4548 = vadd.f32 %v4547, -0.4999988
    %v4549 = vmul.f32 %v4544, %v4548
    %v4550 = vadd.f32 1.0, %v4549
    %v4551 = vmul.f32 %v4542, %v4542
    %v4552 = vmul.f32 %v4551, -0.00019511016
    %v4553 = vadd.f32 %v4552, 0.008332121
    %v4554 = vmul.f32 %v4551, %v4553
    %v4555 = vadd.f32 %v4554, -0.16666654
    %v4556 = vmul.f32 %v4551, %v4555
    %v4557 = vadd.f32 %v4556, 1.0
    %v4558 = vmul.f32 %v4557, %v4542
    %vm4559 = vweird.f32 %v531
    %v4560 = vadd.s32 %v4543, 3
    %v4561 = vand.u32 %v4560, 3
    %vm4562 = vcmp.lt.s32.totalorder %v4561, 2
    %vm4563 = vcmp.eq.s32.totalorder %v4561, 0
    %v4564 = vxor.u32 %v4558, 2147483648
    %v4565 = vsel %vm4563, %v4550, %v4564
    %vm4566 = vcmp.eq.s32.totalorder %v4561, 2
    %v4567 = vxor.u32 %v4550, 2147483648
    %v4568 = vsel %vm4566, %v4567, %v4558
    %v4569 = vsel %vm4562, %v4565, %v4568
    %v4570 = vsel %vm4559, nan, %v4569
    %v4571 = vand.u32 2147483647, %v739
    %vm4572 = vcmp.le.f32.partialorder %v4571, 0.7853982
    %vm4573 = vcmp.lt.s32.totalorder %v739, 0
    %v4574 = vand.u32 %v739, 2139095040
    %v4575 = vshrl.u32 %v4574, 23
    %v4576 = vsub.s32 %v4575, 127
    %v4577 = vand.u32 2147483647, %v739
    %v4578 = vand.u32 %v4577, 8388607
    %v4579 = vor.u32 %v4578, 8388608
    %v4580 = vsub.s32 0, %v4579
    %v4581 = vadd.s32 %v4576, 1
    %vm4582 = vcmp.gt.s32.totalorder %v4581, 0
    %v4583 = vsel %vm4582, %v4581, 0
    %v4584 = vshrl.u32 %v4583, 5
    %v4585 = vand.u32 %v4583, 31
    %v4586 = vsub.s32 32, %v4585
    %v4587 = vshrl.u32 683565275, %v4586
    %v4588 = vshll.u32 683565275, %v4585
    %v4589 = vshrl.u32 2475754826, %v4586
    %v4590 = vor.u32 %v4588, %v4589
    %v4591 = vshll.u32 2475754826, %v4585
    %v4592 = vshrl.u32 2131351028, %v4586
    %v4593 = vor.u32 %v4591, %v4592
    %v4594 = vshll.u32 2131351028, %v4585
    %v4595 = vshrl.u32 2102212464, %v4586
    %v4596 = vor.u32 %v4594, %v4595
    %v4597 = vshll.u32 2102212464, %v4585
    %v4598 = vshrl.u32 920167782, %v4586
    %v4599 = vor.u32 %v4597, %v4598
    %v4600 = vshll.u32 920167782, %v4585
    %v4601 = vshrl.u32 1326507024, %v4586
    %v4602 = vor.u32 %v4600, %v4601
    %vm4603 = vcmp.lt.s32.totalorder %v4584, 1
    %vm4604 = vcmp.lt.s32.totalorder %v4584, 2
    %vm4605 = vcmp.lt.s32.totalorder %v4584, 3
    %vm4606 = vcmp.lt.s32.totalorder %v4584, 4
    %v4607 = vsel %vm4603, %v4587, %v4590
    %v4608 = vsel %vm4606, %v4596, 2102212464
    %v4609 = vsel %vm4605, %v4593, %v4608
    %v4610 = vsel %vm4604, %v4607, %v4609
    %v4611 = vsel %vm4603, %v4590, %v4593
    %v4612 = vsel %vm4606, %v4599, 920167782
    %v4613 = vsel %vm4605, %v4596, %v4612
    %v4614 = vsel %vm4604, %v4611, %v4613
    %v4615 = vsel %vm4603, %v4593, %v4596
    %v4616 = vsel %vm4606, %v4602, 1326507024
    %v4617 = vsel %vm4605, %v4599, %v4616
    %v4618 = vsel %vm4604, %v4615, %v4617
    %v4619 = vshll.u32 %v4579, 8
    %v4620 = vand.u32 %v4619, 65535
    %v4621 = vshrl.u32 %v4619, 16
    %v4622 = vand.u32 %v4618, 65535
    %v4623 = vshrl.u32 %v4618, 16
    %v4624 = vmul.u32 %v4620, %v4622
    %v4625 = vmul.u32 %v4620, %v4623
    %v4626 = vmul.u32 %v4621, %v4622
    %v4627 = vmul.u32 %v4621, %v4623
    %v4628 = vshll.u32 %v4625, 16
    %v4629 = vshrl.u32 %v4625, 16
    %v4630 = vshll.u32 %v4626, 16
    %v4631 = vshrl.u32 %v4626, 16
    %vm4632 = vc.u32 %v4624, %v4628
    %v4633 = vsel %vm4632, 1, 0
    %v4634 = vadd.s32 %v4624, %v4628
    %v4635 = vadd.s32 %v4627, %v4633
    %vm4636 = vc.u32 %v4634, %v4630
    %v4637 = vsel %vm4636, 1, 0
    %v4638 = vadd.s32 %v4634, %v4630
    %v4639 = vadd.s32 %v4635, %v4637
    %v4640 = vadd.s32 %v4639, %v4629
    %v4641 = vadd.s32 %v4640, %v4631
    %v4642 = vand.u32 %v4619, 65535
    %v4643 = vshrl.u32 %v4619, 16
    %v4644 = vand.u32 %v4614, 65535
    %v4645 = vshrl.u32 %v4614, 16
    %v4646 = vmul.u32 %v4642, %v4644
    %v4647 = vmul.u32 %v4642, %v4645
    %v4648 = vmul.u32 %v4643, %v4644
    %v4649 = vmul.u32 %v4643, %v4645
    %v4650 = vshll.u32 %v4647, 16
    %v4651 = vshrl.u32 %v4647, 16
    %v4652 = vshll.u32 %v4648, 16
    %v4653 = vshrl.u32 %v4648, 16
    %vm4654 = vc.u32 %v4646, %v4650
    %v4655 = vsel %vm4654, 1, 0
    %v4656 = vadd.s32 %v4646, %v4650
    %v4657 = vadd.s32 %v4649, %v4655
    %vm4658 = vc.u32 %v4656, %v4652
    %v4659 = vsel %vm4658, 1, 0
    %v4660 = vadd.s32 %v4656, %v4652
    %v4661 = vadd.s32 %v4657, %v4659
    %v4662 = vadd.s32 %v4661, %v4651
    %v4663 = vadd.s32 %v4662, %v4653
    %v4664 = vmul.u32 %v4619, %v4610
    %v4665 = vadd.s32 %v4641, %v4660
    %vm4666 = vc.u32 %v4641, %v4660
    %v4667 = vadd.s32 %v4663, 1
    %v4668 = vsel %vm4666, %v4667, %v4663
    %v4669 = vadd.s32 %v4664, %v4668
    %v4670 = vadd.s32 %v4669, 536870912
    %v4671 = vshrl.u32 %v4670, 30
    %v4672 = vshll.u32 %v4671, 30
    %v4673 = vsub.s32 %v4669, %v4672
    %vm4674 = vcmp.lt.s32.totalorder %v4673, 0
    %v4675 = vsub.s32 0, %v4673
    %v4676 = vsel %vm4674, %v4675, %v4673
    %v4677 = vclz %v4676
    %v4678 = vsub.s32 %v4677, 2
    %vm4679 = vcmp.gt.s32.totalorder 0, %v4678
    %v4680 = vsel %vm4679, 0, %v4678
    %v4681 = vsub.s32 32, %v4680
    %v4682 = vshll.u32 %v4673, %v4680
    %v4683 = vshrl.u32 %v4665, %v4681
    %v4684 = vor.u32 %v4682, %v4683
    %v4685 = vsub.s32 4294967266, %v4680
    %v4686 = vadd.s32 %v4685, 127
    %v4687 = vshll.u32 %v4686, 23
    %v4688 = vor.u32 4788187, %v4687
    %v4689 = vand.u32 2147483647, %v4688
    %v4691 = vcvt.s32.f32 %v4684
    %v4692 = vmul.f32 %v4691, %v4689
    %v4693 = vxor.u32 %v4692, 2147483648
    %v4694 = vsel %vm4573, %v4693, %v4692
    %v4695 = vsub.s32 4, %v4671
    %v4696 = vsel %vm4573, %v4695, %v4671
    %v4697 = vsel %vm4572, %v739, %v4694
    %v4698 = vsel %vm4572, 0, %v4696
    %v4699 = vmul.f32 %v4697, %v4697
    %v4700 = vmul.f32 %v4699, -0.001358992
    %v4701 = vadd.f32 %v4700, 0.041655596
    %v4702 = vmul.f32 %v4699, %v4701
    %v4703 = vadd.f32 %v4702, -0.4999988
    %v4704 = vmul.f32 %v4699, %v4703
    %v4705 = vadd.f32 1.0, %v4704
    %v4706 = vmul.f32 %v4697, %v4697
    %v4707 = vmul.f32 %v4706, -0.00019511016
    %v4708 = vadd.f32 %v4707, 0.008332121
    %v4709 = vmul.f32 %v4706, %v4708
    %v4710 = vadd.f32 %v4709, -0.16666654
    %v4711 = vmul.f32 %v4706, %v4710
    %v4712 = vadd.f32 %v4711, 1.0
    %v4713 = vmul.f32 %v4712, %v4697
    %vm4714 = vweird.f32 %v739
    %v4715 = vadd.s32 %v4698, 3
    %v4716 = vand.u32 %v4715, 3
    %vm4717 = vcmp.lt.s32.totalorder %v4716, 2
    %vm4718 = vcmp.eq.s32.totalorder %v4716, 0
    %v4719 = vxor.u32 %v4713, 2147483648
    %v4720 = vsel %vm4718, %v4705, %v4719
    %vm4721 = vcmp.eq.s32.totalorder %v4716, 2
    %v4722 = vxor.u32 %v4705, 2147483648
    %v4723 = vsel %vm4721, %v4722, %v4713
    %v4724 = vsel %vm4717, %v4720, %v4723
    %v4725 = vsel %vm4714, nan, %v4724
    %v4726 = vand.u32 2147483647, %v947
    %vm4727 = vcmp.le.f32.partialorder %v4726, 0.7853982
    %vm4728 = vcmp.lt.s32.totalorder %v947, 0
    %v4729 = vand.u32 %v947, 2139095040
    %v4730 = vshrl.u32 %v4729, 23
    %v4731 = vsub.s32 %v4730, 127
    %v4732 = vand.u32 2147483647, %v947
    %v4733 = vand.u32 %v4732, 8388607
    %v4734 = vor.u32 %v4733, 8388608
    %v4735 = vsub.s32 0, %v4734
    %v4736 = vadd.s32 %v4731, 1
    %vm4737 = vcmp.gt.s32.totalorder %v4736, 0
    %v4738 = vsel %vm4737, %v4736, 0
    %v4739 = vshrl.u32 %v4738, 5
    %v4740 = vand.u32 %v4738, 31
    %v4741 = vsub.s32 32, %v4740
    %v4742 = vshrl.u32 683565275, %v4741
    %v4743 = vshll.u32 683565275, %v4740
    %v4744 = vshrl.u32 2475754826, %v4741
    %v4745 = vor.u32 %v4743, %v4744
    %v4746 = vshll.u32 2475754826, %v4740
    %v4747 = vshrl.u32 2131351028, %v4741
    %v4748 = vor.u32 %v4746, %v4747
    %v4749 = vshll.u32 2131351028, %v4740
    %v4750 = vshrl.u32 2102212464, %v4741
    %v4751 = vor.u32 %v4749, %v4750
    %v4752 = vshll.u32 2102212464, %v4740
    %v4753 = vshrl.u32 920167782, %v4741
    %v4754 = vor.u32 %v4752, %v4753
    %v4755 = vshll.u32 920167782, %v4740
    %v4756 = vshrl.u32 1326507024, %v4741
    %v4757 = vor.u32 %v4755, %v4756
    %vm4758 = vcmp.lt.s32.totalorder %v4739, 1
    %vm4759 = vcmp.lt.s32.totalorder %v4739, 2
    %vm4760 = vcmp.lt.s32.totalorder %v4739, 3
    %vm4761 = vcmp.lt.s32.totalorder %v4739, 4
    %v4762 = vsel %vm4758, %v4742, %v4745
    %v4763 = vsel %vm4761, %v4751, 2102212464
    %v4764 = vsel %vm4760, %v4748, %v4763
    %v4765 = vsel %vm4759, %v4762, %v4764
    %v4766 = vsel %vm4758, %v4745, %v4748
    %v4767 = vsel %vm4761, %v4754, 920167782
    %v4768 = vsel %vm4760, %v4751, %v4767
    %v4769 = vsel %vm4759, %v4766, %v4768
    %v4770 = vsel %vm4758, %v4748, %v4751
    %v4771 = vsel %vm4761, %v4757, 1326507024
    %v4772 = vsel %vm4760, %v4754, %v4771
    %v4773 = vsel %vm4759, %v4770, %v4772
    %v4774 = vshll.u32 %v4734, 8
    %v4775 = vand.u32 %v4774, 65535
    %v4776 = vshrl.u32 %v4774, 16
    %v4777 = vand.u32 %v4773, 65535
    %v4778 = vshrl.u32 %v4773, 16
    %v4779 = vmul.u32 %v4775, %v4777
    %v4780 = vmul.u32 %v4775, %v4778
    %v4781 = vmul.u32 %v4776, %v4777
    %v4782 = vmul.u32 %v4776, %v4778
    %v4783 = vshll.u32 %v4780, 16
    %v4784 = vshrl.u32 %v4780, 16
    %v4785 = vshll.u32 %v4781, 16
    %v4786 = vshrl.u32 %v4781, 16
    %vm4787 = vc.u32 %v4779, %v4783
    %v4788 = vsel %vm4787, 1, 0
    %v4789 = vadd.s32 %v4779, %v4783
    %v4790 = vadd.s32 %v4782, %v4788
    %vm4791 = vc.u32 %v4789, %v4785
    %v4792 = vsel %vm4791, 1, 0
    %v4793 = vadd.s32 %v4789, %v4785
    %v4794 = vadd.s32 %v4790, %v4792
    %v4795 = vadd.s32 %v4794, %v4784
    %v4796 = vadd.s32 %v4795, %v4786
    %v4797 = vand.u32 %v4774, 65535
    %v4798 = vshrl.u32 %v4774, 16
    %v4799 = vand.u32 %v4769, 65535
    %v4800 = vshrl.u32 %v4769, 16
    %v4801 = vmul.u32 %v4797, %v4799
    %v4802 = vmul.u32 %v4797, %v4800
    %v4803 = vmul.u32 %v4798, %v4799
    %v4804 = vmul.u32 %v4798, %v4800
    %v4805 = vshll.u32 %v4802, 16
    %v4806 = vshrl.u32 %v4802, 16
    %v4807 = vshll.u32 %v4803, 16
    %v4808 = vshrl.u32 %v4803, 16
    %vm4809 = vc.u32 %v4801, %v4805
    %v4810 = vsel %vm4809, 1, 0
    %v4811 = vadd.s32 %v4801, %v4805
    %v4812 = vadd.s32 %v4804, %v4810
    %vm4813 = vc.u32 %v4811, %v4807
    %v4814 = vsel %vm4813, 1, 0
    %v4815 = vadd.s32 %v4811, %v4807
    %v4816 = vadd.s32 %v4812, %v4814
    %v4817 = vadd.s32 %v4816, %v4806
    %v4818 = vadd.s32 %v4817, %v4808
    %v4819 = vmul.u32 %v4774, %v4765
    %v4820 = vadd.s32 %v4796, %v4815
    %vm4821 = vc.u32 %v4796, %v4815
    %v4822 = vadd.s32 %v4818, 1
    %v4823 = vsel %vm4821, %v4822, %v4818
    %v4824 = vadd.s32 %v4819, %v4823
    %v4825 = vadd.s32 %v4824, 536870912
    %v4826 = vshrl.u32 %v4825, 30
    %v4827 = vshll.u32 %v4826, 30
    %v4828 = vsub.s32 %v4824, %v4827
    %vm4829 = vcmp.lt.s32.totalorder %v4828, 0
    %v4830 = vsub.s32 0, %v4828
    %v4831 = vsel %vm4829, %v4830, %v4828
    %v4832 = vclz %v4831
    %v4833 = vsub.s32 %v4832, 2
    %vm4834 = vcmp.gt.s32.totalorder 0, %v4833
    %v4835 = vsel %vm4834, 0, %v4833
    %v4836 = vsub.s32 32, %v4835
    %v4837 = vshll.u32 %v4828, %v4835
    %v4838 = vshrl.u32 %v4820, %v4836
    %v4839 = vor.u32 %v4837, %v4838
    %v4840 = vsub.s32 4294967266, %v4835
    %v4841 = vadd.s32 %v4840, 127
    %v4842 = vshll.u32 %v4841, 23
    %v4843 = vor.u32 4788187, %v4842
    %v4844 = vand.u32 2147483647, %v4843
    %v4846 = vcvt.s32.f32 %v4839
    %v4847 = vmul.f32 %v4846, %v4844
    %v4848 = vxor.u32 %v4847, 2147483648
    %v4849 = vsel %vm4728, %v4848, %v4847
    %v4850 = vsub.s32 4, %v4826
    %v4851 = vsel %vm4728, %v4850, %v4826
    %v4852 = vsel %vm4727, %v947, %v4849
    %v4853 = vsel %vm4727, 0, %v4851
    %v4854 = vmul.f32 %v4852, %v4852
    %v4855 = vmul.f32 %v4854, -0.001358992
    %v4856 = vadd.f32 %v4855, 0.041655596
    %v4857 = vmul.f32 %v4854, %v4856
    %v4858 = vadd.f32 %v4857, -0.4999988
    %v4859 = vmul.f32 %v4854, %v4858
    %v4860 = vadd.f32 1.0, %v4859
    %v4861 = vmul.f32 %v4852, %v4852
    %v4862 = vmul.f32 %v4861, -0.00019511016
    %v4863 = vadd.f32 %v4862, 0.008332121
    %v4864 = vmul.f32 %v4861, %v4863
    %v4865 = vadd.f32 %v4864, -0.16666654
    %v4866 = vmul.f32 %v4861, %v4865
    %v4867 = vadd.f32 %v4866, 1.0
    %v4868 = vmul.f32 %v4867, %v4852
    %vm4869 = vweird.f32 %v947
    %v4870 = vadd.s32 %v4853, 3
    %v4871 = vand.u32 %v4870, 3
    %vm4872 = vcmp.lt.s32.totalorder %v4871, 2
    %vm4873 = vcmp.eq.s32.totalorder %v4871, 0
    %v4874 = vxor.u32 %v4868, 2147483648
    %v4875 = vsel %vm4873, %v4860, %v4874
    %vm4876 = vcmp.eq.s32.totalorder %v4871, 2
    %v4877 = vxor.u32 %v4860, 2147483648
    %v4878 = vsel %vm4876, %v4877, %v4868
    %v4879 = vsel %vm4872, %v4875, %v4878
    %v4880 = vsel %vm4869, nan, %v4879
    %v4881 = vand.u32 2147483647, %v1155
    %vm4882 = vcmp.le.f32.partialorder %v4881, 0.7853982
    %vm4883 = vcmp.lt.s32.totalorder %v1155, 0
    %v4884 = vand.u32 %v1155, 2139095040
    %v4885 = vshrl.u32 %v4884, 23
    %v4886 = vsub.s32 %v4885, 127
    %v4887 = vand.u32 2147483647, %v1155
    %v4888 = vand.u32 %v4887, 8388607
    %v4889 = vor.u32 %v4888, 8388608
    %v4890 = vsub.s32 0, %v4889
    %v4891 = vadd.s32 %v4886, 1
    %vm4892 = vcmp.gt.s32.totalorder %v4891, 0
    %v4893 = vsel %vm4892, %v4891, 0
    %v4894 = vshrl.u32 %v4893, 5
    %v4895 = vand.u32 %v4893, 31
    %v4896 = vsub.s32 32, %v4895
    %v4897 = vshrl.u32 683565275, %v4896
    %v4898 = vshll.u32 683565275, %v4895
    %v4899 = vshrl.u32 2475754826, %v4896
    %v4900 = vor.u32 %v4898, %v4899
    %v4901 = vshll.u32 2475754826, %v4895
    %v4902 = vshrl.u32 2131351028, %v4896
    %v4903 = vor.u32 %v4901, %v4902
    %v4904 = vshll.u32 2131351028, %v4895
    %v4905 = vshrl.u32 2102212464, %v4896
    %v4906 = vor.u32 %v4904, %v4905
    %v4907 = vshll.u32 2102212464, %v4895
    %v4908 = vshrl.u32 920167782, %v4896
    %v4909 = vor.u32 %v4907, %v4908
    %v4910 = vshll.u32 920167782, %v4895
    %v4911 = vshrl.u32 1326507024, %v4896
    %v4912 = vor.u32 %v4910, %v4911
    %vm4913 = vcmp.lt.s32.totalorder %v4894, 1
    %vm4914 = vcmp.lt.s32.totalorder %v4894, 2
    %vm4915 = vcmp.lt.s32.totalorder %v4894, 3
    %vm4916 = vcmp.lt.s32.totalorder %v4894, 4
    %v4917 = vsel %vm4913, %v4897, %v4900
    %v4918 = vsel %vm4916, %v4906, 2102212464
    %v4919 = vsel %vm4915, %v4903, %v4918
    %v4920 = vsel %vm4914, %v4917, %v4919
    %v4921 = vsel %vm4913, %v4900, %v4903
    %v4922 = vsel %vm4916, %v4909, 920167782
    %v4923 = vsel %vm4915, %v4906, %v4922
    %v4924 = vsel %vm4914, %v4921, %v4923
    %v4925 = vsel %vm4913, %v4903, %v4906
    %v4926 = vsel %vm4916, %v4912, 1326507024
    %v4927 = vsel %vm4915, %v4909, %v4926
    %v4928 = vsel %vm4914, %v4925, %v4927
    %v4929 = vshll.u32 %v4889, 8
    %v4930 = vand.u32 %v4929, 65535
    %v4931 = vshrl.u32 %v4929, 16
    %v4932 = vand.u32 %v4928, 65535
    %v4933 = vshrl.u32 %v4928, 16
    %v4934 = vmul.u32 %v4930, %v4932
    %v4935 = vmul.u32 %v4930, %v4933
    %v4936 = vmul.u32 %v4931, %v4932
    %v4937 = vmul.u32 %v4931, %v4933
    %v4938 = vshll.u32 %v4935, 16
    %v4939 = vshrl.u32 %v4935, 16
    %v4940 = vshll.u32 %v4936, 16
    %v4941 = vshrl.u32 %v4936, 16
    %vm4942 = vc.u32 %v4934, %v4938
    %v4943 = vsel %vm4942, 1, 0
    %v4944 = vadd.s32 %v4934, %v4938
    %v4945 = vadd.s32 %v4937, %v4943
    %vm4946 = vc.u32 %v4944, %v4940
    %v4947 = vsel %vm4946, 1, 0
    %v4948 = vadd.s32 %v4944, %v4940
    %v4949 = vadd.s32 %v4945, %v4947
    %v4950 = vadd.s32 %v4949, %v4939
    %v4951 = vadd.s32 %v4950, %v4941
    %v4952 = vand.u32 %v4929, 65535
    %v4953 = vshrl.u32 %v4929, 16
    %v4954 = vand.u32 %v4924, 65535
    %v4955 = vshrl.u32 %v4924, 16
    %v4956 = vmul.u32 %v4952, %v4954
    %v4957 = vmul.u32 %v4952, %v4955
    %v4958 = vmul.u32 %v4953, %v4954
    %v4959 = vmul.u32 %v4953, %v4955
    %v4960 = vshll.u32 %v4957, 16
    %v4961 = vshrl.u32 %v4957, 16
    %v4962 = vshll.u32 %v4958, 16
    %v4963 = vshrl.u32 %v4958, 16
    %vm4964 = vc.u32 %v4956, %v4960
    %v4965 = vsel %vm4964, 1, 0
    %v4966 = vadd.s32 %v4956, %v4960
    %v4967 = vadd.s32 %v4959, %v4965
    %vm4968 = vc.u32 %v4966, %v4962
    %v4969 = vsel %vm4968, 1, 0
    %v4970 = vadd.s32 %v4966, %v4962
    %v4971 = vadd.s32 %v4967, %v4969
    %v4972 = vadd.s32 %v4971, %v4961
    %v4973 = vadd.s32 %v4972, %v4963
    %v4974 = vmul.u32 %v4929, %v4920
    %v4975 = vadd.s32 %v4951, %v4970
    %vm4976 = vc.u32 %v4951, %v4970
    %v4977 = vadd.s32 %v4973, 1
    %v4978 = vsel %vm4976, %v4977, %v4973
    %v4979 = vadd.s32 %v4974, %v4978
    %v4980 = vadd.s32 %v4979, 536870912
    %v4981 = vshrl.u32 %v4980, 30
    %v4982 = vshll.u32 %v4981, 30
    %v4983 = vsub.s32 %v4979, %v4982
    %vm4984 = vcmp.lt.s32.totalorder %v4983, 0
    %v4985 = vsub.s32 0, %v4983
    %v4986 = vsel %vm4984, %v4985, %v4983
    %v4987 = vclz %v4986
    %v4988 = vsub.s32 %v4987, 2
    %vm4989 = vcmp.gt.s32.totalorder 0, %v4988
    %v4990 = vsel %vm4989, 0, %v4988
    %v4991 = vsub.s32 32, %v4990
    %v4992 = vshll.u32 %v4983, %v4990
    %v4993 = vshrl.u32 %v4975, %v4991
    %v4994 = vor.u32 %v4992, %v4993
    %v4995 = vsub.s32 4294967266, %v4990
    %v4996 = vadd.s32 %v4995, 127
    %v4997 = vshll.u32 %v4996, 23
    %v4998 = vor.u32 4788187, %v4997
    %v4999 = vand.u32 2147483647, %v4998
    %v5001 = vcvt.s32.f32 %v4994
    %v5002 = vmul.f32 %v5001, %v4999
    %v5003 = vxor.u32 %v5002, 2147483648
    %v5004 = vsel %vm4883, %v5003, %v5002
    %v5005 = vsub.s32 4, %v4981
    %v5006 = vsel %vm4883, %v5005, %v4981
    %v5007 = vsel %vm4882, %v1155, %v5004
    %v5008 = vsel %vm4882, 0, %v5006
    %v5009 = vmul.f32 %v5007, %v5007
    %v5010 = vmul.f32 %v5009, -0.001358992
    %v5011 = vadd.f32 %v5010, 0.041655596
    %v5012 = vmul.f32 %v5009, %v5011
    %v5013 = vadd.f32 %v5012, -0.4999988
    %v5014 = vmul.f32 %v5009, %v5013
    %v5015 = vadd.f32 1.0, %v5014
    %v5016 = vmul.f32 %v5007, %v5007
    %v5017 = vmul.f32 %v5016, -0.00019511016
    %v5018 = vadd.f32 %v5017, 0.008332121
    %v5019 = vmul.f32 %v5016, %v5018
    %v5020 = vadd.f32 %v5019, -0.16666654
    %v5021 = vmul.f32 %v5016, %v5020
    %v5022 = vadd.f32 %v5021, 1.0
    %v5023 = vmul.f32 %v5022, %v5007
    %vm5024 = vweird.f32 %v1155
    %v5025 = vadd.s32 %v5008, 3
    %v5026 = vand.u32 %v5025, 3
    %vm5027 = vcmp.lt.s32.totalorder %v5026, 2
    %vm5028 = vcmp.eq.s32.totalorder %v5026, 0
    %v5029 = vxor.u32 %v5023, 2147483648
    %v5030 = vsel %vm5028, %v5015, %v5029
    %vm5031 = vcmp.eq.s32.totalorder %v5026, 2
    %v5032 = vxor.u32 %v5015, 2147483648
    %v5033 = vsel %vm5031, %v5032, %v5023
    %v5034 = vsel %vm5027, %v5030, %v5033
    %v5035 = vsel %vm5024, nan, %v5034
    %v5036 = vand.u32 2147483647, %v1363
    %vm5037 = vcmp.le.f32.partialorder %v5036, 0.7853982
    %vm5038 = vcmp.lt.s32.totalorder %v1363, 0
    %v5039 = vand.u32 %v1363, 2139095040
    %v5040 = vshrl.u32 %v5039, 23
    %v5041 = vsub.s32 %v5040, 127
    %v5042 = vand.u32 2147483647, %v1363
    %v5043 = vand.u32 %v5042, 8388607
    %v5044 = vor.u32 %v5043, 8388608
    %v5045 = vsub.s32 0, %v5044
    %v5046 = vadd.s32 %v5041, 1
    %vm5047 = vcmp.gt.s32.totalorder %v5046, 0
    %v5048 = vsel %vm5047, %v5046, 0
    %v5049 = vshrl.u32 %v5048, 5
    %v5050 = vand.u32 %v5048, 31
    %v5051 = vsub.s32 32, %v5050
    %v5052 = vshrl.u32 683565275, %v5051
    %v5053 = vshll.u32 683565275, %v5050
    %v5054 = vshrl.u32 2475754826, %v5051
    %v5055 = vor.u32 %v5053, %v5054
    %v5056 = vshll.u32 2475754826, %v5050
    %v5057 = vshrl.u32 2131351028, %v5051
    %v5058 = vor.u32 %v5056, %v5057
    %v5059 = vshll.u32 2131351028, %v5050
    %v5060 = vshrl.u32 2102212464, %v5051
    %v5061 = vor.u32 %v5059, %v5060
    %v5062 = vshll.u32 2102212464, %v5050
    %v5063 = vshrl.u32 920167782, %v5051
    %v5064 = vor.u32 %v5062, %v5063
    %v5065 = vshll.u32 920167782, %v5050
    %v5066 = vshrl.u32 1326507024, %v5051
    %v5067 = vor.u32 %v5065, %v5066
    %vm5068 = vcmp.lt.s32.totalorder %v5049, 1
    %vm5069 = vcmp.lt.s32.totalorder %v5049, 2
    %vm5070 = vcmp.lt.s32.totalorder %v5049, 3
    %vm5071 = vcmp.lt.s32.totalorder %v5049, 4
    %v5072 = vsel %vm5068, %v5052, %v5055
    %v5073 = vsel %vm5071, %v5061, 2102212464
    %v5074 = vsel %vm5070, %v5058, %v5073
    %v5075 = vsel %vm5069, %v5072, %v5074
    %v5076 = vsel %vm5068, %v5055, %v5058
    %v5077 = vsel %vm5071, %v5064, 920167782
    %v5078 = vsel %vm5070, %v5061, %v5077
    %v5079 = vsel %vm5069, %v5076, %v5078
    %v5080 = vsel %vm5068, %v5058, %v5061
    %v5081 = vsel %vm5071, %v5067, 1326507024
    %v5082 = vsel %vm5070, %v5064, %v5081
    %v5083 = vsel %vm5069, %v5080, %v5082
    %v5084 = vshll.u32 %v5044, 8
    %v5085 = vand.u32 %v5084, 65535
    %v5086 = vshrl.u32 %v5084, 16
    %v5087 = vand.u32 %v5083, 65535
    %v5088 = vshrl.u32 %v5083, 16
    %v5089 = vmul.u32 %v5085, %v5087
    %v5090 = vmul.u32 %v5085, %v5088
    %v5091 = vmul.u32 %v5086, %v5087
    %v5092 = vmul.u32 %v5086, %v5088
    %v5093 = vshll.u32 %v5090, 16
    %v5094 = vshrl.u32 %v5090, 16
    %v5095 = vshll.u32 %v5091, 16
    %v5096 = vshrl.u32 %v5091, 16
    %vm5097 = vc.u32 %v5089, %v5093
    %v5098 = vsel %vm5097, 1, 0
    %v5099 = vadd.s32 %v5089, %v5093
    %v5100 = vadd.s32 %v5092, %v5098
    %vm5101 = vc.u32 %v5099, %v5095
    %v5102 = vsel %vm5101, 1, 0
    %v5103 = vadd.s32 %v5099, %v5095
    %v5104 = vadd.s32 %v5100, %v5102
    %v5105 = vadd.s32 %v5104, %v5094
    %v5106 = vadd.s32 %v5105, %v5096
    %v5107 = vand.u32 %v5084, 65535
    %v5108 = vshrl.u32 %v5084, 16
    %v5109 = vand.u32 %v5079, 65535
    %v5110 = vshrl.u32 %v5079, 16
    %v5111 = vmul.u32 %v5107, %v5109
    %v5112 = vmul.u32 %v5107, %v5110
    %v5113 = vmul.u32 %v5108, %v5109
    %v5114 = vmul.u32 %v5108, %v5110
    %v5115 = vshll.u32 %v5112, 16
    %v5116 = vshrl.u32 %v5112, 16
    %v5117 = vshll.u32 %v5113, 16
    %v5118 = vshrl.u32 %v5113, 16
    %vm5119 = vc.u32 %v5111, %v5115
    %v5120 = vsel %vm5119, 1, 0
    %v5121 = vadd.s32 %v5111, %v5115
    %v5122 = vadd.s32 %v5114, %v5120
    %vm5123 = vc.u32 %v5121, %v5117
    %v5124 = vsel %vm5123, 1, 0
    %v5125 = vadd.s32 %v5121, %v5117
    %v5126 = vadd.s32 %v5122, %v5124
    %v5127 = vadd.s32 %v5126, %v5116
    %v5128 = vadd.s32 %v5127, %v5118
    %v5129 = vmul.u32 %v5084, %v5075
    %v5130 = vadd.s32 %v5106, %v5125
    %vm5131 = vc.u32 %v5106, %v5125
    %v5132 = vadd.s32 %v5128, 1
    %v5133 = vsel %vm5131, %v5132, %v5128
    %v5134 = vadd.s32 %v5129, %v5133
    %v5135 = vadd.s32 %v5134, 536870912
    %v5136 = vshrl.u32 %v5135, 30
    %v5137 = vshll.u32 %v5136, 30
    %v5138 = vsub.s32 %v5134, %v5137
    %vm5139 = vcmp.lt.s32.totalorder %v5138, 0
    %v5140 = vsub.s32 0, %v5138
    %v5141 = vsel %vm5139, %v5140, %v5138
    %v5142 = vclz %v5141
    %v5143 = vsub.s32 %v5142, 2
    %vm5144 = vcmp.gt.s32.totalorder 0, %v5143
    %v5145 = vsel %vm5144, 0, %v5143
    %v5146 = vsub.s32 32, %v5145
    %v5147 = vshll.u32 %v5138, %v5145
    %v5148 = vshrl.u32 %v5130, %v5146
    %v5149 = vor.u32 %v5147, %v5148
    %v5150 = vsub.s32 4294967266, %v5145
    %v5151 = vadd.s32 %v5150, 127
    %v5152 = vshll.u32 %v5151, 23
    %v5153 = vor.u32 4788187, %v5152
    %v5154 = vand.u32 2147483647, %v5153
    %v5156 = vcvt.s32.f32 %v5149
    %v5157 = vmul.f32 %v5156, %v5154
    %v5158 = vxor.u32 %v5157, 2147483648
    %v5159 = vsel %vm5038, %v5158, %v5157
    %v5160 = vsub.s32 4, %v5136
    %v5161 = vsel %vm5038, %v5160, %v5136
    %v5162 = vsel %vm5037, %v1363, %v5159
    %v5163 = vsel %vm5037, 0, %v5161
    %v5164 = vmul.f32 %v5162, %v5162
    %v5165 = vmul.f32 %v5164, -0.001358992
    %v5166 = vadd.f32 %v5165, 0.041655596
    %v5167 = vmul.f32 %v5164, %v5166
    %v5168 = vadd.f32 %v5167, -0.4999988
    %v5169 = vmul.f32 %v5164, %v5168
    %v5170 = vadd.f32 1.0, %v5169
    %v5171 = vmul.f32 %v5162, %v5162
    %v5172 = vmul.f32 %v5171, -0.00019511016
    %v5173 = vadd.f32 %v5172, 0.008332121
    %v5174 = vmul.f32 %v5171, %v5173
    %v5175 = vadd.f32 %v5174, -0.16666654
    %v5176 = vmul.f32 %v5171, %v5175
    %v5177 = vadd.f32 %v5176, 1.0
    %v5178 = vmul.f32 %v5177, %v5162
    %vm5179 = vweird.f32 %v1363
    %v5180 = vadd.s32 %v5163, 3
    %v5181 = vand.u32 %v5180, 3
    %vm5182 = vcmp.lt.s32.totalorder %v5181, 2
    %vm5183 = vcmp.eq.s32.totalorder %v5181, 0
    %v5184 = vxor.u32 %v5178, 2147483648
    %v5185 = vsel %vm5183, %v5170, %v5184
    %vm5186 = vcmp.eq.s32.totalorder %v5181, 2
    %v5187 = vxor.u32 %v5170, 2147483648
    %v5188 = vsel %vm5186, %v5187, %v5178
    %v5189 = vsel %vm5182, %v5185, %v5188
    %v5190 = vsel %vm5179, nan, %v5189
    %v5191 = vand.u32 2147483647, %v1571
    %vm5192 = vcmp.le.f32.partialorder %v5191, 0.7853982
    %vm5193 = vcmp.lt.s32.totalorder %v1571, 0
    %v5194 = vand.u32 %v1571, 2139095040
    %v5195 = vshrl.u32 %v5194, 23
    %v5196 = vsub.s32 %v5195, 127
    %v5197 = vand.u32 2147483647, %v1571
    %v5198 = vand.u32 %v5197, 8388607
    %v5199 = vor.u32 %v5198, 8388608
    %v5200 = vsub.s32 0, %v5199
    %v5201 = vadd.s32 %v5196, 1
    %vm5202 = vcmp.gt.s32.totalorder %v5201, 0
    %v5203 = vsel %vm5202, %v5201, 0
    %v5204 = vshrl.u32 %v5203, 5
    %v5205 = vand.u32 %v5203, 31
    %v5206 = vsub.s32 32, %v5205
    %v5207 = vshrl.u32 683565275, %v5206
    %v5208 = vshll.u32 683565275, %v5205
    %v5209 = vshrl.u32 2475754826, %v5206
    %v5210 = vor.u32 %v5208, %v5209
    %v5211 = vshll.u32 2475754826, %v5205
    %v5212 = vshrl.u32 2131351028, %v5206
    %v5213 = vor.u32 %v5211, %v5212
    %v5214 = vshll.u32 2131351028, %v5205
    %v5215 = vshrl.u32 2102212464, %v5206
    %v5216 = vor.u32 %v5214, %v5215
    %v5217 = vshll.u32 2102212464, %v5205
    %v5218 = vshrl.u32 920167782, %v5206
    %v5219 = vor.u32 %v5217, %v5218
    %v5220 = vshll.u32 920167782, %v5205
    %v5221 = vshrl.u32 1326507024, %v5206
    %v5222 = vor.u32 %v5220, %v5221
    %vm5223 = vcmp.lt.s32.totalorder %v5204, 1
    %vm5224 = vcmp.lt.s32.totalorder %v5204, 2
    %vm5225 = vcmp.lt.s32.totalorder %v5204, 3
    %vm5226 = vcmp.lt.s32.totalorder %v5204, 4
    %v5227 = vsel %vm5223, %v5207, %v5210
    %v5228 = vsel %vm5226, %v5216, 2102212464
    %v5229 = vsel %vm5225, %v5213, %v5228
    %v5230 = vsel %vm5224, %v5227, %v5229
    %v5231 = vsel %vm5223, %v5210, %v5213
    %v5232 = vsel %vm5226, %v5219, 920167782
    %v5233 = vsel %vm5225, %v5216, %v5232
    %v5234 = vsel %vm5224, %v5231, %v5233
    %v5235 = vsel %vm5223, %v5213, %v5216
    %v5236 = vsel %vm5226, %v5222, 1326507024
    %v5237 = vsel %vm5225, %v5219, %v5236
    %v5238 = vsel %vm5224, %v5235, %v5237
    %v5239 = vshll.u32 %v5199, 8
    %v5240 = vand.u32 %v5239, 65535
    %v5241 = vshrl.u32 %v5239, 16
    %v5242 = vand.u32 %v5238, 65535
    %v5243 = vshrl.u32 %v5238, 16
    %v5244 = vmul.u32 %v5240, %v5242
    %v5245 = vmul.u32 %v5240, %v5243
    %v5246 = vmul.u32 %v5241, %v5242
    %v5247 = vmul.u32 %v5241, %v5243
    %v5248 = vshll.u32 %v5245, 16
    %v5249 = vshrl.u32 %v5245, 16
    %v5250 = vshll.u32 %v5246, 16
    %v5251 = vshrl.u32 %v5246, 16
    %vm5252 = vc.u32 %v5244, %v5248
    %v5253 = vsel %vm5252, 1, 0
    %v5254 = vadd.s32 %v5244, %v5248
    %v5255 = vadd.s32 %v5247, %v5253
    %vm5256 = vc.u32 %v5254, %v5250
    %v5257 = vsel %vm5256, 1, 0
    %v5258 = vadd.s32 %v5254, %v5250
    %v5259 = vadd.s32 %v5255, %v5257
    %v5260 = vadd.s32 %v5259, %v5249
    %v5261 = vadd.s32 %v5260, %v5251
    %v5262 = vand.u32 %v5239, 65535
    %v5263 = vshrl.u32 %v5239, 16
    %v5264 = vand.u32 %v5234, 65535
    %v5265 = vshrl.u32 %v5234, 16
    %v5266 = vmul.u32 %v5262, %v5264
    %v5267 = vmul.u32 %v5262, %v5265
    %v5268 = vmul.u32 %v5263, %v5264
    %v5269 = vmul.u32 %v5263, %v5265
    %v5270 = vshll.u32 %v5267, 16
    %v5271 = vshrl.u32 %v5267, 16
    %v5272 = vshll.u32 %v5268, 16
    %v5273 = vshrl.u32 %v5268, 16
    %vm5274 = vc.u32 %v5266, %v5270
    %v5275 = vsel %vm5274, 1, 0
    %v5276 = vadd.s32 %v5266, %v5270
    %v5277 = vadd.s32 %v5269, %v5275
    %vm5278 = vc.u32 %v5276, %v5272
    %v5279 = vsel %vm5278, 1, 0
    %v5280 = vadd.s32 %v5276, %v5272
    %v5281 = vadd.s32 %v5277, %v5279
    %v5282 = vadd.s32 %v5281, %v5271
    %v5283 = vadd.s32 %v5282, %v5273
    %v5284 = vmul.u32 %v5239, %v5230
    %v5285 = vadd.s32 %v5261, %v5280
    %vm5286 = vc.u32 %v5261, %v5280
    %v5287 = vadd.s32 %v5283, 1
    %v5288 = vsel %vm5286, %v5287, %v5283
    %v5289 = vadd.s32 %v5284, %v5288
    %v5290 = vadd.s32 %v5289, 536870912
    %v5291 = vshrl.u32 %v5290, 30
    %v5292 = vshll.u32 %v5291, 30
    %v5293 = vsub.s32 %v5289, %v5292
    %vm5294 = vcmp.lt.s32.totalorder %v5293, 0
    %v5295 = vsub.s32 0, %v5293
    %v5296 = vsel %vm5294, %v5295, %v5293
    %v5297 = vclz %v5296
    %v5298 = vsub.s32 %v5297, 2
    %vm5299 = vcmp.gt.s32.totalorder 0, %v5298
    %v5300 = vsel %vm5299, 0, %v5298
    %v5301 = vsub.s32 32, %v5300
    %v5302 = vshll.u32 %v5293, %v5300
    %v5303 = vshrl.u32 %v5285, %v5301
    %v5304 = vor.u32 %v5302, %v5303
    %v5305 = vsub.s32 4294967266, %v5300
    %v5306 = vadd.s32 %v5305, 127
    %v5307 = vshll.u32 %v5306, 23
    %v5308 = vor.u32 4788187, %v5307
    %v5309 = vand.u32 2147483647, %v5308
    %v5311 = vcvt.s32.f32 %v5304
    %v5312 = vmul.f32 %v5311, %v5309
    %v5313 = vxor.u32 %v5312, 2147483648
    %v5314 = vsel %vm5193, %v5313, %v5312
    %v5315 = vsub.s32 4, %v5291
    %v5316 = vsel %vm5193, %v5315, %v5291
    %v5317 = vsel %vm5192, %v1571, %v5314
    %v5318 = vsel %vm5192, 0, %v5316
    %v5319 = vmul.f32 %v5317, %v5317
    %v5320 = vmul.f32 %v5319, -0.001358992
    %v5321 = vadd.f32 %v5320, 0.041655596
    %v5322 = vmul.f32 %v5319, %v5321
    %v5323 = vadd.f32 %v5322, -0.4999988
    %v5324 = vmul.f32 %v5319, %v5323
    %v5325 = vadd.f32 1.0, %v5324
    %v5326 = vmul.f32 %v5317, %v5317
    %v5327 = vmul.f32 %v5326, -0.00019511016
    %v5328 = vadd.f32 %v5327, 0.008332121
    %v5329 = vmul.f32 %v5326, %v5328
    %v5330 = vadd.f32 %v5329, -0.16666654
    %v5331 = vmul.f32 %v5326, %v5330
    %v5332 = vadd.f32 %v5331, 1.0
    %v5333 = vmul.f32 %v5332, %v5317
    %vm5334 = vweird.f32 %v1571
    %v5335 = vadd.s32 %v5318, 3
    %v5336 = vand.u32 %v5335, 3
    %vm5337 = vcmp.lt.s32.totalorder %v5336, 2
    %vm5338 = vcmp.eq.s32.totalorder %v5336, 0
    %v5339 = vxor.u32 %v5333, 2147483648
    %v5340 = vsel %vm5338, %v5325, %v5339
    %vm5341 = vcmp.eq.s32.totalorder %v5336, 2
    %v5342 = vxor.u32 %v5325, 2147483648
    %v5343 = vsel %vm5341, %v5342, %v5333
    %v5344 = vsel %vm5337, %v5340, %v5343
    %v5345 = vsel %vm5334, nan, %v5344
    %v5346 = vand.u32 2147483647, %v1779
    %vm5347 = vcmp.le.f32.partialorder %v5346, 0.7853982
    %vm5348 = vcmp.lt.s32.totalorder %v1779, 0
    %v5349 = vand.u32 %v1779, 2139095040
    %v5350 = vshrl.u32 %v5349, 23
    %v5351 = vsub.s32 %v5350, 127
    %v5352 = vand.u32 2147483647, %v1779
    %v5353 = vand.u32 %v5352, 8388607
    %v5354 = vor.u32 %v5353, 8388608
    %v5355 = vsub.s32 0, %v5354
    %v5356 = vadd.s32 %v5351, 1
    %vm5357 = vcmp.gt.s32.totalorder %v5356, 0
    %v5358 = vsel %vm5357, %v5356, 0
    %v5359 = vshrl.u32 %v5358, 5
    %v5360 = vand.u32 %v5358, 31
    %v5361 = vsub.s32 32, %v5360
    %v5362 = vshrl.u32 683565275, %v5361
    %v5363 = vshll.u32 683565275, %v5360
    %v5364 = vshrl.u32 2475754826, %v5361
    %v5365 = vor.u32 %v5363, %v5364
    %v5366 = vshll.u32 2475754826, %v5360
    %v5367 = vshrl.u32 2131351028, %v5361
    %v5368 = vor.u32 %v5366, %v5367
    %v5369 = vshll.u32 2131351028, %v5360
    %v5370 = vshrl.u32 2102212464, %v5361
    %v5371 = vor.u32 %v5369, %v5370
    %v5372 = vshll.u32 2102212464, %v5360
    %v5373 = vshrl.u32 920167782, %v5361
    %v5374 = vor.u32 %v5372, %v5373
    %v5375 = vshll.u32 920167782, %v5360
    %v5376 = vshrl.u32 1326507024, %v5361
    %v5377 = vor.u32 %v5375, %v5376
    %vm5378 = vcmp.lt.s32.totalorder %v5359, 1
    %vm5379 = vcmp.lt.s32.totalorder %v5359, 2
    %vm5380 = vcmp.lt.s32.totalorder %v5359, 3
    %vm5381 = vcmp.lt.s32.totalorder %v5359, 4
    %v5382 = vsel %vm5378, %v5362, %v5365
    %v5383 = vsel %vm5381, %v5371, 2102212464
    %v5384 = vsel %vm5380, %v5368, %v5383
    %v5385 = vsel %vm5379, %v5382, %v5384
    %v5386 = vsel %vm5378, %v5365, %v5368
    %v5387 = vsel %vm5381, %v5374, 920167782
    %v5388 = vsel %vm5380, %v5371, %v5387
    %v5389 = vsel %vm5379, %v5386, %v5388
    %v5390 = vsel %vm5378, %v5368, %v5371
    %v5391 = vsel %vm5381, %v5377, 1326507024
    %v5392 = vsel %vm5380, %v5374, %v5391
    %v5393 = vsel %vm5379, %v5390, %v5392
    %v5394 = vshll.u32 %v5354, 8
    %v5395 = vand.u32 %v5394, 65535
    %v5396 = vshrl.u32 %v5394, 16
    %v5397 = vand.u32 %v5393, 65535
    %v5398 = vshrl.u32 %v5393, 16
    %v5399 = vmul.u32 %v5395, %v5397
    %v5400 = vmul.u32 %v5395, %v5398
    %v5401 = vmul.u32 %v5396, %v5397
    %v5402 = vmul.u32 %v5396, %v5398
    %v5403 = vshll.u32 %v5400, 16
    %v5404 = vshrl.u32 %v5400, 16
    %v5405 = vshll.u32 %v5401, 16
    %v5406 = vshrl.u32 %v5401, 16
    %vm5407 = vc.u32 %v5399, %v5403
    %v5408 = vsel %vm5407, 1, 0
    %v5409 = vadd.s32 %v5399, %v5403
    %v5410 = vadd.s32 %v5402, %v5408
    %vm5411 = vc.u32 %v5409, %v5405
    %v5412 = vsel %vm5411, 1, 0
    %v5413 = vadd.s32 %v5409, %v5405
    %v5414 = vadd.s32 %v5410, %v5412
    %v5415 = vadd.s32 %v5414, %v5404
    %v5416 = vadd.s32 %v5415, %v5406
    %v5417 = vand.u32 %v5394, 65535
    %v5418 = vshrl.u32 %v5394, 16
    %v5419 = vand.u32 %v5389, 65535
    %v5420 = vshrl.u32 %v5389, 16
    %v5421 = vmul.u32 %v5417, %v5419
    %v5422 = vmul.u32 %v5417, %v5420
    %v5423 = vmul.u32 %v5418, %v5419
    %v5424 = vmul.u32 %v5418, %v5420
    %v5425 = vshll.u32 %v5422, 16
    %v5426 = vshrl.u32 %v5422, 16
    %v5427 = vshll.u32 %v5423, 16
    %v5428 = vshrl.u32 %v5423, 16
    %vm5429 = vc.u32 %v5421, %v5425
    %v5430 = vsel %vm5429, 1, 0
    %v5431 = vadd.s32 %v5421, %v5425
    %v5432 = vadd.s32 %v5424, %v5430
    %vm5433 = vc.u32 %v5431, %v5427
    %v5434 = vsel %vm5433, 1, 0
    %v5435 = vadd.s32 %v5431, %v5427
    %v5436 = vadd.s32 %v5432, %v5434
    %v5437 = vadd.s32 %v5436, %v5426
    %v5438 = vadd.s32 %v5437, %v5428
    %v5439 = vmul.u32 %v5394, %v5385
    %v5440 = vadd.s32 %v5416, %v5435
    %vm5441 = vc.u32 %v5416, %v5435
    %v5442 = vadd.s32 %v5438, 1
    %v5443 = vsel %vm5441, %v5442, %v5438
    %v5444 = vadd.s32 %v5439, %v5443
    %v5445 = vadd.s32 %v5444, 536870912
    %v5446 = vshrl.u32 %v5445, 30
    %v5447 = vshll.u32 %v5446, 30
    %v5448 = vsub.s32 %v5444, %v5447
    %vm5449 = vcmp.lt.s32.totalorder %v5448, 0
    %v5450 = vsub.s32 0, %v5448
    %v5451 = vsel %vm5449, %v5450, %v5448
    %v5452 = vclz %v5451
    %v5453 = vsub.s32 %v5452, 2
    %vm5454 = vcmp.gt.s32.totalorder 0, %v5453
    %v5455 = vsel %vm5454, 0, %v5453
    %v5456 = vsub.s32 32, %v5455
    %v5457 = vshll.u32 %v5448, %v5455
    %v5458 = vshrl.u32 %v5440, %v5456
    %v5459 = vor.u32 %v5457, %v5458
    %v5460 = vsub.s32 4294967266, %v5455
    %v5461 = vadd.s32 %v5460, 127
    %v5462 = vshll.u32 %v5461, 23
    %v5463 = vor.u32 4788187, %v5462
    %v5464 = vand.u32 2147483647, %v5463
    %v5466 = vcvt.s32.f32 %v5459
    %v5467 = vmul.f32 %v5466, %v5464
    %v5468 = vxor.u32 %v5467, 2147483648
    %v5469 = vsel %vm5348, %v5468, %v5467
    %v5470 = vsub.s32 4, %v5446
    %v5471 = vsel %vm5348, %v5470, %v5446
    %v5472 = vsel %vm5347, %v1779, %v5469
    %v5473 = vsel %vm5347, 0, %v5471
    %v5474 = vmul.f32 %v5472, %v5472
    %v5475 = vmul.f32 %v5474, -0.001358992
    %v5476 = vadd.f32 %v5475, 0.041655596
    %v5477 = vmul.f32 %v5474, %v5476
    %v5478 = vadd.f32 %v5477, -0.4999988
    %v5479 = vmul.f32 %v5474, %v5478
    %v5480 = vadd.f32 1.0, %v5479
    %v5481 = vmul.f32 %v5472, %v5472
    %v5482 = vmul.f32 %v5481, -0.00019511016
    %v5483 = vadd.f32 %v5482, 0.008332121
    %v5484 = vmul.f32 %v5481, %v5483
    %v5485 = vadd.f32 %v5484, -0.16666654
    %v5486 = vmul.f32 %v5481, %v5485
    %v5487 = vadd.f32 %v5486, 1.0
    %v5488 = vmul.f32 %v5487, %v5472
    %vm5489 = vweird.f32 %v1779
    %v5490 = vadd.s32 %v5473, 3
    %v5491 = vand.u32 %v5490, 3
    %vm5492 = vcmp.lt.s32.totalorder %v5491, 2
    %vm5493 = vcmp.eq.s32.totalorder %v5491, 0
    %v5494 = vxor.u32 %v5488, 2147483648
    %v5495 = vsel %vm5493, %v5480, %v5494
    %vm5496 = vcmp.eq.s32.totalorder %v5491, 2
    %v5497 = vxor.u32 %v5480, 2147483648
    %v5498 = vsel %vm5496, %v5497, %v5488
    %v5499 = vsel %vm5492, %v5495, %v5498
    %v5500 = vsel %vm5489, nan, %v5499
    %5501 = vst [vmem:[#allocation1] ss:$2 sm:$0xff] %v42
    %s5502 = scalar_lea.vmem [#allocation1], 16
    %5503 = vst [vmem:[%s5502] ss:$2 sm:$0xff] %v43
    %s5504 = scalar_lea.vmem [#allocation1], 32
    %5505 = vst [vmem:[%s5504] ss:$2 sm:$0xff] %v44
    %s5506 = scalar_lea.vmem [#allocation1], 48
    %5507 = vst [vmem:[%s5506] ss:$2 sm:$0xff] %v45
    %v5508 = vld.sshfl [vmem:[#allocation1] sm:$0xff pattern:$0x75316420]
    %v5509 = vld.sshfl [vmem:[#allocation1 + $0x8] sm:$0xff pattern:$0x75316420]
    %v5510 = vld.sshfl [vmem:[#allocation1 + $0x10] sm:$0xff pattern:$0x75316420]
    %v5511 = vld.sshfl [vmem:[#allocation1 + $0x18] sm:$0xff pattern:$0x75316420]
    %v5512 = vld.sshfl [vmem:[#allocation1 + $0x20] sm:$0xff pattern:$0x75316420]
    %v5513 = vld.sshfl [vmem:[#allocation1 + $0x28] sm:$0xff pattern:$0x75316420]
    %v5514 = vld.sshfl [vmem:[#allocation1 + $0x30] sm:$0xff pattern:$0x75316420]
    %v5515 = vld.sshfl [vmem:[#allocation1 + $0x38] sm:$0xff pattern:$0x75316420]
    %5524 = vst [vmem:[#allocation2] sm:$0x7] %v5508
    %5525 = vst [vmem:[#allocation2 + $0x8] sm:$0x7] %v5509
    %5526 = vst [vmem:[#allocation2 + $0x10] sm:$0x7] %v5510
    %5527 = vst [vmem:[#allocation2 + $0x18] sm:$0x7] %v5511
    %5528 = vst [vmem:[#allocation2 + $0x20] sm:$0x7] %v5512
    %5529 = vst [vmem:[#allocation2 + $0x28] sm:$0x7] %v5513
    %5530 = vst [vmem:[#allocation2 + $0x30] sm:$0x7] %v5514
    %5531 = vst [vmem:[#allocation2 + $0x38] sm:$0x7] %v5515
    %5532 = vst [vmem:[#allocation2] sm:$0xf8] 1.0
    %5533 = vst [vmem:[#allocation2 + $0x8] sm:$0xf8] 1.0
    %5534 = vst [vmem:[#allocation2 + $0x10] sm:$0xf8] 1.0
    %5535 = vst [vmem:[#allocation2 + $0x18] sm:$0xf8] 1.0
    %5536 = vst [vmem:[#allocation2 + $0x20] sm:$0xf8] 1.0
    %5537 = vst [vmem:[#allocation2 + $0x28] sm:$0xf8] 1.0
    %5538 = vst [vmem:[#allocation2 + $0x30] sm:$0xf8] 1.0
    %5539 = vst [vmem:[#allocation2 + $0x38] sm:$0xf8] 1.0
    %5540 = vst [vmem:[#allocation2 + $0x40] sm:$0xff] %v1935
    %5541 = vst [vmem:[#allocation2 + $0x48] sm:$0xff] %v2090
    %5542 = vst [vmem:[#allocation2 + $0x50] sm:$0xff] %v2245
    %5543 = vst [vmem:[#allocation2 + $0x58] sm:$0xff] %v2400
    %5544 = vst [vmem:[#allocation2 + $0x60] sm:$0xff] %v2555
    %5545 = vst [vmem:[#allocation2 + $0x68] sm:$0xff] %v2710
    %5546 = vst [vmem:[#allocation2 + $0x70] sm:$0xff] %v2865
    %5547 = vst [vmem:[#allocation2 + $0x78] sm:$0xff] %v3020
    %5548 = vst [vmem:[#allocation2 + $0x80] sm:$0xff] %v3175
    %5549 = vst [vmem:[#allocation2 + $0x88] sm:$0xff] %v3330
    %5550 = vst [vmem:[#allocation2 + $0x90] sm:$0xff] %v3485
    %5551 = vst [vmem:[#allocation2 + $0x98] sm:$0xff] %v3640
    %5552 = vst [vmem:[#allocation2 + $0xa0] sm:$0xff] %v3795
    %5553 = vst [vmem:[#allocation2 + $0xa8] sm:$0xff] %v3950
    %5554 = vst [vmem:[#allocation2 + $0xb0] sm:$0xff] %v4105
    %5555 = vst [vmem:[#allocation2 + $0xb8] sm:$0xff] %v4260
    %5556 = vst [vmem:[#allocation2 + $0xc0] sm:$0xff] %v4415
    %5557 = vst [vmem:[#allocation2 + $0xc8] sm:$0xff] %v4570
    %5558 = vst [vmem:[#allocation2 + $0xd0] sm:$0xff] %v4725
    %5559 = vst [vmem:[#allocation2 + $0xd8] sm:$0xff] %v4880
    %5560 = vst [vmem:[#allocation2 + $0xe0] sm:$0xff] %v5035
    %5561 = vst [vmem:[#allocation2 + $0xe8] sm:$0xff] %v5190
    %5562 = vst [vmem:[#allocation2 + $0xf0] sm:$0xff] %v5345
    %5563 = vst [vmem:[#allocation2 + $0xf8] sm:$0xff] %v5500
    %v5564 = vld [vmem:[#allocation2] sm:$0xff]
    %v5565 = vld [vmem:[#allocation2 + $0x8] sm:$0xff]
    %v5566 = vld [vmem:[#allocation2 + $0x10] sm:$0xff]
    %v5567 = vld [vmem:[#allocation2 + $0x18] sm:$0xff]
    %v5568 = vld [vmem:[#allocation2 + $0x20] sm:$0xff]
    %v5569 = vld [vmem:[#allocation2 + $0x28] sm:$0xff]
    %v5570 = vld [vmem:[#allocation2 + $0x30] sm:$0xff]
    %v5571 = vld [vmem:[#allocation2 + $0x38] sm:$0xff]
    %v5572 = vld [vmem:[#allocation2 + $0x40] sm:$0xff]
    %v5573 = vld [vmem:[#allocation2 + $0x48] sm:$0xff]
    %v5574 = vld [vmem:[#allocation2 + $0x50] sm:$0xff]
    %v5575 = vld [vmem:[#allocation2 + $0x58] sm:$0xff]
    %v5576 = vld [vmem:[#allocation2 + $0x60] sm:$0xff]
    %v5577 = vld [vmem:[#allocation2 + $0x68] sm:$0xff]
    %v5578 = vld [vmem:[#allocation2 + $0x70] sm:$0xff]
    %v5579 = vld [vmem:[#allocation2 + $0x78] sm:$0xff]
    %v5580 = vld [vmem:[#allocation2 + $0x80] sm:$0xff]
    %v5581 = vld [vmem:[#allocation2 + $0x88] sm:$0xff]
    %v5582 = vld [vmem:[#allocation2 + $0x90] sm:$0xff]
    %v5583 = vld [vmem:[#allocation2 + $0x98] sm:$0xff]
    %v5584 = vld [vmem:[#allocation2 + $0xa0] sm:$0xff]
    %v5585 = vld [vmem:[#allocation2 + $0xa8] sm:$0xff]
    %v5586 = vld [vmem:[#allocation2 + $0xb0] sm:$0xff]
    %v5587 = vld [vmem:[#allocation2 + $0xb8] sm:$0xff]
    %v5588 = vld [vmem:[#allocation2 + $0xc0] sm:$0xff]
    %v5589 = vld [vmem:[#allocation2 + $0xc8] sm:$0xff]
    %v5590 = vld [vmem:[#allocation2 + $0xd0] sm:$0xff]
    %v5591 = vld [vmem:[#allocation2 + $0xd8] sm:$0xff]
    %v5592 = vld [vmem:[#allocation2 + $0xe0] sm:$0xff]
    %v5593 = vld [vmem:[#allocation2 + $0xe8] sm:$0xff]
    %v5594 = vld [vmem:[#allocation2 + $0xf0] sm:$0xff]
    %v5595 = vld [vmem:[#allocation2 + $0xf8] sm:$0xff]
    %vm5596 = vcmask 261120
    %v5598 = vsel %vm5596, %v49, 0
    %v5601 = vsel %vm5596, %v50, 0
    %v5604 = vsel %vm5596, %v51, 0
    %v5607 = vsel %vm5596, %v52, 0
    %5609 = vmatpush.msra.mxu0 0.0
    %5610 = vmatpush.msra.mxu0 0.0
    %5611 = vmatpush.msra.mxu0 0.0
    %5612 = vmatpush.msra.mxu0 0.0
    %5613 = vmatpush.msra.mxu0 0.0
    %5614 = vmatpush.msra.mxu0 0.0
    %5615 = vmatpush.msra.mxu0 0.0
    %5616 = vmatpush.msra.mxu0 0.0
    %5617 = vmatpush.msra.mxu0 0.0
    %5618 = vmatpush.msra.mxu0 0.0
    %5619 = vmatpush.msra.mxu0 0.0
    %5620 = vmatpush.msra.mxu0 0.0
    %v5621 = vand.u32 %v5588, 4294901760
    %5622 = vmatpush.msra.mxu0 %v5621
    %v5623 = vand.u32 %v5580, 4294901760
    %5624 = vmatpush.msra.mxu0 %v5623
    %v5625 = vand.u32 %v5572, 4294901760
    %5626 = vmatpush.msra.mxu0 %v5625
    %v5627 = vand.u32 %v5564, 4294901760
    %5628 = vmatpush.msra.mxu0 %v5627
    %v5629 = vand.u32 %v5598, 4294901760
    %v5630 = vsub.f32 %v5598, %v5629
    %v5631 = vand.u32 %v5630, 4294901760
    %v5632 = vsub.f32 %v5630, %v5631
    %v5633 = vand.u32 %v5632, 4294901760
    %5634 = vmatmul.f32.gmra.mxu0 %v5633
    %v5635 = vpop.f32.mrf.mxu0
    %v5636 = vadd.f32 0.0, %v5635
    %v5637 = vand.u32 %v5601, 4294901760
    %v5638 = vsub.f32 %v5601, %v5637
    %v5639 = vand.u32 %v5638, 4294901760
    %v5640 = vsub.f32 %v5638, %v5639
    %v5641 = vand.u32 %v5640, 4294901760
    %5642 = vmatmul.f32.gmra.mxu0 %v5641
    %v5643 = vpop.f32.mrf.mxu0
    %v5644 = vadd.f32 0.0, %v5643
    %v5645 = vand.u32 %v5604, 4294901760
    %v5646 = vsub.f32 %v5604, %v5645
    %v5647 = vand.u32 %v5646, 4294901760
    %v5648 = vsub.f32 %v5646, %v5647
    %v5649 = vand.u32 %v5648, 4294901760
    %5650 = vmatmul.f32.gmra.mxu0 %v5649
    %v5651 = vpop.f32.mrf.mxu0
    %v5652 = vadd.f32 0.0, %v5651
    %v5653 = vand.u32 %v5607, 4294901760
    %v5654 = vsub.f32 %v5607, %v5653
    %v5655 = vand.u32 %v5654, 4294901760
    %v5656 = vsub.f32 %v5654, %v5655
    %v5657 = vand.u32 %v5656, 4294901760
    %5658 = vmatmul.f32.gmra.mxu0 %v5657
    %v5659 = vpop.f32.mrf.mxu0
    %v5660 = vadd.f32 0.0, %v5659
    %5661 = vdwg.mxu0
    %5662 = vmatpush.msra.mxu0 0.0
    %5663 = vmatpush.msra.mxu0 0.0
    %5664 = vmatpush.msra.mxu0 0.0
    %5665 = vmatpush.msra.mxu0 0.0
    %5666 = vmatpush.msra.mxu0 0.0
    %5667 = vmatpush.msra.mxu0 0.0
    %5668 = vmatpush.msra.mxu0 0.0
    %5669 = vmatpush.msra.mxu0 0.0
    %5670 = vmatpush.msra.mxu0 0.0
    %5671 = vmatpush.msra.mxu0 0.0
    %5672 = vmatpush.msra.mxu0 0.0
    %5673 = vmatpush.msra.mxu0 0.0
    %v5674 = vand.u32 %v5588, 4294901760
    %v5675 = vsub.f32 %v5588, %v5674
    %v5676 = vand.u32 %v5675, 4294901760
    %v5677 = vsub.f32 %v5675, %v5676
    %v5678 = vand.u32 %v5677, 4294901760
    %5679 = vmatpush.msra.mxu0 %v5678
    %v5680 = vand.u32 %v5580, 4294901760
    %v5681 = vsub.f32 %v5580, %v5680
    %v5682 = vand.u32 %v5681, 4294901760
    %v5683 = vsub.f32 %v5681, %v5682
    %v5684 = vand.u32 %v5683, 4294901760
    %5685 = vmatpush.msra.mxu0 %v5684
    %v5686 = vand.u32 %v5572, 4294901760
    %v5687 = vsub.f32 %v5572, %v5686
    %v5688 = vand.u32 %v5687, 4294901760
    %v5689 = vsub.f32 %v5687, %v5688
    %v5690 = vand.u32 %v5689, 4294901760
    %5691 = vmatpush.msra.mxu0 %v5690
    %v5692 = vand.u32 %v5564, 4294901760
    %v5693 = vsub.f32 %v5564, %v5692
    %v5694 = vand.u32 %v5693, 4294901760
    %v5695 = vsub.f32 %v5693, %v5694
    %v5696 = vand.u32 %v5695, 4294901760
    %5697 = vmatpush.msra.mxu0 %v5696
    %v5698 = vand.u32 %v5598, 4294901760
    %5699 = vmatmul.f32.gmra.mxu0 %v5698
    %v5700 = vpop.f32.mrf.mxu0
    %v5701 = vadd.f32 %v5636, %v5700
    %v5702 = vand.u32 %v5601, 4294901760
    %5703 = vmatmul.f32.gmra.mxu0 %v5702
    %v5704 = vpop.f32.mrf.mxu0
    %v5705 = vadd.f32 %v5644, %v5704
    %v5706 = vand.u32 %v5604, 4294901760
    %5707 = vmatmul.f32.gmra.mxu0 %v5706
    %v5708 = vpop.f32.mrf.mxu0
    %v5709 = vadd.f32 %v5652, %v5708
    %v5710 = vand.u32 %v5607, 4294901760
    %5711 = vmatmul.f32.gmra.mxu0 %v5710
    %v5712 = vpop.f32.mrf.mxu0
    %v5713 = vadd.f32 %v5660, %v5712
    %5714 = vdwg.mxu0
    %5715 = vmatpush.msra.mxu0 0.0
    %5716 = vmatpush.msra.mxu0 0.0
    %5717 = vmatpush.msra.mxu0 0.0
    %5718 = vmatpush.msra.mxu0 0.0
    %5719 = vmatpush.msra.mxu0 0.0
    %5720 = vmatpush.msra.mxu0 0.0
    %5721 = vmatpush.msra.mxu0 0.0
    %5722 = vmatpush.msra.mxu0 0.0
    %5723 = vmatpush.msra.mxu0 0.0
    %5724 = vmatpush.msra.mxu0 0.0
    %5725 = vmatpush.msra.mxu0 0.0
    %5726 = vmatpush.msra.mxu0 0.0
    %v5727 = vand.u32 %v5588, 4294901760
    %v5728 = vsub.f32 %v5588, %v5727
    %5729 = vmatpush.msra.mxu0 %v5728
    %v5730 = vand.u32 %v5580, 4294901760
    %v5731 = vsub.f32 %v5580, %v5730
    %5732 = vmatpush.msra.mxu0 %v5731
    %v5733 = vand.u32 %v5572, 4294901760
    %v5734 = vsub.f32 %v5572, %v5733
    %5735 = vmatpush.msra.mxu0 %v5734
    %v5736 = vand.u32 %v5564, 4294901760
    %v5737 = vsub.f32 %v5564, %v5736
    %5738 = vmatpush.msra.mxu0 %v5737
    %v5739 = vand.u32 %v5598, 4294901760
    %v5740 = vsub.f32 %v5598, %v5739
    %5741 = vmatmul.f32.gmra.mxu0 %v5740
    %v5742 = vpop.f32.mrf.mxu0
    %v5743 = vadd.f32 %v5701, %v5742
    %v5744 = vand.u32 %v5601, 4294901760
    %v5745 = vsub.f32 %v5601, %v5744
    %5746 = vmatmul.f32.gmra.mxu0 %v5745
    %v5747 = vpop.f32.mrf.mxu0
    %v5748 = vadd.f32 %v5705, %v5747
    %v5749 = vand.u32 %v5604, 4294901760
    %v5750 = vsub.f32 %v5604, %v5749
    %5751 = vmatmul.f32.gmra.mxu0 %v5750
    %v5752 = vpop.f32.mrf.mxu0
    %v5753 = vadd.f32 %v5709, %v5752
    %v5754 = vand.u32 %v5607, 4294901760
    %v5755 = vsub.f32 %v5607, %v5754
    %5756 = vmatmul.f32.gmra.mxu0 %v5755
    %v5757 = vpop.f32.mrf.mxu0
    %v5758 = vadd.f32 %v5713, %v5757
    %5759 = vdwg.mxu0
    %5760 = vmatpush.msra.mxu0 0.0
    %5761 = vmatpush.msra.mxu0 0.0
    %5762 = vmatpush.msra.mxu0 0.0
    %5763 = vmatpush.msra.mxu0 0.0
    %5764 = vmatpush.msra.mxu0 0.0
    %5765 = vmatpush.msra.mxu0 0.0
    %5766 = vmatpush.msra.mxu0 0.0
    %5767 = vmatpush.msra.mxu0 0.0
    %5768 = vmatpush.msra.mxu0 0.0
    %5769 = vmatpush.msra.mxu0 0.0
    %5770 = vmatpush.msra.mxu0 0.0
    %5771 = vmatpush.msra.mxu0 0.0
    %v5772 = vand.u32 %v5588, 4294901760
    %5773 = vmatpush.msra.mxu0 %v5772
    %v5774 = vand.u32 %v5580, 4294901760
    %5775 = vmatpush.msra.mxu0 %v5774
    %v5776 = vand.u32 %v5572, 4294901760
    %5777 = vmatpush.msra.mxu0 %v5776
    %v5778 = vand.u32 %v5564, 4294901760
    %5779 = vmatpush.msra.mxu0 %v5778
    %v5780 = vand.u32 %v5598, 4294901760
    %v5781 = vsub.f32 %v5598, %v5780
    %v5782 = vand.u32 %v5781, 4294901760
    %5783 = vmatmul.f32.gmra.mxu0 %v5782
    %v5784 = vpop.f32.mrf.mxu0
    %v5785 = vadd.f32 %v5743, %v5784
    %v5786 = vand.u32 %v5601, 4294901760
    %v5787 = vsub.f32 %v5601, %v5786
    %v5788 = vand.u32 %v5787, 4294901760
    %5789 = vmatmul.f32.gmra.mxu0 %v5788
    %v5790 = vpop.f32.mrf.mxu0
    %v5791 = vadd.f32 %v5748, %v5790
    %v5792 = vand.u32 %v5604, 4294901760
    %v5793 = vsub.f32 %v5604, %v5792
    %v5794 = vand.u32 %v5793, 4294901760
    %5795 = vmatmul.f32.gmra.mxu0 %v5794
    %v5796 = vpop.f32.mrf.mxu0
    %v5797 = vadd.f32 %v5753, %v5796
    %v5798 = vand.u32 %v5607, 4294901760
    %v5799 = vsub.f32 %v5607, %v5798
    %v5800 = vand.u32 %v5799, 4294901760
    %5801 = vmatmul.f32.gmra.mxu0 %v5800
    %v5802 = vpop.f32.mrf.mxu0
    %v5803 = vadd.f32 %v5758, %v5802
    %5804 = vdwg.mxu0
    %5805 = vmatpush.msra.mxu0 0.0
    %5806 = vmatpush.msra.mxu0 0.0
    %5807 = vmatpush.msra.mxu0 0.0
    %5808 = vmatpush.msra.mxu0 0.0
    %5809 = vmatpush.msra.mxu0 0.0
    %5810 = vmatpush.msra.mxu0 0.0
    %5811 = vmatpush.msra.mxu0 0.0
    %5812 = vmatpush.msra.mxu0 0.0
    %5813 = vmatpush.msra.mxu0 0.0
    %5814 = vmatpush.msra.mxu0 0.0
    %5815 = vmatpush.msra.mxu0 0.0
    %5816 = vmatpush.msra.mxu0 0.0
    %v5817 = vand.u32 %v5588, 4294901760
    %v5818 = vsub.f32 %v5588, %v5817
    %v5819 = vand.u32 %v5818, 4294901760
    %5820 = vmatpush.msra.mxu0 %v5819
    %v5821 = vand.u32 %v5580, 4294901760
    %v5822 = vsub.f32 %v5580, %v5821
    %v5823 = vand.u32 %v5822, 4294901760
    %5824 = vmatpush.msra.mxu0 %v5823
    %v5825 = vand.u32 %v5572, 4294901760
    %v5826 = vsub.f32 %v5572, %v5825
    %v5827 = vand.u32 %v5826, 4294901760
    %5828 = vmatpush.msra.mxu0 %v5827
    %v5829 = vand.u32 %v5564, 4294901760
    %v5830 = vsub.f32 %v5564, %v5829
    %v5831 = vand.u32 %v5830, 4294901760
    %5832 = vmatpush.msra.mxu0 %v5831
    %v5833 = vand.u32 %v5598, 4294901760
    %5834 = vmatmul.f32.gmra.mxu0 %v5833
    %v5835 = vpop.f32.mrf.mxu0
    %v5836 = vadd.f32 %v5785, %v5835
    %v5837 = vand.u32 %v5601, 4294901760
    %5838 = vmatmul.f32.gmra.mxu0 %v5837
    %v5839 = vpop.f32.mrf.mxu0
    %v5840 = vadd.f32 %v5791, %v5839
    %v5841 = vand.u32 %v5604, 4294901760
    %5842 = vmatmul.f32.gmra.mxu0 %v5841
    %v5843 = vpop.f32.mrf.mxu0
    %v5844 = vadd.f32 %v5797, %v5843
    %v5845 = vand.u32 %v5607, 4294901760
    %5846 = vmatmul.f32.gmra.mxu0 %v5845
    %v5847 = vpop.f32.mrf.mxu0
    %v5848 = vadd.f32 %v5803, %v5847
    %5849 = vdwg.mxu0
    %5850 = vmatpush.msra.mxu0 0.0
    %5851 = vmatpush.msra.mxu0 0.0
    %5852 = vmatpush.msra.mxu0 0.0
    %5853 = vmatpush.msra.mxu0 0.0
    %5854 = vmatpush.msra.mxu0 0.0
    %5855 = vmatpush.msra.mxu0 0.0
    %5856 = vmatpush.msra.mxu0 0.0
    %5857 = vmatpush.msra.mxu0 0.0
    %5858 = vmatpush.msra.mxu0 0.0
    %5859 = vmatpush.msra.mxu0 0.0
    %5860 = vmatpush.msra.mxu0 0.0
    %5861 = vmatpush.msra.mxu0 0.0
    %v5862 = vand.u32 %v5588, 4294901760
    %5863 = vmatpush.msra.mxu0 %v5862
    %v5864 = vand.u32 %v5580, 4294901760
    %5865 = vmatpush.msra.mxu0 %v5864
    %v5866 = vand.u32 %v5572, 4294901760
    %5867 = vmatpush.msra.mxu0 %v5866
    %v5868 = vand.u32 %v5564, 4294901760
    %5869 = vmatpush.msra.mxu0 %v5868
    %v5870 = vand.u32 %v5598, 4294901760
    %5871 = vmatmul.f32.gmra.mxu0 %v5870
    %v5872 = vpop.f32.mrf.mxu0
    %v5873 = vadd.f32 %v5836, %v5872
    %v5874 = vand.u32 %v5601, 4294901760
    %5875 = vmatmul.f32.gmra.mxu0 %v5874
    %v5876 = vpop.f32.mrf.mxu0
    %v5877 = vadd.f32 %v5840, %v5876
    %v5878 = vand.u32 %v5604, 4294901760
    %5879 = vmatmul.f32.gmra.mxu0 %v5878
    %v5880 = vpop.f32.mrf.mxu0
    %v5881 = vadd.f32 %v5844, %v5880
    %v5882 = vand.u32 %v5607, 4294901760
    %5883 = vmatmul.f32.gmra.mxu0 %v5882
    %v5884 = vpop.f32.mrf.mxu0
    %v5885 = vadd.f32 %v5848, %v5884
    %5886 = vdwg.mxu0
    %5887 = vmatpush.msra.mxu0 0.0
    %5888 = vmatpush.msra.mxu0 0.0
    %5889 = vmatpush.msra.mxu0 0.0
    %5890 = vmatpush.msra.mxu0 0.0
    %5891 = vmatpush.msra.mxu0 0.0
    %5892 = vmatpush.msra.mxu0 0.0
    %5893 = vmatpush.msra.mxu0 0.0
    %5894 = vmatpush.msra.mxu0 0.0
    %5895 = vmatpush.msra.mxu0 0.0
    %5896 = vmatpush.msra.mxu0 0.0
    %5897 = vmatpush.msra.mxu0 0.0
    %5898 = vmatpush.msra.mxu0 0.0
    %v5899 = vand.u32 %v5589, 4294901760
    %5900 = vmatpush.msra.mxu0 %v5899
    %v5901 = vand.u32 %v5581, 4294901760
    %5902 = vmatpush.msra.mxu0 %v5901
    %v5903 = vand.u32 %v5573, 4294901760
    %5904 = vmatpush.msra.mxu0 %v5903
    %v5905 = vand.u32 %v5565, 4294901760
    %5906 = vmatpush.msra.mxu0 %v5905
    %v5907 = vand.u32 %v5598, 4294901760
    %v5908 = vsub.f32 %v5598, %v5907
    %v5909 = vand.u32 %v5908, 4294901760
    %v5910 = vsub.f32 %v5908, %v5909
    %v5911 = vand.u32 %v5910, 4294901760
    %5912 = vmatmul.f32.gmra.mxu0 %v5911
    %v5913 = vpop.f32.mrf.mxu0
    %v5914 = vadd.f32 0.0, %v5913
    %v5915 = vand.u32 %v5601, 4294901760
    %v5916 = vsub.f32 %v5601, %v5915
    %v5917 = vand.u32 %v5916, 4294901760
    %v5918 = vsub.f32 %v5916, %v5917
    %v5919 = vand.u32 %v5918, 4294901760
    %5920 = vmatmul.f32.gmra.mxu0 %v5919
    %v5921 = vpop.f32.mrf.mxu0
    %v5922 = vadd.f32 0.0, %v5921
    %v5923 = vand.u32 %v5604, 4294901760
    %v5924 = vsub.f32 %v5604, %v5923
    %v5925 = vand.u32 %v5924, 4294901760
    %v5926 = vsub.f32 %v5924, %v5925
    %v5927 = vand.u32 %v5926, 4294901760
    %5928 = vmatmul.f32.gmra.mxu0 %v5927
    %v5929 = vpop.f32.mrf.mxu0
    %v5930 = vadd.f32 0.0, %v5929
    %v5931 = vand.u32 %v5607, 4294901760
    %v5932 = vsub.f32 %v5607, %v5931
    %v5933 = vand.u32 %v5932, 4294901760
    %v5934 = vsub.f32 %v5932, %v5933
    %v5935 = vand.u32 %v5934, 4294901760
    %5936 = vmatmul.f32.gmra.mxu0 %v5935
    %v5937 = vpop.f32.mrf.mxu0
    %v5938 = vadd.f32 0.0, %v5937
    %5939 = vdwg.mxu0
    %5940 = vmatpush.msra.mxu0 0.0
    %5941 = vmatpush.msra.mxu0 0.0
    %5942 = vmatpush.msra.mxu0 0.0
    %5943 = vmatpush.msra.mxu0 0.0
    %5944 = vmatpush.msra.mxu0 0.0
    %5945 = vmatpush.msra.mxu0 0.0
    %5946 = vmatpush.msra.mxu0 0.0
    %5947 = vmatpush.msra.mxu0 0.0
    %5948 = vmatpush.msra.mxu0 0.0
    %5949 = vmatpush.msra.mxu0 0.0
    %5950 = vmatpush.msra.mxu0 0.0
    %5951 = vmatpush.msra.mxu0 0.0
    %v5952 = vand.u32 %v5589, 4294901760
    %v5953 = vsub.f32 %v5589, %v5952
    %v5954 = vand.u32 %v5953, 4294901760
    %v5955 = vsub.f32 %v5953, %v5954
    %v5956 = vand.u32 %v5955, 4294901760
    %5957 = vmatpush.msra.mxu0 %v5956
    %v5958 = vand.u32 %v5581, 4294901760
    %v5959 = vsub.f32 %v5581, %v5958
    %v5960 = vand.u32 %v5959, 4294901760
    %v5961 = vsub.f32 %v5959, %v5960
    %v5962 = vand.u32 %v5961, 4294901760
    %5963 = vmatpush.msra.mxu0 %v5962
    %v5964 = vand.u32 %v5573, 4294901760
    %v5965 = vsub.f32 %v5573, %v5964
    %v5966 = vand.u32 %v5965, 4294901760
    %v5967 = vsub.f32 %v5965, %v5966
    %v5968 = vand.u32 %v5967, 4294901760
    %5969 = vmatpush.msra.mxu0 %v5968
    %v5970 = vand.u32 %v5565, 4294901760
    %v5971 = vsub.f32 %v5565, %v5970
    %v5972 = vand.u32 %v5971, 4294901760
    %v5973 = vsub.f32 %v5971, %v5972
    %v5974 = vand.u32 %v5973, 4294901760
    %5975 = vmatpush.msra.mxu0 %v5974
    %v5976 = vand.u32 %v5598, 4294901760
    %5977 = vmatmul.f32.gmra.mxu0 %v5976
    %v5978 = vpop.f32.mrf.mxu0
    %v5979 = vadd.f32 %v5914, %v5978
    %v5980 = vand.u32 %v5601, 4294901760
    %5981 = vmatmul.f32.gmra.mxu0 %v5980
    %v5982 = vpop.f32.mrf.mxu0
    %v5983 = vadd.f32 %v5922, %v5982
    %v5984 = vand.u32 %v5604, 4294901760
    %5985 = vmatmul.f32.gmra.mxu0 %v5984
    %v5986 = vpop.f32.mrf.mxu0
    %v5987 = vadd.f32 %v5930, %v5986
    %v5988 = vand.u32 %v5607, 4294901760
    %5989 = vmatmul.f32.gmra.mxu0 %v5988
    %v5990 = vpop.f32.mrf.mxu0
    %v5991 = vadd.f32 %v5938, %v5990
    %5992 = vdwg.mxu0
    %5993 = vmatpush.msra.mxu0 0.0
    %5994 = vmatpush.msra.mxu0 0.0
    %5995 = vmatpush.msra.mxu0 0.0
    %5996 = vmatpush.msra.mxu0 0.0
    %5997 = vmatpush.msra.mxu0 0.0
    %5998 = vmatpush.msra.mxu0 0.0
    %5999 = vmatpush.msra.mxu0 0.0
    %6000 = vmatpush.msra.mxu0 0.0
    %6001 = vmatpush.msra.mxu0 0.0
    %6002 = vmatpush.msra.mxu0 0.0
    %6003 = vmatpush.msra.mxu0 0.0
    %6004 = vmatpush.msra.mxu0 0.0
    %v6005 = vand.u32 %v5589, 4294901760
    %v6006 = vsub.f32 %v5589, %v6005
    %6007 = vmatpush.msra.mxu0 %v6006
    %v6008 = vand.u32 %v5581, 4294901760
    %v6009 = vsub.f32 %v5581, %v6008
    %6010 = vmatpush.msra.mxu0 %v6009
    %v6011 = vand.u32 %v5573, 4294901760
    %v6012 = vsub.f32 %v5573, %v6011
    %6013 = vmatpush.msra.mxu0 %v6012
    %v6014 = vand.u32 %v5565, 4294901760
    %v6015 = vsub.f32 %v5565, %v6014
    %6016 = vmatpush.msra.mxu0 %v6015
    %v6017 = vand.u32 %v5598, 4294901760
    %v6018 = vsub.f32 %v5598, %v6017
    %6019 = vmatmul.f32.gmra.mxu0 %v6018
    %v6020 = vpop.f32.mrf.mxu0
    %v6021 = vadd.f32 %v5979, %v6020
    %v6022 = vand.u32 %v5601, 4294901760
    %v6023 = vsub.f32 %v5601, %v6022
    %6024 = vmatmul.f32.gmra.mxu0 %v6023
    %v6025 = vpop.f32.mrf.mxu0
    %v6026 = vadd.f32 %v5983, %v6025
    %v6027 = vand.u32 %v5604, 4294901760
    %v6028 = vsub.f32 %v5604, %v6027
    %6029 = vmatmul.f32.gmra.mxu0 %v6028
    %v6030 = vpop.f32.mrf.mxu0
    %v6031 = vadd.f32 %v5987, %v6030
    %v6032 = vand.u32 %v5607, 4294901760
    %v6033 = vsub.f32 %v5607, %v6032
    %6034 = vmatmul.f32.gmra.mxu0 %v6033
    %v6035 = vpop.f32.mrf.mxu0
    %v6036 = vadd.f32 %v5991, %v6035
    %6037 = vdwg.mxu0
    %6038 = vmatpush.msra.mxu0 0.0
    %6039 = vmatpush.msra.mxu0 0.0
    %6040 = vmatpush.msra.mxu0 0.0
    %6041 = vmatpush.msra.mxu0 0.0
    %6042 = vmatpush.msra.mxu0 0.0
    %6043 = vmatpush.msra.mxu0 0.0
    %6044 = vmatpush.msra.mxu0 0.0
    %6045 = vmatpush.msra.mxu0 0.0
    %6046 = vmatpush.msra.mxu0 0.0
    %6047 = vmatpush.msra.mxu0 0.0
    %6048 = vmatpush.msra.mxu0 0.0
    %6049 = vmatpush.msra.mxu0 0.0
    %v6050 = vand.u32 %v5589, 4294901760
    %6051 = vmatpush.msra.mxu0 %v6050
    %v6052 = vand.u32 %v5581, 4294901760
    %6053 = vmatpush.msra.mxu0 %v6052
    %v6054 = vand.u32 %v5573, 4294901760
    %6055 = vmatpush.msra.mxu0 %v6054
    %v6056 = vand.u32 %v5565, 4294901760
    %6057 = vmatpush.msra.mxu0 %v6056
    %v6058 = vand.u32 %v5598, 4294901760
    %v6059 = vsub.f32 %v5598, %v6058
    %v6060 = vand.u32 %v6059, 4294901760
    %6061 = vmatmul.f32.gmra.mxu0 %v6060
    %v6062 = vpop.f32.mrf.mxu0
    %v6063 = vadd.f32 %v6021, %v6062
    %v6064 = vand.u32 %v5601, 4294901760
    %v6065 = vsub.f32 %v5601, %v6064
    %v6066 = vand.u32 %v6065, 4294901760
    %6067 = vmatmul.f32.gmra.mxu0 %v6066
    %v6068 = vpop.f32.mrf.mxu0
    %v6069 = vadd.f32 %v6026, %v6068
    %v6070 = vand.u32 %v5604, 4294901760
    %v6071 = vsub.f32 %v5604, %v6070
    %v6072 = vand.u32 %v6071, 4294901760
    %6073 = vmatmul.f32.gmra.mxu0 %v6072
    %v6074 = vpop.f32.mrf.mxu0
    %v6075 = vadd.f32 %v6031, %v6074
    %v6076 = vand.u32 %v5607, 4294901760
    %v6077 = vsub.f32 %v5607, %v6076
    %v6078 = vand.u32 %v6077, 4294901760
    %6079 = vmatmul.f32.gmra.mxu0 %v6078
    %v6080 = vpop.f32.mrf.mxu0
    %v6081 = vadd.f32 %v6036, %v6080
    %6082 = vdwg.mxu0
    %6083 = vmatpush.msra.mxu0 0.0
    %6084 = vmatpush.msra.mxu0 0.0
    %6085 = vmatpush.msra.mxu0 0.0
    %6086 = vmatpush.msra.mxu0 0.0
    %6087 = vmatpush.msra.mxu0 0.0
    %6088 = vmatpush.msra.mxu0 0.0
    %6089 = vmatpush.msra.mxu0 0.0
    %6090 = vmatpush.msra.mxu0 0.0
    %6091 = vmatpush.msra.mxu0 0.0
    %6092 = vmatpush.msra.mxu0 0.0
    %6093 = vmatpush.msra.mxu0 0.0
    %6094 = vmatpush.msra.mxu0 0.0
    %v6095 = vand.u32 %v5589, 4294901760
    %v6096 = vsub.f32 %v5589, %v6095
    %v6097 = vand.u32 %v6096, 4294901760
    %6098 = vmatpush.msra.mxu0 %v6097
    %v6099 = vand.u32 %v5581, 4294901760
    %v6100 = vsub.f32 %v5581, %v6099
    %v6101 = vand.u32 %v6100, 4294901760
    %6102 = vmatpush.msra.mxu0 %v6101
    %v6103 = vand.u32 %v5573, 4294901760
    %v6104 = vsub.f32 %v5573, %v6103
    %v6105 = vand.u32 %v6104, 4294901760
    %6106 = vmatpush.msra.mxu0 %v6105
    %v6107 = vand.u32 %v5565, 4294901760
    %v6108 = vsub.f32 %v5565, %v6107
    %v6109 = vand.u32 %v6108, 4294901760
    %6110 = vmatpush.msra.mxu0 %v6109
    %v6111 = vand.u32 %v5598, 4294901760
    %6112 = vmatmul.f32.gmra.mxu0 %v6111
    %v6113 = vpop.f32.mrf.mxu0
    %v6114 = vadd.f32 %v6063, %v6113
    %v6115 = vand.u32 %v5601, 4294901760
    %6116 = vmatmul.f32.gmra.mxu0 %v6115
    %v6117 = vpop.f32.mrf.mxu0
    %v6118 = vadd.f32 %v6069, %v6117
    %v6119 = vand.u32 %v5604, 4294901760
    %6120 = vmatmul.f32.gmra.mxu0 %v6119
    %v6121 = vpop.f32.mrf.mxu0
    %v6122 = vadd.f32 %v6075, %v6121
    %v6123 = vand.u32 %v5607, 4294901760
    %6124 = vmatmul.f32.gmra.mxu0 %v6123
    %v6125 = vpop.f32.mrf.mxu0
    %v6126 = vadd.f32 %v6081, %v6125
    %6127 = vdwg.mxu0
    %6128 = vmatpush.msra.mxu0 0.0
    %6129 = vmatpush.msra.mxu0 0.0
    %6130 = vmatpush.msra.mxu0 0.0
    %6131 = vmatpush.msra.mxu0 0.0
    %6132 = vmatpush.msra.mxu0 0.0
    %6133 = vmatpush.msra.mxu0 0.0
    %6134 = vmatpush.msra.mxu0 0.0
    %6135 = vmatpush.msra.mxu0 0.0
    %6136 = vmatpush.msra.mxu0 0.0
    %6137 = vmatpush.msra.mxu0 0.0
    %6138 = vmatpush.msra.mxu0 0.0
    %6139 = vmatpush.msra.mxu0 0.0
    %v6140 = vand.u32 %v5589, 4294901760
    %6141 = vmatpush.msra.mxu0 %v6140
    %v6142 = vand.u32 %v5581, 4294901760
    %6143 = vmatpush.msra.mxu0 %v6142
    %v6144 = vand.u32 %v5573, 4294901760
    %6145 = vmatpush.msra.mxu0 %v6144
    %v6146 = vand.u32 %v5565, 4294901760
    %6147 = vmatpush.msra.mxu0 %v6146
    %v6148 = vand.u32 %v5598, 4294901760
    %6149 = vmatmul.f32.gmra.mxu0 %v6148
    %v6150 = vpop.f32.mrf.mxu0
    %v6151 = vadd.f32 %v6114, %v6150
    %v6152 = vand.u32 %v5601, 4294901760
    %6153 = vmatmul.f32.gmra.mxu0 %v6152
    %v6154 = vpop.f32.mrf.mxu0
    %v6155 = vadd.f32 %v6118, %v6154
    %v6156 = vand.u32 %v5604, 4294901760
    %6157 = vmatmul.f32.gmra.mxu0 %v6156
    %v6158 = vpop.f32.mrf.mxu0
    %v6159 = vadd.f32 %v6122, %v6158
    %v6160 = vand.u32 %v5607, 4294901760
    %6161 = vmatmul.f32.gmra.mxu0 %v6160
    %v6162 = vpop.f32.mrf.mxu0
    %v6163 = vadd.f32 %v6126, %v6162
    %6164 = vdwg.mxu0
    %6165 = vmatpush.msra.mxu0 0.0
    %6166 = vmatpush.msra.mxu0 0.0
    %6167 = vmatpush.msra.mxu0 0.0
    %6168 = vmatpush.msra.mxu0 0.0
    %6169 = vmatpush.msra.mxu0 0.0
    %6170 = vmatpush.msra.mxu0 0.0
    %6171 = vmatpush.msra.mxu0 0.0
    %6172 = vmatpush.msra.mxu0 0.0
    %6173 = vmatpush.msra.mxu0 0.0
    %6174 = vmatpush.msra.mxu0 0.0
    %6175 = vmatpush.msra.mxu0 0.0
    %6176 = vmatpush.msra.mxu0 0.0
    %v6177 = vand.u32 %v5590, 4294901760
    %6178 = vmatpush.msra.mxu0 %v6177
    %v6179 = vand.u32 %v5582, 4294901760
    %6180 = vmatpush.msra.mxu0 %v6179
    %v6181 = vand.u32 %v5574, 4294901760
    %6182 = vmatpush.msra.mxu0 %v6181
    %v6183 = vand.u32 %v5566, 4294901760
    %6184 = vmatpush.msra.mxu0 %v6183
    %v6185 = vand.u32 %v5598, 4294901760
    %v6186 = vsub.f32 %v5598, %v6185
    %v6187 = vand.u32 %v6186, 4294901760
    %v6188 = vsub.f32 %v6186, %v6187
    %v6189 = vand.u32 %v6188, 4294901760
    %6190 = vmatmul.f32.gmra.mxu0 %v6189
    %v6191 = vpop.f32.mrf.mxu0
    %v6192 = vadd.f32 0.0, %v6191
    %v6193 = vand.u32 %v5601, 4294901760
    %v6194 = vsub.f32 %v5601, %v6193
    %v6195 = vand.u32 %v6194, 4294901760
    %v6196 = vsub.f32 %v6194, %v6195
    %v6197 = vand.u32 %v6196, 4294901760
    %6198 = vmatmul.f32.gmra.mxu0 %v6197
    %v6199 = vpop.f32.mrf.mxu0
    %v6200 = vadd.f32 0.0, %v6199
    %v6201 = vand.u32 %v5604, 4294901760
    %v6202 = vsub.f32 %v5604, %v6201
    %v6203 = vand.u32 %v6202, 4294901760
    %v6204 = vsub.f32 %v6202, %v6203
    %v6205 = vand.u32 %v6204, 4294901760
    %6206 = vmatmul.f32.gmra.mxu0 %v6205
    %v6207 = vpop.f32.mrf.mxu0
    %v6208 = vadd.f32 0.0, %v6207
    %v6209 = vand.u32 %v5607, 4294901760
    %v6210 = vsub.f32 %v5607, %v6209
    %v6211 = vand.u32 %v6210, 4294901760
    %v6212 = vsub.f32 %v6210, %v6211
    %v6213 = vand.u32 %v6212, 4294901760
    %6214 = vmatmul.f32.gmra.mxu0 %v6213
    %v6215 = vpop.f32.mrf.mxu0
    %v6216 = vadd.f32 0.0, %v6215
    %6217 = vdwg.mxu0
    %6218 = vmatpush.msra.mxu0 0.0
    %6219 = vmatpush.msra.mxu0 0.0
    %6220 = vmatpush.msra.mxu0 0.0
    %6221 = vmatpush.msra.mxu0 0.0
    %6222 = vmatpush.msra.mxu0 0.0
    %6223 = vmatpush.msra.mxu0 0.0
    %6224 = vmatpush.msra.mxu0 0.0
    %6225 = vmatpush.msra.mxu0 0.0
    %6226 = vmatpush.msra.mxu0 0.0
    %6227 = vmatpush.msra.mxu0 0.0
    %6228 = vmatpush.msra.mxu0 0.0
    %6229 = vmatpush.msra.mxu0 0.0
    %v6230 = vand.u32 %v5590, 4294901760
    %v6231 = vsub.f32 %v5590, %v6230
    %v6232 = vand.u32 %v6231, 4294901760
    %v6233 = vsub.f32 %v6231, %v6232
    %v6234 = vand.u32 %v6233, 4294901760
    %6235 = vmatpush.msra.mxu0 %v6234
    %v6236 = vand.u32 %v5582, 4294901760
    %v6237 = vsub.f32 %v5582, %v6236
    %v6238 = vand.u32 %v6237, 4294901760
    %v6239 = vsub.f32 %v6237, %v6238
    %v6240 = vand.u32 %v6239, 4294901760
    %6241 = vmatpush.msra.mxu0 %v6240
    %v6242 = vand.u32 %v5574, 4294901760
    %v6243 = vsub.f32 %v5574, %v6242
    %v6244 = vand.u32 %v6243, 4294901760
    %v6245 = vsub.f32 %v6243, %v6244
    %v6246 = vand.u32 %v6245, 4294901760
    %6247 = vmatpush.msra.mxu0 %v6246
    %v6248 = vand.u32 %v5566, 4294901760
    %v6249 = vsub.f32 %v5566, %v6248
    %v6250 = vand.u32 %v6249, 4294901760
    %v6251 = vsub.f32 %v6249, %v6250
    %v6252 = vand.u32 %v6251, 4294901760
    %6253 = vmatpush.msra.mxu0 %v6252
    %v6254 = vand.u32 %v5598, 4294901760
    %6255 = vmatmul.f32.gmra.mxu0 %v6254
    %v6256 = vpop.f32.mrf.mxu0
    %v6257 = vadd.f32 %v6192, %v6256
    %v6258 = vand.u32 %v5601, 4294901760
    %6259 = vmatmul.f32.gmra.mxu0 %v6258
    %v6260 = vpop.f32.mrf.mxu0
    %v6261 = vadd.f32 %v6200, %v6260
    %v6262 = vand.u32 %v5604, 4294901760
    %6263 = vmatmul.f32.gmra.mxu0 %v6262
    %v6264 = vpop.f32.mrf.mxu0
    %v6265 = vadd.f32 %v6208, %v6264
    %v6266 = vand.u32 %v5607, 4294901760
    %6267 = vmatmul.f32.gmra.mxu0 %v6266
    %v6268 = vpop.f32.mrf.mxu0
    %v6269 = vadd.f32 %v6216, %v6268
    %6270 = vdwg.mxu0
    %6271 = vmatpush.msra.mxu0 0.0
    %6272 = vmatpush.msra.mxu0 0.0
    %6273 = vmatpush.msra.mxu0 0.0
    %6274 = vmatpush.msra.mxu0 0.0
    %6275 = vmatpush.msra.mxu0 0.0
    %6276 = vmatpush.msra.mxu0 0.0
    %6277 = vmatpush.msra.mxu0 0.0
    %6278 = vmatpush.msra.mxu0 0.0
    %6279 = vmatpush.msra.mxu0 0.0
    %6280 = vmatpush.msra.mxu0 0.0
    %6281 = vmatpush.msra.mxu0 0.0
    %6282 = vmatpush.msra.mxu0 0.0
    %v6283 = vand.u32 %v5590, 4294901760
    %v6284 = vsub.f32 %v5590, %v6283
    %6285 = vmatpush.msra.mxu0 %v6284
    %v6286 = vand.u32 %v5582, 4294901760
    %v6287 = vsub.f32 %v5582, %v6286
    %6288 = vmatpush.msra.mxu0 %v6287
    %v6289 = vand.u32 %v5574, 4294901760
    %v6290 = vsub.f32 %v5574, %v6289
    %6291 = vmatpush.msra.mxu0 %v6290
    %v6292 = vand.u32 %v5566, 4294901760
    %v6293 = vsub.f32 %v5566, %v6292
    %6294 = vmatpush.msra.mxu0 %v6293
    %v6295 = vand.u32 %v5598, 4294901760
    %v6296 = vsub.f32 %v5598, %v6295
    %6297 = vmatmul.f32.gmra.mxu0 %v6296
    %v6298 = vpop.f32.mrf.mxu0
    %v6299 = vadd.f32 %v6257, %v6298
    %v6300 = vand.u32 %v5601, 4294901760
    %v6301 = vsub.f32 %v5601, %v6300
    %6302 = vmatmul.f32.gmra.mxu0 %v6301
    %v6303 = vpop.f32.mrf.mxu0
    %v6304 = vadd.f32 %v6261, %v6303
    %v6305 = vand.u32 %v5604, 4294901760
    %v6306 = vsub.f32 %v5604, %v6305
    %6307 = vmatmul.f32.gmra.mxu0 %v6306
    %v6308 = vpop.f32.mrf.mxu0
    %v6309 = vadd.f32 %v6265, %v6308
    %v6310 = vand.u32 %v5607, 4294901760
    %v6311 = vsub.f32 %v5607, %v6310
    %6312 = vmatmul.f32.gmra.mxu0 %v6311
    %v6313 = vpop.f32.mrf.mxu0
    %v6314 = vadd.f32 %v6269, %v6313
    %6315 = vdwg.mxu0
    %6316 = vmatpush.msra.mxu0 0.0
    %6317 = vmatpush.msra.mxu0 0.0
    %6318 = vmatpush.msra.mxu0 0.0
    %6319 = vmatpush.msra.mxu0 0.0
    %6320 = vmatpush.msra.mxu0 0.0
    %6321 = vmatpush.msra.mxu0 0.0
    %6322 = vmatpush.msra.mxu0 0.0
    %6323 = vmatpush.msra.mxu0 0.0
    %6324 = vmatpush.msra.mxu0 0.0
    %6325 = vmatpush.msra.mxu0 0.0
    %6326 = vmatpush.msra.mxu0 0.0
    %6327 = vmatpush.msra.mxu0 0.0
    %v6328 = vand.u32 %v5590, 4294901760
    %6329 = vmatpush.msra.mxu0 %v6328
    %v6330 = vand.u32 %v5582, 4294901760
    %6331 = vmatpush.msra.mxu0 %v6330
    %v6332 = vand.u32 %v5574, 4294901760
    %6333 = vmatpush.msra.mxu0 %v6332
    %v6334 = vand.u32 %v5566, 4294901760
    %6335 = vmatpush.msra.mxu0 %v6334
    %v6336 = vand.u32 %v5598, 4294901760
    %v6337 = vsub.f32 %v5598, %v6336
    %v6338 = vand.u32 %v6337, 4294901760
    %6339 = vmatmul.f32.gmra.mxu0 %v6338
    %v6340 = vpop.f32.mrf.mxu0
    %v6341 = vadd.f32 %v6299, %v6340
    %v6342 = vand.u32 %v5601, 4294901760
    %v6343 = vsub.f32 %v5601, %v6342
    %v6344 = vand.u32 %v6343, 4294901760
    %6345 = vmatmul.f32.gmra.mxu0 %v6344
    %v6346 = vpop.f32.mrf.mxu0
    %v6347 = vadd.f32 %v6304, %v6346
    %v6348 = vand.u32 %v5604, 4294901760
    %v6349 = vsub.f32 %v5604, %v6348
    %v6350 = vand.u32 %v6349, 4294901760
    %6351 = vmatmul.f32.gmra.mxu0 %v6350
    %v6352 = vpop.f32.mrf.mxu0
    %v6353 = vadd.f32 %v6309, %v6352
    %v6354 = vand.u32 %v5607, 4294901760
    %v6355 = vsub.f32 %v5607, %v6354
    %v6356 = vand.u32 %v6355, 4294901760
    %6357 = vmatmul.f32.gmra.mxu0 %v6356
    %v6358 = vpop.f32.mrf.mxu0
    %v6359 = vadd.f32 %v6314, %v6358
    %6360 = vdwg.mxu0
    %6361 = vmatpush.msra.mxu0 0.0
    %6362 = vmatpush.msra.mxu0 0.0
    %6363 = vmatpush.msra.mxu0 0.0
    %6364 = vmatpush.msra.mxu0 0.0
    %6365 = vmatpush.msra.mxu0 0.0
    %6366 = vmatpush.msra.mxu0 0.0
    %6367 = vmatpush.msra.mxu0 0.0
    %6368 = vmatpush.msra.mxu0 0.0
    %6369 = vmatpush.msra.mxu0 0.0
    %6370 = vmatpush.msra.mxu0 0.0
    %6371 = vmatpush.msra.mxu0 0.0
    %6372 = vmatpush.msra.mxu0 0.0
    %v6373 = vand.u32 %v5590, 4294901760
    %v6374 = vsub.f32 %v5590, %v6373
    %v6375 = vand.u32 %v6374, 4294901760
    %6376 = vmatpush.msra.mxu0 %v6375
    %v6377 = vand.u32 %v5582, 4294901760
    %v6378 = vsub.f32 %v5582, %v6377
    %v6379 = vand.u32 %v6378, 4294901760
    %6380 = vmatpush.msra.mxu0 %v6379
    %v6381 = vand.u32 %v5574, 4294901760
    %v6382 = vsub.f32 %v5574, %v6381
    %v6383 = vand.u32 %v6382, 4294901760
    %6384 = vmatpush.msra.mxu0 %v6383
    %v6385 = vand.u32 %v5566, 4294901760
    %v6386 = vsub.f32 %v5566, %v6385
    %v6387 = vand.u32 %v6386, 4294901760
    %6388 = vmatpush.msra.mxu0 %v6387
    %v6389 = vand.u32 %v5598, 4294901760
    %6390 = vmatmul.f32.gmra.mxu0 %v6389
    %v6391 = vpop.f32.mrf.mxu0
    %v6392 = vadd.f32 %v6341, %v6391
    %v6393 = vand.u32 %v5601, 4294901760
    %6394 = vmatmul.f32.gmra.mxu0 %v6393
    %v6395 = vpop.f32.mrf.mxu0
    %v6396 = vadd.f32 %v6347, %v6395
    %v6397 = vand.u32 %v5604, 4294901760
    %6398 = vmatmul.f32.gmra.mxu0 %v6397
    %v6399 = vpop.f32.mrf.mxu0
    %v6400 = vadd.f32 %v6353, %v6399
    %v6401 = vand.u32 %v5607, 4294901760
    %6402 = vmatmul.f32.gmra.mxu0 %v6401
    %v6403 = vpop.f32.mrf.mxu0
    %v6404 = vadd.f32 %v6359, %v6403
    %6405 = vdwg.mxu0
    %6406 = vmatpush.msra.mxu0 0.0
    %6407 = vmatpush.msra.mxu0 0.0
    %6408 = vmatpush.msra.mxu0 0.0
    %6409 = vmatpush.msra.mxu0 0.0
    %6410 = vmatpush.msra.mxu0 0.0
    %6411 = vmatpush.msra.mxu0 0.0
    %6412 = vmatpush.msra.mxu0 0.0
    %6413 = vmatpush.msra.mxu0 0.0
    %6414 = vmatpush.msra.mxu0 0.0
    %6415 = vmatpush.msra.mxu0 0.0
    %6416 = vmatpush.msra.mxu0 0.0
    %6417 = vmatpush.msra.mxu0 0.0
    %v6418 = vand.u32 %v5590, 4294901760
    %6419 = vmatpush.msra.mxu0 %v6418
    %v6420 = vand.u32 %v5582, 4294901760
    %6421 = vmatpush.msra.mxu0 %v6420
    %v6422 = vand.u32 %v5574, 4294901760
    %6423 = vmatpush.msra.mxu0 %v6422
    %v6424 = vand.u32 %v5566, 4294901760
    %6425 = vmatpush.msra.mxu0 %v6424
    %v6426 = vand.u32 %v5598, 4294901760
    %6427 = vmatmul.f32.gmra.mxu0 %v6426
    %v6428 = vpop.f32.mrf.mxu0
    %v6429 = vadd.f32 %v6392, %v6428
    %v6430 = vand.u32 %v5601, 4294901760
    %6431 = vmatmul.f32.gmra.mxu0 %v6430
    %v6432 = vpop.f32.mrf.mxu0
    %v6433 = vadd.f32 %v6396, %v6432
    %v6434 = vand.u32 %v5604, 4294901760
    %6435 = vmatmul.f32.gmra.mxu0 %v6434
    %v6436 = vpop.f32.mrf.mxu0
    %v6437 = vadd.f32 %v6400, %v6436
    %v6438 = vand.u32 %v5607, 4294901760
    %6439 = vmatmul.f32.gmra.mxu0 %v6438
    %v6440 = vpop.f32.mrf.mxu0
    %v6441 = vadd.f32 %v6404, %v6440
    %6442 = vdwg.mxu0
    %6443 = vmatpush.msra.mxu0 0.0
    %6444 = vmatpush.msra.mxu0 0.0
    %6445 = vmatpush.msra.mxu0 0.0
    %6446 = vmatpush.msra.mxu0 0.0
    %6447 = vmatpush.msra.mxu0 0.0
    %6448 = vmatpush.msra.mxu0 0.0
    %6449 = vmatpush.msra.mxu0 0.0
    %6450 = vmatpush.msra.mxu0 0.0
    %6451 = vmatpush.msra.mxu0 0.0
    %6452 = vmatpush.msra.mxu0 0.0
    %6453 = vmatpush.msra.mxu0 0.0
    %6454 = vmatpush.msra.mxu0 0.0
    %v6455 = vand.u32 %v5591, 4294901760
    %6456 = vmatpush.msra.mxu0 %v6455
    %v6457 = vand.u32 %v5583, 4294901760
    %6458 = vmatpush.msra.mxu0 %v6457
    %v6459 = vand.u32 %v5575, 4294901760
    %6460 = vmatpush.msra.mxu0 %v6459
    %v6461 = vand.u32 %v5567, 4294901760
    %6462 = vmatpush.msra.mxu0 %v6461
    %v6463 = vand.u32 %v5598, 4294901760
    %v6464 = vsub.f32 %v5598, %v6463
    %v6465 = vand.u32 %v6464, 4294901760
    %v6466 = vsub.f32 %v6464, %v6465
    %v6467 = vand.u32 %v6466, 4294901760
    %6468 = vmatmul.f32.gmra.mxu0 %v6467
    %v6469 = vpop.f32.mrf.mxu0
    %v6470 = vadd.f32 0.0, %v6469
    %v6471 = vand.u32 %v5601, 4294901760
    %v6472 = vsub.f32 %v5601, %v6471
    %v6473 = vand.u32 %v6472, 4294901760
    %v6474 = vsub.f32 %v6472, %v6473
    %v6475 = vand.u32 %v6474, 4294901760
    %6476 = vmatmul.f32.gmra.mxu0 %v6475
    %v6477 = vpop.f32.mrf.mxu0
    %v6478 = vadd.f32 0.0, %v6477
    %v6479 = vand.u32 %v5604, 4294901760
    %v6480 = vsub.f32 %v5604, %v6479
    %v6481 = vand.u32 %v6480, 4294901760
    %v6482 = vsub.f32 %v6480, %v6481
    %v6483 = vand.u32 %v6482, 4294901760
    %6484 = vmatmul.f32.gmra.mxu0 %v6483
    %v6485 = vpop.f32.mrf.mxu0
    %v6486 = vadd.f32 0.0, %v6485
    %v6487 = vand.u32 %v5607, 4294901760
    %v6488 = vsub.f32 %v5607, %v6487
    %v6489 = vand.u32 %v6488, 4294901760
    %v6490 = vsub.f32 %v6488, %v6489
    %v6491 = vand.u32 %v6490, 4294901760
    %6492 = vmatmul.f32.gmra.mxu0 %v6491
    %v6493 = vpop.f32.mrf.mxu0
    %v6494 = vadd.f32 0.0, %v6493
    %6495 = vdwg.mxu0
    %6496 = vmatpush.msra.mxu0 0.0
    %6497 = vmatpush.msra.mxu0 0.0
    %6498 = vmatpush.msra.mxu0 0.0
    %6499 = vmatpush.msra.mxu0 0.0
    %6500 = vmatpush.msra.mxu0 0.0
    %6501 = vmatpush.msra.mxu0 0.0
    %6502 = vmatpush.msra.mxu0 0.0
    %6503 = vmatpush.msra.mxu0 0.0
    %6504 = vmatpush.msra.mxu0 0.0
    %6505 = vmatpush.msra.mxu0 0.0
    %6506 = vmatpush.msra.mxu0 0.0
    %6507 = vmatpush.msra.mxu0 0.0
    %v6508 = vand.u32 %v5591, 4294901760
    %v6509 = vsub.f32 %v5591, %v6508
    %v6510 = vand.u32 %v6509, 4294901760
    %v6511 = vsub.f32 %v6509, %v6510
    %v6512 = vand.u32 %v6511, 4294901760
    %6513 = vmatpush.msra.mxu0 %v6512
    %v6514 = vand.u32 %v5583, 4294901760
    %v6515 = vsub.f32 %v5583, %v6514
    %v6516 = vand.u32 %v6515, 4294901760
    %v6517 = vsub.f32 %v6515, %v6516
    %v6518 = vand.u32 %v6517, 4294901760
    %6519 = vmatpush.msra.mxu0 %v6518
    %v6520 = vand.u32 %v5575, 4294901760
    %v6521 = vsub.f32 %v5575, %v6520
    %v6522 = vand.u32 %v6521, 4294901760
    %v6523 = vsub.f32 %v6521, %v6522
    %v6524 = vand.u32 %v6523, 4294901760
    %6525 = vmatpush.msra.mxu0 %v6524
    %v6526 = vand.u32 %v5567, 4294901760
    %v6527 = vsub.f32 %v5567, %v6526
    %v6528 = vand.u32 %v6527, 4294901760
    %v6529 = vsub.f32 %v6527, %v6528
    %v6530 = vand.u32 %v6529, 4294901760
    %6531 = vmatpush.msra.mxu0 %v6530
    %v6532 = vand.u32 %v5598, 4294901760
    %6533 = vmatmul.f32.gmra.mxu0 %v6532
    %v6534 = vpop.f32.mrf.mxu0
    %v6535 = vadd.f32 %v6470, %v6534
    %v6536 = vand.u32 %v5601, 4294901760
    %6537 = vmatmul.f32.gmra.mxu0 %v6536
    %v6538 = vpop.f32.mrf.mxu0
    %v6539 = vadd.f32 %v6478, %v6538
    %v6540 = vand.u32 %v5604, 4294901760
    %6541 = vmatmul.f32.gmra.mxu0 %v6540
    %v6542 = vpop.f32.mrf.mxu0
    %v6543 = vadd.f32 %v6486, %v6542
    %v6544 = vand.u32 %v5607, 4294901760
    %6545 = vmatmul.f32.gmra.mxu0 %v6544
    %v6546 = vpop.f32.mrf.mxu0
    %v6547 = vadd.f32 %v6494, %v6546
    %6548 = vdwg.mxu0
    %6549 = vmatpush.msra.mxu0 0.0
    %6550 = vmatpush.msra.mxu0 0.0
    %6551 = vmatpush.msra.mxu0 0.0
    %6552 = vmatpush.msra.mxu0 0.0
    %6553 = vmatpush.msra.mxu0 0.0
    %6554 = vmatpush.msra.mxu0 0.0
    %6555 = vmatpush.msra.mxu0 0.0
    %6556 = vmatpush.msra.mxu0 0.0
    %6557 = vmatpush.msra.mxu0 0.0
    %6558 = vmatpush.msra.mxu0 0.0
    %6559 = vmatpush.msra.mxu0 0.0
    %6560 = vmatpush.msra.mxu0 0.0
    %v6561 = vand.u32 %v5591, 4294901760
    %v6562 = vsub.f32 %v5591, %v6561
    %6563 = vmatpush.msra.mxu0 %v6562
    %v6564 = vand.u32 %v5583, 4294901760
    %v6565 = vsub.f32 %v5583, %v6564
    %6566 = vmatpush.msra.mxu0 %v6565
    %v6567 = vand.u32 %v5575, 4294901760
    %v6568 = vsub.f32 %v5575, %v6567
    %6569 = vmatpush.msra.mxu0 %v6568
    %v6570 = vand.u32 %v5567, 4294901760
    %v6571 = vsub.f32 %v5567, %v6570
    %6572 = vmatpush.msra.mxu0 %v6571
    %v6573 = vand.u32 %v5598, 4294901760
    %v6574 = vsub.f32 %v5598, %v6573
    %6575 = vmatmul.f32.gmra.mxu0 %v6574
    %v6576 = vpop.f32.mrf.mxu0
    %v6577 = vadd.f32 %v6535, %v6576
    %v6578 = vand.u32 %v5601, 4294901760
    %v6579 = vsub.f32 %v5601, %v6578
    %6580 = vmatmul.f32.gmra.mxu0 %v6579
    %v6581 = vpop.f32.mrf.mxu0
    %v6582 = vadd.f32 %v6539, %v6581
    %v6583 = vand.u32 %v5604, 4294901760
    %v6584 = vsub.f32 %v5604, %v6583
    %6585 = vmatmul.f32.gmra.mxu0 %v6584
    %v6586 = vpop.f32.mrf.mxu0
    %v6587 = vadd.f32 %v6543, %v6586
    %v6588 = vand.u32 %v5607, 4294901760
    %v6589 = vsub.f32 %v5607, %v6588
    %6590 = vmatmul.f32.gmra.mxu0 %v6589
    %v6591 = vpop.f32.mrf.mxu0
    %v6592 = vadd.f32 %v6547, %v6591
    %6593 = vdwg.mxu0
    %6594 = vmatpush.msra.mxu0 0.0
    %6595 = vmatpush.msra.mxu0 0.0
    %6596 = vmatpush.msra.mxu0 0.0
    %6597 = vmatpush.msra.mxu0 0.0
    %6598 = vmatpush.msra.mxu0 0.0
    %6599 = vmatpush.msra.mxu0 0.0
    %6600 = vmatpush.msra.mxu0 0.0
    %6601 = vmatpush.msra.mxu0 0.0
    %6602 = vmatpush.msra.mxu0 0.0
    %6603 = vmatpush.msra.mxu0 0.0
    %6604 = vmatpush.msra.mxu0 0.0
    %6605 = vmatpush.msra.mxu0 0.0
    %v6606 = vand.u32 %v5591, 4294901760
    %6607 = vmatpush.msra.mxu0 %v6606
    %v6608 = vand.u32 %v5583, 4294901760
    %6609 = vmatpush.msra.mxu0 %v6608
    %v6610 = vand.u32 %v5575, 4294901760
    %6611 = vmatpush.msra.mxu0 %v6610
    %v6612 = vand.u32 %v5567, 4294901760
    %6613 = vmatpush.msra.mxu0 %v6612
    %v6614 = vand.u32 %v5598, 4294901760
    %v6615 = vsub.f32 %v5598, %v6614
    %v6616 = vand.u32 %v6615, 4294901760
    %6617 = vmatmul.f32.gmra.mxu0 %v6616
    %v6618 = vpop.f32.mrf.mxu0
    %v6619 = vadd.f32 %v6577, %v6618
    %v6620 = vand.u32 %v5601, 4294901760
    %v6621 = vsub.f32 %v5601, %v6620
    %v6622 = vand.u32 %v6621, 4294901760
    %6623 = vmatmul.f32.gmra.mxu0 %v6622
    %v6624 = vpop.f32.mrf.mxu0
    %v6625 = vadd.f32 %v6582, %v6624
    %v6626 = vand.u32 %v5604, 4294901760
    %v6627 = vsub.f32 %v5604, %v6626
    %v6628 = vand.u32 %v6627, 4294901760
    %6629 = vmatmul.f32.gmra.mxu0 %v6628
    %v6630 = vpop.f32.mrf.mxu0
    %v6631 = vadd.f32 %v6587, %v6630
    %v6632 = vand.u32 %v5607, 4294901760
    %v6633 = vsub.f32 %v5607, %v6632
    %v6634 = vand.u32 %v6633, 4294901760
    %6635 = vmatmul.f32.gmra.mxu0 %v6634
    %v6636 = vpop.f32.mrf.mxu0
    %v6637 = vadd.f32 %v6592, %v6636
    %6638 = vdwg.mxu0
    %6639 = vmatpush.msra.mxu0 0.0
    %6640 = vmatpush.msra.mxu0 0.0
    %6641 = vmatpush.msra.mxu0 0.0
    %6642 = vmatpush.msra.mxu0 0.0
    %6643 = vmatpush.msra.mxu0 0.0
    %6644 = vmatpush.msra.mxu0 0.0
    %6645 = vmatpush.msra.mxu0 0.0
    %6646 = vmatpush.msra.mxu0 0.0
    %6647 = vmatpush.msra.mxu0 0.0
    %6648 = vmatpush.msra.mxu0 0.0
    %6649 = vmatpush.msra.mxu0 0.0
    %6650 = vmatpush.msra.mxu0 0.0
    %v6651 = vand.u32 %v5591, 4294901760
    %v6652 = vsub.f32 %v5591, %v6651
    %v6653 = vand.u32 %v6652, 4294901760
    %6654 = vmatpush.msra.mxu0 %v6653
    %v6655 = vand.u32 %v5583, 4294901760
    %v6656 = vsub.f32 %v5583, %v6655
    %v6657 = vand.u32 %v6656, 4294901760
    %6658 = vmatpush.msra.mxu0 %v6657
    %v6659 = vand.u32 %v5575, 4294901760
    %v6660 = vsub.f32 %v5575, %v6659
    %v6661 = vand.u32 %v6660, 4294901760
    %6662 = vmatpush.msra.mxu0 %v6661
    %v6663 = vand.u32 %v5567, 4294901760
    %v6664 = vsub.f32 %v5567, %v6663
    %v6665 = vand.u32 %v6664, 4294901760
    %6666 = vmatpush.msra.mxu0 %v6665
    %v6667 = vand.u32 %v5598, 4294901760
    %6668 = vmatmul.f32.gmra.mxu0 %v6667
    %v6669 = vpop.f32.mrf.mxu0
    %v6670 = vadd.f32 %v6619, %v6669
    %v6671 = vand.u32 %v5601, 4294901760
    %6672 = vmatmul.f32.gmra.mxu0 %v6671
    %v6673 = vpop.f32.mrf.mxu0
    %v6674 = vadd.f32 %v6625, %v6673
    %v6675 = vand.u32 %v5604, 4294901760
    %6676 = vmatmul.f32.gmra.mxu0 %v6675
    %v6677 = vpop.f32.mrf.mxu0
    %v6678 = vadd.f32 %v6631, %v6677
    %v6679 = vand.u32 %v5607, 4294901760
    %6680 = vmatmul.f32.gmra.mxu0 %v6679
    %v6681 = vpop.f32.mrf.mxu0
    %v6682 = vadd.f32 %v6637, %v6681
    %6683 = vdwg.mxu0
    %6684 = vmatpush.msra.mxu0 0.0
    %6685 = vmatpush.msra.mxu0 0.0
    %6686 = vmatpush.msra.mxu0 0.0
    %6687 = vmatpush.msra.mxu0 0.0
    %6688 = vmatpush.msra.mxu0 0.0
    %6689 = vmatpush.msra.mxu0 0.0
    %6690 = vmatpush.msra.mxu0 0.0
    %6691 = vmatpush.msra.mxu0 0.0
    %6692 = vmatpush.msra.mxu0 0.0
    %6693 = vmatpush.msra.mxu0 0.0
    %6694 = vmatpush.msra.mxu0 0.0
    %6695 = vmatpush.msra.mxu0 0.0
    %v6696 = vand.u32 %v5591, 4294901760
    %6697 = vmatpush.msra.mxu0 %v6696
    %v6698 = vand.u32 %v5583, 4294901760
    %6699 = vmatpush.msra.mxu0 %v6698
    %v6700 = vand.u32 %v5575, 4294901760
    %6701 = vmatpush.msra.mxu0 %v6700
    %v6702 = vand.u32 %v5567, 4294901760
    %6703 = vmatpush.msra.mxu0 %v6702
    %v6704 = vand.u32 %v5598, 4294901760
    %6705 = vmatmul.f32.gmra.mxu0 %v6704
    %v6706 = vpop.f32.mrf.mxu0
    %v6707 = vadd.f32 %v6670, %v6706
    %v6708 = vand.u32 %v5601, 4294901760
    %6709 = vmatmul.f32.gmra.mxu0 %v6708
    %v6710 = vpop.f32.mrf.mxu0
    %v6711 = vadd.f32 %v6674, %v6710
    %v6712 = vand.u32 %v5604, 4294901760
    %6713 = vmatmul.f32.gmra.mxu0 %v6712
    %v6714 = vpop.f32.mrf.mxu0
    %v6715 = vadd.f32 %v6678, %v6714
    %v6716 = vand.u32 %v5607, 4294901760
    %6717 = vmatmul.f32.gmra.mxu0 %v6716
    %v6718 = vpop.f32.mrf.mxu0
    %v6719 = vadd.f32 %v6682, %v6718
    %6720 = vdwg.mxu0
    %6721 = vmatpush.msra.mxu0 0.0
    %6722 = vmatpush.msra.mxu0 0.0
    %6723 = vmatpush.msra.mxu0 0.0
    %6724 = vmatpush.msra.mxu0 0.0
    %6725 = vmatpush.msra.mxu0 0.0
    %6726 = vmatpush.msra.mxu0 0.0
    %6727 = vmatpush.msra.mxu0 0.0
    %6728 = vmatpush.msra.mxu0 0.0
    %6729 = vmatpush.msra.mxu0 0.0
    %6730 = vmatpush.msra.mxu0 0.0
    %6731 = vmatpush.msra.mxu0 0.0
    %6732 = vmatpush.msra.mxu0 0.0
    %v6733 = vand.u32 %v5592, 4294901760
    %6734 = vmatpush.msra.mxu0 %v6733
    %v6735 = vand.u32 %v5584, 4294901760
    %6736 = vmatpush.msra.mxu0 %v6735
    %v6737 = vand.u32 %v5576, 4294901760
    %6738 = vmatpush.msra.mxu0 %v6737
    %v6739 = vand.u32 %v5568, 4294901760
    %6740 = vmatpush.msra.mxu0 %v6739
    %v6741 = vand.u32 %v5598, 4294901760
    %v6742 = vsub.f32 %v5598, %v6741
    %v6743 = vand.u32 %v6742, 4294901760
    %v6744 = vsub.f32 %v6742, %v6743
    %v6745 = vand.u32 %v6744, 4294901760
    %6746 = vmatmul.f32.gmra.mxu0 %v6745
    %v6747 = vpop.f32.mrf.mxu0
    %v6748 = vadd.f32 0.0, %v6747
    %v6749 = vand.u32 %v5601, 4294901760
    %v6750 = vsub.f32 %v5601, %v6749
    %v6751 = vand.u32 %v6750, 4294901760
    %v6752 = vsub.f32 %v6750, %v6751
    %v6753 = vand.u32 %v6752, 4294901760
    %6754 = vmatmul.f32.gmra.mxu0 %v6753
    %v6755 = vpop.f32.mrf.mxu0
    %v6756 = vadd.f32 0.0, %v6755
    %v6757 = vand.u32 %v5604, 4294901760
    %v6758 = vsub.f32 %v5604, %v6757
    %v6759 = vand.u32 %v6758, 4294901760
    %v6760 = vsub.f32 %v6758, %v6759
    %v6761 = vand.u32 %v6760, 4294901760
    %6762 = vmatmul.f32.gmra.mxu0 %v6761
    %v6763 = vpop.f32.mrf.mxu0
    %v6764 = vadd.f32 0.0, %v6763
    %v6765 = vand.u32 %v5607, 4294901760
    %v6766 = vsub.f32 %v5607, %v6765
    %v6767 = vand.u32 %v6766, 4294901760
    %v6768 = vsub.f32 %v6766, %v6767
    %v6769 = vand.u32 %v6768, 4294901760
    %6770 = vmatmul.f32.gmra.mxu0 %v6769
    %v6771 = vpop.f32.mrf.mxu0
    %v6772 = vadd.f32 0.0, %v6771
    %6773 = vdwg.mxu0
    %6774 = vmatpush.msra.mxu0 0.0
    %6775 = vmatpush.msra.mxu0 0.0
    %6776 = vmatpush.msra.mxu0 0.0
    %6777 = vmatpush.msra.mxu0 0.0
    %6778 = vmatpush.msra.mxu0 0.0
    %6779 = vmatpush.msra.mxu0 0.0
    %6780 = vmatpush.msra.mxu0 0.0
    %6781 = vmatpush.msra.mxu0 0.0
    %6782 = vmatpush.msra.mxu0 0.0
    %6783 = vmatpush.msra.mxu0 0.0
    %6784 = vmatpush.msra.mxu0 0.0
    %6785 = vmatpush.msra.mxu0 0.0
    %v6786 = vand.u32 %v5592, 4294901760
    %v6787 = vsub.f32 %v5592, %v6786
    %v6788 = vand.u32 %v6787, 4294901760
    %v6789 = vsub.f32 %v6787, %v6788
    %v6790 = vand.u32 %v6789, 4294901760
    %6791 = vmatpush.msra.mxu0 %v6790
    %v6792 = vand.u32 %v5584, 4294901760
    %v6793 = vsub.f32 %v5584, %v6792
    %v6794 = vand.u32 %v6793, 4294901760
    %v6795 = vsub.f32 %v6793, %v6794
    %v6796 = vand.u32 %v6795, 4294901760
    %6797 = vmatpush.msra.mxu0 %v6796
    %v6798 = vand.u32 %v5576, 4294901760
    %v6799 = vsub.f32 %v5576, %v6798
    %v6800 = vand.u32 %v6799, 4294901760
    %v6801 = vsub.f32 %v6799, %v6800
    %v6802 = vand.u32 %v6801, 4294901760
    %6803 = vmatpush.msra.mxu0 %v6802
    %v6804 = vand.u32 %v5568, 4294901760
    %v6805 = vsub.f32 %v5568, %v6804
    %v6806 = vand.u32 %v6805, 4294901760
    %v6807 = vsub.f32 %v6805, %v6806
    %v6808 = vand.u32 %v6807, 4294901760
    %6809 = vmatpush.msra.mxu0 %v6808
    %v6810 = vand.u32 %v5598, 4294901760
    %6811 = vmatmul.f32.gmra.mxu0 %v6810
    %v6812 = vpop.f32.mrf.mxu0
    %v6813 = vadd.f32 %v6748, %v6812
    %v6814 = vand.u32 %v5601, 4294901760
    %6815 = vmatmul.f32.gmra.mxu0 %v6814
    %v6816 = vpop.f32.mrf.mxu0
    %v6817 = vadd.f32 %v6756, %v6816
    %v6818 = vand.u32 %v5604, 4294901760
    %6819 = vmatmul.f32.gmra.mxu0 %v6818
    %v6820 = vpop.f32.mrf.mxu0
    %v6821 = vadd.f32 %v6764, %v6820
    %v6822 = vand.u32 %v5607, 4294901760
    %6823 = vmatmul.f32.gmra.mxu0 %v6822
    %v6824 = vpop.f32.mrf.mxu0
    %v6825 = vadd.f32 %v6772, %v6824
    %6826 = vdwg.mxu0
    %6827 = vmatpush.msra.mxu0 0.0
    %6828 = vmatpush.msra.mxu0 0.0
    %6829 = vmatpush.msra.mxu0 0.0
    %6830 = vmatpush.msra.mxu0 0.0
    %6831 = vmatpush.msra.mxu0 0.0
    %6832 = vmatpush.msra.mxu0 0.0
    %6833 = vmatpush.msra.mxu0 0.0
    %6834 = vmatpush.msra.mxu0 0.0
    %6835 = vmatpush.msra.mxu0 0.0
    %6836 = vmatpush.msra.mxu0 0.0
    %6837 = vmatpush.msra.mxu0 0.0
    %6838 = vmatpush.msra.mxu0 0.0
    %v6839 = vand.u32 %v5592, 4294901760
    %v6840 = vsub.f32 %v5592, %v6839
    %6841 = vmatpush.msra.mxu0 %v6840
    %v6842 = vand.u32 %v5584, 4294901760
    %v6843 = vsub.f32 %v5584, %v6842
    %6844 = vmatpush.msra.mxu0 %v6843
    %v6845 = vand.u32 %v5576, 4294901760
    %v6846 = vsub.f32 %v5576, %v6845
    %6847 = vmatpush.msra.mxu0 %v6846
    %v6848 = vand.u32 %v5568, 4294901760
    %v6849 = vsub.f32 %v5568, %v6848
    %6850 = vmatpush.msra.mxu0 %v6849
    %v6851 = vand.u32 %v5598, 4294901760
    %v6852 = vsub.f32 %v5598, %v6851
    %6853 = vmatmul.f32.gmra.mxu0 %v6852
    %v6854 = vpop.f32.mrf.mxu0
    %v6855 = vadd.f32 %v6813, %v6854
    %v6856 = vand.u32 %v5601, 4294901760
    %v6857 = vsub.f32 %v5601, %v6856
    %6858 = vmatmul.f32.gmra.mxu0 %v6857
    %v6859 = vpop.f32.mrf.mxu0
    %v6860 = vadd.f32 %v6817, %v6859
    %v6861 = vand.u32 %v5604, 4294901760
    %v6862 = vsub.f32 %v5604, %v6861
    %6863 = vmatmul.f32.gmra.mxu0 %v6862
    %v6864 = vpop.f32.mrf.mxu0
    %v6865 = vadd.f32 %v6821, %v6864
    %v6866 = vand.u32 %v5607, 4294901760
    %v6867 = vsub.f32 %v5607, %v6866
    %6868 = vmatmul.f32.gmra.mxu0 %v6867
    %v6869 = vpop.f32.mrf.mxu0
    %v6870 = vadd.f32 %v6825, %v6869
    %6871 = vdwg.mxu0
    %6872 = vmatpush.msra.mxu0 0.0
    %6873 = vmatpush.msra.mxu0 0.0
    %6874 = vmatpush.msra.mxu0 0.0
    %6875 = vmatpush.msra.mxu0 0.0
    %6876 = vmatpush.msra.mxu0 0.0
    %6877 = vmatpush.msra.mxu0 0.0
    %6878 = vmatpush.msra.mxu0 0.0
    %6879 = vmatpush.msra.mxu0 0.0
    %6880 = vmatpush.msra.mxu0 0.0
    %6881 = vmatpush.msra.mxu0 0.0
    %6882 = vmatpush.msra.mxu0 0.0
    %6883 = vmatpush.msra.mxu0 0.0
    %v6884 = vand.u32 %v5592, 4294901760
    %6885 = vmatpush.msra.mxu0 %v6884
    %v6886 = vand.u32 %v5584, 4294901760
    %6887 = vmatpush.msra.mxu0 %v6886
    %v6888 = vand.u32 %v5576, 4294901760
    %6889 = vmatpush.msra.mxu0 %v6888
    %v6890 = vand.u32 %v5568, 4294901760
    %6891 = vmatpush.msra.mxu0 %v6890
    %v6892 = vand.u32 %v5598, 4294901760
    %v6893 = vsub.f32 %v5598, %v6892
    %v6894 = vand.u32 %v6893, 4294901760
    %6895 = vmatmul.f32.gmra.mxu0 %v6894
    %v6896 = vpop.f32.mrf.mxu0
    %v6897 = vadd.f32 %v6855, %v6896
    %v6898 = vand.u32 %v5601, 4294901760
    %v6899 = vsub.f32 %v5601, %v6898
    %v6900 = vand.u32 %v6899, 4294901760
    %6901 = vmatmul.f32.gmra.mxu0 %v6900
    %v6902 = vpop.f32.mrf.mxu0
    %v6903 = vadd.f32 %v6860, %v6902
    %v6904 = vand.u32 %v5604, 4294901760
    %v6905 = vsub.f32 %v5604, %v6904
    %v6906 = vand.u32 %v6905, 4294901760
    %6907 = vmatmul.f32.gmra.mxu0 %v6906
    %v6908 = vpop.f32.mrf.mxu0
    %v6909 = vadd.f32 %v6865, %v6908
    %v6910 = vand.u32 %v5607, 4294901760
    %v6911 = vsub.f32 %v5607, %v6910
    %v6912 = vand.u32 %v6911, 4294901760
    %6913 = vmatmul.f32.gmra.mxu0 %v6912
    %v6914 = vpop.f32.mrf.mxu0
    %v6915 = vadd.f32 %v6870, %v6914
    %6916 = vdwg.mxu0
    %6917 = vmatpush.msra.mxu0 0.0
    %6918 = vmatpush.msra.mxu0 0.0
    %6919 = vmatpush.msra.mxu0 0.0
    %6920 = vmatpush.msra.mxu0 0.0
    %6921 = vmatpush.msra.mxu0 0.0
    %6922 = vmatpush.msra.mxu0 0.0
    %6923 = vmatpush.msra.mxu0 0.0
    %6924 = vmatpush.msra.mxu0 0.0
    %6925 = vmatpush.msra.mxu0 0.0
    %6926 = vmatpush.msra.mxu0 0.0
    %6927 = vmatpush.msra.mxu0 0.0
    %6928 = vmatpush.msra.mxu0 0.0
    %v6929 = vand.u32 %v5592, 4294901760
    %v6930 = vsub.f32 %v5592, %v6929
    %v6931 = vand.u32 %v6930, 4294901760
    %6932 = vmatpush.msra.mxu0 %v6931
    %v6933 = vand.u32 %v5584, 4294901760
    %v6934 = vsub.f32 %v5584, %v6933
    %v6935 = vand.u32 %v6934, 4294901760
    %6936 = vmatpush.msra.mxu0 %v6935
    %v6937 = vand.u32 %v5576, 4294901760
    %v6938 = vsub.f32 %v5576, %v6937
    %v6939 = vand.u32 %v6938, 4294901760
    %6940 = vmatpush.msra.mxu0 %v6939
    %v6941 = vand.u32 %v5568, 4294901760
    %v6942 = vsub.f32 %v5568, %v6941
    %v6943 = vand.u32 %v6942, 4294901760
    %6944 = vmatpush.msra.mxu0 %v6943
    %v6945 = vand.u32 %v5598, 4294901760
    %6946 = vmatmul.f32.gmra.mxu0 %v6945
    %v6947 = vpop.f32.mrf.mxu0
    %v6948 = vadd.f32 %v6897, %v6947
    %v6949 = vand.u32 %v5601, 4294901760
    %6950 = vmatmul.f32.gmra.mxu0 %v6949
    %v6951 = vpop.f32.mrf.mxu0
    %v6952 = vadd.f32 %v6903, %v6951
    %v6953 = vand.u32 %v5604, 4294901760
    %6954 = vmatmul.f32.gmra.mxu0 %v6953
    %v6955 = vpop.f32.mrf.mxu0
    %v6956 = vadd.f32 %v6909, %v6955
    %v6957 = vand.u32 %v5607, 4294901760
    %6958 = vmatmul.f32.gmra.mxu0 %v6957
    %v6959 = vpop.f32.mrf.mxu0
    %v6960 = vadd.f32 %v6915, %v6959
    %6961 = vdwg.mxu0
    %6962 = vmatpush.msra.mxu0 0.0
    %6963 = vmatpush.msra.mxu0 0.0
    %6964 = vmatpush.msra.mxu0 0.0
    %6965 = vmatpush.msra.mxu0 0.0
    %6966 = vmatpush.msra.mxu0 0.0
    %6967 = vmatpush.msra.mxu0 0.0
    %6968 = vmatpush.msra.mxu0 0.0
    %6969 = vmatpush.msra.mxu0 0.0
    %6970 = vmatpush.msra.mxu0 0.0
    %6971 = vmatpush.msra.mxu0 0.0
    %6972 = vmatpush.msra.mxu0 0.0
    %6973 = vmatpush.msra.mxu0 0.0
    %v6974 = vand.u32 %v5592, 4294901760
    %6975 = vmatpush.msra.mxu0 %v6974
    %v6976 = vand.u32 %v5584, 4294901760
    %6977 = vmatpush.msra.mxu0 %v6976
    %v6978 = vand.u32 %v5576, 4294901760
    %6979 = vmatpush.msra.mxu0 %v6978
    %v6980 = vand.u32 %v5568, 4294901760
    %6981 = vmatpush.msra.mxu0 %v6980
    %v6982 = vand.u32 %v5598, 4294901760
    %6983 = vmatmul.f32.gmra.mxu0 %v6982
    %v6984 = vpop.f32.mrf.mxu0
    %v6985 = vadd.f32 %v6948, %v6984
    %v6986 = vand.u32 %v5601, 4294901760
    %6987 = vmatmul.f32.gmra.mxu0 %v6986
    %v6988 = vpop.f32.mrf.mxu0
    %v6989 = vadd.f32 %v6952, %v6988
    %v6990 = vand.u32 %v5604, 4294901760
    %6991 = vmatmul.f32.gmra.mxu0 %v6990
    %v6992 = vpop.f32.mrf.mxu0
    %v6993 = vadd.f32 %v6956, %v6992
    %v6994 = vand.u32 %v5607, 4294901760
    %6995 = vmatmul.f32.gmra.mxu0 %v6994
    %v6996 = vpop.f32.mrf.mxu0
    %v6997 = vadd.f32 %v6960, %v6996
    %6998 = vdwg.mxu0
    %6999 = vmatpush.msra.mxu0 0.0
    %7000 = vmatpush.msra.mxu0 0.0
    %7001 = vmatpush.msra.mxu0 0.0
    %7002 = vmatpush.msra.mxu0 0.0
    %7003 = vmatpush.msra.mxu0 0.0
    %7004 = vmatpush.msra.mxu0 0.0
    %7005 = vmatpush.msra.mxu0 0.0
    %7006 = vmatpush.msra.mxu0 0.0
    %7007 = vmatpush.msra.mxu0 0.0
    %7008 = vmatpush.msra.mxu0 0.0
    %7009 = vmatpush.msra.mxu0 0.0
    %7010 = vmatpush.msra.mxu0 0.0
    %v7011 = vand.u32 %v5593, 4294901760
    %7012 = vmatpush.msra.mxu0 %v7011
    %v7013 = vand.u32 %v5585, 4294901760
    %7014 = vmatpush.msra.mxu0 %v7013
    %v7015 = vand.u32 %v5577, 4294901760
    %7016 = vmatpush.msra.mxu0 %v7015
    %v7017 = vand.u32 %v5569, 4294901760
    %7018 = vmatpush.msra.mxu0 %v7017
    %v7019 = vand.u32 %v5598, 4294901760
    %v7020 = vsub.f32 %v5598, %v7019
    %v7021 = vand.u32 %v7020, 4294901760
    %v7022 = vsub.f32 %v7020, %v7021
    %v7023 = vand.u32 %v7022, 4294901760
    %7024 = vmatmul.f32.gmra.mxu0 %v7023
    %v7025 = vpop.f32.mrf.mxu0
    %v7026 = vadd.f32 0.0, %v7025
    %v7027 = vand.u32 %v5601, 4294901760
    %v7028 = vsub.f32 %v5601, %v7027
    %v7029 = vand.u32 %v7028, 4294901760
    %v7030 = vsub.f32 %v7028, %v7029
    %v7031 = vand.u32 %v7030, 4294901760
    %7032 = vmatmul.f32.gmra.mxu0 %v7031
    %v7033 = vpop.f32.mrf.mxu0
    %v7034 = vadd.f32 0.0, %v7033
    %v7035 = vand.u32 %v5604, 4294901760
    %v7036 = vsub.f32 %v5604, %v7035
    %v7037 = vand.u32 %v7036, 4294901760
    %v7038 = vsub.f32 %v7036, %v7037
    %v7039 = vand.u32 %v7038, 4294901760
    %7040 = vmatmul.f32.gmra.mxu0 %v7039
    %v7041 = vpop.f32.mrf.mxu0
    %v7042 = vadd.f32 0.0, %v7041
    %v7043 = vand.u32 %v5607, 4294901760
    %v7044 = vsub.f32 %v5607, %v7043
    %v7045 = vand.u32 %v7044, 4294901760
    %v7046 = vsub.f32 %v7044, %v7045
    %v7047 = vand.u32 %v7046, 4294901760
    %7048 = vmatmul.f32.gmra.mxu0 %v7047
    %v7049 = vpop.f32.mrf.mxu0
    %v7050 = vadd.f32 0.0, %v7049
    %7051 = vdwg.mxu0
    %7052 = vmatpush.msra.mxu0 0.0
    %7053 = vmatpush.msra.mxu0 0.0
    %7054 = vmatpush.msra.mxu0 0.0
    %7055 = vmatpush.msra.mxu0 0.0
    %7056 = vmatpush.msra.mxu0 0.0
    %7057 = vmatpush.msra.mxu0 0.0
    %7058 = vmatpush.msra.mxu0 0.0
    %7059 = vmatpush.msra.mxu0 0.0
    %7060 = vmatpush.msra.mxu0 0.0
    %7061 = vmatpush.msra.mxu0 0.0
    %7062 = vmatpush.msra.mxu0 0.0
    %7063 = vmatpush.msra.mxu0 0.0
    %v7064 = vand.u32 %v5593, 4294901760
    %v7065 = vsub.f32 %v5593, %v7064
    %v7066 = vand.u32 %v7065, 4294901760
    %v7067 = vsub.f32 %v7065, %v7066
    %v7068 = vand.u32 %v7067, 4294901760
    %7069 = vmatpush.msra.mxu0 %v7068
    %v7070 = vand.u32 %v5585, 4294901760
    %v7071 = vsub.f32 %v5585, %v7070
    %v7072 = vand.u32 %v7071, 4294901760
    %v7073 = vsub.f32 %v7071, %v7072
    %v7074 = vand.u32 %v7073, 4294901760
    %7075 = vmatpush.msra.mxu0 %v7074
    %v7076 = vand.u32 %v5577, 4294901760
    %v7077 = vsub.f32 %v5577, %v7076
    %v7078 = vand.u32 %v7077, 4294901760
    %v7079 = vsub.f32 %v7077, %v7078
    %v7080 = vand.u32 %v7079, 4294901760
    %7081 = vmatpush.msra.mxu0 %v7080
    %v7082 = vand.u32 %v5569, 4294901760
    %v7083 = vsub.f32 %v5569, %v7082
    %v7084 = vand.u32 %v7083, 4294901760
    %v7085 = vsub.f32 %v7083, %v7084
    %v7086 = vand.u32 %v7085, 4294901760
    %7087 = vmatpush.msra.mxu0 %v7086
    %v7088 = vand.u32 %v5598, 4294901760
    %7089 = vmatmul.f32.gmra.mxu0 %v7088
    %v7090 = vpop.f32.mrf.mxu0
    %v7091 = vadd.f32 %v7026, %v7090
    %v7092 = vand.u32 %v5601, 4294901760
    %7093 = vmatmul.f32.gmra.mxu0 %v7092
    %v7094 = vpop.f32.mrf.mxu0
    %v7095 = vadd.f32 %v7034, %v7094
    %v7096 = vand.u32 %v5604, 4294901760
    %7097 = vmatmul.f32.gmra.mxu0 %v7096
    %v7098 = vpop.f32.mrf.mxu0
    %v7099 = vadd.f32 %v7042, %v7098
    %v7100 = vand.u32 %v5607, 4294901760
    %7101 = vmatmul.f32.gmra.mxu0 %v7100
    %v7102 = vpop.f32.mrf.mxu0
    %v7103 = vadd.f32 %v7050, %v7102
    %7104 = vdwg.mxu0
    %7105 = vmatpush.msra.mxu0 0.0
    %7106 = vmatpush.msra.mxu0 0.0
    %7107 = vmatpush.msra.mxu0 0.0
    %7108 = vmatpush.msra.mxu0 0.0
    %7109 = vmatpush.msra.mxu0 0.0
    %7110 = vmatpush.msra.mxu0 0.0
    %7111 = vmatpush.msra.mxu0 0.0
    %7112 = vmatpush.msra.mxu0 0.0
    %7113 = vmatpush.msra.mxu0 0.0
    %7114 = vmatpush.msra.mxu0 0.0
    %7115 = vmatpush.msra.mxu0 0.0
    %7116 = vmatpush.msra.mxu0 0.0
    %v7117 = vand.u32 %v5593, 4294901760
    %v7118 = vsub.f32 %v5593, %v7117
    %7119 = vmatpush.msra.mxu0 %v7118
    %v7120 = vand.u32 %v5585, 4294901760
    %v7121 = vsub.f32 %v5585, %v7120
    %7122 = vmatpush.msra.mxu0 %v7121
    %v7123 = vand.u32 %v5577, 4294901760
    %v7124 = vsub.f32 %v5577, %v7123
    %7125 = vmatpush.msra.mxu0 %v7124
    %v7126 = vand.u32 %v5569, 4294901760
    %v7127 = vsub.f32 %v5569, %v7126
    %7128 = vmatpush.msra.mxu0 %v7127
    %v7129 = vand.u32 %v5598, 4294901760
    %v7130 = vsub.f32 %v5598, %v7129
    %7131 = vmatmul.f32.gmra.mxu0 %v7130
    %v7132 = vpop.f32.mrf.mxu0
    %v7133 = vadd.f32 %v7091, %v7132
    %v7134 = vand.u32 %v5601, 4294901760
    %v7135 = vsub.f32 %v5601, %v7134
    %7136 = vmatmul.f32.gmra.mxu0 %v7135
    %v7137 = vpop.f32.mrf.mxu0
    %v7138 = vadd.f32 %v7095, %v7137
    %v7139 = vand.u32 %v5604, 4294901760
    %v7140 = vsub.f32 %v5604, %v7139
    %7141 = vmatmul.f32.gmra.mxu0 %v7140
    %v7142 = vpop.f32.mrf.mxu0
    %v7143 = vadd.f32 %v7099, %v7142
    %v7144 = vand.u32 %v5607, 4294901760
    %v7145 = vsub.f32 %v5607, %v7144
    %7146 = vmatmul.f32.gmra.mxu0 %v7145
    %v7147 = vpop.f32.mrf.mxu0
    %v7148 = vadd.f32 %v7103, %v7147
    %7149 = vdwg.mxu0
    %7150 = vmatpush.msra.mxu0 0.0
    %7151 = vmatpush.msra.mxu0 0.0
    %7152 = vmatpush.msra.mxu0 0.0
    %7153 = vmatpush.msra.mxu0 0.0
    %7154 = vmatpush.msra.mxu0 0.0
    %7155 = vmatpush.msra.mxu0 0.0
    %7156 = vmatpush.msra.mxu0 0.0
    %7157 = vmatpush.msra.mxu0 0.0
    %7158 = vmatpush.msra.mxu0 0.0
    %7159 = vmatpush.msra.mxu0 0.0
    %7160 = vmatpush.msra.mxu0 0.0
    %7161 = vmatpush.msra.mxu0 0.0
    %v7162 = vand.u32 %v5593, 4294901760
    %7163 = vmatpush.msra.mxu0 %v7162
    %v7164 = vand.u32 %v5585, 4294901760
    %7165 = vmatpush.msra.mxu0 %v7164
    %v7166 = vand.u32 %v5577, 4294901760
    %7167 = vmatpush.msra.mxu0 %v7166
    %v7168 = vand.u32 %v5569, 4294901760
    %7169 = vmatpush.msra.mxu0 %v7168
    %v7170 = vand.u32 %v5598, 4294901760
    %v7171 = vsub.f32 %v5598, %v7170
    %v7172 = vand.u32 %v7171, 4294901760
    %7173 = vmatmul.f32.gmra.mxu0 %v7172
    %v7174 = vpop.f32.mrf.mxu0
    %v7175 = vadd.f32 %v7133, %v7174
    %v7176 = vand.u32 %v5601, 4294901760
    %v7177 = vsub.f32 %v5601, %v7176
    %v7178 = vand.u32 %v7177, 4294901760
    %7179 = vmatmul.f32.gmra.mxu0 %v7178
    %v7180 = vpop.f32.mrf.mxu0
    %v7181 = vadd.f32 %v7138, %v7180
    %v7182 = vand.u32 %v5604, 4294901760
    %v7183 = vsub.f32 %v5604, %v7182
    %v7184 = vand.u32 %v7183, 4294901760
    %7185 = vmatmul.f32.gmra.mxu0 %v7184
    %v7186 = vpop.f32.mrf.mxu0
    %v7187 = vadd.f32 %v7143, %v7186
    %v7188 = vand.u32 %v5607, 4294901760
    %v7189 = vsub.f32 %v5607, %v7188
    %v7190 = vand.u32 %v7189, 4294901760
    %7191 = vmatmul.f32.gmra.mxu0 %v7190
    %v7192 = vpop.f32.mrf.mxu0
    %v7193 = vadd.f32 %v7148, %v7192
    %7194 = vdwg.mxu0
    %7195 = vmatpush.msra.mxu0 0.0
    %7196 = vmatpush.msra.mxu0 0.0
    %7197 = vmatpush.msra.mxu0 0.0
    %7198 = vmatpush.msra.mxu0 0.0
    %7199 = vmatpush.msra.mxu0 0.0
    %7200 = vmatpush.msra.mxu0 0.0
    %7201 = vmatpush.msra.mxu0 0.0
    %7202 = vmatpush.msra.mxu0 0.0
    %7203 = vmatpush.msra.mxu0 0.0
    %7204 = vmatpush.msra.mxu0 0.0
    %7205 = vmatpush.msra.mxu0 0.0
    %7206 = vmatpush.msra.mxu0 0.0
    %v7207 = vand.u32 %v5593, 4294901760
    %v7208 = vsub.f32 %v5593, %v7207
    %v7209 = vand.u32 %v7208, 4294901760
    %7210 = vmatpush.msra.mxu0 %v7209
    %v7211 = vand.u32 %v5585, 4294901760
    %v7212 = vsub.f32 %v5585, %v7211
    %v7213 = vand.u32 %v7212, 4294901760
    %7214 = vmatpush.msra.mxu0 %v7213
    %v7215 = vand.u32 %v5577, 4294901760
    %v7216 = vsub.f32 %v5577, %v7215
    %v7217 = vand.u32 %v7216, 4294901760
    %7218 = vmatpush.msra.mxu0 %v7217
    %v7219 = vand.u32 %v5569, 4294901760
    %v7220 = vsub.f32 %v5569, %v7219
    %v7221 = vand.u32 %v7220, 4294901760
    %7222 = vmatpush.msra.mxu0 %v7221
    %v7223 = vand.u32 %v5598, 4294901760
    %7224 = vmatmul.f32.gmra.mxu0 %v7223
    %v7225 = vpop.f32.mrf.mxu0
    %v7226 = vadd.f32 %v7175, %v7225
    %v7227 = vand.u32 %v5601, 4294901760
    %7228 = vmatmul.f32.gmra.mxu0 %v7227
    %v7229 = vpop.f32.mrf.mxu0
    %v7230 = vadd.f32 %v7181, %v7229
    %v7231 = vand.u32 %v5604, 4294901760
    %7232 = vmatmul.f32.gmra.mxu0 %v7231
    %v7233 = vpop.f32.mrf.mxu0
    %v7234 = vadd.f32 %v7187, %v7233
    %v7235 = vand.u32 %v5607, 4294901760
    %7236 = vmatmul.f32.gmra.mxu0 %v7235
    %v7237 = vpop.f32.mrf.mxu0
    %v7238 = vadd.f32 %v7193, %v7237
    %7239 = vdwg.mxu0
    %7240 = vmatpush.msra.mxu0 0.0
    %7241 = vmatpush.msra.mxu0 0.0
    %7242 = vmatpush.msra.mxu0 0.0
    %7243 = vmatpush.msra.mxu0 0.0
    %7244 = vmatpush.msra.mxu0 0.0
    %7245 = vmatpush.msra.mxu0 0.0
    %7246 = vmatpush.msra.mxu0 0.0
    %7247 = vmatpush.msra.mxu0 0.0
    %7248 = vmatpush.msra.mxu0 0.0
    %7249 = vmatpush.msra.mxu0 0.0
    %7250 = vmatpush.msra.mxu0 0.0
    %7251 = vmatpush.msra.mxu0 0.0
    %v7252 = vand.u32 %v5593, 4294901760
    %7253 = vmatpush.msra.mxu0 %v7252
    %v7254 = vand.u32 %v5585, 4294901760
    %7255 = vmatpush.msra.mxu0 %v7254
    %v7256 = vand.u32 %v5577, 4294901760
    %7257 = vmatpush.msra.mxu0 %v7256
    %v7258 = vand.u32 %v5569, 4294901760
    %7259 = vmatpush.msra.mxu0 %v7258
    %v7260 = vand.u32 %v5598, 4294901760
    %7261 = vmatmul.f32.gmra.mxu0 %v7260
    %v7262 = vpop.f32.mrf.mxu0
    %v7263 = vadd.f32 %v7226, %v7262
    %v7264 = vand.u32 %v5601, 4294901760
    %7265 = vmatmul.f32.gmra.mxu0 %v7264
    %v7266 = vpop.f32.mrf.mxu0
    %v7267 = vadd.f32 %v7230, %v7266
    %v7268 = vand.u32 %v5604, 4294901760
    %7269 = vmatmul.f32.gmra.mxu0 %v7268
    %v7270 = vpop.f32.mrf.mxu0
    %v7271 = vadd.f32 %v7234, %v7270
    %v7272 = vand.u32 %v5607, 4294901760
    %7273 = vmatmul.f32.gmra.mxu0 %v7272
    %v7274 = vpop.f32.mrf.mxu0
    %v7275 = vadd.f32 %v7238, %v7274
    %7276 = vdwg.mxu0
    %7277 = vmatpush.msra.mxu0 0.0
    %7278 = vmatpush.msra.mxu0 0.0
    %7279 = vmatpush.msra.mxu0 0.0
    %7280 = vmatpush.msra.mxu0 0.0
    %7281 = vmatpush.msra.mxu0 0.0
    %7282 = vmatpush.msra.mxu0 0.0
    %7283 = vmatpush.msra.mxu0 0.0
    %7284 = vmatpush.msra.mxu0 0.0
    %7285 = vmatpush.msra.mxu0 0.0
    %7286 = vmatpush.msra.mxu0 0.0
    %7287 = vmatpush.msra.mxu0 0.0
    %7288 = vmatpush.msra.mxu0 0.0
    %v7289 = vand.u32 %v5594, 4294901760
    %7290 = vmatpush.msra.mxu0 %v7289
    %v7291 = vand.u32 %v5586, 4294901760
    %7292 = vmatpush.msra.mxu0 %v7291
    %v7293 = vand.u32 %v5578, 4294901760
    %7294 = vmatpush.msra.mxu0 %v7293
    %v7295 = vand.u32 %v5570, 4294901760
    %7296 = vmatpush.msra.mxu0 %v7295
    %v7297 = vand.u32 %v5598, 4294901760
    %v7298 = vsub.f32 %v5598, %v7297
    %v7299 = vand.u32 %v7298, 4294901760
    %v7300 = vsub.f32 %v7298, %v7299
    %v7301 = vand.u32 %v7300, 4294901760
    %7302 = vmatmul.f32.gmra.mxu0 %v7301
    %v7303 = vpop.f32.mrf.mxu0
    %v7304 = vadd.f32 0.0, %v7303
    %v7305 = vand.u32 %v5601, 4294901760
    %v7306 = vsub.f32 %v5601, %v7305
    %v7307 = vand.u32 %v7306, 4294901760
    %v7308 = vsub.f32 %v7306, %v7307
    %v7309 = vand.u32 %v7308, 4294901760
    %7310 = vmatmul.f32.gmra.mxu0 %v7309
    %v7311 = vpop.f32.mrf.mxu0
    %v7312 = vadd.f32 0.0, %v7311
    %v7313 = vand.u32 %v5604, 4294901760
    %v7314 = vsub.f32 %v5604, %v7313
    %v7315 = vand.u32 %v7314, 4294901760
    %v7316 = vsub.f32 %v7314, %v7315
    %v7317 = vand.u32 %v7316, 4294901760
    %7318 = vmatmul.f32.gmra.mxu0 %v7317
    %v7319 = vpop.f32.mrf.mxu0
    %v7320 = vadd.f32 0.0, %v7319
    %v7321 = vand.u32 %v5607, 4294901760
    %v7322 = vsub.f32 %v5607, %v7321
    %v7323 = vand.u32 %v7322, 4294901760
    %v7324 = vsub.f32 %v7322, %v7323
    %v7325 = vand.u32 %v7324, 4294901760
    %7326 = vmatmul.f32.gmra.mxu0 %v7325
    %v7327 = vpop.f32.mrf.mxu0
    %v7328 = vadd.f32 0.0, %v7327
    %7329 = vdwg.mxu0
    %7330 = vmatpush.msra.mxu0 0.0
    %7331 = vmatpush.msra.mxu0 0.0
    %7332 = vmatpush.msra.mxu0 0.0
    %7333 = vmatpush.msra.mxu0 0.0
    %7334 = vmatpush.msra.mxu0 0.0
    %7335 = vmatpush.msra.mxu0 0.0
    %7336 = vmatpush.msra.mxu0 0.0
    %7337 = vmatpush.msra.mxu0 0.0
    %7338 = vmatpush.msra.mxu0 0.0
    %7339 = vmatpush.msra.mxu0 0.0
    %7340 = vmatpush.msra.mxu0 0.0
    %7341 = vmatpush.msra.mxu0 0.0
    %v7342 = vand.u32 %v5594, 4294901760
    %v7343 = vsub.f32 %v5594, %v7342
    %v7344 = vand.u32 %v7343, 4294901760
    %v7345 = vsub.f32 %v7343, %v7344
    %v7346 = vand.u32 %v7345, 4294901760
    %7347 = vmatpush.msra.mxu0 %v7346
    %v7348 = vand.u32 %v5586, 4294901760
    %v7349 = vsub.f32 %v5586, %v7348
    %v7350 = vand.u32 %v7349, 4294901760
    %v7351 = vsub.f32 %v7349, %v7350
    %v7352 = vand.u32 %v7351, 4294901760
    %7353 = vmatpush.msra.mxu0 %v7352
    %v7354 = vand.u32 %v5578, 4294901760
    %v7355 = vsub.f32 %v5578, %v7354
    %v7356 = vand.u32 %v7355, 4294901760
    %v7357 = vsub.f32 %v7355, %v7356
    %v7358 = vand.u32 %v7357, 4294901760
    %7359 = vmatpush.msra.mxu0 %v7358
    %v7360 = vand.u32 %v5570, 4294901760
    %v7361 = vsub.f32 %v5570, %v7360
    %v7362 = vand.u32 %v7361, 4294901760
    %v7363 = vsub.f32 %v7361, %v7362
    %v7364 = vand.u32 %v7363, 4294901760
    %7365 = vmatpush.msra.mxu0 %v7364
    %v7366 = vand.u32 %v5598, 4294901760
    %7367 = vmatmul.f32.gmra.mxu0 %v7366
    %v7368 = vpop.f32.mrf.mxu0
    %v7369 = vadd.f32 %v7304, %v7368
    %v7370 = vand.u32 %v5601, 4294901760
    %7371 = vmatmul.f32.gmra.mxu0 %v7370
    %v7372 = vpop.f32.mrf.mxu0
    %v7373 = vadd.f32 %v7312, %v7372
    %v7374 = vand.u32 %v5604, 4294901760
    %7375 = vmatmul.f32.gmra.mxu0 %v7374
    %v7376 = vpop.f32.mrf.mxu0
    %v7377 = vadd.f32 %v7320, %v7376
    %v7378 = vand.u32 %v5607, 4294901760
    %7379 = vmatmul.f32.gmra.mxu0 %v7378
    %v7380 = vpop.f32.mrf.mxu0
    %v7381 = vadd.f32 %v7328, %v7380
    %7382 = vdwg.mxu0
    %7383 = vmatpush.msra.mxu0 0.0
    %7384 = vmatpush.msra.mxu0 0.0
    %7385 = vmatpush.msra.mxu0 0.0
    %7386 = vmatpush.msra.mxu0 0.0
    %7387 = vmatpush.msra.mxu0 0.0
    %7388 = vmatpush.msra.mxu0 0.0
    %7389 = vmatpush.msra.mxu0 0.0
    %7390 = vmatpush.msra.mxu0 0.0
    %7391 = vmatpush.msra.mxu0 0.0
    %7392 = vmatpush.msra.mxu0 0.0
    %7393 = vmatpush.msra.mxu0 0.0
    %7394 = vmatpush.msra.mxu0 0.0
    %v7395 = vand.u32 %v5594, 4294901760
    %v7396 = vsub.f32 %v5594, %v7395
    %7397 = vmatpush.msra.mxu0 %v7396
    %v7398 = vand.u32 %v5586, 4294901760
    %v7399 = vsub.f32 %v5586, %v7398
    %7400 = vmatpush.msra.mxu0 %v7399
    %v7401 = vand.u32 %v5578, 4294901760
    %v7402 = vsub.f32 %v5578, %v7401
    %7403 = vmatpush.msra.mxu0 %v7402
    %v7404 = vand.u32 %v5570, 4294901760
    %v7405 = vsub.f32 %v5570, %v7404
    %7406 = vmatpush.msra.mxu0 %v7405
    %v7407 = vand.u32 %v5598, 4294901760
    %v7408 = vsub.f32 %v5598, %v7407
    %7409 = vmatmul.f32.gmra.mxu0 %v7408
    %v7410 = vpop.f32.mrf.mxu0
    %v7411 = vadd.f32 %v7369, %v7410
    %v7412 = vand.u32 %v5601, 4294901760
    %v7413 = vsub.f32 %v5601, %v7412
    %7414 = vmatmul.f32.gmra.mxu0 %v7413
    %v7415 = vpop.f32.mrf.mxu0
    %v7416 = vadd.f32 %v7373, %v7415
    %v7417 = vand.u32 %v5604, 4294901760
    %v7418 = vsub.f32 %v5604, %v7417
    %7419 = vmatmul.f32.gmra.mxu0 %v7418
    %v7420 = vpop.f32.mrf.mxu0
    %v7421 = vadd.f32 %v7377, %v7420
    %v7422 = vand.u32 %v5607, 4294901760
    %v7423 = vsub.f32 %v5607, %v7422
    %7424 = vmatmul.f32.gmra.mxu0 %v7423
    %v7425 = vpop.f32.mrf.mxu0
    %v7426 = vadd.f32 %v7381, %v7425
    %7427 = vdwg.mxu0
    %7428 = vmatpush.msra.mxu0 0.0
    %7429 = vmatpush.msra.mxu0 0.0
    %7430 = vmatpush.msra.mxu0 0.0
    %7431 = vmatpush.msra.mxu0 0.0
    %7432 = vmatpush.msra.mxu0 0.0
    %7433 = vmatpush.msra.mxu0 0.0
    %7434 = vmatpush.msra.mxu0 0.0
    %7435 = vmatpush.msra.mxu0 0.0
    %7436 = vmatpush.msra.mxu0 0.0
    %7437 = vmatpush.msra.mxu0 0.0
    %7438 = vmatpush.msra.mxu0 0.0
    %7439 = vmatpush.msra.mxu0 0.0
    %v7440 = vand.u32 %v5594, 4294901760
    %7441 = vmatpush.msra.mxu0 %v7440
    %v7442 = vand.u32 %v5586, 4294901760
    %7443 = vmatpush.msra.mxu0 %v7442
    %v7444 = vand.u32 %v5578, 4294901760
    %7445 = vmatpush.msra.mxu0 %v7444
    %v7446 = vand.u32 %v5570, 4294901760
    %7447 = vmatpush.msra.mxu0 %v7446
    %v7448 = vand.u32 %v5598, 4294901760
    %v7449 = vsub.f32 %v5598, %v7448
    %v7450 = vand.u32 %v7449, 4294901760
    %7451 = vmatmul.f32.gmra.mxu0 %v7450
    %v7452 = vpop.f32.mrf.mxu0
    %v7453 = vadd.f32 %v7411, %v7452
    %v7454 = vand.u32 %v5601, 4294901760
    %v7455 = vsub.f32 %v5601, %v7454
    %v7456 = vand.u32 %v7455, 4294901760
    %7457 = vmatmul.f32.gmra.mxu0 %v7456
    %v7458 = vpop.f32.mrf.mxu0
    %v7459 = vadd.f32 %v7416, %v7458
    %v7460 = vand.u32 %v5604, 4294901760
    %v7461 = vsub.f32 %v5604, %v7460
    %v7462 = vand.u32 %v7461, 4294901760
    %7463 = vmatmul.f32.gmra.mxu0 %v7462
    %v7464 = vpop.f32.mrf.mxu0
    %v7465 = vadd.f32 %v7421, %v7464
    %v7466 = vand.u32 %v5607, 4294901760
    %v7467 = vsub.f32 %v5607, %v7466
    %v7468 = vand.u32 %v7467, 4294901760
    %7469 = vmatmul.f32.gmra.mxu0 %v7468
    %v7470 = vpop.f32.mrf.mxu0
    %v7471 = vadd.f32 %v7426, %v7470
    %7472 = vdwg.mxu0
    %7473 = vmatpush.msra.mxu0 0.0
    %7474 = vmatpush.msra.mxu0 0.0
    %7475 = vmatpush.msra.mxu0 0.0
    %7476 = vmatpush.msra.mxu0 0.0
    %7477 = vmatpush.msra.mxu0 0.0
    %7478 = vmatpush.msra.mxu0 0.0
    %7479 = vmatpush.msra.mxu0 0.0
    %7480 = vmatpush.msra.mxu0 0.0
    %7481 = vmatpush.msra.mxu0 0.0
    %7482 = vmatpush.msra.mxu0 0.0
    %7483 = vmatpush.msra.mxu0 0.0
    %7484 = vmatpush.msra.mxu0 0.0
    %v7485 = vand.u32 %v5594, 4294901760
    %v7486 = vsub.f32 %v5594, %v7485
    %v7487 = vand.u32 %v7486, 4294901760
    %7488 = vmatpush.msra.mxu0 %v7487
    %v7489 = vand.u32 %v5586, 4294901760
    %v7490 = vsub.f32 %v5586, %v7489
    %v7491 = vand.u32 %v7490, 4294901760
    %7492 = vmatpush.msra.mxu0 %v7491
    %v7493 = vand.u32 %v5578, 4294901760
    %v7494 = vsub.f32 %v5578, %v7493
    %v7495 = vand.u32 %v7494, 4294901760
    %7496 = vmatpush.msra.mxu0 %v7495
    %v7497 = vand.u32 %v5570, 4294901760
    %v7498 = vsub.f32 %v5570, %v7497
    %v7499 = vand.u32 %v7498, 4294901760
    %7500 = vmatpush.msra.mxu0 %v7499
    %v7501 = vand.u32 %v5598, 4294901760
    %7502 = vmatmul.f32.gmra.mxu0 %v7501
    %v7503 = vpop.f32.mrf.mxu0
    %v7504 = vadd.f32 %v7453, %v7503
    %v7505 = vand.u32 %v5601, 4294901760
    %7506 = vmatmul.f32.gmra.mxu0 %v7505
    %v7507 = vpop.f32.mrf.mxu0
    %v7508 = vadd.f32 %v7459, %v7507
    %v7509 = vand.u32 %v5604, 4294901760
    %7510 = vmatmul.f32.gmra.mxu0 %v7509
    %v7511 = vpop.f32.mrf.mxu0
    %v7512 = vadd.f32 %v7465, %v7511
    %v7513 = vand.u32 %v5607, 4294901760
    %7514 = vmatmul.f32.gmra.mxu0 %v7513
    %v7515 = vpop.f32.mrf.mxu0
    %v7516 = vadd.f32 %v7471, %v7515
    %7517 = vdwg.mxu0
    %7518 = vmatpush.msra.mxu0 0.0
    %7519 = vmatpush.msra.mxu0 0.0
    %7520 = vmatpush.msra.mxu0 0.0
    %7521 = vmatpush.msra.mxu0 0.0
    %7522 = vmatpush.msra.mxu0 0.0
    %7523 = vmatpush.msra.mxu0 0.0
    %7524 = vmatpush.msra.mxu0 0.0
    %7525 = vmatpush.msra.mxu0 0.0
    %7526 = vmatpush.msra.mxu0 0.0
    %7527 = vmatpush.msra.mxu0 0.0
    %7528 = vmatpush.msra.mxu0 0.0
    %7529 = vmatpush.msra.mxu0 0.0
    %v7530 = vand.u32 %v5594, 4294901760
    %7531 = vmatpush.msra.mxu0 %v7530
    %v7532 = vand.u32 %v5586, 4294901760
    %7533 = vmatpush.msra.mxu0 %v7532
    %v7534 = vand.u32 %v5578, 4294901760
    %7535 = vmatpush.msra.mxu0 %v7534
    %v7536 = vand.u32 %v5570, 4294901760
    %7537 = vmatpush.msra.mxu0 %v7536
    %v7538 = vand.u32 %v5598, 4294901760
    %7539 = vmatmul.f32.gmra.mxu0 %v7538
    %v7540 = vpop.f32.mrf.mxu0
    %v7541 = vadd.f32 %v7504, %v7540
    %v7542 = vand.u32 %v5601, 4294901760
    %7543 = vmatmul.f32.gmra.mxu0 %v7542
    %v7544 = vpop.f32.mrf.mxu0
    %v7545 = vadd.f32 %v7508, %v7544
    %v7546 = vand.u32 %v5604, 4294901760
    %7547 = vmatmul.f32.gmra.mxu0 %v7546
    %v7548 = vpop.f32.mrf.mxu0
    %v7549 = vadd.f32 %v7512, %v7548
    %v7550 = vand.u32 %v5607, 4294901760
    %7551 = vmatmul.f32.gmra.mxu0 %v7550
    %v7552 = vpop.f32.mrf.mxu0
    %v7553 = vadd.f32 %v7516, %v7552
    %7554 = vdwg.mxu0
    %7555 = vmatpush.msra.mxu0 0.0
    %7556 = vmatpush.msra.mxu0 0.0
    %7557 = vmatpush.msra.mxu0 0.0
    %7558 = vmatpush.msra.mxu0 0.0
    %7559 = vmatpush.msra.mxu0 0.0
    %7560 = vmatpush.msra.mxu0 0.0
    %7561 = vmatpush.msra.mxu0 0.0
    %7562 = vmatpush.msra.mxu0 0.0
    %7563 = vmatpush.msra.mxu0 0.0
    %7564 = vmatpush.msra.mxu0 0.0
    %7565 = vmatpush.msra.mxu0 0.0
    %7566 = vmatpush.msra.mxu0 0.0
    %v7567 = vand.u32 %v5595, 4294901760
    %7568 = vmatpush.msra.mxu0 %v7567
    %v7569 = vand.u32 %v5587, 4294901760
    %7570 = vmatpush.msra.mxu0 %v7569
    %v7571 = vand.u32 %v5579, 4294901760
    %7572 = vmatpush.msra.mxu0 %v7571
    %v7573 = vand.u32 %v5571, 4294901760
    %7574 = vmatpush.msra.mxu0 %v7573
    %v7575 = vand.u32 %v5598, 4294901760
    %v7576 = vsub.f32 %v5598, %v7575
    %v7577 = vand.u32 %v7576, 4294901760
    %v7578 = vsub.f32 %v7576, %v7577
    %v7579 = vand.u32 %v7578, 4294901760
    %7580 = vmatmul.f32.gmra.mxu0 %v7579
    %v7581 = vpop.f32.mrf.mxu0
    %v7582 = vadd.f32 0.0, %v7581
    %v7583 = vand.u32 %v5601, 4294901760
    %v7584 = vsub.f32 %v5601, %v7583
    %v7585 = vand.u32 %v7584, 4294901760
    %v7586 = vsub.f32 %v7584, %v7585
    %v7587 = vand.u32 %v7586, 4294901760
    %7588 = vmatmul.f32.gmra.mxu0 %v7587
    %v7589 = vpop.f32.mrf.mxu0
    %v7590 = vadd.f32 0.0, %v7589
    %v7591 = vand.u32 %v5604, 4294901760
    %v7592 = vsub.f32 %v5604, %v7591
    %v7593 = vand.u32 %v7592, 4294901760
    %v7594 = vsub.f32 %v7592, %v7593
    %v7595 = vand.u32 %v7594, 4294901760
    %7596 = vmatmul.f32.gmra.mxu0 %v7595
    %v7597 = vpop.f32.mrf.mxu0
    %v7598 = vadd.f32 0.0, %v7597
    %v7599 = vand.u32 %v5607, 4294901760
    %v7600 = vsub.f32 %v5607, %v7599
    %v7601 = vand.u32 %v7600, 4294901760
    %v7602 = vsub.f32 %v7600, %v7601
    %v7603 = vand.u32 %v7602, 4294901760
    %7604 = vmatmul.f32.gmra.mxu0 %v7603
    %v7605 = vpop.f32.mrf.mxu0
    %v7606 = vadd.f32 0.0, %v7605
    %7607 = vdwg.mxu0
    %7608 = vmatpush.msra.mxu0 0.0
    %7609 = vmatpush.msra.mxu0 0.0
    %7610 = vmatpush.msra.mxu0 0.0
    %7611 = vmatpush.msra.mxu0 0.0
    %7612 = vmatpush.msra.mxu0 0.0
    %7613 = vmatpush.msra.mxu0 0.0
    %7614 = vmatpush.msra.mxu0 0.0
    %7615 = vmatpush.msra.mxu0 0.0
    %7616 = vmatpush.msra.mxu0 0.0
    %7617 = vmatpush.msra.mxu0 0.0
    %7618 = vmatpush.msra.mxu0 0.0
    %7619 = vmatpush.msra.mxu0 0.0
    %v7620 = vand.u32 %v5595, 4294901760
    %v7621 = vsub.f32 %v5595, %v7620
    %v7622 = vand.u32 %v7621, 4294901760
    %v7623 = vsub.f32 %v7621, %v7622
    %v7624 = vand.u32 %v7623, 4294901760
    %7625 = vmatpush.msra.mxu0 %v7624
    %v7626 = vand.u32 %v5587, 4294901760
    %v7627 = vsub.f32 %v5587, %v7626
    %v7628 = vand.u32 %v7627, 4294901760
    %v7629 = vsub.f32 %v7627, %v7628
    %v7630 = vand.u32 %v7629, 4294901760
    %7631 = vmatpush.msra.mxu0 %v7630
    %v7632 = vand.u32 %v5579, 4294901760
    %v7633 = vsub.f32 %v5579, %v7632
    %v7634 = vand.u32 %v7633, 4294901760
    %v7635 = vsub.f32 %v7633, %v7634
    %v7636 = vand.u32 %v7635, 4294901760
    %7637 = vmatpush.msra.mxu0 %v7636
    %v7638 = vand.u32 %v5571, 4294901760
    %v7639 = vsub.f32 %v5571, %v7638
    %v7640 = vand.u32 %v7639, 4294901760
    %v7641 = vsub.f32 %v7639, %v7640
    %v7642 = vand.u32 %v7641, 4294901760
    %7643 = vmatpush.msra.mxu0 %v7642
    %v7644 = vand.u32 %v5598, 4294901760
    %7645 = vmatmul.f32.gmra.mxu0 %v7644
    %v7646 = vpop.f32.mrf.mxu0
    %v7647 = vadd.f32 %v7582, %v7646
    %v7648 = vand.u32 %v5601, 4294901760
    %7649 = vmatmul.f32.gmra.mxu0 %v7648
    %v7650 = vpop.f32.mrf.mxu0
    %v7651 = vadd.f32 %v7590, %v7650
    %v7652 = vand.u32 %v5604, 4294901760
    %7653 = vmatmul.f32.gmra.mxu0 %v7652
    %v7654 = vpop.f32.mrf.mxu0
    %v7655 = vadd.f32 %v7598, %v7654
    %v7656 = vand.u32 %v5607, 4294901760
    %7657 = vmatmul.f32.gmra.mxu0 %v7656
    %v7658 = vpop.f32.mrf.mxu0
    %v7659 = vadd.f32 %v7606, %v7658
    %7660 = vdwg.mxu0
    %7661 = vmatpush.msra.mxu0 0.0
    %7662 = vmatpush.msra.mxu0 0.0
    %7663 = vmatpush.msra.mxu0 0.0
    %7664 = vmatpush.msra.mxu0 0.0
    %7665 = vmatpush.msra.mxu0 0.0
    %7666 = vmatpush.msra.mxu0 0.0
    %7667 = vmatpush.msra.mxu0 0.0
    %7668 = vmatpush.msra.mxu0 0.0
    %7669 = vmatpush.msra.mxu0 0.0
    %7670 = vmatpush.msra.mxu0 0.0
    %7671 = vmatpush.msra.mxu0 0.0
    %7672 = vmatpush.msra.mxu0 0.0
    %v7673 = vand.u32 %v5595, 4294901760
    %v7674 = vsub.f32 %v5595, %v7673
    %7675 = vmatpush.msra.mxu0 %v7674
    %v7676 = vand.u32 %v5587, 4294901760
    %v7677 = vsub.f32 %v5587, %v7676
    %7678 = vmatpush.msra.mxu0 %v7677
    %v7679 = vand.u32 %v5579, 4294901760
    %v7680 = vsub.f32 %v5579, %v7679
    %7681 = vmatpush.msra.mxu0 %v7680
    %v7682 = vand.u32 %v5571, 4294901760
    %v7683 = vsub.f32 %v5571, %v7682
    %7684 = vmatpush.msra.mxu0 %v7683
    %v7685 = vand.u32 %v5598, 4294901760
    %v7686 = vsub.f32 %v5598, %v7685
    %7687 = vmatmul.f32.gmra.mxu0 %v7686
    %v7688 = vpop.f32.mrf.mxu0
    %v7689 = vadd.f32 %v7647, %v7688
    %v7690 = vand.u32 %v5601, 4294901760
    %v7691 = vsub.f32 %v5601, %v7690
    %7692 = vmatmul.f32.gmra.mxu0 %v7691
    %v7693 = vpop.f32.mrf.mxu0
    %v7694 = vadd.f32 %v7651, %v7693
    %v7695 = vand.u32 %v5604, 4294901760
    %v7696 = vsub.f32 %v5604, %v7695
    %7697 = vmatmul.f32.gmra.mxu0 %v7696
    %v7698 = vpop.f32.mrf.mxu0
    %v7699 = vadd.f32 %v7655, %v7698
    %v7700 = vand.u32 %v5607, 4294901760
    %v7701 = vsub.f32 %v5607, %v7700
    %7702 = vmatmul.f32.gmra.mxu0 %v7701
    %v7703 = vpop.f32.mrf.mxu0
    %v7704 = vadd.f32 %v7659, %v7703
    %7705 = vdwg.mxu0
    %7706 = vmatpush.msra.mxu0 0.0
    %7707 = vmatpush.msra.mxu0 0.0
    %7708 = vmatpush.msra.mxu0 0.0
    %7709 = vmatpush.msra.mxu0 0.0
    %7710 = vmatpush.msra.mxu0 0.0
    %7711 = vmatpush.msra.mxu0 0.0
    %7712 = vmatpush.msra.mxu0 0.0
    %7713 = vmatpush.msra.mxu0 0.0
    %7714 = vmatpush.msra.mxu0 0.0
    %7715 = vmatpush.msra.mxu0 0.0
    %7716 = vmatpush.msra.mxu0 0.0
    %7717 = vmatpush.msra.mxu0 0.0
    %v7718 = vand.u32 %v5595, 4294901760
    %7719 = vmatpush.msra.mxu0 %v7718
    %v7720 = vand.u32 %v5587, 4294901760
    %7721 = vmatpush.msra.mxu0 %v7720
    %v7722 = vand.u32 %v5579, 4294901760
    %7723 = vmatpush.msra.mxu0 %v7722
    %v7724 = vand.u32 %v5571, 4294901760
    %7725 = vmatpush.msra.mxu0 %v7724
    %v7726 = vand.u32 %v5598, 4294901760
    %v7727 = vsub.f32 %v5598, %v7726
    %v7728 = vand.u32 %v7727, 4294901760
    %7729 = vmatmul.f32.gmra.mxu0 %v7728
    %v7730 = vpop.f32.mrf.mxu0
    %v7731 = vadd.f32 %v7689, %v7730
    %v7732 = vand.u32 %v5601, 4294901760
    %v7733 = vsub.f32 %v5601, %v7732
    %v7734 = vand.u32 %v7733, 4294901760
    %7735 = vmatmul.f32.gmra.mxu0 %v7734
    %v7736 = vpop.f32.mrf.mxu0
    %v7737 = vadd.f32 %v7694, %v7736
    %v7738 = vand.u32 %v5604, 4294901760
    %v7739 = vsub.f32 %v5604, %v7738
    %v7740 = vand.u32 %v7739, 4294901760
    %7741 = vmatmul.f32.gmra.mxu0 %v7740
    %v7742 = vpop.f32.mrf.mxu0
    %v7743 = vadd.f32 %v7699, %v7742
    %v7744 = vand.u32 %v5607, 4294901760
    %v7745 = vsub.f32 %v5607, %v7744
    %v7746 = vand.u32 %v7745, 4294901760
    %7747 = vmatmul.f32.gmra.mxu0 %v7746
    %v7748 = vpop.f32.mrf.mxu0
    %v7749 = vadd.f32 %v7704, %v7748
    %7750 = vdwg.mxu0
    %7751 = vmatpush.msra.mxu0 0.0
    %7752 = vmatpush.msra.mxu0 0.0
    %7753 = vmatpush.msra.mxu0 0.0
    %7754 = vmatpush.msra.mxu0 0.0
    %7755 = vmatpush.msra.mxu0 0.0
    %7756 = vmatpush.msra.mxu0 0.0
    %7757 = vmatpush.msra.mxu0 0.0
    %7758 = vmatpush.msra.mxu0 0.0
    %7759 = vmatpush.msra.mxu0 0.0
    %7760 = vmatpush.msra.mxu0 0.0
    %7761 = vmatpush.msra.mxu0 0.0
    %7762 = vmatpush.msra.mxu0 0.0
    %v7763 = vand.u32 %v5595, 4294901760
    %v7764 = vsub.f32 %v5595, %v7763
    %v7765 = vand.u32 %v7764, 4294901760
    %7766 = vmatpush.msra.mxu0 %v7765
    %v7767 = vand.u32 %v5587, 4294901760
    %v7768 = vsub.f32 %v5587, %v7767
    %v7769 = vand.u32 %v7768, 4294901760
    %7770 = vmatpush.msra.mxu0 %v7769
    %v7771 = vand.u32 %v5579, 4294901760
    %v7772 = vsub.f32 %v5579, %v7771
    %v7773 = vand.u32 %v7772, 4294901760
    %7774 = vmatpush.msra.mxu0 %v7773
    %v7775 = vand.u32 %v5571, 4294901760
    %v7776 = vsub.f32 %v5571, %v7775
    %v7777 = vand.u32 %v7776, 4294901760
    %7778 = vmatpush.msra.mxu0 %v7777
    %v7779 = vand.u32 %v5598, 4294901760
    %7780 = vmatmul.f32.gmra.mxu0 %v7779
    %v7781 = vpop.f32.mrf.mxu0
    %v7782 = vadd.f32 %v7731, %v7781
    %v7783 = vand.u32 %v5601, 4294901760
    %7784 = vmatmul.f32.gmra.mxu0 %v7783
    %v7785 = vpop.f32.mrf.mxu0
    %v7786 = vadd.f32 %v7737, %v7785
    %v7787 = vand.u32 %v5604, 4294901760
    %7788 = vmatmul.f32.gmra.mxu0 %v7787
    %v7789 = vpop.f32.mrf.mxu0
    %v7790 = vadd.f32 %v7743, %v7789
    %v7791 = vand.u32 %v5607, 4294901760
    %7792 = vmatmul.f32.gmra.mxu0 %v7791
    %v7793 = vpop.f32.mrf.mxu0
    %v7794 = vadd.f32 %v7749, %v7793
    %7795 = vdwg.mxu0
    %7796 = vmatpush.msra.mxu0 0.0
    %7797 = vmatpush.msra.mxu0 0.0
    %7798 = vmatpush.msra.mxu0 0.0
    %7799 = vmatpush.msra.mxu0 0.0
    %7800 = vmatpush.msra.mxu0 0.0
    %7801 = vmatpush.msra.mxu0 0.0
    %7802 = vmatpush.msra.mxu0 0.0
    %7803 = vmatpush.msra.mxu0 0.0
    %7804 = vmatpush.msra.mxu0 0.0
    %7805 = vmatpush.msra.mxu0 0.0
    %7806 = vmatpush.msra.mxu0 0.0
    %7807 = vmatpush.msra.mxu0 0.0
    %v7808 = vand.u32 %v5595, 4294901760
    %7809 = vmatpush.msra.mxu0 %v7808
    %v7810 = vand.u32 %v5587, 4294901760
    %7811 = vmatpush.msra.mxu0 %v7810
    %v7812 = vand.u32 %v5579, 4294901760
    %7813 = vmatpush.msra.mxu0 %v7812
    %v7814 = vand.u32 %v5571, 4294901760
    %7815 = vmatpush.msra.mxu0 %v7814
    %v7816 = vand.u32 %v5598, 4294901760
    %7817 = vmatmul.f32.gmra.mxu0 %v7816
    %v7818 = vpop.f32.mrf.mxu0
    %v7819 = vadd.f32 %v7782, %v7818
    %v7820 = vand.u32 %v5601, 4294901760
    %7821 = vmatmul.f32.gmra.mxu0 %v7820
    %v7822 = vpop.f32.mrf.mxu0
    %v7823 = vadd.f32 %v7786, %v7822
    %v7824 = vand.u32 %v5604, 4294901760
    %7825 = vmatmul.f32.gmra.mxu0 %v7824
    %v7826 = vpop.f32.mrf.mxu0
    %v7827 = vadd.f32 %v7790, %v7826
    %v7828 = vand.u32 %v5607, 4294901760
    %7829 = vmatmul.f32.gmra.mxu0 %v7828
    %v7830 = vpop.f32.mrf.mxu0
    %v7831 = vadd.f32 %v7794, %v7830
    %7832 = vdwg.mxu0
    %v7833 = vmax.f32 %v5873, 0.0
    %v7834 = vmax.f32 %v6151, 0.0
    %v7835 = vmax.f32 %v6429, 0.0
    %v7836 = vmax.f32 %v6707, 0.0
    %v7837 = vmax.f32 %v6985, 0.0
    %v7838 = vmax.f32 %v7263, 0.0
    %v7839 = vmax.f32 %v7541, 0.0
    %v7840 = vmax.f32 %v7819, 0.0
    %v7841 = vmax.f32 %v5877, 0.0
    %v7842 = vmax.f32 %v6155, 0.0
    %v7843 = vmax.f32 %v6433, 0.0
    %v7844 = vmax.f32 %v6711, 0.0
    %v7845 = vmax.f32 %v6989, 0.0
    %v7846 = vmax.f32 %v7267, 0.0
    %v7847 = vmax.f32 %v7545, 0.0
    %v7848 = vmax.f32 %v7823, 0.0
    %v7849 = vmax.f32 %v5881, 0.0
    %v7850 = vmax.f32 %v6159, 0.0
    %v7851 = vmax.f32 %v6437, 0.0
    %v7852 = vmax.f32 %v6715, 0.0
    %v7853 = vmax.f32 %v6993, 0.0
    %v7854 = vmax.f32 %v7271, 0.0
    %v7855 = vmax.f32 %v7549, 0.0
    %v7856 = vmax.f32 %v7827, 0.0
    %v7857 = vmax.f32 %v5885, 0.0
    %v7858 = vmax.f32 %v6163, 0.0
    %v7859 = vmax.f32 %v6441, 0.0
    %v7860 = vmax.f32 %v6719, 0.0
    %v7861 = vmax.f32 %v6997, 0.0
    %v7862 = vmax.f32 %v7275, 0.0
    %v7863 = vmax.f32 %v7553, 0.0
    %v7864 = vmax.f32 %v7831, 0.0
    %7866 = vset.pattern.permute.xlu0 32
    %7867 = vperm.xlu0 %7866, %v53
    %v7868 = vpop.permute.xlu0 %7867
    %7871 = vset.pattern.permute.xlu0 32
    %7872 = vperm.xlu0 %7871, %v54
    %v7873 = vpop.permute.xlu0 %7872
    %7876 = vset.pattern.permute.xlu0 32
    %7877 = vperm.xlu0 %7876, %v55
    %v7878 = vpop.permute.xlu0 %7877
    %7881 = vset.pattern.permute.xlu0 32
    %7882 = vperm.xlu0 %7881, %v56
    %v7883 = vpop.permute.xlu0 %7882
    %v7885 = vsel %vm5596, %v53, 0
    %v7887 = vsel %vm5596, %v54, 0
    %v7889 = vsel %vm5596, %v55, 0
    %v7891 = vsel %vm5596, %v56, 0
    %7893 = vmatpush.msra.mxu0 0.0
    %7894 = vmatpush.msra.mxu0 0.0
    %7895 = vmatpush.msra.mxu0 0.0
    %7896 = vmatpush.msra.mxu0 0.0
    %7897 = vmatpush.msra.mxu0 0.0
    %7898 = vmatpush.msra.mxu0 0.0
    %7899 = vmatpush.msra.mxu0 0.0
    %7900 = vmatpush.msra.mxu0 0.0
    %7901 = vmatpush.msra.mxu0 0.0
    %7902 = vmatpush.msra.mxu0 0.0
    %7903 = vmatpush.msra.mxu0 0.0
    %7904 = vmatpush.msra.mxu0 0.0
    %v7905 = vand.u32 %v7857, 4294901760
    %7906 = vmatpush.msra.mxu0 %v7905
    %v7907 = vand.u32 %v7849, 4294901760
    %7908 = vmatpush.msra.mxu0 %v7907
    %v7909 = vand.u32 %v7841, 4294901760
    %7910 = vmatpush.msra.mxu0 %v7909
    %v7911 = vand.u32 %v7833, 4294901760
    %7912 = vmatpush.msra.mxu0 %v7911
    %v7913 = vand.u32 %v7885, 4294901760
    %v7914 = vsub.f32 %v7885, %v7913
    %v7915 = vand.u32 %v7914, 4294901760
    %v7916 = vsub.f32 %v7914, %v7915
    %v7917 = vand.u32 %v7916, 4294901760
    %7918 = vmatmul.f32.gmra.mxu0 %v7917
    %v7919 = vpop.f32.mrf.mxu0
    %v7920 = vadd.f32 %v7868, %v7919
    %v7921 = vand.u32 %v7887, 4294901760
    %v7922 = vsub.f32 %v7887, %v7921
    %v7923 = vand.u32 %v7922, 4294901760
    %v7924 = vsub.f32 %v7922, %v7923
    %v7925 = vand.u32 %v7924, 4294901760
    %7926 = vmatmul.f32.gmra.mxu0 %v7925
    %v7927 = vpop.f32.mrf.mxu0
    %v7928 = vadd.f32 %v7873, %v7927
    %v7929 = vand.u32 %v7889, 4294901760
    %v7930 = vsub.f32 %v7889, %v7929
    %v7931 = vand.u32 %v7930, 4294901760
    %v7932 = vsub.f32 %v7930, %v7931
    %v7933 = vand.u32 %v7932, 4294901760
    %7934 = vmatmul.f32.gmra.mxu0 %v7933
    %v7935 = vpop.f32.mrf.mxu0
    %v7936 = vadd.f32 %v7878, %v7935
    %v7937 = vand.u32 %v7891, 4294901760
    %v7938 = vsub.f32 %v7891, %v7937
    %v7939 = vand.u32 %v7938, 4294901760
    %v7940 = vsub.f32 %v7938, %v7939
    %v7941 = vand.u32 %v7940, 4294901760
    %7942 = vmatmul.f32.gmra.mxu0 %v7941
    %v7943 = vpop.f32.mrf.mxu0
    %v7944 = vadd.f32 %v7883, %v7943
    %7945 = vdwg.mxu0
    %7946 = vmatpush.msra.mxu0 0.0
    %7947 = vmatpush.msra.mxu0 0.0
    %7948 = vmatpush.msra.mxu0 0.0
    %7949 = vmatpush.msra.mxu0 0.0
    %7950 = vmatpush.msra.mxu0 0.0
    %7951 = vmatpush.msra.mxu0 0.0
    %7952 = vmatpush.msra.mxu0 0.0
    %7953 = vmatpush.msra.mxu0 0.0
    %7954 = vmatpush.msra.mxu0 0.0
    %7955 = vmatpush.msra.mxu0 0.0
    %7956 = vmatpush.msra.mxu0 0.0
    %7957 = vmatpush.msra.mxu0 0.0
    %v7958 = vand.u32 %v7857, 4294901760
    %v7959 = vsub.f32 %v7857, %v7958
    %v7960 = vand.u32 %v7959, 4294901760
    %v7961 = vsub.f32 %v7959, %v7960
    %v7962 = vand.u32 %v7961, 4294901760
    %7963 = vmatpush.msra.mxu0 %v7962
    %v7964 = vand.u32 %v7849, 4294901760
    %v7965 = vsub.f32 %v7849, %v7964
    %v7966 = vand.u32 %v7965, 4294901760
    %v7967 = vsub.f32 %v7965, %v7966
    %v7968 = vand.u32 %v7967, 4294901760
    %7969 = vmatpush.msra.mxu0 %v7968
    %v7970 = vand.u32 %v7841, 4294901760
    %v7971 = vsub.f32 %v7841, %v7970
    %v7972 = vand.u32 %v7971, 4294901760
    %v7973 = vsub.f32 %v7971, %v7972
    %v7974 = vand.u32 %v7973, 4294901760
    %7975 = vmatpush.msra.mxu0 %v7974
    %v7976 = vand.u32 %v7833, 4294901760
    %v7977 = vsub.f32 %v7833, %v7976
    %v7978 = vand.u32 %v7977, 4294901760
    %v7979 = vsub.f32 %v7977, %v7978
    %v7980 = vand.u32 %v7979, 4294901760
    %7981 = vmatpush.msra.mxu0 %v7980
    %v7982 = vand.u32 %v7885, 4294901760
    %7983 = vmatmul.f32.gmra.mxu0 %v7982
    %v7984 = vpop.f32.mrf.mxu0
    %v7985 = vadd.f32 %v7920, %v7984
    %v7986 = vand.u32 %v7887, 4294901760
    %7987 = vmatmul.f32.gmra.mxu0 %v7986
    %v7988 = vpop.f32.mrf.mxu0
    %v7989 = vadd.f32 %v7928, %v7988
    %v7990 = vand.u32 %v7889, 4294901760
    %7991 = vmatmul.f32.gmra.mxu0 %v7990
    %v7992 = vpop.f32.mrf.mxu0
    %v7993 = vadd.f32 %v7936, %v7992
    %v7994 = vand.u32 %v7891, 4294901760
    %7995 = vmatmul.f32.gmra.mxu0 %v7994
    %v7996 = vpop.f32.mrf.mxu0
    %v7997 = vadd.f32 %v7944, %v7996
    %7998 = vdwg.mxu0
    %7999 = vmatpush.msra.mxu0 0.0
    %8000 = vmatpush.msra.mxu0 0.0
    %8001 = vmatpush.msra.mxu0 0.0
    %8002 = vmatpush.msra.mxu0 0.0
    %8003 = vmatpush.msra.mxu0 0.0
    %8004 = vmatpush.msra.mxu0 0.0
    %8005 = vmatpush.msra.mxu0 0.0
    %8006 = vmatpush.msra.mxu0 0.0
    %8007 = vmatpush.msra.mxu0 0.0
    %8008 = vmatpush.msra.mxu0 0.0
    %8009 = vmatpush.msra.mxu0 0.0
    %8010 = vmatpush.msra.mxu0 0.0
    %v8011 = vand.u32 %v7857, 4294901760
    %v8012 = vsub.f32 %v7857, %v8011
    %8013 = vmatpush.msra.mxu0 %v8012
    %v8014 = vand.u32 %v7849, 4294901760
    %v8015 = vsub.f32 %v7849, %v8014
    %8016 = vmatpush.msra.mxu0 %v8015
    %v8017 = vand.u32 %v7841, 4294901760
    %v8018 = vsub.f32 %v7841, %v8017
    %8019 = vmatpush.msra.mxu0 %v8018
    %v8020 = vand.u32 %v7833, 4294901760
    %v8021 = vsub.f32 %v7833, %v8020
    %8022 = vmatpush.msra.mxu0 %v8021
    %v8023 = vand.u32 %v7885, 4294901760
    %v8024 = vsub.f32 %v7885, %v8023
    %8025 = vmatmul.f32.gmra.mxu0 %v8024
    %v8026 = vpop.f32.mrf.mxu0
    %v8027 = vadd.f32 %v7985, %v8026
    %v8028 = vand.u32 %v7887, 4294901760
    %v8029 = vsub.f32 %v7887, %v8028
    %8030 = vmatmul.f32.gmra.mxu0 %v8029
    %v8031 = vpop.f32.mrf.mxu0
    %v8032 = vadd.f32 %v7989, %v8031
    %v8033 = vand.u32 %v7889, 4294901760
    %v8034 = vsub.f32 %v7889, %v8033
    %8035 = vmatmul.f32.gmra.mxu0 %v8034
    %v8036 = vpop.f32.mrf.mxu0
    %v8037 = vadd.f32 %v7993, %v8036
    %v8038 = vand.u32 %v7891, 4294901760
    %v8039 = vsub.f32 %v7891, %v8038
    %8040 = vmatmul.f32.gmra.mxu0 %v8039
    %v8041 = vpop.f32.mrf.mxu0
    %v8042 = vadd.f32 %v7997, %v8041
    %8043 = vdwg.mxu0
    %8044 = vmatpush.msra.mxu0 0.0
    %8045 = vmatpush.msra.mxu0 0.0
    %8046 = vmatpush.msra.mxu0 0.0
    %8047 = vmatpush.msra.mxu0 0.0
    %8048 = vmatpush.msra.mxu0 0.0
    %8049 = vmatpush.msra.mxu0 0.0
    %8050 = vmatpush.msra.mxu0 0.0
    %8051 = vmatpush.msra.mxu0 0.0
    %8052 = vmatpush.msra.mxu0 0.0
    %8053 = vmatpush.msra.mxu0 0.0
    %8054 = vmatpush.msra.mxu0 0.0
    %8055 = vmatpush.msra.mxu0 0.0
    %v8056 = vand.u32 %v7857, 4294901760
    %8057 = vmatpush.msra.mxu0 %v8056
    %v8058 = vand.u32 %v7849, 4294901760
    %8059 = vmatpush.msra.mxu0 %v8058
    %v8060 = vand.u32 %v7841, 4294901760
    %8061 = vmatpush.msra.mxu0 %v8060
    %v8062 = vand.u32 %v7833, 4294901760
    %8063 = vmatpush.msra.mxu0 %v8062
    %v8064 = vand.u32 %v7885, 4294901760
    %v8065 = vsub.f32 %v7885, %v8064
    %v8066 = vand.u32 %v8065, 4294901760
    %8067 = vmatmul.f32.gmra.mxu0 %v8066
    %v8068 = vpop.f32.mrf.mxu0
    %v8069 = vadd.f32 %v8027, %v8068
    %v8070 = vand.u32 %v7887, 4294901760
    %v8071 = vsub.f32 %v7887, %v8070
    %v8072 = vand.u32 %v8071, 4294901760
    %8073 = vmatmul.f32.gmra.mxu0 %v8072
    %v8074 = vpop.f32.mrf.mxu0
    %v8075 = vadd.f32 %v8032, %v8074
    %v8076 = vand.u32 %v7889, 4294901760
    %v8077 = vsub.f32 %v7889, %v8076
    %v8078 = vand.u32 %v8077, 4294901760
    %8079 = vmatmul.f32.gmra.mxu0 %v8078
    %v8080 = vpop.f32.mrf.mxu0
    %v8081 = vadd.f32 %v8037, %v8080
    %v8082 = vand.u32 %v7891, 4294901760
    %v8083 = vsub.f32 %v7891, %v8082
    %v8084 = vand.u32 %v8083, 4294901760
    %8085 = vmatmul.f32.gmra.mxu0 %v8084
    %v8086 = vpop.f32.mrf.mxu0
    %v8087 = vadd.f32 %v8042, %v8086
    %8088 = vdwg.mxu0
    %8089 = vmatpush.msra.mxu0 0.0
    %8090 = vmatpush.msra.mxu0 0.0
    %8091 = vmatpush.msra.mxu0 0.0
    %8092 = vmatpush.msra.mxu0 0.0
    %8093 = vmatpush.msra.mxu0 0.0
    %8094 = vmatpush.msra.mxu0 0.0
    %8095 = vmatpush.msra.mxu0 0.0
    %8096 = vmatpush.msra.mxu0 0.0
    %8097 = vmatpush.msra.mxu0 0.0
    %8098 = vmatpush.msra.mxu0 0.0
    %8099 = vmatpush.msra.mxu0 0.0
    %8100 = vmatpush.msra.mxu0 0.0
    %v8101 = vand.u32 %v7857, 4294901760
    %v8102 = vsub.f32 %v7857, %v8101
    %v8103 = vand.u32 %v8102, 4294901760
    %8104 = vmatpush.msra.mxu0 %v8103
    %v8105 = vand.u32 %v7849, 4294901760
    %v8106 = vsub.f32 %v7849, %v8105
    %v8107 = vand.u32 %v8106, 4294901760
    %8108 = vmatpush.msra.mxu0 %v8107
    %v8109 = vand.u32 %v7841, 4294901760
    %v8110 = vsub.f32 %v7841, %v8109
    %v8111 = vand.u32 %v8110, 4294901760
    %8112 = vmatpush.msra.mxu0 %v8111
    %v8113 = vand.u32 %v7833, 4294901760
    %v8114 = vsub.f32 %v7833, %v8113
    %v8115 = vand.u32 %v8114, 4294901760
    %8116 = vmatpush.msra.mxu0 %v8115
    %v8117 = vand.u32 %v7885, 4294901760
    %8118 = vmatmul.f32.gmra.mxu0 %v8117
    %v8119 = vpop.f32.mrf.mxu0
    %v8120 = vadd.f32 %v8069, %v8119
    %v8121 = vand.u32 %v7887, 4294901760
    %8122 = vmatmul.f32.gmra.mxu0 %v8121
    %v8123 = vpop.f32.mrf.mxu0
    %v8124 = vadd.f32 %v8075, %v8123
    %v8125 = vand.u32 %v7889, 4294901760
    %8126 = vmatmul.f32.gmra.mxu0 %v8125
    %v8127 = vpop.f32.mrf.mxu0
    %v8128 = vadd.f32 %v8081, %v8127
    %v8129 = vand.u32 %v7891, 4294901760
    %8130 = vmatmul.f32.gmra.mxu0 %v8129
    %v8131 = vpop.f32.mrf.mxu0
    %v8132 = vadd.f32 %v8087, %v8131
    %8133 = vdwg.mxu0
    %8134 = vmatpush.msra.mxu0 0.0
    %8135 = vmatpush.msra.mxu0 0.0
    %8136 = vmatpush.msra.mxu0 0.0
    %8137 = vmatpush.msra.mxu0 0.0
    %8138 = vmatpush.msra.mxu0 0.0
    %8139 = vmatpush.msra.mxu0 0.0
    %8140 = vmatpush.msra.mxu0 0.0
    %8141 = vmatpush.msra.mxu0 0.0
    %8142 = vmatpush.msra.mxu0 0.0
    %8143 = vmatpush.msra.mxu0 0.0
    %8144 = vmatpush.msra.mxu0 0.0
    %8145 = vmatpush.msra.mxu0 0.0
    %v8146 = vand.u32 %v7857, 4294901760
    %8147 = vmatpush.msra.mxu0 %v8146
    %v8148 = vand.u32 %v7849, 4294901760
    %8149 = vmatpush.msra.mxu0 %v8148
    %v8150 = vand.u32 %v7841, 4294901760
    %8151 = vmatpush.msra.mxu0 %v8150
    %v8152 = vand.u32 %v7833, 4294901760
    %8153 = vmatpush.msra.mxu0 %v8152
    %v8154 = vand.u32 %v7885, 4294901760
    %8155 = vmatmul.f32.gmra.mxu0 %v8154
    %v8156 = vpop.f32.mrf.mxu0
    %v8157 = vadd.f32 %v8120, %v8156
    %v8158 = vand.u32 %v7887, 4294901760
    %8159 = vmatmul.f32.gmra.mxu0 %v8158
    %v8160 = vpop.f32.mrf.mxu0
    %v8161 = vadd.f32 %v8124, %v8160
    %v8162 = vand.u32 %v7889, 4294901760
    %8163 = vmatmul.f32.gmra.mxu0 %v8162
    %v8164 = vpop.f32.mrf.mxu0
    %v8165 = vadd.f32 %v8128, %v8164
    %v8166 = vand.u32 %v7891, 4294901760
    %8167 = vmatmul.f32.gmra.mxu0 %v8166
    %v8168 = vpop.f32.mrf.mxu0
    %v8169 = vadd.f32 %v8132, %v8168
    %8170 = vdwg.mxu0
    %8171 = vmatpush.msra.mxu0 0.0
    %8172 = vmatpush.msra.mxu0 0.0
    %8173 = vmatpush.msra.mxu0 0.0
    %8174 = vmatpush.msra.mxu0 0.0
    %8175 = vmatpush.msra.mxu0 0.0
    %8176 = vmatpush.msra.mxu0 0.0
    %8177 = vmatpush.msra.mxu0 0.0
    %8178 = vmatpush.msra.mxu0 0.0
    %8179 = vmatpush.msra.mxu0 0.0
    %8180 = vmatpush.msra.mxu0 0.0
    %8181 = vmatpush.msra.mxu0 0.0
    %8182 = vmatpush.msra.mxu0 0.0
    %v8183 = vand.u32 %v7858, 4294901760
    %8184 = vmatpush.msra.mxu0 %v8183
    %v8185 = vand.u32 %v7850, 4294901760
    %8186 = vmatpush.msra.mxu0 %v8185
    %v8187 = vand.u32 %v7842, 4294901760
    %8188 = vmatpush.msra.mxu0 %v8187
    %v8189 = vand.u32 %v7834, 4294901760
    %8190 = vmatpush.msra.mxu0 %v8189
    %v8191 = vand.u32 %v7885, 4294901760
    %v8192 = vsub.f32 %v7885, %v8191
    %v8193 = vand.u32 %v8192, 4294901760
    %v8194 = vsub.f32 %v8192, %v8193
    %v8195 = vand.u32 %v8194, 4294901760
    %8196 = vmatmul.f32.gmra.mxu0 %v8195
    %v8197 = vpop.f32.mrf.mxu0
    %v8198 = vadd.f32 %v7868, %v8197
    %v8199 = vand.u32 %v7887, 4294901760
    %v8200 = vsub.f32 %v7887, %v8199
    %v8201 = vand.u32 %v8200, 4294901760
    %v8202 = vsub.f32 %v8200, %v8201
    %v8203 = vand.u32 %v8202, 4294901760
    %8204 = vmatmul.f32.gmra.mxu0 %v8203
    %v8205 = vpop.f32.mrf.mxu0
    %v8206 = vadd.f32 %v7873, %v8205
    %v8207 = vand.u32 %v7889, 4294901760
    %v8208 = vsub.f32 %v7889, %v8207
    %v8209 = vand.u32 %v8208, 4294901760
    %v8210 = vsub.f32 %v8208, %v8209
    %v8211 = vand.u32 %v8210, 4294901760
    %8212 = vmatmul.f32.gmra.mxu0 %v8211
    %v8213 = vpop.f32.mrf.mxu0
    %v8214 = vadd.f32 %v7878, %v8213
    %v8215 = vand.u32 %v7891, 4294901760
    %v8216 = vsub.f32 %v7891, %v8215
    %v8217 = vand.u32 %v8216, 4294901760
    %v8218 = vsub.f32 %v8216, %v8217
    %v8219 = vand.u32 %v8218, 4294901760
    %8220 = vmatmul.f32.gmra.mxu0 %v8219
    %v8221 = vpop.f32.mrf.mxu0
    %v8222 = vadd.f32 %v7883, %v8221
    %8223 = vdwg.mxu0
    %8224 = vmatpush.msra.mxu0 0.0
    %8225 = vmatpush.msra.mxu0 0.0
    %8226 = vmatpush.msra.mxu0 0.0
    %8227 = vmatpush.msra.mxu0 0.0
    %8228 = vmatpush.msra.mxu0 0.0
    %8229 = vmatpush.msra.mxu0 0.0
    %8230 = vmatpush.msra.mxu0 0.0
    %8231 = vmatpush.msra.mxu0 0.0
    %8232 = vmatpush.msra.mxu0 0.0
    %8233 = vmatpush.msra.mxu0 0.0
    %8234 = vmatpush.msra.mxu0 0.0
    %8235 = vmatpush.msra.mxu0 0.0
    %v8236 = vand.u32 %v7858, 4294901760
    %v8237 = vsub.f32 %v7858, %v8236
    %v8238 = vand.u32 %v8237, 4294901760
    %v8239 = vsub.f32 %v8237, %v8238
    %v8240 = vand.u32 %v8239, 4294901760
    %8241 = vmatpush.msra.mxu0 %v8240
    %v8242 = vand.u32 %v7850, 4294901760
    %v8243 = vsub.f32 %v7850, %v8242
    %v8244 = vand.u32 %v8243, 4294901760
    %v8245 = vsub.f32 %v8243, %v8244
    %v8246 = vand.u32 %v8245, 4294901760
    %8247 = vmatpush.msra.mxu0 %v8246
    %v8248 = vand.u32 %v7842, 4294901760
    %v8249 = vsub.f32 %v7842, %v8248
    %v8250 = vand.u32 %v8249, 4294901760
    %v8251 = vsub.f32 %v8249, %v8250
    %v8252 = vand.u32 %v8251, 4294901760
    %8253 = vmatpush.msra.mxu0 %v8252
    %v8254 = vand.u32 %v7834, 4294901760
    %v8255 = vsub.f32 %v7834, %v8254
    %v8256 = vand.u32 %v8255, 4294901760
    %v8257 = vsub.f32 %v8255, %v8256
    %v8258 = vand.u32 %v8257, 4294901760
    %8259 = vmatpush.msra.mxu0 %v8258
    %v8260 = vand.u32 %v7885, 4294901760
    %8261 = vmatmul.f32.gmra.mxu0 %v8260
    %v8262 = vpop.f32.mrf.mxu0
    %v8263 = vadd.f32 %v8198, %v8262
    %v8264 = vand.u32 %v7887, 4294901760
    %8265 = vmatmul.f32.gmra.mxu0 %v8264
    %v8266 = vpop.f32.mrf.mxu0
    %v8267 = vadd.f32 %v8206, %v8266
    %v8268 = vand.u32 %v7889, 4294901760
    %8269 = vmatmul.f32.gmra.mxu0 %v8268
    %v8270 = vpop.f32.mrf.mxu0
    %v8271 = vadd.f32 %v8214, %v8270
    %v8272 = vand.u32 %v7891, 4294901760
    %8273 = vmatmul.f32.gmra.mxu0 %v8272
    %v8274 = vpop.f32.mrf.mxu0
    %v8275 = vadd.f32 %v8222, %v8274
    %8276 = vdwg.mxu0
    %8277 = vmatpush.msra.mxu0 0.0
    %8278 = vmatpush.msra.mxu0 0.0
    %8279 = vmatpush.msra.mxu0 0.0
    %8280 = vmatpush.msra.mxu0 0.0
    %8281 = vmatpush.msra.mxu0 0.0
    %8282 = vmatpush.msra.mxu0 0.0
    %8283 = vmatpush.msra.mxu0 0.0
    %8284 = vmatpush.msra.mxu0 0.0
    %8285 = vmatpush.msra.mxu0 0.0
    %8286 = vmatpush.msra.mxu0 0.0
    %8287 = vmatpush.msra.mxu0 0.0
    %8288 = vmatpush.msra.mxu0 0.0
    %v8289 = vand.u32 %v7858, 4294901760
    %v8290 = vsub.f32 %v7858, %v8289
    %8291 = vmatpush.msra.mxu0 %v8290
    %v8292 = vand.u32 %v7850, 4294901760
    %v8293 = vsub.f32 %v7850, %v8292
    %8294 = vmatpush.msra.mxu0 %v8293
    %v8295 = vand.u32 %v7842, 4294901760
    %v8296 = vsub.f32 %v7842, %v8295
    %8297 = vmatpush.msra.mxu0 %v8296
    %v8298 = vand.u32 %v7834, 4294901760
    %v8299 = vsub.f32 %v7834, %v8298
    %8300 = vmatpush.msra.mxu0 %v8299
    %v8301 = vand.u32 %v7885, 4294901760
    %v8302 = vsub.f32 %v7885, %v8301
    %8303 = vmatmul.f32.gmra.mxu0 %v8302
    %v8304 = vpop.f32.mrf.mxu0
    %v8305 = vadd.f32 %v8263, %v8304
    %v8306 = vand.u32 %v7887, 4294901760
    %v8307 = vsub.f32 %v7887, %v8306
    %8308 = vmatmul.f32.gmra.mxu0 %v8307
    %v8309 = vpop.f32.mrf.mxu0
    %v8310 = vadd.f32 %v8267, %v8309
    %v8311 = vand.u32 %v7889, 4294901760
    %v8312 = vsub.f32 %v7889, %v8311
    %8313 = vmatmul.f32.gmra.mxu0 %v8312
    %v8314 = vpop.f32.mrf.mxu0
    %v8315 = vadd.f32 %v8271, %v8314
    %v8316 = vand.u32 %v7891, 4294901760
    %v8317 = vsub.f32 %v7891, %v8316
    %8318 = vmatmul.f32.gmra.mxu0 %v8317
    %v8319 = vpop.f32.mrf.mxu0
    %v8320 = vadd.f32 %v8275, %v8319
    %8321 = vdwg.mxu0
    %8322 = vmatpush.msra.mxu0 0.0
    %8323 = vmatpush.msra.mxu0 0.0
    %8324 = vmatpush.msra.mxu0 0.0
    %8325 = vmatpush.msra.mxu0 0.0
    %8326 = vmatpush.msra.mxu0 0.0
    %8327 = vmatpush.msra.mxu0 0.0
    %8328 = vmatpush.msra.mxu0 0.0
    %8329 = vmatpush.msra.mxu0 0.0
    %8330 = vmatpush.msra.mxu0 0.0
    %8331 = vmatpush.msra.mxu0 0.0
    %8332 = vmatpush.msra.mxu0 0.0
    %8333 = vmatpush.msra.mxu0 0.0
    %v8334 = vand.u32 %v7858, 4294901760
    %8335 = vmatpush.msra.mxu0 %v8334
    %v8336 = vand.u32 %v7850, 4294901760
    %8337 = vmatpush.msra.mxu0 %v8336
    %v8338 = vand.u32 %v7842, 4294901760
    %8339 = vmatpush.msra.mxu0 %v8338
    %v8340 = vand.u32 %v7834, 4294901760
    %8341 = vmatpush.msra.mxu0 %v8340
    %v8342 = vand.u32 %v7885, 4294901760
    %v8343 = vsub.f32 %v7885, %v8342
    %v8344 = vand.u32 %v8343, 4294901760
    %8345 = vmatmul.f32.gmra.mxu0 %v8344
    %v8346 = vpop.f32.mrf.mxu0
    %v8347 = vadd.f32 %v8305, %v8346
    %v8348 = vand.u32 %v7887, 4294901760
    %v8349 = vsub.f32 %v7887, %v8348
    %v8350 = vand.u32 %v8349, 4294901760
    %8351 = vmatmul.f32.gmra.mxu0 %v8350
    %v8352 = vpop.f32.mrf.mxu0
    %v8353 = vadd.f32 %v8310, %v8352
    %v8354 = vand.u32 %v7889, 4294901760
    %v8355 = vsub.f32 %v7889, %v8354
    %v8356 = vand.u32 %v8355, 4294901760
    %8357 = vmatmul.f32.gmra.mxu0 %v8356
    %v8358 = vpop.f32.mrf.mxu0
    %v8359 = vadd.f32 %v8315, %v8358
    %v8360 = vand.u32 %v7891, 4294901760
    %v8361 = vsub.f32 %v7891, %v8360
    %v8362 = vand.u32 %v8361, 4294901760
    %8363 = vmatmul.f32.gmra.mxu0 %v8362
    %v8364 = vpop.f32.mrf.mxu0
    %v8365 = vadd.f32 %v8320, %v8364
    %8366 = vdwg.mxu0
    %8367 = vmatpush.msra.mxu0 0.0
    %8368 = vmatpush.msra.mxu0 0.0
    %8369 = vmatpush.msra.mxu0 0.0
    %8370 = vmatpush.msra.mxu0 0.0
    %8371 = vmatpush.msra.mxu0 0.0
    %8372 = vmatpush.msra.mxu0 0.0
    %8373 = vmatpush.msra.mxu0 0.0
    %8374 = vmatpush.msra.mxu0 0.0
    %8375 = vmatpush.msra.mxu0 0.0
    %8376 = vmatpush.msra.mxu0 0.0
    %8377 = vmatpush.msra.mxu0 0.0
    %8378 = vmatpush.msra.mxu0 0.0
    %v8379 = vand.u32 %v7858, 4294901760
    %v8380 = vsub.f32 %v7858, %v8379
    %v8381 = vand.u32 %v8380, 4294901760
    %8382 = vmatpush.msra.mxu0 %v8381
    %v8383 = vand.u32 %v7850, 4294901760
    %v8384 = vsub.f32 %v7850, %v8383
    %v8385 = vand.u32 %v8384, 4294901760
    %8386 = vmatpush.msra.mxu0 %v8385
    %v8387 = vand.u32 %v7842, 4294901760
    %v8388 = vsub.f32 %v7842, %v8387
    %v8389 = vand.u32 %v8388, 4294901760
    %8390 = vmatpush.msra.mxu0 %v8389
    %v8391 = vand.u32 %v7834, 4294901760
    %v8392 = vsub.f32 %v7834, %v8391
    %v8393 = vand.u32 %v8392, 4294901760
    %8394 = vmatpush.msra.mxu0 %v8393
    %v8395 = vand.u32 %v7885, 4294901760
    %8396 = vmatmul.f32.gmra.mxu0 %v8395
    %v8397 = vpop.f32.mrf.mxu0
    %v8398 = vadd.f32 %v8347, %v8397
    %v8399 = vand.u32 %v7887, 4294901760
    %8400 = vmatmul.f32.gmra.mxu0 %v8399
    %v8401 = vpop.f32.mrf.mxu0
    %v8402 = vadd.f32 %v8353, %v8401
    %v8403 = vand.u32 %v7889, 4294901760
    %8404 = vmatmul.f32.gmra.mxu0 %v8403
    %v8405 = vpop.f32.mrf.mxu0
    %v8406 = vadd.f32 %v8359, %v8405
    %v8407 = vand.u32 %v7891, 4294901760
    %8408 = vmatmul.f32.gmra.mxu0 %v8407
    %v8409 = vpop.f32.mrf.mxu0
    %v8410 = vadd.f32 %v8365, %v8409
    %8411 = vdwg.mxu0
    %8412 = vmatpush.msra.mxu0 0.0
    %8413 = vmatpush.msra.mxu0 0.0
    %8414 = vmatpush.msra.mxu0 0.0
    %8415 = vmatpush.msra.mxu0 0.0
    %8416 = vmatpush.msra.mxu0 0.0
    %8417 = vmatpush.msra.mxu0 0.0
    %8418 = vmatpush.msra.mxu0 0.0
    %8419 = vmatpush.msra.mxu0 0.0
    %8420 = vmatpush.msra.mxu0 0.0
    %8421 = vmatpush.msra.mxu0 0.0
    %8422 = vmatpush.msra.mxu0 0.0
    %8423 = vmatpush.msra.mxu0 0.0
    %v8424 = vand.u32 %v7858, 4294901760
    %8425 = vmatpush.msra.mxu0 %v8424
    %v8426 = vand.u32 %v7850, 4294901760
    %8427 = vmatpush.msra.mxu0 %v8426
    %v8428 = vand.u32 %v7842, 4294901760
    %8429 = vmatpush.msra.mxu0 %v8428
    %v8430 = vand.u32 %v7834, 4294901760
    %8431 = vmatpush.msra.mxu0 %v8430
    %v8432 = vand.u32 %v7885, 4294901760
    %8433 = vmatmul.f32.gmra.mxu0 %v8432
    %v8434 = vpop.f32.mrf.mxu0
    %v8435 = vadd.f32 %v8398, %v8434
    %v8436 = vand.u32 %v7887, 4294901760
    %8437 = vmatmul.f32.gmra.mxu0 %v8436
    %v8438 = vpop.f32.mrf.mxu0
    %v8439 = vadd.f32 %v8402, %v8438
    %v8440 = vand.u32 %v7889, 4294901760
    %8441 = vmatmul.f32.gmra.mxu0 %v8440
    %v8442 = vpop.f32.mrf.mxu0
    %v8443 = vadd.f32 %v8406, %v8442
    %v8444 = vand.u32 %v7891, 4294901760
    %8445 = vmatmul.f32.gmra.mxu0 %v8444
    %v8446 = vpop.f32.mrf.mxu0
    %v8447 = vadd.f32 %v8410, %v8446
    %8448 = vdwg.mxu0
    %8449 = vmatpush.msra.mxu0 0.0
    %8450 = vmatpush.msra.mxu0 0.0
    %8451 = vmatpush.msra.mxu0 0.0
    %8452 = vmatpush.msra.mxu0 0.0
    %8453 = vmatpush.msra.mxu0 0.0
    %8454 = vmatpush.msra.mxu0 0.0
    %8455 = vmatpush.msra.mxu0 0.0
    %8456 = vmatpush.msra.mxu0 0.0
    %8457 = vmatpush.msra.mxu0 0.0
    %8458 = vmatpush.msra.mxu0 0.0
    %8459 = vmatpush.msra.mxu0 0.0
    %8460 = vmatpush.msra.mxu0 0.0
    %v8461 = vand.u32 %v7859, 4294901760
    %8462 = vmatpush.msra.mxu0 %v8461
    %v8463 = vand.u32 %v7851, 4294901760
    %8464 = vmatpush.msra.mxu0 %v8463
    %v8465 = vand.u32 %v7843, 4294901760
    %8466 = vmatpush.msra.mxu0 %v8465
    %v8467 = vand.u32 %v7835, 4294901760
    %8468 = vmatpush.msra.mxu0 %v8467
    %v8469 = vand.u32 %v7885, 4294901760
    %v8470 = vsub.f32 %v7885, %v8469
    %v8471 = vand.u32 %v8470, 4294901760
    %v8472 = vsub.f32 %v8470, %v8471
    %v8473 = vand.u32 %v8472, 4294901760
    %8474 = vmatmul.f32.gmra.mxu0 %v8473
    %v8475 = vpop.f32.mrf.mxu0
    %v8476 = vadd.f32 %v7868, %v8475
    %v8477 = vand.u32 %v7887, 4294901760
    %v8478 = vsub.f32 %v7887, %v8477
    %v8479 = vand.u32 %v8478, 4294901760
    %v8480 = vsub.f32 %v8478, %v8479
    %v8481 = vand.u32 %v8480, 4294901760
    %8482 = vmatmul.f32.gmra.mxu0 %v8481
    %v8483 = vpop.f32.mrf.mxu0
    %v8484 = vadd.f32 %v7873, %v8483
    %v8485 = vand.u32 %v7889, 4294901760
    %v8486 = vsub.f32 %v7889, %v8485
    %v8487 = vand.u32 %v8486, 4294901760
    %v8488 = vsub.f32 %v8486, %v8487
    %v8489 = vand.u32 %v8488, 4294901760
    %8490 = vmatmul.f32.gmra.mxu0 %v8489
    %v8491 = vpop.f32.mrf.mxu0
    %v8492 = vadd.f32 %v7878, %v8491
    %v8493 = vand.u32 %v7891, 4294901760
    %v8494 = vsub.f32 %v7891, %v8493
    %v8495 = vand.u32 %v8494, 4294901760
    %v8496 = vsub.f32 %v8494, %v8495
    %v8497 = vand.u32 %v8496, 4294901760
    %8498 = vmatmul.f32.gmra.mxu0 %v8497
    %v8499 = vpop.f32.mrf.mxu0
    %v8500 = vadd.f32 %v7883, %v8499
    %8501 = vdwg.mxu0
    %8502 = vmatpush.msra.mxu0 0.0
    %8503 = vmatpush.msra.mxu0 0.0
    %8504 = vmatpush.msra.mxu0 0.0
    %8505 = vmatpush.msra.mxu0 0.0
    %8506 = vmatpush.msra.mxu0 0.0
    %8507 = vmatpush.msra.mxu0 0.0
    %8508 = vmatpush.msra.mxu0 0.0
    %8509 = vmatpush.msra.mxu0 0.0
    %8510 = vmatpush.msra.mxu0 0.0
    %8511 = vmatpush.msra.mxu0 0.0
    %8512 = vmatpush.msra.mxu0 0.0
    %8513 = vmatpush.msra.mxu0 0.0
    %v8514 = vand.u32 %v7859, 4294901760
    %v8515 = vsub.f32 %v7859, %v8514
    %v8516 = vand.u32 %v8515, 4294901760
    %v8517 = vsub.f32 %v8515, %v8516
    %v8518 = vand.u32 %v8517, 4294901760
    %8519 = vmatpush.msra.mxu0 %v8518
    %v8520 = vand.u32 %v7851, 4294901760
    %v8521 = vsub.f32 %v7851, %v8520
    %v8522 = vand.u32 %v8521, 4294901760
    %v8523 = vsub.f32 %v8521, %v8522
    %v8524 = vand.u32 %v8523, 4294901760
    %8525 = vmatpush.msra.mxu0 %v8524
    %v8526 = vand.u32 %v7843, 4294901760
    %v8527 = vsub.f32 %v7843, %v8526
    %v8528 = vand.u32 %v8527, 4294901760
    %v8529 = vsub.f32 %v8527, %v8528
    %v8530 = vand.u32 %v8529, 4294901760
    %8531 = vmatpush.msra.mxu0 %v8530
    %v8532 = vand.u32 %v7835, 4294901760
    %v8533 = vsub.f32 %v7835, %v8532
    %v8534 = vand.u32 %v8533, 4294901760
    %v8535 = vsub.f32 %v8533, %v8534
    %v8536 = vand.u32 %v8535, 4294901760
    %8537 = vmatpush.msra.mxu0 %v8536
    %v8538 = vand.u32 %v7885, 4294901760
    %8539 = vmatmul.f32.gmra.mxu0 %v8538
    %v8540 = vpop.f32.mrf.mxu0
    %v8541 = vadd.f32 %v8476, %v8540
    %v8542 = vand.u32 %v7887, 4294901760
    %8543 = vmatmul.f32.gmra.mxu0 %v8542
    %v8544 = vpop.f32.mrf.mxu0
    %v8545 = vadd.f32 %v8484, %v8544
    %v8546 = vand.u32 %v7889, 4294901760
    %8547 = vmatmul.f32.gmra.mxu0 %v8546
    %v8548 = vpop.f32.mrf.mxu0
    %v8549 = vadd.f32 %v8492, %v8548
    %v8550 = vand.u32 %v7891, 4294901760
    %8551 = vmatmul.f32.gmra.mxu0 %v8550
    %v8552 = vpop.f32.mrf.mxu0
    %v8553 = vadd.f32 %v8500, %v8552
    %8554 = vdwg.mxu0
    %8555 = vmatpush.msra.mxu0 0.0
    %8556 = vmatpush.msra.mxu0 0.0
    %8557 = vmatpush.msra.mxu0 0.0
    %8558 = vmatpush.msra.mxu0 0.0
    %8559 = vmatpush.msra.mxu0 0.0
    %8560 = vmatpush.msra.mxu0 0.0
    %8561 = vmatpush.msra.mxu0 0.0
    %8562 = vmatpush.msra.mxu0 0.0
    %8563 = vmatpush.msra.mxu0 0.0
    %8564 = vmatpush.msra.mxu0 0.0
    %8565 = vmatpush.msra.mxu0 0.0
    %8566 = vmatpush.msra.mxu0 0.0
    %v8567 = vand.u32 %v7859, 4294901760
    %v8568 = vsub.f32 %v7859, %v8567
    %8569 = vmatpush.msra.mxu0 %v8568
    %v8570 = vand.u32 %v7851, 4294901760
    %v8571 = vsub.f32 %v7851, %v8570
    %8572 = vmatpush.msra.mxu0 %v8571
    %v8573 = vand.u32 %v7843, 4294901760
    %v8574 = vsub.f32 %v7843, %v8573
    %8575 = vmatpush.msra.mxu0 %v8574
    %v8576 = vand.u32 %v7835, 4294901760
    %v8577 = vsub.f32 %v7835, %v8576
    %8578 = vmatpush.msra.mxu0 %v8577
    %v8579 = vand.u32 %v7885, 4294901760
    %v8580 = vsub.f32 %v7885, %v8579
    %8581 = vmatmul.f32.gmra.mxu0 %v8580
    %v8582 = vpop.f32.mrf.mxu0
    %v8583 = vadd.f32 %v8541, %v8582
    %v8584 = vand.u32 %v7887, 4294901760
    %v8585 = vsub.f32 %v7887, %v8584
    %8586 = vmatmul.f32.gmra.mxu0 %v8585
    %v8587 = vpop.f32.mrf.mxu0
    %v8588 = vadd.f32 %v8545, %v8587
    %v8589 = vand.u32 %v7889, 4294901760
    %v8590 = vsub.f32 %v7889, %v8589
    %8591 = vmatmul.f32.gmra.mxu0 %v8590
    %v8592 = vpop.f32.mrf.mxu0
    %v8593 = vadd.f32 %v8549, %v8592
    %v8594 = vand.u32 %v7891, 4294901760
    %v8595 = vsub.f32 %v7891, %v8594
    %8596 = vmatmul.f32.gmra.mxu0 %v8595
    %v8597 = vpop.f32.mrf.mxu0
    %v8598 = vadd.f32 %v8553, %v8597
    %8599 = vdwg.mxu0
    %8600 = vmatpush.msra.mxu0 0.0
    %8601 = vmatpush.msra.mxu0 0.0
    %8602 = vmatpush.msra.mxu0 0.0
    %8603 = vmatpush.msra.mxu0 0.0
    %8604 = vmatpush.msra.mxu0 0.0
    %8605 = vmatpush.msra.mxu0 0.0
    %8606 = vmatpush.msra.mxu0 0.0
    %8607 = vmatpush.msra.mxu0 0.0
    %8608 = vmatpush.msra.mxu0 0.0
    %8609 = vmatpush.msra.mxu0 0.0
    %8610 = vmatpush.msra.mxu0 0.0
    %8611 = vmatpush.msra.mxu0 0.0
    %v8612 = vand.u32 %v7859, 4294901760
    %8613 = vmatpush.msra.mxu0 %v8612
    %v8614 = vand.u32 %v7851, 4294901760
    %8615 = vmatpush.msra.mxu0 %v8614
    %v8616 = vand.u32 %v7843, 4294901760
    %8617 = vmatpush.msra.mxu0 %v8616
    %v8618 = vand.u32 %v7835, 4294901760
    %8619 = vmatpush.msra.mxu0 %v8618
    %v8620 = vand.u32 %v7885, 4294901760
    %v8621 = vsub.f32 %v7885, %v8620
    %v8622 = vand.u32 %v8621, 4294901760
    %8623 = vmatmul.f32.gmra.mxu0 %v8622
    %v8624 = vpop.f32.mrf.mxu0
    %v8625 = vadd.f32 %v8583, %v8624
    %v8626 = vand.u32 %v7887, 4294901760
    %v8627 = vsub.f32 %v7887, %v8626
    %v8628 = vand.u32 %v8627, 4294901760
    %8629 = vmatmul.f32.gmra.mxu0 %v8628
    %v8630 = vpop.f32.mrf.mxu0
    %v8631 = vadd.f32 %v8588, %v8630
    %v8632 = vand.u32 %v7889, 4294901760
    %v8633 = vsub.f32 %v7889, %v8632
    %v8634 = vand.u32 %v8633, 4294901760
    %8635 = vmatmul.f32.gmra.mxu0 %v8634
    %v8636 = vpop.f32.mrf.mxu0
    %v8637 = vadd.f32 %v8593, %v8636
    %v8638 = vand.u32 %v7891, 4294901760
    %v8639 = vsub.f32 %v7891, %v8638
    %v8640 = vand.u32 %v8639, 4294901760
    %8641 = vmatmul.f32.gmra.mxu0 %v8640
    %v8642 = vpop.f32.mrf.mxu0
    %v8643 = vadd.f32 %v8598, %v8642
    %8644 = vdwg.mxu0
    %8645 = vmatpush.msra.mxu0 0.0
    %8646 = vmatpush.msra.mxu0 0.0
    %8647 = vmatpush.msra.mxu0 0.0
    %8648 = vmatpush.msra.mxu0 0.0
    %8649 = vmatpush.msra.mxu0 0.0
    %8650 = vmatpush.msra.mxu0 0.0
    %8651 = vmatpush.msra.mxu0 0.0
    %8652 = vmatpush.msra.mxu0 0.0
    %8653 = vmatpush.msra.mxu0 0.0
    %8654 = vmatpush.msra.mxu0 0.0
    %8655 = vmatpush.msra.mxu0 0.0
    %8656 = vmatpush.msra.mxu0 0.0
    %v8657 = vand.u32 %v7859, 4294901760
    %v8658 = vsub.f32 %v7859, %v8657
    %v8659 = vand.u32 %v8658, 4294901760
    %8660 = vmatpush.msra.mxu0 %v8659
    %v8661 = vand.u32 %v7851, 4294901760
    %v8662 = vsub.f32 %v7851, %v8661
    %v8663 = vand.u32 %v8662, 4294901760
    %8664 = vmatpush.msra.mxu0 %v8663
    %v8665 = vand.u32 %v7843, 4294901760
    %v8666 = vsub.f32 %v7843, %v8665
    %v8667 = vand.u32 %v8666, 4294901760
    %8668 = vmatpush.msra.mxu0 %v8667
    %v8669 = vand.u32 %v7835, 4294901760
    %v8670 = vsub.f32 %v7835, %v8669
    %v8671 = vand.u32 %v8670, 4294901760
    %8672 = vmatpush.msra.mxu0 %v8671
    %v8673 = vand.u32 %v7885, 4294901760
    %8674 = vmatmul.f32.gmra.mxu0 %v8673
    %v8675 = vpop.f32.mrf.mxu0
    %v8676 = vadd.f32 %v8625, %v8675
    %v8677 = vand.u32 %v7887, 4294901760
    %8678 = vmatmul.f32.gmra.mxu0 %v8677
    %v8679 = vpop.f32.mrf.mxu0
    %v8680 = vadd.f32 %v8631, %v8679
    %v8681 = vand.u32 %v7889, 4294901760
    %8682 = vmatmul.f32.gmra.mxu0 %v8681
    %v8683 = vpop.f32.mrf.mxu0
    %v8684 = vadd.f32 %v8637, %v8683
    %v8685 = vand.u32 %v7891, 4294901760
    %8686 = vmatmul.f32.gmra.mxu0 %v8685
    %v8687 = vpop.f32.mrf.mxu0
    %v8688 = vadd.f32 %v8643, %v8687
    %8689 = vdwg.mxu0
    %8690 = vmatpush.msra.mxu0 0.0
    %8691 = vmatpush.msra.mxu0 0.0
    %8692 = vmatpush.msra.mxu0 0.0
    %8693 = vmatpush.msra.mxu0 0.0
    %8694 = vmatpush.msra.mxu0 0.0
    %8695 = vmatpush.msra.mxu0 0.0
    %8696 = vmatpush.msra.mxu0 0.0
    %8697 = vmatpush.msra.mxu0 0.0
    %8698 = vmatpush.msra.mxu0 0.0
    %8699 = vmatpush.msra.mxu0 0.0
    %8700 = vmatpush.msra.mxu0 0.0
    %8701 = vmatpush.msra.mxu0 0.0
    %v8702 = vand.u32 %v7859, 4294901760
    %8703 = vmatpush.msra.mxu0 %v8702
    %v8704 = vand.u32 %v7851, 4294901760
    %8705 = vmatpush.msra.mxu0 %v8704
    %v8706 = vand.u32 %v7843, 4294901760
    %8707 = vmatpush.msra.mxu0 %v8706
    %v8708 = vand.u32 %v7835, 4294901760
    %8709 = vmatpush.msra.mxu0 %v8708
    %v8710 = vand.u32 %v7885, 4294901760
    %8711 = vmatmul.f32.gmra.mxu0 %v8710
    %v8712 = vpop.f32.mrf.mxu0
    %v8713 = vadd.f32 %v8676, %v8712
    %v8714 = vand.u32 %v7887, 4294901760
    %8715 = vmatmul.f32.gmra.mxu0 %v8714
    %v8716 = vpop.f32.mrf.mxu0
    %v8717 = vadd.f32 %v8680, %v8716
    %v8718 = vand.u32 %v7889, 4294901760
    %8719 = vmatmul.f32.gmra.mxu0 %v8718
    %v8720 = vpop.f32.mrf.mxu0
    %v8721 = vadd.f32 %v8684, %v8720
    %v8722 = vand.u32 %v7891, 4294901760
    %8723 = vmatmul.f32.gmra.mxu0 %v8722
    %v8724 = vpop.f32.mrf.mxu0
    %v8725 = vadd.f32 %v8688, %v8724
    %8726 = vdwg.mxu0
    %8727 = vmatpush.msra.mxu0 0.0
    %8728 = vmatpush.msra.mxu0 0.0
    %8729 = vmatpush.msra.mxu0 0.0
    %8730 = vmatpush.msra.mxu0 0.0
    %8731 = vmatpush.msra.mxu0 0.0
    %8732 = vmatpush.msra.mxu0 0.0
    %8733 = vmatpush.msra.mxu0 0.0
    %8734 = vmatpush.msra.mxu0 0.0
    %8735 = vmatpush.msra.mxu0 0.0
    %8736 = vmatpush.msra.mxu0 0.0
    %8737 = vmatpush.msra.mxu0 0.0
    %8738 = vmatpush.msra.mxu0 0.0
    %v8739 = vand.u32 %v7860, 4294901760
    %8740 = vmatpush.msra.mxu0 %v8739
    %v8741 = vand.u32 %v7852, 4294901760
    %8742 = vmatpush.msra.mxu0 %v8741
    %v8743 = vand.u32 %v7844, 4294901760
    %8744 = vmatpush.msra.mxu0 %v8743
    %v8745 = vand.u32 %v7836, 4294901760
    %8746 = vmatpush.msra.mxu0 %v8745
    %v8747 = vand.u32 %v7885, 4294901760
    %v8748 = vsub.f32 %v7885, %v8747
    %v8749 = vand.u32 %v8748, 4294901760
    %v8750 = vsub.f32 %v8748, %v8749
    %v8751 = vand.u32 %v8750, 4294901760
    %8752 = vmatmul.f32.gmra.mxu0 %v8751
    %v8753 = vpop.f32.mrf.mxu0
    %v8754 = vadd.f32 %v7868, %v8753
    %v8755 = vand.u32 %v7887, 4294901760
    %v8756 = vsub.f32 %v7887, %v8755
    %v8757 = vand.u32 %v8756, 4294901760
    %v8758 = vsub.f32 %v8756, %v8757
    %v8759 = vand.u32 %v8758, 4294901760
    %8760 = vmatmul.f32.gmra.mxu0 %v8759
    %v8761 = vpop.f32.mrf.mxu0
    %v8762 = vadd.f32 %v7873, %v8761
    %v8763 = vand.u32 %v7889, 4294901760
    %v8764 = vsub.f32 %v7889, %v8763
    %v8765 = vand.u32 %v8764, 4294901760
    %v8766 = vsub.f32 %v8764, %v8765
    %v8767 = vand.u32 %v8766, 4294901760
    %8768 = vmatmul.f32.gmra.mxu0 %v8767
    %v8769 = vpop.f32.mrf.mxu0
    %v8770 = vadd.f32 %v7878, %v8769
    %v8771 = vand.u32 %v7891, 4294901760
    %v8772 = vsub.f32 %v7891, %v8771
    %v8773 = vand.u32 %v8772, 4294901760
    %v8774 = vsub.f32 %v8772, %v8773
    %v8775 = vand.u32 %v8774, 4294901760
    %8776 = vmatmul.f32.gmra.mxu0 %v8775
    %v8777 = vpop.f32.mrf.mxu0
    %v8778 = vadd.f32 %v7883, %v8777
    %8779 = vdwg.mxu0
    %8780 = vmatpush.msra.mxu0 0.0
    %8781 = vmatpush.msra.mxu0 0.0
    %8782 = vmatpush.msra.mxu0 0.0
    %8783 = vmatpush.msra.mxu0 0.0
    %8784 = vmatpush.msra.mxu0 0.0
    %8785 = vmatpush.msra.mxu0 0.0
    %8786 = vmatpush.msra.mxu0 0.0
    %8787 = vmatpush.msra.mxu0 0.0
    %8788 = vmatpush.msra.mxu0 0.0
    %8789 = vmatpush.msra.mxu0 0.0
    %8790 = vmatpush.msra.mxu0 0.0
    %8791 = vmatpush.msra.mxu0 0.0
    %v8792 = vand.u32 %v7860, 4294901760
    %v8793 = vsub.f32 %v7860, %v8792
    %v8794 = vand.u32 %v8793, 4294901760
    %v8795 = vsub.f32 %v8793, %v8794
    %v8796 = vand.u32 %v8795, 4294901760
    %8797 = vmatpush.msra.mxu0 %v8796
    %v8798 = vand.u32 %v7852, 4294901760
    %v8799 = vsub.f32 %v7852, %v8798
    %v8800 = vand.u32 %v8799, 4294901760
    %v8801 = vsub.f32 %v8799, %v8800
    %v8802 = vand.u32 %v8801, 4294901760
    %8803 = vmatpush.msra.mxu0 %v8802
    %v8804 = vand.u32 %v7844, 4294901760
    %v8805 = vsub.f32 %v7844, %v8804
    %v8806 = vand.u32 %v8805, 4294901760
    %v8807 = vsub.f32 %v8805, %v8806
    %v8808 = vand.u32 %v8807, 4294901760
    %8809 = vmatpush.msra.mxu0 %v8808
    %v8810 = vand.u32 %v7836, 4294901760
    %v8811 = vsub.f32 %v7836, %v8810
    %v8812 = vand.u32 %v8811, 4294901760
    %v8813 = vsub.f32 %v8811, %v8812
    %v8814 = vand.u32 %v8813, 4294901760
    %8815 = vmatpush.msra.mxu0 %v8814
    %v8816 = vand.u32 %v7885, 4294901760
    %8817 = vmatmul.f32.gmra.mxu0 %v8816
    %v8818 = vpop.f32.mrf.mxu0
    %v8819 = vadd.f32 %v8754, %v8818
    %v8820 = vand.u32 %v7887, 4294901760
    %8821 = vmatmul.f32.gmra.mxu0 %v8820
    %v8822 = vpop.f32.mrf.mxu0
    %v8823 = vadd.f32 %v8762, %v8822
    %v8824 = vand.u32 %v7889, 4294901760
    %8825 = vmatmul.f32.gmra.mxu0 %v8824
    %v8826 = vpop.f32.mrf.mxu0
    %v8827 = vadd.f32 %v8770, %v8826
    %v8828 = vand.u32 %v7891, 4294901760
    %8829 = vmatmul.f32.gmra.mxu0 %v8828
    %v8830 = vpop.f32.mrf.mxu0
    %v8831 = vadd.f32 %v8778, %v8830
    %8832 = vdwg.mxu0
    %8833 = vmatpush.msra.mxu0 0.0
    %8834 = vmatpush.msra.mxu0 0.0
    %8835 = vmatpush.msra.mxu0 0.0
    %8836 = vmatpush.msra.mxu0 0.0
    %8837 = vmatpush.msra.mxu0 0.0
    %8838 = vmatpush.msra.mxu0 0.0
    %8839 = vmatpush.msra.mxu0 0.0
    %8840 = vmatpush.msra.mxu0 0.0
    %8841 = vmatpush.msra.mxu0 0.0
    %8842 = vmatpush.msra.mxu0 0.0
    %8843 = vmatpush.msra.mxu0 0.0
    %8844 = vmatpush.msra.mxu0 0.0
    %v8845 = vand.u32 %v7860, 4294901760
    %v8846 = vsub.f32 %v7860, %v8845
    %8847 = vmatpush.msra.mxu0 %v8846
    %v8848 = vand.u32 %v7852, 4294901760
    %v8849 = vsub.f32 %v7852, %v8848
    %8850 = vmatpush.msra.mxu0 %v8849
    %v8851 = vand.u32 %v7844, 4294901760
    %v8852 = vsub.f32 %v7844, %v8851
    %8853 = vmatpush.msra.mxu0 %v8852
    %v8854 = vand.u32 %v7836, 4294901760
    %v8855 = vsub.f32 %v7836, %v8854
    %8856 = vmatpush.msra.mxu0 %v8855
    %v8857 = vand.u32 %v7885, 4294901760
    %v8858 = vsub.f32 %v7885, %v8857
    %8859 = vmatmul.f32.gmra.mxu0 %v8858
    %v8860 = vpop.f32.mrf.mxu0
    %v8861 = vadd.f32 %v8819, %v8860
    %v8862 = vand.u32 %v7887, 4294901760
    %v8863 = vsub.f32 %v7887, %v8862
    %8864 = vmatmul.f32.gmra.mxu0 %v8863
    %v8865 = vpop.f32.mrf.mxu0
    %v8866 = vadd.f32 %v8823, %v8865
    %v8867 = vand.u32 %v7889, 4294901760
    %v8868 = vsub.f32 %v7889, %v8867
    %8869 = vmatmul.f32.gmra.mxu0 %v8868
    %v8870 = vpop.f32.mrf.mxu0
    %v8871 = vadd.f32 %v8827, %v8870
    %v8872 = vand.u32 %v7891, 4294901760
    %v8873 = vsub.f32 %v7891, %v8872
    %8874 = vmatmul.f32.gmra.mxu0 %v8873
    %v8875 = vpop.f32.mrf.mxu0
    %v8876 = vadd.f32 %v8831, %v8875
    %8877 = vdwg.mxu0
    %8878 = vmatpush.msra.mxu0 0.0
    %8879 = vmatpush.msra.mxu0 0.0
    %8880 = vmatpush.msra.mxu0 0.0
    %8881 = vmatpush.msra.mxu0 0.0
    %8882 = vmatpush.msra.mxu0 0.0
    %8883 = vmatpush.msra.mxu0 0.0
    %8884 = vmatpush.msra.mxu0 0.0
    %8885 = vmatpush.msra.mxu0 0.0
    %8886 = vmatpush.msra.mxu0 0.0
    %8887 = vmatpush.msra.mxu0 0.0
    %8888 = vmatpush.msra.mxu0 0.0
    %8889 = vmatpush.msra.mxu0 0.0
    %v8890 = vand.u32 %v7860, 4294901760
    %8891 = vmatpush.msra.mxu0 %v8890
    %v8892 = vand.u32 %v7852, 4294901760
    %8893 = vmatpush.msra.mxu0 %v8892
    %v8894 = vand.u32 %v7844, 4294901760
    %8895 = vmatpush.msra.mxu0 %v8894
    %v8896 = vand.u32 %v7836, 4294901760
    %8897 = vmatpush.msra.mxu0 %v8896
    %v8898 = vand.u32 %v7885, 4294901760
    %v8899 = vsub.f32 %v7885, %v8898
    %v8900 = vand.u32 %v8899, 4294901760
    %8901 = vmatmul.f32.gmra.mxu0 %v8900
    %v8902 = vpop.f32.mrf.mxu0
    %v8903 = vadd.f32 %v8861, %v8902
    %v8904 = vand.u32 %v7887, 4294901760
    %v8905 = vsub.f32 %v7887, %v8904
    %v8906 = vand.u32 %v8905, 4294901760
    %8907 = vmatmul.f32.gmra.mxu0 %v8906
    %v8908 = vpop.f32.mrf.mxu0
    %v8909 = vadd.f32 %v8866, %v8908
    %v8910 = vand.u32 %v7889, 4294901760
    %v8911 = vsub.f32 %v7889, %v8910
    %v8912 = vand.u32 %v8911, 4294901760
    %8913 = vmatmul.f32.gmra.mxu0 %v8912
    %v8914 = vpop.f32.mrf.mxu0
    %v8915 = vadd.f32 %v8871, %v8914
    %v8916 = vand.u32 %v7891, 4294901760
    %v8917 = vsub.f32 %v7891, %v8916
    %v8918 = vand.u32 %v8917, 4294901760
    %8919 = vmatmul.f32.gmra.mxu0 %v8918
    %v8920 = vpop.f32.mrf.mxu0
    %v8921 = vadd.f32 %v8876, %v8920
    %8922 = vdwg.mxu0
    %8923 = vmatpush.msra.mxu0 0.0
    %8924 = vmatpush.msra.mxu0 0.0
    %8925 = vmatpush.msra.mxu0 0.0
    %8926 = vmatpush.msra.mxu0 0.0
    %8927 = vmatpush.msra.mxu0 0.0
    %8928 = vmatpush.msra.mxu0 0.0
    %8929 = vmatpush.msra.mxu0 0.0
    %8930 = vmatpush.msra.mxu0 0.0
    %8931 = vmatpush.msra.mxu0 0.0
    %8932 = vmatpush.msra.mxu0 0.0
    %8933 = vmatpush.msra.mxu0 0.0
    %8934 = vmatpush.msra.mxu0 0.0
    %v8935 = vand.u32 %v7860, 4294901760
    %v8936 = vsub.f32 %v7860, %v8935
    %v8937 = vand.u32 %v8936, 4294901760
    %8938 = vmatpush.msra.mxu0 %v8937
    %v8939 = vand.u32 %v7852, 4294901760
    %v8940 = vsub.f32 %v7852, %v8939
    %v8941 = vand.u32 %v8940, 4294901760
    %8942 = vmatpush.msra.mxu0 %v8941
    %v8943 = vand.u32 %v7844, 4294901760
    %v8944 = vsub.f32 %v7844, %v8943
    %v8945 = vand.u32 %v8944, 4294901760
    %8946 = vmatpush.msra.mxu0 %v8945
    %v8947 = vand.u32 %v7836, 4294901760
    %v8948 = vsub.f32 %v7836, %v8947
    %v8949 = vand.u32 %v8948, 4294901760
    %8950 = vmatpush.msra.mxu0 %v8949
    %v8951 = vand.u32 %v7885, 4294901760
    %8952 = vmatmul.f32.gmra.mxu0 %v8951
    %v8953 = vpop.f32.mrf.mxu0
    %v8954 = vadd.f32 %v8903, %v8953
    %v8955 = vand.u32 %v7887, 4294901760
    %8956 = vmatmul.f32.gmra.mxu0 %v8955
    %v8957 = vpop.f32.mrf.mxu0
    %v8958 = vadd.f32 %v8909, %v8957
    %v8959 = vand.u32 %v7889, 4294901760
    %8960 = vmatmul.f32.gmra.mxu0 %v8959
    %v8961 = vpop.f32.mrf.mxu0
    %v8962 = vadd.f32 %v8915, %v8961
    %v8963 = vand.u32 %v7891, 4294901760
    %8964 = vmatmul.f32.gmra.mxu0 %v8963
    %v8965 = vpop.f32.mrf.mxu0
    %v8966 = vadd.f32 %v8921, %v8965
    %8967 = vdwg.mxu0
    %8968 = vmatpush.msra.mxu0 0.0
    %8969 = vmatpush.msra.mxu0 0.0
    %8970 = vmatpush.msra.mxu0 0.0
    %8971 = vmatpush.msra.mxu0 0.0
    %8972 = vmatpush.msra.mxu0 0.0
    %8973 = vmatpush.msra.mxu0 0.0
    %8974 = vmatpush.msra.mxu0 0.0
    %8975 = vmatpush.msra.mxu0 0.0
    %8976 = vmatpush.msra.mxu0 0.0
    %8977 = vmatpush.msra.mxu0 0.0
    %8978 = vmatpush.msra.mxu0 0.0
    %8979 = vmatpush.msra.mxu0 0.0
    %v8980 = vand.u32 %v7860, 4294901760
    %8981 = vmatpush.msra.mxu0 %v8980
    %v8982 = vand.u32 %v7852, 4294901760
    %8983 = vmatpush.msra.mxu0 %v8982
    %v8984 = vand.u32 %v7844, 4294901760
    %8985 = vmatpush.msra.mxu0 %v8984
    %v8986 = vand.u32 %v7836, 4294901760
    %8987 = vmatpush.msra.mxu0 %v8986
    %v8988 = vand.u32 %v7885, 4294901760
    %8989 = vmatmul.f32.gmra.mxu0 %v8988
    %v8990 = vpop.f32.mrf.mxu0
    %v8991 = vadd.f32 %v8954, %v8990
    %v8992 = vand.u32 %v7887, 4294901760
    %8993 = vmatmul.f32.gmra.mxu0 %v8992
    %v8994 = vpop.f32.mrf.mxu0
    %v8995 = vadd.f32 %v8958, %v8994
    %v8996 = vand.u32 %v7889, 4294901760
    %8997 = vmatmul.f32.gmra.mxu0 %v8996
    %v8998 = vpop.f32.mrf.mxu0
    %v8999 = vadd.f32 %v8962, %v8998
    %v9000 = vand.u32 %v7891, 4294901760
    %9001 = vmatmul.f32.gmra.mxu0 %v9000
    %v9002 = vpop.f32.mrf.mxu0
    %v9003 = vadd.f32 %v8966, %v9002
    %9004 = vdwg.mxu0
    %9005 = vmatpush.msra.mxu0 0.0
    %9006 = vmatpush.msra.mxu0 0.0
    %9007 = vmatpush.msra.mxu0 0.0
    %9008 = vmatpush.msra.mxu0 0.0
    %9009 = vmatpush.msra.mxu0 0.0
    %9010 = vmatpush.msra.mxu0 0.0
    %9011 = vmatpush.msra.mxu0 0.0
    %9012 = vmatpush.msra.mxu0 0.0
    %9013 = vmatpush.msra.mxu0 0.0
    %9014 = vmatpush.msra.mxu0 0.0
    %9015 = vmatpush.msra.mxu0 0.0
    %9016 = vmatpush.msra.mxu0 0.0
    %v9017 = vand.u32 %v7861, 4294901760
    %9018 = vmatpush.msra.mxu0 %v9017
    %v9019 = vand.u32 %v7853, 4294901760
    %9020 = vmatpush.msra.mxu0 %v9019
    %v9021 = vand.u32 %v7845, 4294901760
    %9022 = vmatpush.msra.mxu0 %v9021
    %v9023 = vand.u32 %v7837, 4294901760
    %9024 = vmatpush.msra.mxu0 %v9023
    %v9025 = vand.u32 %v7885, 4294901760
    %v9026 = vsub.f32 %v7885, %v9025
    %v9027 = vand.u32 %v9026, 4294901760
    %v9028 = vsub.f32 %v9026, %v9027
    %v9029 = vand.u32 %v9028, 4294901760
    %9030 = vmatmul.f32.gmra.mxu0 %v9029
    %v9031 = vpop.f32.mrf.mxu0
    %v9032 = vadd.f32 %v7868, %v9031
    %v9033 = vand.u32 %v7887, 4294901760
    %v9034 = vsub.f32 %v7887, %v9033
    %v9035 = vand.u32 %v9034, 4294901760
    %v9036 = vsub.f32 %v9034, %v9035
    %v9037 = vand.u32 %v9036, 4294901760
    %9038 = vmatmul.f32.gmra.mxu0 %v9037
    %v9039 = vpop.f32.mrf.mxu0
    %v9040 = vadd.f32 %v7873, %v9039
    %v9041 = vand.u32 %v7889, 4294901760
    %v9042 = vsub.f32 %v7889, %v9041
    %v9043 = vand.u32 %v9042, 4294901760
    %v9044 = vsub.f32 %v9042, %v9043
    %v9045 = vand.u32 %v9044, 4294901760
    %9046 = vmatmul.f32.gmra.mxu0 %v9045
    %v9047 = vpop.f32.mrf.mxu0
    %v9048 = vadd.f32 %v7878, %v9047
    %v9049 = vand.u32 %v7891, 4294901760
    %v9050 = vsub.f32 %v7891, %v9049
    %v9051 = vand.u32 %v9050, 4294901760
    %v9052 = vsub.f32 %v9050, %v9051
    %v9053 = vand.u32 %v9052, 4294901760
    %9054 = vmatmul.f32.gmra.mxu0 %v9053
    %v9055 = vpop.f32.mrf.mxu0
    %v9056 = vadd.f32 %v7883, %v9055
    %9057 = vdwg.mxu0
    %9058 = vmatpush.msra.mxu0 0.0
    %9059 = vmatpush.msra.mxu0 0.0
    %9060 = vmatpush.msra.mxu0 0.0
    %9061 = vmatpush.msra.mxu0 0.0
    %9062 = vmatpush.msra.mxu0 0.0
    %9063 = vmatpush.msra.mxu0 0.0
    %9064 = vmatpush.msra.mxu0 0.0
    %9065 = vmatpush.msra.mxu0 0.0
    %9066 = vmatpush.msra.mxu0 0.0
    %9067 = vmatpush.msra.mxu0 0.0
    %9068 = vmatpush.msra.mxu0 0.0
    %9069 = vmatpush.msra.mxu0 0.0
    %v9070 = vand.u32 %v7861, 4294901760
    %v9071 = vsub.f32 %v7861, %v9070
    %v9072 = vand.u32 %v9071, 4294901760
    %v9073 = vsub.f32 %v9071, %v9072
    %v9074 = vand.u32 %v9073, 4294901760
    %9075 = vmatpush.msra.mxu0 %v9074
    %v9076 = vand.u32 %v7853, 4294901760
    %v9077 = vsub.f32 %v7853, %v9076
    %v9078 = vand.u32 %v9077, 4294901760
    %v9079 = vsub.f32 %v9077, %v9078
    %v9080 = vand.u32 %v9079, 4294901760
    %9081 = vmatpush.msra.mxu0 %v9080
    %v9082 = vand.u32 %v7845, 4294901760
    %v9083 = vsub.f32 %v7845, %v9082
    %v9084 = vand.u32 %v9083, 4294901760
    %v9085 = vsub.f32 %v9083, %v9084
    %v9086 = vand.u32 %v9085, 4294901760
    %9087 = vmatpush.msra.mxu0 %v9086
    %v9088 = vand.u32 %v7837, 4294901760
    %v9089 = vsub.f32 %v7837, %v9088
    %v9090 = vand.u32 %v9089, 4294901760
    %v9091 = vsub.f32 %v9089, %v9090
    %v9092 = vand.u32 %v9091, 4294901760
    %9093 = vmatpush.msra.mxu0 %v9092
    %v9094 = vand.u32 %v7885, 4294901760
    %9095 = vmatmul.f32.gmra.mxu0 %v9094
    %v9096 = vpop.f32.mrf.mxu0
    %v9097 = vadd.f32 %v9032, %v9096
    %v9098 = vand.u32 %v7887, 4294901760
    %9099 = vmatmul.f32.gmra.mxu0 %v9098
    %v9100 = vpop.f32.mrf.mxu0
    %v9101 = vadd.f32 %v9040, %v9100
    %v9102 = vand.u32 %v7889, 4294901760
    %9103 = vmatmul.f32.gmra.mxu0 %v9102
    %v9104 = vpop.f32.mrf.mxu0
    %v9105 = vadd.f32 %v9048, %v9104
    %v9106 = vand.u32 %v7891, 4294901760
    %9107 = vmatmul.f32.gmra.mxu0 %v9106
    %v9108 = vpop.f32.mrf.mxu0
    %v9109 = vadd.f32 %v9056, %v9108
    %9110 = vdwg.mxu0
    %9111 = vmatpush.msra.mxu0 0.0
    %9112 = vmatpush.msra.mxu0 0.0
    %9113 = vmatpush.msra.mxu0 0.0
    %9114 = vmatpush.msra.mxu0 0.0
    %9115 = vmatpush.msra.mxu0 0.0
    %9116 = vmatpush.msra.mxu0 0.0
    %9117 = vmatpush.msra.mxu0 0.0
    %9118 = vmatpush.msra.mxu0 0.0
    %9119 = vmatpush.msra.mxu0 0.0
    %9120 = vmatpush.msra.mxu0 0.0
    %9121 = vmatpush.msra.mxu0 0.0
    %9122 = vmatpush.msra.mxu0 0.0
    %v9123 = vand.u32 %v7861, 4294901760
    %v9124 = vsub.f32 %v7861, %v9123
    %9125 = vmatpush.msra.mxu0 %v9124
    %v9126 = vand.u32 %v7853, 4294901760
    %v9127 = vsub.f32 %v7853, %v9126
    %9128 = vmatpush.msra.mxu0 %v9127
    %v9129 = vand.u32 %v7845, 4294901760
    %v9130 = vsub.f32 %v7845, %v9129
    %9131 = vmatpush.msra.mxu0 %v9130
    %v9132 = vand.u32 %v7837, 4294901760
    %v9133 = vsub.f32 %v7837, %v9132
    %9134 = vmatpush.msra.mxu0 %v9133
    %v9135 = vand.u32 %v7885, 4294901760
    %v9136 = vsub.f32 %v7885, %v9135
    %9137 = vmatmul.f32.gmra.mxu0 %v9136
    %v9138 = vpop.f32.mrf.mxu0
    %v9139 = vadd.f32 %v9097, %v9138
    %v9140 = vand.u32 %v7887, 4294901760
    %v9141 = vsub.f32 %v7887, %v9140
    %9142 = vmatmul.f32.gmra.mxu0 %v9141
    %v9143 = vpop.f32.mrf.mxu0
    %v9144 = vadd.f32 %v9101, %v9143
    %v9145 = vand.u32 %v7889, 4294901760
    %v9146 = vsub.f32 %v7889, %v9145
    %9147 = vmatmul.f32.gmra.mxu0 %v9146
    %v9148 = vpop.f32.mrf.mxu0
    %v9149 = vadd.f32 %v9105, %v9148
    %v9150 = vand.u32 %v7891, 4294901760
    %v9151 = vsub.f32 %v7891, %v9150
    %9152 = vmatmul.f32.gmra.mxu0 %v9151
    %v9153 = vpop.f32.mrf.mxu0
    %v9154 = vadd.f32 %v9109, %v9153
    %9155 = vdwg.mxu0
    %9156 = vmatpush.msra.mxu0 0.0
    %9157 = vmatpush.msra.mxu0 0.0
    %9158 = vmatpush.msra.mxu0 0.0
    %9159 = vmatpush.msra.mxu0 0.0
    %9160 = vmatpush.msra.mxu0 0.0
    %9161 = vmatpush.msra.mxu0 0.0
    %9162 = vmatpush.msra.mxu0 0.0
    %9163 = vmatpush.msra.mxu0 0.0
    %9164 = vmatpush.msra.mxu0 0.0
    %9165 = vmatpush.msra.mxu0 0.0
    %9166 = vmatpush.msra.mxu0 0.0
    %9167 = vmatpush.msra.mxu0 0.0
    %v9168 = vand.u32 %v7861, 4294901760
    %9169 = vmatpush.msra.mxu0 %v9168
    %v9170 = vand.u32 %v7853, 4294901760
    %9171 = vmatpush.msra.mxu0 %v9170
    %v9172 = vand.u32 %v7845, 4294901760
    %9173 = vmatpush.msra.mxu0 %v9172
    %v9174 = vand.u32 %v7837, 4294901760
    %9175 = vmatpush.msra.mxu0 %v9174
    %v9176 = vand.u32 %v7885, 4294901760
    %v9177 = vsub.f32 %v7885, %v9176
    %v9178 = vand.u32 %v9177, 4294901760
    %9179 = vmatmul.f32.gmra.mxu0 %v9178
    %v9180 = vpop.f32.mrf.mxu0
    %v9181 = vadd.f32 %v9139, %v9180
    %v9182 = vand.u32 %v7887, 4294901760
    %v9183 = vsub.f32 %v7887, %v9182
    %v9184 = vand.u32 %v9183, 4294901760
    %9185 = vmatmul.f32.gmra.mxu0 %v9184
    %v9186 = vpop.f32.mrf.mxu0
    %v9187 = vadd.f32 %v9144, %v9186
    %v9188 = vand.u32 %v7889, 4294901760
    %v9189 = vsub.f32 %v7889, %v9188
    %v9190 = vand.u32 %v9189, 4294901760
    %9191 = vmatmul.f32.gmra.mxu0 %v9190
    %v9192 = vpop.f32.mrf.mxu0
    %v9193 = vadd.f32 %v9149, %v9192
    %v9194 = vand.u32 %v7891, 4294901760
    %v9195 = vsub.f32 %v7891, %v9194
    %v9196 = vand.u32 %v9195, 4294901760
    %9197 = vmatmul.f32.gmra.mxu0 %v9196
    %v9198 = vpop.f32.mrf.mxu0
    %v9199 = vadd.f32 %v9154, %v9198
    %9200 = vdwg.mxu0
    %9201 = vmatpush.msra.mxu0 0.0
    %9202 = vmatpush.msra.mxu0 0.0
    %9203 = vmatpush.msra.mxu0 0.0
    %9204 = vmatpush.msra.mxu0 0.0
    %9205 = vmatpush.msra.mxu0 0.0
    %9206 = vmatpush.msra.mxu0 0.0
    %9207 = vmatpush.msra.mxu0 0.0
    %9208 = vmatpush.msra.mxu0 0.0
    %9209 = vmatpush.msra.mxu0 0.0
    %9210 = vmatpush.msra.mxu0 0.0
    %9211 = vmatpush.msra.mxu0 0.0
    %9212 = vmatpush.msra.mxu0 0.0
    %v9213 = vand.u32 %v7861, 4294901760
    %v9214 = vsub.f32 %v7861, %v9213
    %v9215 = vand.u32 %v9214, 4294901760
    %9216 = vmatpush.msra.mxu0 %v9215
    %v9217 = vand.u32 %v7853, 4294901760
    %v9218 = vsub.f32 %v7853, %v9217
    %v9219 = vand.u32 %v9218, 4294901760
    %9220 = vmatpush.msra.mxu0 %v9219
    %v9221 = vand.u32 %v7845, 4294901760
    %v9222 = vsub.f32 %v7845, %v9221
    %v9223 = vand.u32 %v9222, 4294901760
    %9224 = vmatpush.msra.mxu0 %v9223
    %v9225 = vand.u32 %v7837, 4294901760
    %v9226 = vsub.f32 %v7837, %v9225
    %v9227 = vand.u32 %v9226, 4294901760
    %9228 = vmatpush.msra.mxu0 %v9227
    %v9229 = vand.u32 %v7885, 4294901760
    %9230 = vmatmul.f32.gmra.mxu0 %v9229
    %v9231 = vpop.f32.mrf.mxu0
    %v9232 = vadd.f32 %v9181, %v9231
    %v9233 = vand.u32 %v7887, 4294901760
    %9234 = vmatmul.f32.gmra.mxu0 %v9233
    %v9235 = vpop.f32.mrf.mxu0
    %v9236 = vadd.f32 %v9187, %v9235
    %v9237 = vand.u32 %v7889, 4294901760
    %9238 = vmatmul.f32.gmra.mxu0 %v9237
    %v9239 = vpop.f32.mrf.mxu0
    %v9240 = vadd.f32 %v9193, %v9239
    %v9241 = vand.u32 %v7891, 4294901760
    %9242 = vmatmul.f32.gmra.mxu0 %v9241
    %v9243 = vpop.f32.mrf.mxu0
    %v9244 = vadd.f32 %v9199, %v9243
    %9245 = vdwg.mxu0
    %9246 = vmatpush.msra.mxu0 0.0
    %9247 = vmatpush.msra.mxu0 0.0
    %9248 = vmatpush.msra.mxu0 0.0
    %9249 = vmatpush.msra.mxu0 0.0
    %9250 = vmatpush.msra.mxu0 0.0
    %9251 = vmatpush.msra.mxu0 0.0
    %9252 = vmatpush.msra.mxu0 0.0
    %9253 = vmatpush.msra.mxu0 0.0
    %9254 = vmatpush.msra.mxu0 0.0
    %9255 = vmatpush.msra.mxu0 0.0
    %9256 = vmatpush.msra.mxu0 0.0
    %9257 = vmatpush.msra.mxu0 0.0
    %v9258 = vand.u32 %v7861, 4294901760
    %9259 = vmatpush.msra.mxu0 %v9258
    %v9260 = vand.u32 %v7853, 4294901760
    %9261 = vmatpush.msra.mxu0 %v9260
    %v9262 = vand.u32 %v7845, 4294901760
    %9263 = vmatpush.msra.mxu0 %v9262
    %v9264 = vand.u32 %v7837, 4294901760
    %9265 = vmatpush.msra.mxu0 %v9264
    %v9266 = vand.u32 %v7885, 4294901760
    %9267 = vmatmul.f32.gmra.mxu0 %v9266
    %v9268 = vpop.f32.mrf.mxu0
    %v9269 = vadd.f32 %v9232, %v9268
    %v9270 = vand.u32 %v7887, 4294901760
    %9271 = vmatmul.f32.gmra.mxu0 %v9270
    %v9272 = vpop.f32.mrf.mxu0
    %v9273 = vadd.f32 %v9236, %v9272
    %v9274 = vand.u32 %v7889, 4294901760
    %9275 = vmatmul.f32.gmra.mxu0 %v9274
    %v9276 = vpop.f32.mrf.mxu0
    %v9277 = vadd.f32 %v9240, %v9276
    %v9278 = vand.u32 %v7891, 4294901760
    %9279 = vmatmul.f32.gmra.mxu0 %v9278
    %v9280 = vpop.f32.mrf.mxu0
    %v9281 = vadd.f32 %v9244, %v9280
    %9282 = vdwg.mxu0
    %9283 = vmatpush.msra.mxu0 0.0
    %9284 = vmatpush.msra.mxu0 0.0
    %9285 = vmatpush.msra.mxu0 0.0
    %9286 = vmatpush.msra.mxu0 0.0
    %9287 = vmatpush.msra.mxu0 0.0
    %9288 = vmatpush.msra.mxu0 0.0
    %9289 = vmatpush.msra.mxu0 0.0
    %9290 = vmatpush.msra.mxu0 0.0
    %9291 = vmatpush.msra.mxu0 0.0
    %9292 = vmatpush.msra.mxu0 0.0
    %9293 = vmatpush.msra.mxu0 0.0
    %9294 = vmatpush.msra.mxu0 0.0
    %v9295 = vand.u32 %v7862, 4294901760
    %9296 = vmatpush.msra.mxu0 %v9295
    %v9297 = vand.u32 %v7854, 4294901760
    %9298 = vmatpush.msra.mxu0 %v9297
    %v9299 = vand.u32 %v7846, 4294901760
    %9300 = vmatpush.msra.mxu0 %v9299
    %v9301 = vand.u32 %v7838, 4294901760
    %9302 = vmatpush.msra.mxu0 %v9301
    %v9303 = vand.u32 %v7885, 4294901760
    %v9304 = vsub.f32 %v7885, %v9303
    %v9305 = vand.u32 %v9304, 4294901760
    %v9306 = vsub.f32 %v9304, %v9305
    %v9307 = vand.u32 %v9306, 4294901760
    %9308 = vmatmul.f32.gmra.mxu0 %v9307
    %v9309 = vpop.f32.mrf.mxu0
    %v9310 = vadd.f32 %v7868, %v9309
    %v9311 = vand.u32 %v7887, 4294901760
    %v9312 = vsub.f32 %v7887, %v9311
    %v9313 = vand.u32 %v9312, 4294901760
    %v9314 = vsub.f32 %v9312, %v9313
    %v9315 = vand.u32 %v9314, 4294901760
    %9316 = vmatmul.f32.gmra.mxu0 %v9315
    %v9317 = vpop.f32.mrf.mxu0
    %v9318 = vadd.f32 %v7873, %v9317
    %v9319 = vand.u32 %v7889, 4294901760
    %v9320 = vsub.f32 %v7889, %v9319
    %v9321 = vand.u32 %v9320, 4294901760
    %v9322 = vsub.f32 %v9320, %v9321
    %v9323 = vand.u32 %v9322, 4294901760
    %9324 = vmatmul.f32.gmra.mxu0 %v9323
    %v9325 = vpop.f32.mrf.mxu0
    %v9326 = vadd.f32 %v7878, %v9325
    %v9327 = vand.u32 %v7891, 4294901760
    %v9328 = vsub.f32 %v7891, %v9327
    %v9329 = vand.u32 %v9328, 4294901760
    %v9330 = vsub.f32 %v9328, %v9329
    %v9331 = vand.u32 %v9330, 4294901760
    %9332 = vmatmul.f32.gmra.mxu0 %v9331
    %v9333 = vpop.f32.mrf.mxu0
    %v9334 = vadd.f32 %v7883, %v9333
    %9335 = vdwg.mxu0
    %9336 = vmatpush.msra.mxu0 0.0
    %9337 = vmatpush.msra.mxu0 0.0
    %9338 = vmatpush.msra.mxu0 0.0
    %9339 = vmatpush.msra.mxu0 0.0
    %9340 = vmatpush.msra.mxu0 0.0
    %9341 = vmatpush.msra.mxu0 0.0
    %9342 = vmatpush.msra.mxu0 0.0
    %9343 = vmatpush.msra.mxu0 0.0
    %9344 = vmatpush.msra.mxu0 0.0
    %9345 = vmatpush.msra.mxu0 0.0
    %9346 = vmatpush.msra.mxu0 0.0
    %9347 = vmatpush.msra.mxu0 0.0
    %v9348 = vand.u32 %v7862, 4294901760
    %v9349 = vsub.f32 %v7862, %v9348
    %v9350 = vand.u32 %v9349, 4294901760
    %v9351 = vsub.f32 %v9349, %v9350
    %v9352 = vand.u32 %v9351, 4294901760
    %9353 = vmatpush.msra.mxu0 %v9352
    %v9354 = vand.u32 %v7854, 4294901760
    %v9355 = vsub.f32 %v7854, %v9354
    %v9356 = vand.u32 %v9355, 4294901760
    %v9357 = vsub.f32 %v9355, %v9356
    %v9358 = vand.u32 %v9357, 4294901760
    %9359 = vmatpush.msra.mxu0 %v9358
    %v9360 = vand.u32 %v7846, 4294901760
    %v9361 = vsub.f32 %v7846, %v9360
    %v9362 = vand.u32 %v9361, 4294901760
    %v9363 = vsub.f32 %v9361, %v9362
    %v9364 = vand.u32 %v9363, 4294901760
    %9365 = vmatpush.msra.mxu0 %v9364
    %v9366 = vand.u32 %v7838, 4294901760
    %v9367 = vsub.f32 %v7838, %v9366
    %v9368 = vand.u32 %v9367, 4294901760
    %v9369 = vsub.f32 %v9367, %v9368
    %v9370 = vand.u32 %v9369, 4294901760
    %9371 = vmatpush.msra.mxu0 %v9370
    %v9372 = vand.u32 %v7885, 4294901760
    %9373 = vmatmul.f32.gmra.mxu0 %v9372
    %v9374 = vpop.f32.mrf.mxu0
    %v9375 = vadd.f32 %v9310, %v9374
    %v9376 = vand.u32 %v7887, 4294901760
    %9377 = vmatmul.f32.gmra.mxu0 %v9376
    %v9378 = vpop.f32.mrf.mxu0
    %v9379 = vadd.f32 %v9318, %v9378
    %v9380 = vand.u32 %v7889, 4294901760
    %9381 = vmatmul.f32.gmra.mxu0 %v9380
    %v9382 = vpop.f32.mrf.mxu0
    %v9383 = vadd.f32 %v9326, %v9382
    %v9384 = vand.u32 %v7891, 4294901760
    %9385 = vmatmul.f32.gmra.mxu0 %v9384
    %v9386 = vpop.f32.mrf.mxu0
    %v9387 = vadd.f32 %v9334, %v9386
    %9388 = vdwg.mxu0
    %9389 = vmatpush.msra.mxu0 0.0
    %9390 = vmatpush.msra.mxu0 0.0
    %9391 = vmatpush.msra.mxu0 0.0
    %9392 = vmatpush.msra.mxu0 0.0
    %9393 = vmatpush.msra.mxu0 0.0
    %9394 = vmatpush.msra.mxu0 0.0
    %9395 = vmatpush.msra.mxu0 0.0
    %9396 = vmatpush.msra.mxu0 0.0
    %9397 = vmatpush.msra.mxu0 0.0
    %9398 = vmatpush.msra.mxu0 0.0
    %9399 = vmatpush.msra.mxu0 0.0
    %9400 = vmatpush.msra.mxu0 0.0
    %v9401 = vand.u32 %v7862, 4294901760
    %v9402 = vsub.f32 %v7862, %v9401
    %9403 = vmatpush.msra.mxu0 %v9402
    %v9404 = vand.u32 %v7854, 4294901760
    %v9405 = vsub.f32 %v7854, %v9404
    %9406 = vmatpush.msra.mxu0 %v9405
    %v9407 = vand.u32 %v7846, 4294901760
    %v9408 = vsub.f32 %v7846, %v9407
    %9409 = vmatpush.msra.mxu0 %v9408
    %v9410 = vand.u32 %v7838, 4294901760
    %v9411 = vsub.f32 %v7838, %v9410
    %9412 = vmatpush.msra.mxu0 %v9411
    %v9413 = vand.u32 %v7885, 4294901760
    %v9414 = vsub.f32 %v7885, %v9413
    %9415 = vmatmul.f32.gmra.mxu0 %v9414
    %v9416 = vpop.f32.mrf.mxu0
    %v9417 = vadd.f32 %v9375, %v9416
    %v9418 = vand.u32 %v7887, 4294901760
    %v9419 = vsub.f32 %v7887, %v9418
    %9420 = vmatmul.f32.gmra.mxu0 %v9419
    %v9421 = vpop.f32.mrf.mxu0
    %v9422 = vadd.f32 %v9379, %v9421
    %v9423 = vand.u32 %v7889, 4294901760
    %v9424 = vsub.f32 %v7889, %v9423
    %9425 = vmatmul.f32.gmra.mxu0 %v9424
    %v9426 = vpop.f32.mrf.mxu0
    %v9427 = vadd.f32 %v9383, %v9426
    %v9428 = vand.u32 %v7891, 4294901760
    %v9429 = vsub.f32 %v7891, %v9428
    %9430 = vmatmul.f32.gmra.mxu0 %v9429
    %v9431 = vpop.f32.mrf.mxu0
    %v9432 = vadd.f32 %v9387, %v9431
    %9433 = vdwg.mxu0
    %9434 = vmatpush.msra.mxu0 0.0
    %9435 = vmatpush.msra.mxu0 0.0
    %9436 = vmatpush.msra.mxu0 0.0
    %9437 = vmatpush.msra.mxu0 0.0
    %9438 = vmatpush.msra.mxu0 0.0
    %9439 = vmatpush.msra.mxu0 0.0
    %9440 = vmatpush.msra.mxu0 0.0
    %9441 = vmatpush.msra.mxu0 0.0
    %9442 = vmatpush.msra.mxu0 0.0
    %9443 = vmatpush.msra.mxu0 0.0
    %9444 = vmatpush.msra.mxu0 0.0
    %9445 = vmatpush.msra.mxu0 0.0
    %v9446 = vand.u32 %v7862, 4294901760
    %9447 = vmatpush.msra.mxu0 %v9446
    %v9448 = vand.u32 %v7854, 4294901760
    %9449 = vmatpush.msra.mxu0 %v9448
    %v9450 = vand.u32 %v7846, 4294901760
    %9451 = vmatpush.msra.mxu0 %v9450
    %v9452 = vand.u32 %v7838, 4294901760
    %9453 = vmatpush.msra.mxu0 %v9452
    %v9454 = vand.u32 %v7885, 4294901760
    %v9455 = vsub.f32 %v7885, %v9454
    %v9456 = vand.u32 %v9455, 4294901760
    %9457 = vmatmul.f32.gmra.mxu0 %v9456
    %v9458 = vpop.f32.mrf.mxu0
    %v9459 = vadd.f32 %v9417, %v9458
    %v9460 = vand.u32 %v7887, 4294901760
    %v9461 = vsub.f32 %v7887, %v9460
    %v9462 = vand.u32 %v9461, 4294901760
    %9463 = vmatmul.f32.gmra.mxu0 %v9462
    %v9464 = vpop.f32.mrf.mxu0
    %v9465 = vadd.f32 %v9422, %v9464
    %v9466 = vand.u32 %v7889, 4294901760
    %v9467 = vsub.f32 %v7889, %v9466
    %v9468 = vand.u32 %v9467, 4294901760
    %9469 = vmatmul.f32.gmra.mxu0 %v9468
    %v9470 = vpop.f32.mrf.mxu0
    %v9471 = vadd.f32 %v9427, %v9470
    %v9472 = vand.u32 %v7891, 4294901760
    %v9473 = vsub.f32 %v7891, %v9472
    %v9474 = vand.u32 %v9473, 4294901760
    %9475 = vmatmul.f32.gmra.mxu0 %v9474
    %v9476 = vpop.f32.mrf.mxu0
    %v9477 = vadd.f32 %v9432, %v9476
    %9478 = vdwg.mxu0
    %9479 = vmatpush.msra.mxu0 0.0
    %9480 = vmatpush.msra.mxu0 0.0
    %9481 = vmatpush.msra.mxu0 0.0
    %9482 = vmatpush.msra.mxu0 0.0
    %9483 = vmatpush.msra.mxu0 0.0
    %9484 = vmatpush.msra.mxu0 0.0
    %9485 = vmatpush.msra.mxu0 0.0
    %9486 = vmatpush.msra.mxu0 0.0
    %9487 = vmatpush.msra.mxu0 0.0
    %9488 = vmatpush.msra.mxu0 0.0
    %9489 = vmatpush.msra.mxu0 0.0
    %9490 = vmatpush.msra.mxu0 0.0
    %v9491 = vand.u32 %v7862, 4294901760
    %v9492 = vsub.f32 %v7862, %v9491
    %v9493 = vand.u32 %v9492, 4294901760
    %9494 = vmatpush.msra.mxu0 %v9493
    %v9495 = vand.u32 %v7854, 4294901760
    %v9496 = vsub.f32 %v7854, %v9495
    %v9497 = vand.u32 %v9496, 4294901760
    %9498 = vmatpush.msra.mxu0 %v9497
    %v9499 = vand.u32 %v7846, 4294901760
    %v9500 = vsub.f32 %v7846, %v9499
    %v9501 = vand.u32 %v9500, 4294901760
    %9502 = vmatpush.msra.mxu0 %v9501
    %v9503 = vand.u32 %v7838, 4294901760
    %v9504 = vsub.f32 %v7838, %v9503
    %v9505 = vand.u32 %v9504, 4294901760
    %9506 = vmatpush.msra.mxu0 %v9505
    %v9507 = vand.u32 %v7885, 4294901760
    %9508 = vmatmul.f32.gmra.mxu0 %v9507
    %v9509 = vpop.f32.mrf.mxu0
    %v9510 = vadd.f32 %v9459, %v9509
    %v9511 = vand.u32 %v7887, 4294901760
    %9512 = vmatmul.f32.gmra.mxu0 %v9511
    %v9513 = vpop.f32.mrf.mxu0
    %v9514 = vadd.f32 %v9465, %v9513
    %v9515 = vand.u32 %v7889, 4294901760
    %9516 = vmatmul.f32.gmra.mxu0 %v9515
    %v9517 = vpop.f32.mrf.mxu0
    %v9518 = vadd.f32 %v9471, %v9517
    %v9519 = vand.u32 %v7891, 4294901760
    %9520 = vmatmul.f32.gmra.mxu0 %v9519
    %v9521 = vpop.f32.mrf.mxu0
    %v9522 = vadd.f32 %v9477, %v9521
    %9523 = vdwg.mxu0
    %9524 = vmatpush.msra.mxu0 0.0
    %9525 = vmatpush.msra.mxu0 0.0
    %9526 = vmatpush.msra.mxu0 0.0
    %9527 = vmatpush.msra.mxu0 0.0
    %9528 = vmatpush.msra.mxu0 0.0
    %9529 = vmatpush.msra.mxu0 0.0
    %9530 = vmatpush.msra.mxu0 0.0
    %9531 = vmatpush.msra.mxu0 0.0
    %9532 = vmatpush.msra.mxu0 0.0
    %9533 = vmatpush.msra.mxu0 0.0
    %9534 = vmatpush.msra.mxu0 0.0
    %9535 = vmatpush.msra.mxu0 0.0
    %v9536 = vand.u32 %v7862, 4294901760
    %9537 = vmatpush.msra.mxu0 %v9536
    %v9538 = vand.u32 %v7854, 4294901760
    %9539 = vmatpush.msra.mxu0 %v9538
    %v9540 = vand.u32 %v7846, 4294901760
    %9541 = vmatpush.msra.mxu0 %v9540
    %v9542 = vand.u32 %v7838, 4294901760
    %9543 = vmatpush.msra.mxu0 %v9542
    %v9544 = vand.u32 %v7885, 4294901760
    %9545 = vmatmul.f32.gmra.mxu0 %v9544
    %v9546 = vpop.f32.mrf.mxu0
    %v9547 = vadd.f32 %v9510, %v9546
    %v9548 = vand.u32 %v7887, 4294901760
    %9549 = vmatmul.f32.gmra.mxu0 %v9548
    %v9550 = vpop.f32.mrf.mxu0
    %v9551 = vadd.f32 %v9514, %v9550
    %v9552 = vand.u32 %v7889, 4294901760
    %9553 = vmatmul.f32.gmra.mxu0 %v9552
    %v9554 = vpop.f32.mrf.mxu0
    %v9555 = vadd.f32 %v9518, %v9554
    %v9556 = vand.u32 %v7891, 4294901760
    %9557 = vmatmul.f32.gmra.mxu0 %v9556
    %v9558 = vpop.f32.mrf.mxu0
    %v9559 = vadd.f32 %v9522, %v9558
    %9560 = vdwg.mxu0
    %9561 = vmatpush.msra.mxu0 0.0
    %9562 = vmatpush.msra.mxu0 0.0
    %9563 = vmatpush.msra.mxu0 0.0
    %9564 = vmatpush.msra.mxu0 0.0
    %9565 = vmatpush.msra.mxu0 0.0
    %9566 = vmatpush.msra.mxu0 0.0
    %9567 = vmatpush.msra.mxu0 0.0
    %9568 = vmatpush.msra.mxu0 0.0
    %9569 = vmatpush.msra.mxu0 0.0
    %9570 = vmatpush.msra.mxu0 0.0
    %9571 = vmatpush.msra.mxu0 0.0
    %9572 = vmatpush.msra.mxu0 0.0
    %v9573 = vand.u32 %v7863, 4294901760
    %9574 = vmatpush.msra.mxu0 %v9573
    %v9575 = vand.u32 %v7855, 4294901760
    %9576 = vmatpush.msra.mxu0 %v9575
    %v9577 = vand.u32 %v7847, 4294901760
    %9578 = vmatpush.msra.mxu0 %v9577
    %v9579 = vand.u32 %v7839, 4294901760
    %9580 = vmatpush.msra.mxu0 %v9579
    %v9581 = vand.u32 %v7885, 4294901760
    %v9582 = vsub.f32 %v7885, %v9581
    %v9583 = vand.u32 %v9582, 4294901760
    %v9584 = vsub.f32 %v9582, %v9583
    %v9585 = vand.u32 %v9584, 4294901760
    %9586 = vmatmul.f32.gmra.mxu0 %v9585
    %v9587 = vpop.f32.mrf.mxu0
    %v9588 = vadd.f32 %v7868, %v9587
    %v9589 = vand.u32 %v7887, 4294901760
    %v9590 = vsub.f32 %v7887, %v9589
    %v9591 = vand.u32 %v9590, 4294901760
    %v9592 = vsub.f32 %v9590, %v9591
    %v9593 = vand.u32 %v9592, 4294901760
    %9594 = vmatmul.f32.gmra.mxu0 %v9593
    %v9595 = vpop.f32.mrf.mxu0
    %v9596 = vadd.f32 %v7873, %v9595
    %v9597 = vand.u32 %v7889, 4294901760
    %v9598 = vsub.f32 %v7889, %v9597
    %v9599 = vand.u32 %v9598, 4294901760
    %v9600 = vsub.f32 %v9598, %v9599
    %v9601 = vand.u32 %v9600, 4294901760
    %9602 = vmatmul.f32.gmra.mxu0 %v9601
    %v9603 = vpop.f32.mrf.mxu0
    %v9604 = vadd.f32 %v7878, %v9603
    %v9605 = vand.u32 %v7891, 4294901760
    %v9606 = vsub.f32 %v7891, %v9605
    %v9607 = vand.u32 %v9606, 4294901760
    %v9608 = vsub.f32 %v9606, %v9607
    %v9609 = vand.u32 %v9608, 4294901760
    %9610 = vmatmul.f32.gmra.mxu0 %v9609
    %v9611 = vpop.f32.mrf.mxu0
    %v9612 = vadd.f32 %v7883, %v9611
    %9613 = vdwg.mxu0
    %9614 = vmatpush.msra.mxu0 0.0
    %9615 = vmatpush.msra.mxu0 0.0
    %9616 = vmatpush.msra.mxu0 0.0
    %9617 = vmatpush.msra.mxu0 0.0
    %9618 = vmatpush.msra.mxu0 0.0
    %9619 = vmatpush.msra.mxu0 0.0
    %9620 = vmatpush.msra.mxu0 0.0
    %9621 = vmatpush.msra.mxu0 0.0
    %9622 = vmatpush.msra.mxu0 0.0
    %9623 = vmatpush.msra.mxu0 0.0
    %9624 = vmatpush.msra.mxu0 0.0
    %9625 = vmatpush.msra.mxu0 0.0
    %v9626 = vand.u32 %v7863, 4294901760
    %v9627 = vsub.f32 %v7863, %v9626
    %v9628 = vand.u32 %v9627, 4294901760
    %v9629 = vsub.f32 %v9627, %v9628
    %v9630 = vand.u32 %v9629, 4294901760
    %9631 = vmatpush.msra.mxu0 %v9630
    %v9632 = vand.u32 %v7855, 4294901760
    %v9633 = vsub.f32 %v7855, %v9632
    %v9634 = vand.u32 %v9633, 4294901760
    %v9635 = vsub.f32 %v9633, %v9634
    %v9636 = vand.u32 %v9635, 4294901760
    %9637 = vmatpush.msra.mxu0 %v9636
    %v9638 = vand.u32 %v7847, 4294901760
    %v9639 = vsub.f32 %v7847, %v9638
    %v9640 = vand.u32 %v9639, 4294901760
    %v9641 = vsub.f32 %v9639, %v9640
    %v9642 = vand.u32 %v9641, 4294901760
    %9643 = vmatpush.msra.mxu0 %v9642
    %v9644 = vand.u32 %v7839, 4294901760
    %v9645 = vsub.f32 %v7839, %v9644
    %v9646 = vand.u32 %v9645, 4294901760
    %v9647 = vsub.f32 %v9645, %v9646
    %v9648 = vand.u32 %v9647, 4294901760
    %9649 = vmatpush.msra.mxu0 %v9648
    %v9650 = vand.u32 %v7885, 4294901760
    %9651 = vmatmul.f32.gmra.mxu0 %v9650
    %v9652 = vpop.f32.mrf.mxu0
    %v9653 = vadd.f32 %v9588, %v9652
    %v9654 = vand.u32 %v7887, 4294901760
    %9655 = vmatmul.f32.gmra.mxu0 %v9654
    %v9656 = vpop.f32.mrf.mxu0
    %v9657 = vadd.f32 %v9596, %v9656
    %v9658 = vand.u32 %v7889, 4294901760
    %9659 = vmatmul.f32.gmra.mxu0 %v9658
    %v9660 = vpop.f32.mrf.mxu0
    %v9661 = vadd.f32 %v9604, %v9660
    %v9662 = vand.u32 %v7891, 4294901760
    %9663 = vmatmul.f32.gmra.mxu0 %v9662
    %v9664 = vpop.f32.mrf.mxu0
    %v9665 = vadd.f32 %v9612, %v9664
    %9666 = vdwg.mxu0
    %9667 = vmatpush.msra.mxu0 0.0
    %9668 = vmatpush.msra.mxu0 0.0
    %9669 = vmatpush.msra.mxu0 0.0
    %9670 = vmatpush.msra.mxu0 0.0
    %9671 = vmatpush.msra.mxu0 0.0
    %9672 = vmatpush.msra.mxu0 0.0
    %9673 = vmatpush.msra.mxu0 0.0
    %9674 = vmatpush.msra.mxu0 0.0
    %9675 = vmatpush.msra.mxu0 0.0
    %9676 = vmatpush.msra.mxu0 0.0
    %9677 = vmatpush.msra.mxu0 0.0
    %9678 = vmatpush.msra.mxu0 0.0
    %v9679 = vand.u32 %v7863, 4294901760
    %v9680 = vsub.f32 %v7863, %v9679
    %9681 = vmatpush.msra.mxu0 %v9680
    %v9682 = vand.u32 %v7855, 4294901760
    %v9683 = vsub.f32 %v7855, %v9682
    %9684 = vmatpush.msra.mxu0 %v9683
    %v9685 = vand.u32 %v7847, 4294901760
    %v9686 = vsub.f32 %v7847, %v9685
    %9687 = vmatpush.msra.mxu0 %v9686
    %v9688 = vand.u32 %v7839, 4294901760
    %v9689 = vsub.f32 %v7839, %v9688
    %9690 = vmatpush.msra.mxu0 %v9689
    %v9691 = vand.u32 %v7885, 4294901760
    %v9692 = vsub.f32 %v7885, %v9691
    %9693 = vmatmul.f32.gmra.mxu0 %v9692
    %v9694 = vpop.f32.mrf.mxu0
    %v9695 = vadd.f32 %v9653, %v9694
    %v9696 = vand.u32 %v7887, 4294901760
    %v9697 = vsub.f32 %v7887, %v9696
    %9698 = vmatmul.f32.gmra.mxu0 %v9697
    %v9699 = vpop.f32.mrf.mxu0
    %v9700 = vadd.f32 %v9657, %v9699
    %v9701 = vand.u32 %v7889, 4294901760
    %v9702 = vsub.f32 %v7889, %v9701
    %9703 = vmatmul.f32.gmra.mxu0 %v9702
    %v9704 = vpop.f32.mrf.mxu0
    %v9705 = vadd.f32 %v9661, %v9704
    %v9706 = vand.u32 %v7891, 4294901760
    %v9707 = vsub.f32 %v7891, %v9706
    %9708 = vmatmul.f32.gmra.mxu0 %v9707
    %v9709 = vpop.f32.mrf.mxu0
    %v9710 = vadd.f32 %v9665, %v9709
    %9711 = vdwg.mxu0
    %9712 = vmatpush.msra.mxu0 0.0
    %9713 = vmatpush.msra.mxu0 0.0
    %9714 = vmatpush.msra.mxu0 0.0
    %9715 = vmatpush.msra.mxu0 0.0
    %9716 = vmatpush.msra.mxu0 0.0
    %9717 = vmatpush.msra.mxu0 0.0
    %9718 = vmatpush.msra.mxu0 0.0
    %9719 = vmatpush.msra.mxu0 0.0
    %9720 = vmatpush.msra.mxu0 0.0
    %9721 = vmatpush.msra.mxu0 0.0
    %9722 = vmatpush.msra.mxu0 0.0
    %9723 = vmatpush.msra.mxu0 0.0
    %v9724 = vand.u32 %v7863, 4294901760
    %9725 = vmatpush.msra.mxu0 %v9724
    %v9726 = vand.u32 %v7855, 4294901760
    %9727 = vmatpush.msra.mxu0 %v9726
    %v9728 = vand.u32 %v7847, 4294901760
    %9729 = vmatpush.msra.mxu0 %v9728
    %v9730 = vand.u32 %v7839, 4294901760
    %9731 = vmatpush.msra.mxu0 %v9730
    %v9732 = vand.u32 %v7885, 4294901760
    %v9733 = vsub.f32 %v7885, %v9732
    %v9734 = vand.u32 %v9733, 4294901760
    %9735 = vmatmul.f32.gmra.mxu0 %v9734
    %v9736 = vpop.f32.mrf.mxu0
    %v9737 = vadd.f32 %v9695, %v9736
    %v9738 = vand.u32 %v7887, 4294901760
    %v9739 = vsub.f32 %v7887, %v9738
    %v9740 = vand.u32 %v9739, 4294901760
    %9741 = vmatmul.f32.gmra.mxu0 %v9740
    %v9742 = vpop.f32.mrf.mxu0
    %v9743 = vadd.f32 %v9700, %v9742
    %v9744 = vand.u32 %v7889, 4294901760
    %v9745 = vsub.f32 %v7889, %v9744
    %v9746 = vand.u32 %v9745, 4294901760
    %9747 = vmatmul.f32.gmra.mxu0 %v9746
    %v9748 = vpop.f32.mrf.mxu0
    %v9749 = vadd.f32 %v9705, %v9748
    %v9750 = vand.u32 %v7891, 4294901760
    %v9751 = vsub.f32 %v7891, %v9750
    %v9752 = vand.u32 %v9751, 4294901760
    %9753 = vmatmul.f32.gmra.mxu0 %v9752
    %v9754 = vpop.f32.mrf.mxu0
    %v9755 = vadd.f32 %v9710, %v9754
    %9756 = vdwg.mxu0
    %9757 = vmatpush.msra.mxu0 0.0
    %9758 = vmatpush.msra.mxu0 0.0
    %9759 = vmatpush.msra.mxu0 0.0
    %9760 = vmatpush.msra.mxu0 0.0
    %9761 = vmatpush.msra.mxu0 0.0
    %9762 = vmatpush.msra.mxu0 0.0
    %9763 = vmatpush.msra.mxu0 0.0
    %9764 = vmatpush.msra.mxu0 0.0
    %9765 = vmatpush.msra.mxu0 0.0
    %9766 = vmatpush.msra.mxu0 0.0
    %9767 = vmatpush.msra.mxu0 0.0
    %9768 = vmatpush.msra.mxu0 0.0
    %v9769 = vand.u32 %v7863, 4294901760
    %v9770 = vsub.f32 %v7863, %v9769
    %v9771 = vand.u32 %v9770, 4294901760
    %9772 = vmatpush.msra.mxu0 %v9771
    %v9773 = vand.u32 %v7855, 4294901760
    %v9774 = vsub.f32 %v7855, %v9773
    %v9775 = vand.u32 %v9774, 4294901760
    %9776 = vmatpush.msra.mxu0 %v9775
    %v9777 = vand.u32 %v7847, 4294901760
    %v9778 = vsub.f32 %v7847, %v9777
    %v9779 = vand.u32 %v9778, 4294901760
    %9780 = vmatpush.msra.mxu0 %v9779
    %v9781 = vand.u32 %v7839, 4294901760
    %v9782 = vsub.f32 %v7839, %v9781
    %v9783 = vand.u32 %v9782, 4294901760
    %9784 = vmatpush.msra.mxu0 %v9783
    %v9785 = vand.u32 %v7885, 4294901760
    %9786 = vmatmul.f32.gmra.mxu0 %v9785
    %v9787 = vpop.f32.mrf.mxu0
    %v9788 = vadd.f32 %v9737, %v9787
    %v9789 = vand.u32 %v7887, 4294901760
    %9790 = vmatmul.f32.gmra.mxu0 %v9789
    %v9791 = vpop.f32.mrf.mxu0
    %v9792 = vadd.f32 %v9743, %v9791
    %v9793 = vand.u32 %v7889, 4294901760
    %9794 = vmatmul.f32.gmra.mxu0 %v9793
    %v9795 = vpop.f32.mrf.mxu0
    %v9796 = vadd.f32 %v9749, %v9795
    %v9797 = vand.u32 %v7891, 4294901760
    %9798 = vmatmul.f32.gmra.mxu0 %v9797
    %v9799 = vpop.f32.mrf.mxu0
    %v9800 = vadd.f32 %v9755, %v9799
    %9801 = vdwg.mxu0
    %9802 = vmatpush.msra.mxu0 0.0
    %9803 = vmatpush.msra.mxu0 0.0
    %9804 = vmatpush.msra.mxu0 0.0
    %9805 = vmatpush.msra.mxu0 0.0
    %9806 = vmatpush.msra.mxu0 0.0
    %9807 = vmatpush.msra.mxu0 0.0
    %9808 = vmatpush.msra.mxu0 0.0
    %9809 = vmatpush.msra.mxu0 0.0
    %9810 = vmatpush.msra.mxu0 0.0
    %9811 = vmatpush.msra.mxu0 0.0
    %9812 = vmatpush.msra.mxu0 0.0
    %9813 = vmatpush.msra.mxu0 0.0
    %v9814 = vand.u32 %v7863, 4294901760
    %9815 = vmatpush.msra.mxu0 %v9814
    %v9816 = vand.u32 %v7855, 4294901760
    %9817 = vmatpush.msra.mxu0 %v9816
    %v9818 = vand.u32 %v7847, 4294901760
    %9819 = vmatpush.msra.mxu0 %v9818
    %v9820 = vand.u32 %v7839, 4294901760
    %9821 = vmatpush.msra.mxu0 %v9820
    %v9822 = vand.u32 %v7885, 4294901760
    %9823 = vmatmul.f32.gmra.mxu0 %v9822
    %v9824 = vpop.f32.mrf.mxu0
    %v9825 = vadd.f32 %v9788, %v9824
    %v9826 = vand.u32 %v7887, 4294901760
    %9827 = vmatmul.f32.gmra.mxu0 %v9826
    %v9828 = vpop.f32.mrf.mxu0
    %v9829 = vadd.f32 %v9792, %v9828
    %v9830 = vand.u32 %v7889, 4294901760
    %9831 = vmatmul.f32.gmra.mxu0 %v9830
    %v9832 = vpop.f32.mrf.mxu0
    %v9833 = vadd.f32 %v9796, %v9832
    %v9834 = vand.u32 %v7891, 4294901760
    %9835 = vmatmul.f32.gmra.mxu0 %v9834
    %v9836 = vpop.f32.mrf.mxu0
    %v9837 = vadd.f32 %v9800, %v9836
    %9838 = vdwg.mxu0
    %9839 = vmatpush.msra.mxu0 0.0
    %9840 = vmatpush.msra.mxu0 0.0
    %9841 = vmatpush.msra.mxu0 0.0
    %9842 = vmatpush.msra.mxu0 0.0
    %9843 = vmatpush.msra.mxu0 0.0
    %9844 = vmatpush.msra.mxu0 0.0
    %9845 = vmatpush.msra.mxu0 0.0
    %9846 = vmatpush.msra.mxu0 0.0
    %9847 = vmatpush.msra.mxu0 0.0
    %9848 = vmatpush.msra.mxu0 0.0
    %9849 = vmatpush.msra.mxu0 0.0
    %9850 = vmatpush.msra.mxu0 0.0
    %v9851 = vand.u32 %v7864, 4294901760
    %9852 = vmatpush.msra.mxu0 %v9851
    %v9853 = vand.u32 %v7856, 4294901760
    %9854 = vmatpush.msra.mxu0 %v9853
    %v9855 = vand.u32 %v7848, 4294901760
    %9856 = vmatpush.msra.mxu0 %v9855
    %v9857 = vand.u32 %v7840, 4294901760
    %9858 = vmatpush.msra.mxu0 %v9857
    %v9859 = vand.u32 %v7885, 4294901760
    %v9860 = vsub.f32 %v7885, %v9859
    %v9861 = vand.u32 %v9860, 4294901760
    %v9862 = vsub.f32 %v9860, %v9861
    %v9863 = vand.u32 %v9862, 4294901760
    %9864 = vmatmul.f32.gmra.mxu0 %v9863
    %v9865 = vpop.f32.mrf.mxu0
    %v9866 = vadd.f32 %v7868, %v9865
    %v9867 = vand.u32 %v7887, 4294901760
    %v9868 = vsub.f32 %v7887, %v9867
    %v9869 = vand.u32 %v9868, 4294901760
    %v9870 = vsub.f32 %v9868, %v9869
    %v9871 = vand.u32 %v9870, 4294901760
    %9872 = vmatmul.f32.gmra.mxu0 %v9871
    %v9873 = vpop.f32.mrf.mxu0
    %v9874 = vadd.f32 %v7873, %v9873
    %v9875 = vand.u32 %v7889, 4294901760
    %v9876 = vsub.f32 %v7889, %v9875
    %v9877 = vand.u32 %v9876, 4294901760
    %v9878 = vsub.f32 %v9876, %v9877
    %v9879 = vand.u32 %v9878, 4294901760
    %9880 = vmatmul.f32.gmra.mxu0 %v9879
    %v9881 = vpop.f32.mrf.mxu0
    %v9882 = vadd.f32 %v7878, %v9881
    %v9883 = vand.u32 %v7891, 4294901760
    %v9884 = vsub.f32 %v7891, %v9883
    %v9885 = vand.u32 %v9884, 4294901760
    %v9886 = vsub.f32 %v9884, %v9885
    %v9887 = vand.u32 %v9886, 4294901760
    %9888 = vmatmul.f32.gmra.mxu0 %v9887
    %v9889 = vpop.f32.mrf.mxu0
    %v9890 = vadd.f32 %v7883, %v9889
    %9891 = vdwg.mxu0
    %9892 = vmatpush.msra.mxu0 0.0
    %9893 = vmatpush.msra.mxu0 0.0
    %9894 = vmatpush.msra.mxu0 0.0
    %9895 = vmatpush.msra.mxu0 0.0
    %9896 = vmatpush.msra.mxu0 0.0
    %9897 = vmatpush.msra.mxu0 0.0
    %9898 = vmatpush.msra.mxu0 0.0
    %9899 = vmatpush.msra.mxu0 0.0
    %9900 = vmatpush.msra.mxu0 0.0
    %9901 = vmatpush.msra.mxu0 0.0
    %9902 = vmatpush.msra.mxu0 0.0
    %9903 = vmatpush.msra.mxu0 0.0
    %v9904 = vand.u32 %v7864, 4294901760
    %v9905 = vsub.f32 %v7864, %v9904
    %v9906 = vand.u32 %v9905, 4294901760
    %v9907 = vsub.f32 %v9905, %v9906
    %v9908 = vand.u32 %v9907, 4294901760
    %9909 = vmatpush.msra.mxu0 %v9908
    %v9910 = vand.u32 %v7856, 4294901760
    %v9911 = vsub.f32 %v7856, %v9910
    %v9912 = vand.u32 %v9911, 4294901760
    %v9913 = vsub.f32 %v9911, %v9912
    %v9914 = vand.u32 %v9913, 4294901760
    %9915 = vmatpush.msra.mxu0 %v9914
    %v9916 = vand.u32 %v7848, 4294901760
    %v9917 = vsub.f32 %v7848, %v9916
    %v9918 = vand.u32 %v9917, 4294901760
    %v9919 = vsub.f32 %v9917, %v9918
    %v9920 = vand.u32 %v9919, 4294901760
    %9921 = vmatpush.msra.mxu0 %v9920
    %v9922 = vand.u32 %v7840, 4294901760
    %v9923 = vsub.f32 %v7840, %v9922
    %v9924 = vand.u32 %v9923, 4294901760
    %v9925 = vsub.f32 %v9923, %v9924
    %v9926 = vand.u32 %v9925, 4294901760
    %9927 = vmatpush.msra.mxu0 %v9926
    %v9928 = vand.u32 %v7885, 4294901760
    %9929 = vmatmul.f32.gmra.mxu0 %v9928
    %v9930 = vpop.f32.mrf.mxu0
    %v9931 = vadd.f32 %v9866, %v9930
    %v9932 = vand.u32 %v7887, 4294901760
    %9933 = vmatmul.f32.gmra.mxu0 %v9932
    %v9934 = vpop.f32.mrf.mxu0
    %v9935 = vadd.f32 %v9874, %v9934
    %v9936 = vand.u32 %v7889, 4294901760
    %9937 = vmatmul.f32.gmra.mxu0 %v9936
    %v9938 = vpop.f32.mrf.mxu0
    %v9939 = vadd.f32 %v9882, %v9938
    %v9940 = vand.u32 %v7891, 4294901760
    %9941 = vmatmul.f32.gmra.mxu0 %v9940
    %v9942 = vpop.f32.mrf.mxu0
    %v9943 = vadd.f32 %v9890, %v9942
    %9944 = vdwg.mxu0
    %9945 = vmatpush.msra.mxu0 0.0
    %9946 = vmatpush.msra.mxu0 0.0
    %9947 = vmatpush.msra.mxu0 0.0
    %9948 = vmatpush.msra.mxu0 0.0
    %9949 = vmatpush.msra.mxu0 0.0
    %9950 = vmatpush.msra.mxu0 0.0
    %9951 = vmatpush.msra.mxu0 0.0
    %9952 = vmatpush.msra.mxu0 0.0
    %9953 = vmatpush.msra.mxu0 0.0
    %9954 = vmatpush.msra.mxu0 0.0
    %9955 = vmatpush.msra.mxu0 0.0
    %9956 = vmatpush.msra.mxu0 0.0
    %v9957 = vand.u32 %v7864, 4294901760
    %v9958 = vsub.f32 %v7864, %v9957
    %9959 = vmatpush.msra.mxu0 %v9958
    %v9960 = vand.u32 %v7856, 4294901760
    %v9961 = vsub.f32 %v7856, %v9960
    %9962 = vmatpush.msra.mxu0 %v9961
    %v9963 = vand.u32 %v7848, 4294901760
    %v9964 = vsub.f32 %v7848, %v9963
    %9965 = vmatpush.msra.mxu0 %v9964
    %v9966 = vand.u32 %v7840, 4294901760
    %v9967 = vsub.f32 %v7840, %v9966
    %9968 = vmatpush.msra.mxu0 %v9967
    %v9969 = vand.u32 %v7885, 4294901760
    %v9970 = vsub.f32 %v7885, %v9969
    %9971 = vmatmul.f32.gmra.mxu0 %v9970
    %v9972 = vpop.f32.mrf.mxu0
    %v9973 = vadd.f32 %v9931, %v9972
    %v9974 = vand.u32 %v7887, 4294901760
    %v9975 = vsub.f32 %v7887, %v9974
    %9976 = vmatmul.f32.gmra.mxu0 %v9975
    %v9977 = vpop.f32.mrf.mxu0
    %v9978 = vadd.f32 %v9935, %v9977
    %v9979 = vand.u32 %v7889, 4294901760
    %v9980 = vsub.f32 %v7889, %v9979
    %9981 = vmatmul.f32.gmra.mxu0 %v9980
    %v9982 = vpop.f32.mrf.mxu0
    %v9983 = vadd.f32 %v9939, %v9982
    %v9984 = vand.u32 %v7891, 4294901760
    %v9985 = vsub.f32 %v7891, %v9984
    %9986 = vmatmul.f32.gmra.mxu0 %v9985
    %v9987 = vpop.f32.mrf.mxu0
    %v9988 = vadd.f32 %v9943, %v9987
    %9989 = vdwg.mxu0
    %9990 = vmatpush.msra.mxu0 0.0
    %9991 = vmatpush.msra.mxu0 0.0
    %9992 = vmatpush.msra.mxu0 0.0
    %9993 = vmatpush.msra.mxu0 0.0
    %9994 = vmatpush.msra.mxu0 0.0
    %9995 = vmatpush.msra.mxu0 0.0
    %9996 = vmatpush.msra.mxu0 0.0
    %9997 = vmatpush.msra.mxu0 0.0
    %9998 = vmatpush.msra.mxu0 0.0
    %9999 = vmatpush.msra.mxu0 0.0
    %10000 = vmatpush.msra.mxu0 0.0
    %10001 = vmatpush.msra.mxu0 0.0
    %v10002 = vand.u32 %v7864, 4294901760
    %10003 = vmatpush.msra.mxu0 %v10002
    %v10004 = vand.u32 %v7856, 4294901760
    %10005 = vmatpush.msra.mxu0 %v10004
    %v10006 = vand.u32 %v7848, 4294901760
    %10007 = vmatpush.msra.mxu0 %v10006
    %v10008 = vand.u32 %v7840, 4294901760
    %10009 = vmatpush.msra.mxu0 %v10008
    %v10010 = vand.u32 %v7885, 4294901760
    %v10011 = vsub.f32 %v7885, %v10010
    %v10012 = vand.u32 %v10011, 4294901760
    %10013 = vmatmul.f32.gmra.mxu0 %v10012
    %v10014 = vpop.f32.mrf.mxu0
    %v10015 = vadd.f32 %v9973, %v10014
    %v10016 = vand.u32 %v7887, 4294901760
    %v10017 = vsub.f32 %v7887, %v10016
    %v10018 = vand.u32 %v10017, 4294901760
    %10019 = vmatmul.f32.gmra.mxu0 %v10018
    %v10020 = vpop.f32.mrf.mxu0
    %v10021 = vadd.f32 %v9978, %v10020
    %v10022 = vand.u32 %v7889, 4294901760
    %v10023 = vsub.f32 %v7889, %v10022
    %v10024 = vand.u32 %v10023, 4294901760
    %10025 = vmatmul.f32.gmra.mxu0 %v10024
    %v10026 = vpop.f32.mrf.mxu0
    %v10027 = vadd.f32 %v9983, %v10026
    %v10028 = vand.u32 %v7891, 4294901760
    %v10029 = vsub.f32 %v7891, %v10028
    %v10030 = vand.u32 %v10029, 4294901760
    %10031 = vmatmul.f32.gmra.mxu0 %v10030
    %v10032 = vpop.f32.mrf.mxu0
    %v10033 = vadd.f32 %v9988, %v10032
    %10034 = vdwg.mxu0
    %10035 = vmatpush.msra.mxu0 0.0
    %10036 = vmatpush.msra.mxu0 0.0
    %10037 = vmatpush.msra.mxu0 0.0
    %10038 = vmatpush.msra.mxu0 0.0
    %10039 = vmatpush.msra.mxu0 0.0
    %10040 = vmatpush.msra.mxu0 0.0
    %10041 = vmatpush.msra.mxu0 0.0
    %10042 = vmatpush.msra.mxu0 0.0
    %10043 = vmatpush.msra.mxu0 0.0
    %10044 = vmatpush.msra.mxu0 0.0
    %10045 = vmatpush.msra.mxu0 0.0
    %10046 = vmatpush.msra.mxu0 0.0
    %v10047 = vand.u32 %v7864, 4294901760
    %v10048 = vsub.f32 %v7864, %v10047
    %v10049 = vand.u32 %v10048, 4294901760
    %10050 = vmatpush.msra.mxu0 %v10049
    %v10051 = vand.u32 %v7856, 4294901760
    %v10052 = vsub.f32 %v7856, %v10051
    %v10053 = vand.u32 %v10052, 4294901760
    %10054 = vmatpush.msra.mxu0 %v10053
    %v10055 = vand.u32 %v7848, 4294901760
    %v10056 = vsub.f32 %v7848, %v10055
    %v10057 = vand.u32 %v10056, 4294901760
    %10058 = vmatpush.msra.mxu0 %v10057
    %v10059 = vand.u32 %v7840, 4294901760
    %v10060 = vsub.f32 %v7840, %v10059
    %v10061 = vand.u32 %v10060, 4294901760
    %10062 = vmatpush.msra.mxu0 %v10061
    %v10063 = vand.u32 %v7885, 4294901760
    %10064 = vmatmul.f32.gmra.mxu0 %v10063
    %v10065 = vpop.f32.mrf.mxu0
    %v10066 = vadd.f32 %v10015, %v10065
    %v10067 = vand.u32 %v7887, 4294901760
    %10068 = vmatmul.f32.gmra.mxu0 %v10067
    %v10069 = vpop.f32.mrf.mxu0
    %v10070 = vadd.f32 %v10021, %v10069
    %v10071 = vand.u32 %v7889, 4294901760
    %10072 = vmatmul.f32.gmra.mxu0 %v10071
    %v10073 = vpop.f32.mrf.mxu0
    %v10074 = vadd.f32 %v10027, %v10073
    %v10075 = vand.u32 %v7891, 4294901760
    %10076 = vmatmul.f32.gmra.mxu0 %v10075
    %v10077 = vpop.f32.mrf.mxu0
    %v10078 = vadd.f32 %v10033, %v10077
    %10079 = vdwg.mxu0
    %10080 = vmatpush.msra.mxu0 0.0
    %10081 = vmatpush.msra.mxu0 0.0
    %10082 = vmatpush.msra.mxu0 0.0
    %10083 = vmatpush.msra.mxu0 0.0
    %10084 = vmatpush.msra.mxu0 0.0
    %10085 = vmatpush.msra.mxu0 0.0
    %10086 = vmatpush.msra.mxu0 0.0
    %10087 = vmatpush.msra.mxu0 0.0
    %10088 = vmatpush.msra.mxu0 0.0
    %10089 = vmatpush.msra.mxu0 0.0
    %10090 = vmatpush.msra.mxu0 0.0
    %10091 = vmatpush.msra.mxu0 0.0
    %v10092 = vand.u32 %v7864, 4294901760
    %10093 = vmatpush.msra.mxu0 %v10092
    %v10094 = vand.u32 %v7856, 4294901760
    %10095 = vmatpush.msra.mxu0 %v10094
    %v10096 = vand.u32 %v7848, 4294901760
    %10097 = vmatpush.msra.mxu0 %v10096
    %v10098 = vand.u32 %v7840, 4294901760
    %10099 = vmatpush.msra.mxu0 %v10098
    %v10100 = vand.u32 %v7885, 4294901760
    %10101 = vmatmul.f32.gmra.mxu0 %v10100
    %v10102 = vpop.f32.mrf.mxu0
    %v10103 = vadd.f32 %v10066, %v10102
    %v10104 = vand.u32 %v7887, 4294901760
    %10105 = vmatmul.f32.gmra.mxu0 %v10104
    %v10106 = vpop.f32.mrf.mxu0
    %v10107 = vadd.f32 %v10070, %v10106
    %v10108 = vand.u32 %v7889, 4294901760
    %10109 = vmatmul.f32.gmra.mxu0 %v10108
    %v10110 = vpop.f32.mrf.mxu0
    %v10111 = vadd.f32 %v10074, %v10110
    %v10112 = vand.u32 %v7891, 4294901760
    %10113 = vmatmul.f32.gmra.mxu0 %v10112
    %v10114 = vpop.f32.mrf.mxu0
    %v10115 = vadd.f32 %v10078, %v10114
    %10116 = vdwg.mxu0
    %v10117 = vmax.f32 %v8157, 0.0
    %v10118 = vmax.f32 %v8435, 0.0
    %v10119 = vmax.f32 %v8713, 0.0
    %v10120 = vmax.f32 %v8991, 0.0
    %v10121 = vmax.f32 %v9269, 0.0
    %v10122 = vmax.f32 %v9547, 0.0
    %v10123 = vmax.f32 %v9825, 0.0
    %v10124 = vmax.f32 %v10103, 0.0
    %v10125 = vmax.f32 %v8161, 0.0
    %v10126 = vmax.f32 %v8439, 0.0
    %v10127 = vmax.f32 %v8717, 0.0
    %v10128 = vmax.f32 %v8995, 0.0
    %v10129 = vmax.f32 %v9273, 0.0
    %v10130 = vmax.f32 %v9551, 0.0
    %v10131 = vmax.f32 %v9829, 0.0
    %v10132 = vmax.f32 %v10107, 0.0
    %v10133 = vmax.f32 %v8165, 0.0
    %v10134 = vmax.f32 %v8443, 0.0
    %v10135 = vmax.f32 %v8721, 0.0
    %v10136 = vmax.f32 %v8999, 0.0
    %v10137 = vmax.f32 %v9277, 0.0
    %v10138 = vmax.f32 %v9555, 0.0
    %v10139 = vmax.f32 %v9833, 0.0
    %v10140 = vmax.f32 %v10111, 0.0
    %v10141 = vmax.f32 %v8169, 0.0
    %v10142 = vmax.f32 %v8447, 0.0
    %v10143 = vmax.f32 %v8725, 0.0
    %v10144 = vmax.f32 %v9003, 0.0
    %v10145 = vmax.f32 %v9281, 0.0
    %v10146 = vmax.f32 %v9559, 0.0
    %v10147 = vmax.f32 %v9837, 0.0
    %v10148 = vmax.f32 %v10115, 0.0
    %10150 = vset.pattern.permute.xlu0 32
    %10151 = vperm.xlu0 %10150, %v57
    %v10152 = vpop.permute.xlu0 %10151
    %10155 = vset.pattern.permute.xlu0 32
    %10156 = vperm.xlu0 %10155, %v58
    %v10157 = vpop.permute.xlu0 %10156
    %v10159 = vsel %vm5596, %v57, 0
    %v10161 = vsel %vm5596, %v58, 0
    %10163 = vmatpush.msra.mxu0 0.0
    %10164 = vmatpush.msra.mxu0 0.0
    %10165 = vmatpush.msra.mxu0 0.0
    %10166 = vmatpush.msra.mxu0 0.0
    %10167 = vmatpush.msra.mxu0 0.0
    %10168 = vmatpush.msra.mxu0 0.0
    %10169 = vmatpush.msra.mxu0 0.0
    %10170 = vmatpush.msra.mxu0 0.0
    %10171 = vmatpush.msra.mxu0 0.0
    %10172 = vmatpush.msra.mxu0 0.0
    %10173 = vmatpush.msra.mxu0 0.0
    %10174 = vmatpush.msra.mxu0 0.0
    %v10175 = vand.u32 %v10141, 4294901760
    %10176 = vmatpush.msra.mxu0 %v10175
    %v10177 = vand.u32 %v10133, 4294901760
    %10178 = vmatpush.msra.mxu0 %v10177
    %v10179 = vand.u32 %v10125, 4294901760
    %10180 = vmatpush.msra.mxu0 %v10179
    %v10181 = vand.u32 %v10117, 4294901760
    %10182 = vmatpush.msra.mxu0 %v10181
    %v10183 = vand.u32 %v10159, 4294901760
    %v10184 = vsub.f32 %v10159, %v10183
    %v10185 = vand.u32 %v10184, 4294901760
    %v10186 = vsub.f32 %v10184, %v10185
    %v10187 = vand.u32 %v10186, 4294901760
    %10188 = vmatmul.f32.gmra.mxu0 %v10187
    %v10189 = vpop.f32.mrf.mxu0
    %v10190 = vadd.f32 %v10152, %v10189
    %v10191 = vand.u32 %v10161, 4294901760
    %v10192 = vsub.f32 %v10161, %v10191
    %v10193 = vand.u32 %v10192, 4294901760
    %v10194 = vsub.f32 %v10192, %v10193
    %v10195 = vand.u32 %v10194, 4294901760
    %10196 = vmatmul.f32.gmra.mxu0 %v10195
    %v10197 = vpop.f32.mrf.mxu0
    %v10198 = vadd.f32 %v10157, %v10197
    %10199 = vdwg.mxu0
    %10200 = vmatpush.msra.mxu0 0.0
    %10201 = vmatpush.msra.mxu0 0.0
    %10202 = vmatpush.msra.mxu0 0.0
    %10203 = vmatpush.msra.mxu0 0.0
    %10204 = vmatpush.msra.mxu0 0.0
    %10205 = vmatpush.msra.mxu0 0.0
    %10206 = vmatpush.msra.mxu0 0.0
    %10207 = vmatpush.msra.mxu0 0.0
    %10208 = vmatpush.msra.mxu0 0.0
    %10209 = vmatpush.msra.mxu0 0.0
    %10210 = vmatpush.msra.mxu0 0.0
    %10211 = vmatpush.msra.mxu0 0.0
    %v10212 = vand.u32 %v10141, 4294901760
    %v10213 = vsub.f32 %v10141, %v10212
    %v10214 = vand.u32 %v10213, 4294901760
    %v10215 = vsub.f32 %v10213, %v10214
    %v10216 = vand.u32 %v10215, 4294901760
    %10217 = vmatpush.msra.mxu0 %v10216
    %v10218 = vand.u32 %v10133, 4294901760
    %v10219 = vsub.f32 %v10133, %v10218
    %v10220 = vand.u32 %v10219, 4294901760
    %v10221 = vsub.f32 %v10219, %v10220
    %v10222 = vand.u32 %v10221, 4294901760
    %10223 = vmatpush.msra.mxu0 %v10222
    %v10224 = vand.u32 %v10125, 4294901760
    %v10225 = vsub.f32 %v10125, %v10224
    %v10226 = vand.u32 %v10225, 4294901760
    %v10227 = vsub.f32 %v10225, %v10226
    %v10228 = vand.u32 %v10227, 4294901760
    %10229 = vmatpush.msra.mxu0 %v10228
    %v10230 = vand.u32 %v10117, 4294901760
    %v10231 = vsub.f32 %v10117, %v10230
    %v10232 = vand.u32 %v10231, 4294901760
    %v10233 = vsub.f32 %v10231, %v10232
    %v10234 = vand.u32 %v10233, 4294901760
    %10235 = vmatpush.msra.mxu0 %v10234
    %v10236 = vand.u32 %v10159, 4294901760
    %10237 = vmatmul.f32.gmra.mxu0 %v10236
    %v10238 = vpop.f32.mrf.mxu0
    %v10239 = vadd.f32 %v10190, %v10238
    %v10240 = vand.u32 %v10161, 4294901760
    %10241 = vmatmul.f32.gmra.mxu0 %v10240
    %v10242 = vpop.f32.mrf.mxu0
    %v10243 = vadd.f32 %v10198, %v10242
    %10244 = vdwg.mxu0
    %10245 = vmatpush.msra.mxu0 0.0
    %10246 = vmatpush.msra.mxu0 0.0
    %10247 = vmatpush.msra.mxu0 0.0
    %10248 = vmatpush.msra.mxu0 0.0
    %10249 = vmatpush.msra.mxu0 0.0
    %10250 = vmatpush.msra.mxu0 0.0
    %10251 = vmatpush.msra.mxu0 0.0
    %10252 = vmatpush.msra.mxu0 0.0
    %10253 = vmatpush.msra.mxu0 0.0
    %10254 = vmatpush.msra.mxu0 0.0
    %10255 = vmatpush.msra.mxu0 0.0
    %10256 = vmatpush.msra.mxu0 0.0
    %v10257 = vand.u32 %v10141, 4294901760
    %v10258 = vsub.f32 %v10141, %v10257
    %10259 = vmatpush.msra.mxu0 %v10258
    %v10260 = vand.u32 %v10133, 4294901760
    %v10261 = vsub.f32 %v10133, %v10260
    %10262 = vmatpush.msra.mxu0 %v10261
    %v10263 = vand.u32 %v10125, 4294901760
    %v10264 = vsub.f32 %v10125, %v10263
    %10265 = vmatpush.msra.mxu0 %v10264
    %v10266 = vand.u32 %v10117, 4294901760
    %v10267 = vsub.f32 %v10117, %v10266
    %10268 = vmatpush.msra.mxu0 %v10267
    %v10269 = vand.u32 %v10159, 4294901760
    %v10270 = vsub.f32 %v10159, %v10269
    %10271 = vmatmul.f32.gmra.mxu0 %v10270
    %v10272 = vpop.f32.mrf.mxu0
    %v10273 = vadd.f32 %v10239, %v10272
    %v10274 = vand.u32 %v10161, 4294901760
    %v10275 = vsub.f32 %v10161, %v10274
    %10276 = vmatmul.f32.gmra.mxu0 %v10275
    %v10277 = vpop.f32.mrf.mxu0
    %v10278 = vadd.f32 %v10243, %v10277
    %10279 = vdwg.mxu0
    %10280 = vmatpush.msra.mxu0 0.0
    %10281 = vmatpush.msra.mxu0 0.0
    %10282 = vmatpush.msra.mxu0 0.0
    %10283 = vmatpush.msra.mxu0 0.0
    %10284 = vmatpush.msra.mxu0 0.0
    %10285 = vmatpush.msra.mxu0 0.0
    %10286 = vmatpush.msra.mxu0 0.0
    %10287 = vmatpush.msra.mxu0 0.0
    %10288 = vmatpush.msra.mxu0 0.0
    %10289 = vmatpush.msra.mxu0 0.0
    %10290 = vmatpush.msra.mxu0 0.0
    %10291 = vmatpush.msra.mxu0 0.0
    %v10292 = vand.u32 %v10141, 4294901760
    %10293 = vmatpush.msra.mxu0 %v10292
    %v10294 = vand.u32 %v10133, 4294901760
    %10295 = vmatpush.msra.mxu0 %v10294
    %v10296 = vand.u32 %v10125, 4294901760
    %10297 = vmatpush.msra.mxu0 %v10296
    %v10298 = vand.u32 %v10117, 4294901760
    %10299 = vmatpush.msra.mxu0 %v10298
    %v10300 = vand.u32 %v10159, 4294901760
    %v10301 = vsub.f32 %v10159, %v10300
    %v10302 = vand.u32 %v10301, 4294901760
    %10303 = vmatmul.f32.gmra.mxu0 %v10302
    %v10304 = vpop.f32.mrf.mxu0
    %v10305 = vadd.f32 %v10273, %v10304
    %v10306 = vand.u32 %v10161, 4294901760
    %v10307 = vsub.f32 %v10161, %v10306
    %v10308 = vand.u32 %v10307, 4294901760
    %10309 = vmatmul.f32.gmra.mxu0 %v10308
    %v10310 = vpop.f32.mrf.mxu0
    %v10311 = vadd.f32 %v10278, %v10310
    %10312 = vdwg.mxu0
    %10313 = vmatpush.msra.mxu0 0.0
    %10314 = vmatpush.msra.mxu0 0.0
    %10315 = vmatpush.msra.mxu0 0.0
    %10316 = vmatpush.msra.mxu0 0.0
    %10317 = vmatpush.msra.mxu0 0.0
    %10318 = vmatpush.msra.mxu0 0.0
    %10319 = vmatpush.msra.mxu0 0.0
    %10320 = vmatpush.msra.mxu0 0.0
    %10321 = vmatpush.msra.mxu0 0.0
    %10322 = vmatpush.msra.mxu0 0.0
    %10323 = vmatpush.msra.mxu0 0.0
    %10324 = vmatpush.msra.mxu0 0.0
    %v10325 = vand.u32 %v10141, 4294901760
    %v10326 = vsub.f32 %v10141, %v10325
    %v10327 = vand.u32 %v10326, 4294901760
    %10328 = vmatpush.msra.mxu0 %v10327
    %v10329 = vand.u32 %v10133, 4294901760
    %v10330 = vsub.f32 %v10133, %v10329
    %v10331 = vand.u32 %v10330, 4294901760
    %10332 = vmatpush.msra.mxu0 %v10331
    %v10333 = vand.u32 %v10125, 4294901760
    %v10334 = vsub.f32 %v10125, %v10333
    %v10335 = vand.u32 %v10334, 4294901760
    %10336 = vmatpush.msra.mxu0 %v10335
    %v10337 = vand.u32 %v10117, 4294901760
    %v10338 = vsub.f32 %v10117, %v10337
    %v10339 = vand.u32 %v10338, 4294901760
    %10340 = vmatpush.msra.mxu0 %v10339
    %v10341 = vand.u32 %v10159, 4294901760
    %10342 = vmatmul.f32.gmra.mxu0 %v10341
    %v10343 = vpop.f32.mrf.mxu0
    %v10344 = vadd.f32 %v10305, %v10343
    %v10345 = vand.u32 %v10161, 4294901760
    %10346 = vmatmul.f32.gmra.mxu0 %v10345
    %v10347 = vpop.f32.mrf.mxu0
    %v10348 = vadd.f32 %v10311, %v10347
    %10349 = vdwg.mxu0
    %10350 = vmatpush.msra.mxu0 0.0
    %10351 = vmatpush.msra.mxu0 0.0
    %10352 = vmatpush.msra.mxu0 0.0
    %10353 = vmatpush.msra.mxu0 0.0
    %10354 = vmatpush.msra.mxu0 0.0
    %10355 = vmatpush.msra.mxu0 0.0
    %10356 = vmatpush.msra.mxu0 0.0
    %10357 = vmatpush.msra.mxu0 0.0
    %10358 = vmatpush.msra.mxu0 0.0
    %10359 = vmatpush.msra.mxu0 0.0
    %10360 = vmatpush.msra.mxu0 0.0
    %10361 = vmatpush.msra.mxu0 0.0
    %v10362 = vand.u32 %v10141, 4294901760
    %10363 = vmatpush.msra.mxu0 %v10362
    %v10364 = vand.u32 %v10133, 4294901760
    %10365 = vmatpush.msra.mxu0 %v10364
    %v10366 = vand.u32 %v10125, 4294901760
    %10367 = vmatpush.msra.mxu0 %v10366
    %v10368 = vand.u32 %v10117, 4294901760
    %10369 = vmatpush.msra.mxu0 %v10368
    %v10370 = vand.u32 %v10159, 4294901760
    %10371 = vmatmul.f32.gmra.mxu0 %v10370
    %v10372 = vpop.f32.mrf.mxu0
    %v10373 = vadd.f32 %v10344, %v10372
    %v10374 = vand.u32 %v10161, 4294901760
    %10375 = vmatmul.f32.gmra.mxu0 %v10374
    %v10376 = vpop.f32.mrf.mxu0
    %v10377 = vadd.f32 %v10348, %v10376
    %10378 = vdwg.mxu0
    %10379 = vmatpush.msra.mxu0 0.0
    %10380 = vmatpush.msra.mxu0 0.0
    %10381 = vmatpush.msra.mxu0 0.0
    %10382 = vmatpush.msra.mxu0 0.0
    %10383 = vmatpush.msra.mxu0 0.0
    %10384 = vmatpush.msra.mxu0 0.0
    %10385 = vmatpush.msra.mxu0 0.0
    %10386 = vmatpush.msra.mxu0 0.0
    %10387 = vmatpush.msra.mxu0 0.0
    %10388 = vmatpush.msra.mxu0 0.0
    %10389 = vmatpush.msra.mxu0 0.0
    %10390 = vmatpush.msra.mxu0 0.0
    %v10391 = vand.u32 %v10142, 4294901760
    %10392 = vmatpush.msra.mxu0 %v10391
    %v10393 = vand.u32 %v10134, 4294901760
    %10394 = vmatpush.msra.mxu0 %v10393
    %v10395 = vand.u32 %v10126, 4294901760
    %10396 = vmatpush.msra.mxu0 %v10395
    %v10397 = vand.u32 %v10118, 4294901760
    %10398 = vmatpush.msra.mxu0 %v10397
    %v10399 = vand.u32 %v10159, 4294901760
    %v10400 = vsub.f32 %v10159, %v10399
    %v10401 = vand.u32 %v10400, 4294901760
    %v10402 = vsub.f32 %v10400, %v10401
    %v10403 = vand.u32 %v10402, 4294901760
    %10404 = vmatmul.f32.gmra.mxu0 %v10403
    %v10405 = vpop.f32.mrf.mxu0
    %v10406 = vadd.f32 %v10152, %v10405
    %v10407 = vand.u32 %v10161, 4294901760
    %v10408 = vsub.f32 %v10161, %v10407
    %v10409 = vand.u32 %v10408, 4294901760
    %v10410 = vsub.f32 %v10408, %v10409
    %v10411 = vand.u32 %v10410, 4294901760
    %10412 = vmatmul.f32.gmra.mxu0 %v10411
    %v10413 = vpop.f32.mrf.mxu0
    %v10414 = vadd.f32 %v10157, %v10413
    %10415 = vdwg.mxu0
    %10416 = vmatpush.msra.mxu0 0.0
    %10417 = vmatpush.msra.mxu0 0.0
    %10418 = vmatpush.msra.mxu0 0.0
    %10419 = vmatpush.msra.mxu0 0.0
    %10420 = vmatpush.msra.mxu0 0.0
    %10421 = vmatpush.msra.mxu0 0.0
    %10422 = vmatpush.msra.mxu0 0.0
    %10423 = vmatpush.msra.mxu0 0.0
    %10424 = vmatpush.msra.mxu0 0.0
    %10425 = vmatpush.msra.mxu0 0.0
    %10426 = vmatpush.msra.mxu0 0.0
    %10427 = vmatpush.msra.mxu0 0.0
    %v10428 = vand.u32 %v10142, 4294901760
    %v10429 = vsub.f32 %v10142, %v10428
    %v10430 = vand.u32 %v10429, 4294901760
    %v10431 = vsub.f32 %v10429, %v10430
    %v10432 = vand.u32 %v10431, 4294901760
    %10433 = vmatpush.msra.mxu0 %v10432
    %v10434 = vand.u32 %v10134, 4294901760
    %v10435 = vsub.f32 %v10134, %v10434
    %v10436 = vand.u32 %v10435, 4294901760
    %v10437 = vsub.f32 %v10435, %v10436
    %v10438 = vand.u32 %v10437, 4294901760
    %10439 = vmatpush.msra.mxu0 %v10438
    %v10440 = vand.u32 %v10126, 4294901760
    %v10441 = vsub.f32 %v10126, %v10440
    %v10442 = vand.u32 %v10441, 4294901760
    %v10443 = vsub.f32 %v10441, %v10442
    %v10444 = vand.u32 %v10443, 4294901760
    %10445 = vmatpush.msra.mxu0 %v10444
    %v10446 = vand.u32 %v10118, 4294901760
    %v10447 = vsub.f32 %v10118, %v10446
    %v10448 = vand.u32 %v10447, 4294901760
    %v10449 = vsub.f32 %v10447, %v10448
    %v10450 = vand.u32 %v10449, 4294901760
    %10451 = vmatpush.msra.mxu0 %v10450
    %v10452 = vand.u32 %v10159, 4294901760
    %10453 = vmatmul.f32.gmra.mxu0 %v10452
    %v10454 = vpop.f32.mrf.mxu0
    %v10455 = vadd.f32 %v10406, %v10454
    %v10456 = vand.u32 %v10161, 4294901760
    %10457 = vmatmul.f32.gmra.mxu0 %v10456
    %v10458 = vpop.f32.mrf.mxu0
    %v10459 = vadd.f32 %v10414, %v10458
    %10460 = vdwg.mxu0
    %10461 = vmatpush.msra.mxu0 0.0
    %10462 = vmatpush.msra.mxu0 0.0
    %10463 = vmatpush.msra.mxu0 0.0
    %10464 = vmatpush.msra.mxu0 0.0
    %10465 = vmatpush.msra.mxu0 0.0
    %10466 = vmatpush.msra.mxu0 0.0
    %10467 = vmatpush.msra.mxu0 0.0
    %10468 = vmatpush.msra.mxu0 0.0
    %10469 = vmatpush.msra.mxu0 0.0
    %10470 = vmatpush.msra.mxu0 0.0
    %10471 = vmatpush.msra.mxu0 0.0
    %10472 = vmatpush.msra.mxu0 0.0
    %v10473 = vand.u32 %v10142, 4294901760
    %v10474 = vsub.f32 %v10142, %v10473
    %10475 = vmatpush.msra.mxu0 %v10474
    %v10476 = vand.u32 %v10134, 4294901760
    %v10477 = vsub.f32 %v10134, %v10476
    %10478 = vmatpush.msra.mxu0 %v10477
    %v10479 = vand.u32 %v10126, 4294901760
    %v10480 = vsub.f32 %v10126, %v10479
    %10481 = vmatpush.msra.mxu0 %v10480
    %v10482 = vand.u32 %v10118, 4294901760
    %v10483 = vsub.f32 %v10118, %v10482
    %10484 = vmatpush.msra.mxu0 %v10483
    %v10485 = vand.u32 %v10159, 4294901760
    %v10486 = vsub.f32 %v10159, %v10485
    %10487 = vmatmul.f32.gmra.mxu0 %v10486
    %v10488 = vpop.f32.mrf.mxu0
    %v10489 = vadd.f32 %v10455, %v10488
    %v10490 = vand.u32 %v10161, 4294901760
    %v10491 = vsub.f32 %v10161, %v10490
    %10492 = vmatmul.f32.gmra.mxu0 %v10491
    %v10493 = vpop.f32.mrf.mxu0
    %v10494 = vadd.f32 %v10459, %v10493
    %10495 = vdwg.mxu0
    %10496 = vmatpush.msra.mxu0 0.0
    %10497 = vmatpush.msra.mxu0 0.0
    %10498 = vmatpush.msra.mxu0 0.0
    %10499 = vmatpush.msra.mxu0 0.0
    %10500 = vmatpush.msra.mxu0 0.0
    %10501 = vmatpush.msra.mxu0 0.0
    %10502 = vmatpush.msra.mxu0 0.0
    %10503 = vmatpush.msra.mxu0 0.0
    %10504 = vmatpush.msra.mxu0 0.0
    %10505 = vmatpush.msra.mxu0 0.0
    %10506 = vmatpush.msra.mxu0 0.0
    %10507 = vmatpush.msra.mxu0 0.0
    %v10508 = vand.u32 %v10142, 4294901760
    %10509 = vmatpush.msra.mxu0 %v10508
    %v10510 = vand.u32 %v10134, 4294901760
    %10511 = vmatpush.msra.mxu0 %v10510
    %v10512 = vand.u32 %v10126, 4294901760
    %10513 = vmatpush.msra.mxu0 %v10512
    %v10514 = vand.u32 %v10118, 4294901760
    %10515 = vmatpush.msra.mxu0 %v10514
    %v10516 = vand.u32 %v10159, 4294901760
    %v10517 = vsub.f32 %v10159, %v10516
    %v10518 = vand.u32 %v10517, 4294901760
    %10519 = vmatmul.f32.gmra.mxu0 %v10518
    %v10520 = vpop.f32.mrf.mxu0
    %v10521 = vadd.f32 %v10489, %v10520
    %v10522 = vand.u32 %v10161, 4294901760
    %v10523 = vsub.f32 %v10161, %v10522
    %v10524 = vand.u32 %v10523, 4294901760
    %10525 = vmatmul.f32.gmra.mxu0 %v10524
    %v10526 = vpop.f32.mrf.mxu0
    %v10527 = vadd.f32 %v10494, %v10526
    %10528 = vdwg.mxu0
    %10529 = vmatpush.msra.mxu0 0.0
    %10530 = vmatpush.msra.mxu0 0.0
    %10531 = vmatpush.msra.mxu0 0.0
    %10532 = vmatpush.msra.mxu0 0.0
    %10533 = vmatpush.msra.mxu0 0.0
    %10534 = vmatpush.msra.mxu0 0.0
    %10535 = vmatpush.msra.mxu0 0.0
    %10536 = vmatpush.msra.mxu0 0.0
    %10537 = vmatpush.msra.mxu0 0.0
    %10538 = vmatpush.msra.mxu0 0.0
    %10539 = vmatpush.msra.mxu0 0.0
    %10540 = vmatpush.msra.mxu0 0.0
    %v10541 = vand.u32 %v10142, 4294901760
    %v10542 = vsub.f32 %v10142, %v10541
    %v10543 = vand.u32 %v10542, 4294901760
    %10544 = vmatpush.msra.mxu0 %v10543
    %v10545 = vand.u32 %v10134, 4294901760
    %v10546 = vsub.f32 %v10134, %v10545
    %v10547 = vand.u32 %v10546, 4294901760
    %10548 = vmatpush.msra.mxu0 %v10547
    %v10549 = vand.u32 %v10126, 4294901760
    %v10550 = vsub.f32 %v10126, %v10549
    %v10551 = vand.u32 %v10550, 4294901760
    %10552 = vmatpush.msra.mxu0 %v10551
    %v10553 = vand.u32 %v10118, 4294901760
    %v10554 = vsub.f32 %v10118, %v10553
    %v10555 = vand.u32 %v10554, 4294901760
    %10556 = vmatpush.msra.mxu0 %v10555
    %v10557 = vand.u32 %v10159, 4294901760
    %10558 = vmatmul.f32.gmra.mxu0 %v10557
    %v10559 = vpop.f32.mrf.mxu0
    %v10560 = vadd.f32 %v10521, %v10559
    %v10561 = vand.u32 %v10161, 4294901760
    %10562 = vmatmul.f32.gmra.mxu0 %v10561
    %v10563 = vpop.f32.mrf.mxu0
    %v10564 = vadd.f32 %v10527, %v10563
    %10565 = vdwg.mxu0
    %10566 = vmatpush.msra.mxu0 0.0
    %10567 = vmatpush.msra.mxu0 0.0
    %10568 = vmatpush.msra.mxu0 0.0
    %10569 = vmatpush.msra.mxu0 0.0
    %10570 = vmatpush.msra.mxu0 0.0
    %10571 = vmatpush.msra.mxu0 0.0
    %10572 = vmatpush.msra.mxu0 0.0
    %10573 = vmatpush.msra.mxu0 0.0
    %10574 = vmatpush.msra.mxu0 0.0
    %10575 = vmatpush.msra.mxu0 0.0
    %10576 = vmatpush.msra.mxu0 0.0
    %10577 = vmatpush.msra.mxu0 0.0
    %v10578 = vand.u32 %v10142, 4294901760
    %10579 = vmatpush.msra.mxu0 %v10578
    %v10580 = vand.u32 %v10134, 4294901760
    %10581 = vmatpush.msra.mxu0 %v10580
    %v10582 = vand.u32 %v10126, 4294901760
    %10583 = vmatpush.msra.mxu0 %v10582
    %v10584 = vand.u32 %v10118, 4294901760
    %10585 = vmatpush.msra.mxu0 %v10584
    %v10586 = vand.u32 %v10159, 4294901760
    %10587 = vmatmul.f32.gmra.mxu0 %v10586
    %v10588 = vpop.f32.mrf.mxu0
    %v10589 = vadd.f32 %v10560, %v10588
    %v10590 = vand.u32 %v10161, 4294901760
    %10591 = vmatmul.f32.gmra.mxu0 %v10590
    %v10592 = vpop.f32.mrf.mxu0
    %v10593 = vadd.f32 %v10564, %v10592
    %10594 = vdwg.mxu0
    %10595 = vmatpush.msra.mxu0 0.0
    %10596 = vmatpush.msra.mxu0 0.0
    %10597 = vmatpush.msra.mxu0 0.0
    %10598 = vmatpush.msra.mxu0 0.0
    %10599 = vmatpush.msra.mxu0 0.0
    %10600 = vmatpush.msra.mxu0 0.0
    %10601 = vmatpush.msra.mxu0 0.0
    %10602 = vmatpush.msra.mxu0 0.0
    %10603 = vmatpush.msra.mxu0 0.0
    %10604 = vmatpush.msra.mxu0 0.0
    %10605 = vmatpush.msra.mxu0 0.0
    %10606 = vmatpush.msra.mxu0 0.0
    %v10607 = vand.u32 %v10143, 4294901760
    %10608 = vmatpush.msra.mxu0 %v10607
    %v10609 = vand.u32 %v10135, 4294901760
    %10610 = vmatpush.msra.mxu0 %v10609
    %v10611 = vand.u32 %v10127, 4294901760
    %10612 = vmatpush.msra.mxu0 %v10611
    %v10613 = vand.u32 %v10119, 4294901760
    %10614 = vmatpush.msra.mxu0 %v10613
    %v10615 = vand.u32 %v10159, 4294901760
    %v10616 = vsub.f32 %v10159, %v10615
    %v10617 = vand.u32 %v10616, 4294901760
    %v10618 = vsub.f32 %v10616, %v10617
    %v10619 = vand.u32 %v10618, 4294901760
    %10620 = vmatmul.f32.gmra.mxu0 %v10619
    %v10621 = vpop.f32.mrf.mxu0
    %v10622 = vadd.f32 %v10152, %v10621
    %v10623 = vand.u32 %v10161, 4294901760
    %v10624 = vsub.f32 %v10161, %v10623
    %v10625 = vand.u32 %v10624, 4294901760
    %v10626 = vsub.f32 %v10624, %v10625
    %v10627 = vand.u32 %v10626, 4294901760
    %10628 = vmatmul.f32.gmra.mxu0 %v10627
    %v10629 = vpop.f32.mrf.mxu0
    %v10630 = vadd.f32 %v10157, %v10629
    %10631 = vdwg.mxu0
    %10632 = vmatpush.msra.mxu0 0.0
    %10633 = vmatpush.msra.mxu0 0.0
    %10634 = vmatpush.msra.mxu0 0.0
    %10635 = vmatpush.msra.mxu0 0.0
    %10636 = vmatpush.msra.mxu0 0.0
    %10637 = vmatpush.msra.mxu0 0.0
    %10638 = vmatpush.msra.mxu0 0.0
    %10639 = vmatpush.msra.mxu0 0.0
    %10640 = vmatpush.msra.mxu0 0.0
    %10641 = vmatpush.msra.mxu0 0.0
    %10642 = vmatpush.msra.mxu0 0.0
    %10643 = vmatpush.msra.mxu0 0.0
    %v10644 = vand.u32 %v10143, 4294901760
    %v10645 = vsub.f32 %v10143, %v10644
    %v10646 = vand.u32 %v10645, 4294901760
    %v10647 = vsub.f32 %v10645, %v10646
    %v10648 = vand.u32 %v10647, 4294901760
    %10649 = vmatpush.msra.mxu0 %v10648
    %v10650 = vand.u32 %v10135, 4294901760
    %v10651 = vsub.f32 %v10135, %v10650
    %v10652 = vand.u32 %v10651, 4294901760
    %v10653 = vsub.f32 %v10651, %v10652
    %v10654 = vand.u32 %v10653, 4294901760
    %10655 = vmatpush.msra.mxu0 %v10654
    %v10656 = vand.u32 %v10127, 4294901760
    %v10657 = vsub.f32 %v10127, %v10656
    %v10658 = vand.u32 %v10657, 4294901760
    %v10659 = vsub.f32 %v10657, %v10658
    %v10660 = vand.u32 %v10659, 4294901760
    %10661 = vmatpush.msra.mxu0 %v10660
    %v10662 = vand.u32 %v10119, 4294901760
    %v10663 = vsub.f32 %v10119, %v10662
    %v10664 = vand.u32 %v10663, 4294901760
    %v10665 = vsub.f32 %v10663, %v10664
    %v10666 = vand.u32 %v10665, 4294901760
    %10667 = vmatpush.msra.mxu0 %v10666
    %v10668 = vand.u32 %v10159, 4294901760
    %10669 = vmatmul.f32.gmra.mxu0 %v10668
    %v10670 = vpop.f32.mrf.mxu0
    %v10671 = vadd.f32 %v10622, %v10670
    %v10672 = vand.u32 %v10161, 4294901760
    %10673 = vmatmul.f32.gmra.mxu0 %v10672
    %v10674 = vpop.f32.mrf.mxu0
    %v10675 = vadd.f32 %v10630, %v10674
    %10676 = vdwg.mxu0
    %10677 = vmatpush.msra.mxu0 0.0
    %10678 = vmatpush.msra.mxu0 0.0
    %10679 = vmatpush.msra.mxu0 0.0
    %10680 = vmatpush.msra.mxu0 0.0
    %10681 = vmatpush.msra.mxu0 0.0
    %10682 = vmatpush.msra.mxu0 0.0
    %10683 = vmatpush.msra.mxu0 0.0
    %10684 = vmatpush.msra.mxu0 0.0
    %10685 = vmatpush.msra.mxu0 0.0
    %10686 = vmatpush.msra.mxu0 0.0
    %10687 = vmatpush.msra.mxu0 0.0
    %10688 = vmatpush.msra.mxu0 0.0
    %v10689 = vand.u32 %v10143, 4294901760
    %v10690 = vsub.f32 %v10143, %v10689
    %10691 = vmatpush.msra.mxu0 %v10690
    %v10692 = vand.u32 %v10135, 4294901760
    %v10693 = vsub.f32 %v10135, %v10692
    %10694 = vmatpush.msra.mxu0 %v10693
    %v10695 = vand.u32 %v10127, 4294901760
    %v10696 = vsub.f32 %v10127, %v10695
    %10697 = vmatpush.msra.mxu0 %v10696
    %v10698 = vand.u32 %v10119, 4294901760
    %v10699 = vsub.f32 %v10119, %v10698
    %10700 = vmatpush.msra.mxu0 %v10699
    %v10701 = vand.u32 %v10159, 4294901760
    %v10702 = vsub.f32 %v10159, %v10701
    %10703 = vmatmul.f32.gmra.mxu0 %v10702
    %v10704 = vpop.f32.mrf.mxu0
    %v10705 = vadd.f32 %v10671, %v10704
    %v10706 = vand.u32 %v10161, 4294901760
    %v10707 = vsub.f32 %v10161, %v10706
    %10708 = vmatmul.f32.gmra.mxu0 %v10707
    %v10709 = vpop.f32.mrf.mxu0
    %v10710 = vadd.f32 %v10675, %v10709
    %10711 = vdwg.mxu0
    %10712 = vmatpush.msra.mxu0 0.0
    %10713 = vmatpush.msra.mxu0 0.0
    %10714 = vmatpush.msra.mxu0 0.0
    %10715 = vmatpush.msra.mxu0 0.0
    %10716 = vmatpush.msra.mxu0 0.0
    %10717 = vmatpush.msra.mxu0 0.0
    %10718 = vmatpush.msra.mxu0 0.0
    %10719 = vmatpush.msra.mxu0 0.0
    %10720 = vmatpush.msra.mxu0 0.0
    %10721 = vmatpush.msra.mxu0 0.0
    %10722 = vmatpush.msra.mxu0 0.0
    %10723 = vmatpush.msra.mxu0 0.0
    %v10724 = vand.u32 %v10143, 4294901760
    %10725 = vmatpush.msra.mxu0 %v10724
    %v10726 = vand.u32 %v10135, 4294901760
    %10727 = vmatpush.msra.mxu0 %v10726
    %v10728 = vand.u32 %v10127, 4294901760
    %10729 = vmatpush.msra.mxu0 %v10728
    %v10730 = vand.u32 %v10119, 4294901760
    %10731 = vmatpush.msra.mxu0 %v10730
    %v10732 = vand.u32 %v10159, 4294901760
    %v10733 = vsub.f32 %v10159, %v10732
    %v10734 = vand.u32 %v10733, 4294901760
    %10735 = vmatmul.f32.gmra.mxu0 %v10734
    %v10736 = vpop.f32.mrf.mxu0
    %v10737 = vadd.f32 %v10705, %v10736
    %v10738 = vand.u32 %v10161, 4294901760
    %v10739 = vsub.f32 %v10161, %v10738
    %v10740 = vand.u32 %v10739, 4294901760
    %10741 = vmatmul.f32.gmra.mxu0 %v10740
    %v10742 = vpop.f32.mrf.mxu0
    %v10743 = vadd.f32 %v10710, %v10742
    %10744 = vdwg.mxu0
    %10745 = vmatpush.msra.mxu0 0.0
    %10746 = vmatpush.msra.mxu0 0.0
    %10747 = vmatpush.msra.mxu0 0.0
    %10748 = vmatpush.msra.mxu0 0.0
    %10749 = vmatpush.msra.mxu0 0.0
    %10750 = vmatpush.msra.mxu0 0.0
    %10751 = vmatpush.msra.mxu0 0.0
    %10752 = vmatpush.msra.mxu0 0.0
    %10753 = vmatpush.msra.mxu0 0.0
    %10754 = vmatpush.msra.mxu0 0.0
    %10755 = vmatpush.msra.mxu0 0.0
    %10756 = vmatpush.msra.mxu0 0.0
    %v10757 = vand.u32 %v10143, 4294901760
    %v10758 = vsub.f32 %v10143, %v10757
    %v10759 = vand.u32 %v10758, 4294901760
    %10760 = vmatpush.msra.mxu0 %v10759
    %v10761 = vand.u32 %v10135, 4294901760
    %v10762 = vsub.f32 %v10135, %v10761
    %v10763 = vand.u32 %v10762, 4294901760
    %10764 = vmatpush.msra.mxu0 %v10763
    %v10765 = vand.u32 %v10127, 4294901760
    %v10766 = vsub.f32 %v10127, %v10765
    %v10767 = vand.u32 %v10766, 4294901760
    %10768 = vmatpush.msra.mxu0 %v10767
    %v10769 = vand.u32 %v10119, 4294901760
    %v10770 = vsub.f32 %v10119, %v10769
    %v10771 = vand.u32 %v10770, 4294901760
    %10772 = vmatpush.msra.mxu0 %v10771
    %v10773 = vand.u32 %v10159, 4294901760
    %10774 = vmatmul.f32.gmra.mxu0 %v10773
    %v10775 = vpop.f32.mrf.mxu0
    %v10776 = vadd.f32 %v10737, %v10775
    %v10777 = vand.u32 %v10161, 4294901760
    %10778 = vmatmul.f32.gmra.mxu0 %v10777
    %v10779 = vpop.f32.mrf.mxu0
    %v10780 = vadd.f32 %v10743, %v10779
    %10781 = vdwg.mxu0
    %10782 = vmatpush.msra.mxu0 0.0
    %10783 = vmatpush.msra.mxu0 0.0
    %10784 = vmatpush.msra.mxu0 0.0
    %10785 = vmatpush.msra.mxu0 0.0
    %10786 = vmatpush.msra.mxu0 0.0
    %10787 = vmatpush.msra.mxu0 0.0
    %10788 = vmatpush.msra.mxu0 0.0
    %10789 = vmatpush.msra.mxu0 0.0
    %10790 = vmatpush.msra.mxu0 0.0
    %10791 = vmatpush.msra.mxu0 0.0
    %10792 = vmatpush.msra.mxu0 0.0
    %10793 = vmatpush.msra.mxu0 0.0
    %v10794 = vand.u32 %v10143, 4294901760
    %10795 = vmatpush.msra.mxu0 %v10794
    %v10796 = vand.u32 %v10135, 4294901760
    %10797 = vmatpush.msra.mxu0 %v10796
    %v10798 = vand.u32 %v10127, 4294901760
    %10799 = vmatpush.msra.mxu0 %v10798
    %v10800 = vand.u32 %v10119, 4294901760
    %10801 = vmatpush.msra.mxu0 %v10800
    %v10802 = vand.u32 %v10159, 4294901760
    %10803 = vmatmul.f32.gmra.mxu0 %v10802
    %v10804 = vpop.f32.mrf.mxu0
    %v10805 = vadd.f32 %v10776, %v10804
    %v10806 = vand.u32 %v10161, 4294901760
    %10807 = vmatmul.f32.gmra.mxu0 %v10806
    %v10808 = vpop.f32.mrf.mxu0
    %v10809 = vadd.f32 %v10780, %v10808
    %10810 = vdwg.mxu0
    %10811 = vmatpush.msra.mxu0 0.0
    %10812 = vmatpush.msra.mxu0 0.0
    %10813 = vmatpush.msra.mxu0 0.0
    %10814 = vmatpush.msra.mxu0 0.0
    %10815 = vmatpush.msra.mxu0 0.0
    %10816 = vmatpush.msra.mxu0 0.0
    %10817 = vmatpush.msra.mxu0 0.0
    %10818 = vmatpush.msra.mxu0 0.0
    %10819 = vmatpush.msra.mxu0 0.0
    %10820 = vmatpush.msra.mxu0 0.0
    %10821 = vmatpush.msra.mxu0 0.0
    %10822 = vmatpush.msra.mxu0 0.0
    %v10823 = vand.u32 %v10144, 4294901760
    %10824 = vmatpush.msra.mxu0 %v10823
    %v10825 = vand.u32 %v10136, 4294901760
    %10826 = vmatpush.msra.mxu0 %v10825
    %v10827 = vand.u32 %v10128, 4294901760
    %10828 = vmatpush.msra.mxu0 %v10827
    %v10829 = vand.u32 %v10120, 4294901760
    %10830 = vmatpush.msra.mxu0 %v10829
    %v10831 = vand.u32 %v10159, 4294901760
    %v10832 = vsub.f32 %v10159, %v10831
    %v10833 = vand.u32 %v10832, 4294901760
    %v10834 = vsub.f32 %v10832, %v10833
    %v10835 = vand.u32 %v10834, 4294901760
    %10836 = vmatmul.f32.gmra.mxu0 %v10835
    %v10837 = vpop.f32.mrf.mxu0
    %v10838 = vadd.f32 %v10152, %v10837
    %v10839 = vand.u32 %v10161, 4294901760
    %v10840 = vsub.f32 %v10161, %v10839
    %v10841 = vand.u32 %v10840, 4294901760
    %v10842 = vsub.f32 %v10840, %v10841
    %v10843 = vand.u32 %v10842, 4294901760
    %10844 = vmatmul.f32.gmra.mxu0 %v10843
    %v10845 = vpop.f32.mrf.mxu0
    %v10846 = vadd.f32 %v10157, %v10845
    %10847 = vdwg.mxu0
    %10848 = vmatpush.msra.mxu0 0.0
    %10849 = vmatpush.msra.mxu0 0.0
    %10850 = vmatpush.msra.mxu0 0.0
    %10851 = vmatpush.msra.mxu0 0.0
    %10852 = vmatpush.msra.mxu0 0.0
    %10853 = vmatpush.msra.mxu0 0.0
    %10854 = vmatpush.msra.mxu0 0.0
    %10855 = vmatpush.msra.mxu0 0.0
    %10856 = vmatpush.msra.mxu0 0.0
    %10857 = vmatpush.msra.mxu0 0.0
    %10858 = vmatpush.msra.mxu0 0.0
    %10859 = vmatpush.msra.mxu0 0.0
    %v10860 = vand.u32 %v10144, 4294901760
    %v10861 = vsub.f32 %v10144, %v10860
    %v10862 = vand.u32 %v10861, 4294901760
    %v10863 = vsub.f32 %v10861, %v10862
    %v10864 = vand.u32 %v10863, 4294901760
    %10865 = vmatpush.msra.mxu0 %v10864
    %v10866 = vand.u32 %v10136, 4294901760
    %v10867 = vsub.f32 %v10136, %v10866
    %v10868 = vand.u32 %v10867, 4294901760
    %v10869 = vsub.f32 %v10867, %v10868
    %v10870 = vand.u32 %v10869, 4294901760
    %10871 = vmatpush.msra.mxu0 %v10870
    %v10872 = vand.u32 %v10128, 4294901760
    %v10873 = vsub.f32 %v10128, %v10872
    %v10874 = vand.u32 %v10873, 4294901760
    %v10875 = vsub.f32 %v10873, %v10874
    %v10876 = vand.u32 %v10875, 4294901760
    %10877 = vmatpush.msra.mxu0 %v10876
    %v10878 = vand.u32 %v10120, 4294901760
    %v10879 = vsub.f32 %v10120, %v10878
    %v10880 = vand.u32 %v10879, 4294901760
    %v10881 = vsub.f32 %v10879, %v10880
    %v10882 = vand.u32 %v10881, 4294901760
    %10883 = vmatpush.msra.mxu0 %v10882
    %v10884 = vand.u32 %v10159, 4294901760
    %10885 = vmatmul.f32.gmra.mxu0 %v10884
    %v10886 = vpop.f32.mrf.mxu0
    %v10887 = vadd.f32 %v10838, %v10886
    %v10888 = vand.u32 %v10161, 4294901760
    %10889 = vmatmul.f32.gmra.mxu0 %v10888
    %v10890 = vpop.f32.mrf.mxu0
    %v10891 = vadd.f32 %v10846, %v10890
    %10892 = vdwg.mxu0
    %10893 = vmatpush.msra.mxu0 0.0
    %10894 = vmatpush.msra.mxu0 0.0
    %10895 = vmatpush.msra.mxu0 0.0
    %10896 = vmatpush.msra.mxu0 0.0
    %10897 = vmatpush.msra.mxu0 0.0
    %10898 = vmatpush.msra.mxu0 0.0
    %10899 = vmatpush.msra.mxu0 0.0
    %10900 = vmatpush.msra.mxu0 0.0
    %10901 = vmatpush.msra.mxu0 0.0
    %10902 = vmatpush.msra.mxu0 0.0
    %10903 = vmatpush.msra.mxu0 0.0
    %10904 = vmatpush.msra.mxu0 0.0
    %v10905 = vand.u32 %v10144, 4294901760
    %v10906 = vsub.f32 %v10144, %v10905
    %10907 = vmatpush.msra.mxu0 %v10906
    %v10908 = vand.u32 %v10136, 4294901760
    %v10909 = vsub.f32 %v10136, %v10908
    %10910 = vmatpush.msra.mxu0 %v10909
    %v10911 = vand.u32 %v10128, 4294901760
    %v10912 = vsub.f32 %v10128, %v10911
    %10913 = vmatpush.msra.mxu0 %v10912
    %v10914 = vand.u32 %v10120, 4294901760
    %v10915 = vsub.f32 %v10120, %v10914
    %10916 = vmatpush.msra.mxu0 %v10915
    %v10917 = vand.u32 %v10159, 4294901760
    %v10918 = vsub.f32 %v10159, %v10917
    %10919 = vmatmul.f32.gmra.mxu0 %v10918
    %v10920 = vpop.f32.mrf.mxu0
    %v10921 = vadd.f32 %v10887, %v10920
    %v10922 = vand.u32 %v10161, 4294901760
    %v10923 = vsub.f32 %v10161, %v10922
    %10924 = vmatmul.f32.gmra.mxu0 %v10923
    %v10925 = vpop.f32.mrf.mxu0
    %v10926 = vadd.f32 %v10891, %v10925
    %10927 = vdwg.mxu0
    %10928 = vmatpush.msra.mxu0 0.0
    %10929 = vmatpush.msra.mxu0 0.0
    %10930 = vmatpush.msra.mxu0 0.0
    %10931 = vmatpush.msra.mxu0 0.0
    %10932 = vmatpush.msra.mxu0 0.0
    %10933 = vmatpush.msra.mxu0 0.0
    %10934 = vmatpush.msra.mxu0 0.0
    %10935 = vmatpush.msra.mxu0 0.0
    %10936 = vmatpush.msra.mxu0 0.0
    %10937 = vmatpush.msra.mxu0 0.0
    %10938 = vmatpush.msra.mxu0 0.0
    %10939 = vmatpush.msra.mxu0 0.0
    %v10940 = vand.u32 %v10144, 4294901760
    %10941 = vmatpush.msra.mxu0 %v10940
    %v10942 = vand.u32 %v10136, 4294901760
    %10943 = vmatpush.msra.mxu0 %v10942
    %v10944 = vand.u32 %v10128, 4294901760
    %10945 = vmatpush.msra.mxu0 %v10944
    %v10946 = vand.u32 %v10120, 4294901760
    %10947 = vmatpush.msra.mxu0 %v10946
    %v10948 = vand.u32 %v10159, 4294901760
    %v10949 = vsub.f32 %v10159, %v10948
    %v10950 = vand.u32 %v10949, 4294901760
    %10951 = vmatmul.f32.gmra.mxu0 %v10950
    %v10952 = vpop.f32.mrf.mxu0
    %v10953 = vadd.f32 %v10921, %v10952
    %v10954 = vand.u32 %v10161, 4294901760
    %v10955 = vsub.f32 %v10161, %v10954
    %v10956 = vand.u32 %v10955, 4294901760
    %10957 = vmatmul.f32.gmra.mxu0 %v10956
    %v10958 = vpop.f32.mrf.mxu0
    %v10959 = vadd.f32 %v10926, %v10958
    %10960 = vdwg.mxu0
    %10961 = vmatpush.msra.mxu0 0.0
    %10962 = vmatpush.msra.mxu0 0.0
    %10963 = vmatpush.msra.mxu0 0.0
    %10964 = vmatpush.msra.mxu0 0.0
    %10965 = vmatpush.msra.mxu0 0.0
    %10966 = vmatpush.msra.mxu0 0.0
    %10967 = vmatpush.msra.mxu0 0.0
    %10968 = vmatpush.msra.mxu0 0.0
    %10969 = vmatpush.msra.mxu0 0.0
    %10970 = vmatpush.msra.mxu0 0.0
    %10971 = vmatpush.msra.mxu0 0.0
    %10972 = vmatpush.msra.mxu0 0.0
    %v10973 = vand.u32 %v10144, 4294901760
    %v10974 = vsub.f32 %v10144, %v10973
    %v10975 = vand.u32 %v10974, 4294901760
    %10976 = vmatpush.msra.mxu0 %v10975
    %v10977 = vand.u32 %v10136, 4294901760
    %v10978 = vsub.f32 %v10136, %v10977
    %v10979 = vand.u32 %v10978, 4294901760
    %10980 = vmatpush.msra.mxu0 %v10979
    %v10981 = vand.u32 %v10128, 4294901760
    %v10982 = vsub.f32 %v10128, %v10981
    %v10983 = vand.u32 %v10982, 4294901760
    %10984 = vmatpush.msra.mxu0 %v10983
    %v10985 = vand.u32 %v10120, 4294901760
    %v10986 = vsub.f32 %v10120, %v10985
    %v10987 = vand.u32 %v10986, 4294901760
    %10988 = vmatpush.msra.mxu0 %v10987
    %v10989 = vand.u32 %v10159, 4294901760
    %10990 = vmatmul.f32.gmra.mxu0 %v10989
    %v10991 = vpop.f32.mrf.mxu0
    %v10992 = vadd.f32 %v10953, %v10991
    %v10993 = vand.u32 %v10161, 4294901760
    %10994 = vmatmul.f32.gmra.mxu0 %v10993
    %v10995 = vpop.f32.mrf.mxu0
    %v10996 = vadd.f32 %v10959, %v10995
    %10997 = vdwg.mxu0
    %10998 = vmatpush.msra.mxu0 0.0
    %10999 = vmatpush.msra.mxu0 0.0
    %11000 = vmatpush.msra.mxu0 0.0
    %11001 = vmatpush.msra.mxu0 0.0
    %11002 = vmatpush.msra.mxu0 0.0
    %11003 = vmatpush.msra.mxu0 0.0
    %11004 = vmatpush.msra.mxu0 0.0
    %11005 = vmatpush.msra.mxu0 0.0
    %11006 = vmatpush.msra.mxu0 0.0
    %11007 = vmatpush.msra.mxu0 0.0
    %11008 = vmatpush.msra.mxu0 0.0
    %11009 = vmatpush.msra.mxu0 0.0
    %v11010 = vand.u32 %v10144, 4294901760
    %11011 = vmatpush.msra.mxu0 %v11010
    %v11012 = vand.u32 %v10136, 4294901760
    %11013 = vmatpush.msra.mxu0 %v11012
    %v11014 = vand.u32 %v10128, 4294901760
    %11015 = vmatpush.msra.mxu0 %v11014
    %v11016 = vand.u32 %v10120, 4294901760
    %11017 = vmatpush.msra.mxu0 %v11016
    %v11018 = vand.u32 %v10159, 4294901760
    %11019 = vmatmul.f32.gmra.mxu0 %v11018
    %v11020 = vpop.f32.mrf.mxu0
    %v11021 = vadd.f32 %v10992, %v11020
    %v11022 = vand.u32 %v10161, 4294901760
    %11023 = vmatmul.f32.gmra.mxu0 %v11022
    %v11024 = vpop.f32.mrf.mxu0
    %v11025 = vadd.f32 %v10996, %v11024
    %11026 = vdwg.mxu0
    %11027 = vmatpush.msra.mxu0 0.0
    %11028 = vmatpush.msra.mxu0 0.0
    %11029 = vmatpush.msra.mxu0 0.0
    %11030 = vmatpush.msra.mxu0 0.0
    %11031 = vmatpush.msra.mxu0 0.0
    %11032 = vmatpush.msra.mxu0 0.0
    %11033 = vmatpush.msra.mxu0 0.0
    %11034 = vmatpush.msra.mxu0 0.0
    %11035 = vmatpush.msra.mxu0 0.0
    %11036 = vmatpush.msra.mxu0 0.0
    %11037 = vmatpush.msra.mxu0 0.0
    %11038 = vmatpush.msra.mxu0 0.0
    %v11039 = vand.u32 %v10145, 4294901760
    %11040 = vmatpush.msra.mxu0 %v11039
    %v11041 = vand.u32 %v10137, 4294901760
    %11042 = vmatpush.msra.mxu0 %v11041
    %v11043 = vand.u32 %v10129, 4294901760
    %11044 = vmatpush.msra.mxu0 %v11043
    %v11045 = vand.u32 %v10121, 4294901760
    %11046 = vmatpush.msra.mxu0 %v11045
    %v11047 = vand.u32 %v10159, 4294901760
    %v11048 = vsub.f32 %v10159, %v11047
    %v11049 = vand.u32 %v11048, 4294901760
    %v11050 = vsub.f32 %v11048, %v11049
    %v11051 = vand.u32 %v11050, 4294901760
    %11052 = vmatmul.f32.gmra.mxu0 %v11051
    %v11053 = vpop.f32.mrf.mxu0
    %v11054 = vadd.f32 %v10152, %v11053
    %v11055 = vand.u32 %v10161, 4294901760
    %v11056 = vsub.f32 %v10161, %v11055
    %v11057 = vand.u32 %v11056, 4294901760
    %v11058 = vsub.f32 %v11056, %v11057
    %v11059 = vand.u32 %v11058, 4294901760
    %11060 = vmatmul.f32.gmra.mxu0 %v11059
    %v11061 = vpop.f32.mrf.mxu0
    %v11062 = vadd.f32 %v10157, %v11061
    %11063 = vdwg.mxu0
    %11064 = vmatpush.msra.mxu0 0.0
    %11065 = vmatpush.msra.mxu0 0.0
    %11066 = vmatpush.msra.mxu0 0.0
    %11067 = vmatpush.msra.mxu0 0.0
    %11068 = vmatpush.msra.mxu0 0.0
    %11069 = vmatpush.msra.mxu0 0.0
    %11070 = vmatpush.msra.mxu0 0.0
    %11071 = vmatpush.msra.mxu0 0.0
    %11072 = vmatpush.msra.mxu0 0.0
    %11073 = vmatpush.msra.mxu0 0.0
    %11074 = vmatpush.msra.mxu0 0.0
    %11075 = vmatpush.msra.mxu0 0.0
    %v11076 = vand.u32 %v10145, 4294901760
    %v11077 = vsub.f32 %v10145, %v11076
    %v11078 = vand.u32 %v11077, 4294901760
    %v11079 = vsub.f32 %v11077, %v11078
    %v11080 = vand.u32 %v11079, 4294901760
    %11081 = vmatpush.msra.mxu0 %v11080
    %v11082 = vand.u32 %v10137, 4294901760
    %v11083 = vsub.f32 %v10137, %v11082
    %v11084 = vand.u32 %v11083, 4294901760
    %v11085 = vsub.f32 %v11083, %v11084
    %v11086 = vand.u32 %v11085, 4294901760
    %11087 = vmatpush.msra.mxu0 %v11086
    %v11088 = vand.u32 %v10129, 4294901760
    %v11089 = vsub.f32 %v10129, %v11088
    %v11090 = vand.u32 %v11089, 4294901760
    %v11091 = vsub.f32 %v11089, %v11090
    %v11092 = vand.u32 %v11091, 4294901760
    %11093 = vmatpush.msra.mxu0 %v11092
    %v11094 = vand.u32 %v10121, 4294901760
    %v11095 = vsub.f32 %v10121, %v11094
    %v11096 = vand.u32 %v11095, 4294901760
    %v11097 = vsub.f32 %v11095, %v11096
    %v11098 = vand.u32 %v11097, 4294901760
    %11099 = vmatpush.msra.mxu0 %v11098
    %v11100 = vand.u32 %v10159, 4294901760
    %11101 = vmatmul.f32.gmra.mxu0 %v11100
    %v11102 = vpop.f32.mrf.mxu0
    %v11103 = vadd.f32 %v11054, %v11102
    %v11104 = vand.u32 %v10161, 4294901760
    %11105 = vmatmul.f32.gmra.mxu0 %v11104
    %v11106 = vpop.f32.mrf.mxu0
    %v11107 = vadd.f32 %v11062, %v11106
    %11108 = vdwg.mxu0
    %11109 = vmatpush.msra.mxu0 0.0
    %11110 = vmatpush.msra.mxu0 0.0
    %11111 = vmatpush.msra.mxu0 0.0
    %11112 = vmatpush.msra.mxu0 0.0
    %11113 = vmatpush.msra.mxu0 0.0
    %11114 = vmatpush.msra.mxu0 0.0
    %11115 = vmatpush.msra.mxu0 0.0
    %11116 = vmatpush.msra.mxu0 0.0
    %11117 = vmatpush.msra.mxu0 0.0
    %11118 = vmatpush.msra.mxu0 0.0
    %11119 = vmatpush.msra.mxu0 0.0
    %11120 = vmatpush.msra.mxu0 0.0
    %v11121 = vand.u32 %v10145, 4294901760
    %v11122 = vsub.f32 %v10145, %v11121
    %11123 = vmatpush.msra.mxu0 %v11122
    %v11124 = vand.u32 %v10137, 4294901760
    %v11125 = vsub.f32 %v10137, %v11124
    %11126 = vmatpush.msra.mxu0 %v11125
    %v11127 = vand.u32 %v10129, 4294901760
    %v11128 = vsub.f32 %v10129, %v11127
    %11129 = vmatpush.msra.mxu0 %v11128
    %v11130 = vand.u32 %v10121, 4294901760
    %v11131 = vsub.f32 %v10121, %v11130
    %11132 = vmatpush.msra.mxu0 %v11131
    %v11133 = vand.u32 %v10159, 4294901760
    %v11134 = vsub.f32 %v10159, %v11133
    %11135 = vmatmul.f32.gmra.mxu0 %v11134
    %v11136 = vpop.f32.mrf.mxu0
    %v11137 = vadd.f32 %v11103, %v11136
    %v11138 = vand.u32 %v10161, 4294901760
    %v11139 = vsub.f32 %v10161, %v11138
    %11140 = vmatmul.f32.gmra.mxu0 %v11139
    %v11141 = vpop.f32.mrf.mxu0
    %v11142 = vadd.f32 %v11107, %v11141
    %11143 = vdwg.mxu0
    %11144 = vmatpush.msra.mxu0 0.0
    %11145 = vmatpush.msra.mxu0 0.0
    %11146 = vmatpush.msra.mxu0 0.0
    %11147 = vmatpush.msra.mxu0 0.0
    %11148 = vmatpush.msra.mxu0 0.0
    %11149 = vmatpush.msra.mxu0 0.0
    %11150 = vmatpush.msra.mxu0 0.0
    %11151 = vmatpush.msra.mxu0 0.0
    %11152 = vmatpush.msra.mxu0 0.0
    %11153 = vmatpush.msra.mxu0 0.0
    %11154 = vmatpush.msra.mxu0 0.0
    %11155 = vmatpush.msra.mxu0 0.0
    %v11156 = vand.u32 %v10145, 4294901760
    %11157 = vmatpush.msra.mxu0 %v11156
    %v11158 = vand.u32 %v10137, 4294901760
    %11159 = vmatpush.msra.mxu0 %v11158
    %v11160 = vand.u32 %v10129, 4294901760
    %11161 = vmatpush.msra.mxu0 %v11160
    %v11162 = vand.u32 %v10121, 4294901760
    %11163 = vmatpush.msra.mxu0 %v11162
    %v11164 = vand.u32 %v10159, 4294901760
    %v11165 = vsub.f32 %v10159, %v11164
    %v11166 = vand.u32 %v11165, 4294901760
    %11167 = vmatmul.f32.gmra.mxu0 %v11166
    %v11168 = vpop.f32.mrf.mxu0
    %v11169 = vadd.f32 %v11137, %v11168
    %v11170 = vand.u32 %v10161, 4294901760
    %v11171 = vsub.f32 %v10161, %v11170
    %v11172 = vand.u32 %v11171, 4294901760
    %11173 = vmatmul.f32.gmra.mxu0 %v11172
    %v11174 = vpop.f32.mrf.mxu0
    %v11175 = vadd.f32 %v11142, %v11174
    %11176 = vdwg.mxu0
    %11177 = vmatpush.msra.mxu0 0.0
    %11178 = vmatpush.msra.mxu0 0.0
    %11179 = vmatpush.msra.mxu0 0.0
    %11180 = vmatpush.msra.mxu0 0.0
    %11181 = vmatpush.msra.mxu0 0.0
    %11182 = vmatpush.msra.mxu0 0.0
    %11183 = vmatpush.msra.mxu0 0.0
    %11184 = vmatpush.msra.mxu0 0.0
    %11185 = vmatpush.msra.mxu0 0.0
    %11186 = vmatpush.msra.mxu0 0.0
    %11187 = vmatpush.msra.mxu0 0.0
    %11188 = vmatpush.msra.mxu0 0.0
    %v11189 = vand.u32 %v10145, 4294901760
    %v11190 = vsub.f32 %v10145, %v11189
    %v11191 = vand.u32 %v11190, 4294901760
    %11192 = vmatpush.msra.mxu0 %v11191
    %v11193 = vand.u32 %v10137, 4294901760
    %v11194 = vsub.f32 %v10137, %v11193
    %v11195 = vand.u32 %v11194, 4294901760
    %11196 = vmatpush.msra.mxu0 %v11195
    %v11197 = vand.u32 %v10129, 4294901760
    %v11198 = vsub.f32 %v10129, %v11197
    %v11199 = vand.u32 %v11198, 4294901760
    %11200 = vmatpush.msra.mxu0 %v11199
    %v11201 = vand.u32 %v10121, 4294901760
    %v11202 = vsub.f32 %v10121, %v11201
    %v11203 = vand.u32 %v11202, 4294901760
    %11204 = vmatpush.msra.mxu0 %v11203
    %v11205 = vand.u32 %v10159, 4294901760
    %11206 = vmatmul.f32.gmra.mxu0 %v11205
    %v11207 = vpop.f32.mrf.mxu0
    %v11208 = vadd.f32 %v11169, %v11207
    %v11209 = vand.u32 %v10161, 4294901760
    %11210 = vmatmul.f32.gmra.mxu0 %v11209
    %v11211 = vpop.f32.mrf.mxu0
    %v11212 = vadd.f32 %v11175, %v11211
    %11213 = vdwg.mxu0
    %11214 = vmatpush.msra.mxu0 0.0
    %11215 = vmatpush.msra.mxu0 0.0
    %11216 = vmatpush.msra.mxu0 0.0
    %11217 = vmatpush.msra.mxu0 0.0
    %11218 = vmatpush.msra.mxu0 0.0
    %11219 = vmatpush.msra.mxu0 0.0
    %11220 = vmatpush.msra.mxu0 0.0
    %11221 = vmatpush.msra.mxu0 0.0
    %11222 = vmatpush.msra.mxu0 0.0
    %11223 = vmatpush.msra.mxu0 0.0
    %11224 = vmatpush.msra.mxu0 0.0
    %11225 = vmatpush.msra.mxu0 0.0
    %v11226 = vand.u32 %v10145, 4294901760
    %11227 = vmatpush.msra.mxu0 %v11226
    %v11228 = vand.u32 %v10137, 4294901760
    %11229 = vmatpush.msra.mxu0 %v11228
    %v11230 = vand.u32 %v10129, 4294901760
    %11231 = vmatpush.msra.mxu0 %v11230
    %v11232 = vand.u32 %v10121, 4294901760
    %11233 = vmatpush.msra.mxu0 %v11232
    %v11234 = vand.u32 %v10159, 4294901760
    %11235 = vmatmul.f32.gmra.mxu0 %v11234
    %v11236 = vpop.f32.mrf.mxu0
    %v11237 = vadd.f32 %v11208, %v11236
    %v11238 = vand.u32 %v10161, 4294901760
    %11239 = vmatmul.f32.gmra.mxu0 %v11238
    %v11240 = vpop.f32.mrf.mxu0
    %v11241 = vadd.f32 %v11212, %v11240
    %11242 = vdwg.mxu0
    %11243 = vmatpush.msra.mxu0 0.0
    %11244 = vmatpush.msra.mxu0 0.0
    %11245 = vmatpush.msra.mxu0 0.0
    %11246 = vmatpush.msra.mxu0 0.0
    %11247 = vmatpush.msra.mxu0 0.0
    %11248 = vmatpush.msra.mxu0 0.0
    %11249 = vmatpush.msra.mxu0 0.0
    %11250 = vmatpush.msra.mxu0 0.0
    %11251 = vmatpush.msra.mxu0 0.0
    %11252 = vmatpush.msra.mxu0 0.0
    %11253 = vmatpush.msra.mxu0 0.0
    %11254 = vmatpush.msra.mxu0 0.0
    %v11255 = vand.u32 %v10146, 4294901760
    %11256 = vmatpush.msra.mxu0 %v11255
    %v11257 = vand.u32 %v10138, 4294901760
    %11258 = vmatpush.msra.mxu0 %v11257
    %v11259 = vand.u32 %v10130, 4294901760
    %11260 = vmatpush.msra.mxu0 %v11259
    %v11261 = vand.u32 %v10122, 4294901760
    %11262 = vmatpush.msra.mxu0 %v11261
    %v11263 = vand.u32 %v10159, 4294901760
    %v11264 = vsub.f32 %v10159, %v11263
    %v11265 = vand.u32 %v11264, 4294901760
    %v11266 = vsub.f32 %v11264, %v11265
    %v11267 = vand.u32 %v11266, 4294901760
    %11268 = vmatmul.f32.gmra.mxu0 %v11267
    %v11269 = vpop.f32.mrf.mxu0
    %v11270 = vadd.f32 %v10152, %v11269
    %v11271 = vand.u32 %v10161, 4294901760
    %v11272 = vsub.f32 %v10161, %v11271
    %v11273 = vand.u32 %v11272, 4294901760
    %v11274 = vsub.f32 %v11272, %v11273
    %v11275 = vand.u32 %v11274, 4294901760
    %11276 = vmatmul.f32.gmra.mxu0 %v11275
    %v11277 = vpop.f32.mrf.mxu0
    %v11278 = vadd.f32 %v10157, %v11277
    %11279 = vdwg.mxu0
    %11280 = vmatpush.msra.mxu0 0.0
    %11281 = vmatpush.msra.mxu0 0.0
    %11282 = vmatpush.msra.mxu0 0.0
    %11283 = vmatpush.msra.mxu0 0.0
    %11284 = vmatpush.msra.mxu0 0.0
    %11285 = vmatpush.msra.mxu0 0.0
    %11286 = vmatpush.msra.mxu0 0.0
    %11287 = vmatpush.msra.mxu0 0.0
    %11288 = vmatpush.msra.mxu0 0.0
    %11289 = vmatpush.msra.mxu0 0.0
    %11290 = vmatpush.msra.mxu0 0.0
    %11291 = vmatpush.msra.mxu0 0.0
    %v11292 = vand.u32 %v10146, 4294901760
    %v11293 = vsub.f32 %v10146, %v11292
    %v11294 = vand.u32 %v11293, 4294901760
    %v11295 = vsub.f32 %v11293, %v11294
    %v11296 = vand.u32 %v11295, 4294901760
    %11297 = vmatpush.msra.mxu0 %v11296
    %v11298 = vand.u32 %v10138, 4294901760
    %v11299 = vsub.f32 %v10138, %v11298
    %v11300 = vand.u32 %v11299, 4294901760
    %v11301 = vsub.f32 %v11299, %v11300
    %v11302 = vand.u32 %v11301, 4294901760
    %11303 = vmatpush.msra.mxu0 %v11302
    %v11304 = vand.u32 %v10130, 4294901760
    %v11305 = vsub.f32 %v10130, %v11304
    %v11306 = vand.u32 %v11305, 4294901760
    %v11307 = vsub.f32 %v11305, %v11306
    %v11308 = vand.u32 %v11307, 4294901760
    %11309 = vmatpush.msra.mxu0 %v11308
    %v11310 = vand.u32 %v10122, 4294901760
    %v11311 = vsub.f32 %v10122, %v11310
    %v11312 = vand.u32 %v11311, 4294901760
    %v11313 = vsub.f32 %v11311, %v11312
    %v11314 = vand.u32 %v11313, 4294901760
    %11315 = vmatpush.msra.mxu0 %v11314
    %v11316 = vand.u32 %v10159, 4294901760
    %11317 = vmatmul.f32.gmra.mxu0 %v11316
    %v11318 = vpop.f32.mrf.mxu0
    %v11319 = vadd.f32 %v11270, %v11318
    %v11320 = vand.u32 %v10161, 4294901760
    %11321 = vmatmul.f32.gmra.mxu0 %v11320
    %v11322 = vpop.f32.mrf.mxu0
    %v11323 = vadd.f32 %v11278, %v11322
    %11324 = vdwg.mxu0
    %11325 = vmatpush.msra.mxu0 0.0
    %11326 = vmatpush.msra.mxu0 0.0
    %11327 = vmatpush.msra.mxu0 0.0
    %11328 = vmatpush.msra.mxu0 0.0
    %11329 = vmatpush.msra.mxu0 0.0
    %11330 = vmatpush.msra.mxu0 0.0
    %11331 = vmatpush.msra.mxu0 0.0
    %11332 = vmatpush.msra.mxu0 0.0
    %11333 = vmatpush.msra.mxu0 0.0
    %11334 = vmatpush.msra.mxu0 0.0
    %11335 = vmatpush.msra.mxu0 0.0
    %11336 = vmatpush.msra.mxu0 0.0
    %v11337 = vand.u32 %v10146, 4294901760
    %v11338 = vsub.f32 %v10146, %v11337
    %11339 = vmatpush.msra.mxu0 %v11338
    %v11340 = vand.u32 %v10138, 4294901760
    %v11341 = vsub.f32 %v10138, %v11340
    %11342 = vmatpush.msra.mxu0 %v11341
    %v11343 = vand.u32 %v10130, 4294901760
    %v11344 = vsub.f32 %v10130, %v11343
    %11345 = vmatpush.msra.mxu0 %v11344
    %v11346 = vand.u32 %v10122, 4294901760
    %v11347 = vsub.f32 %v10122, %v11346
    %11348 = vmatpush.msra.mxu0 %v11347
    %v11349 = vand.u32 %v10159, 4294901760
    %v11350 = vsub.f32 %v10159, %v11349
    %11351 = vmatmul.f32.gmra.mxu0 %v11350
    %v11352 = vpop.f32.mrf.mxu0
    %v11353 = vadd.f32 %v11319, %v11352
    %v11354 = vand.u32 %v10161, 4294901760
    %v11355 = vsub.f32 %v10161, %v11354
    %11356 = vmatmul.f32.gmra.mxu0 %v11355
    %v11357 = vpop.f32.mrf.mxu0
    %v11358 = vadd.f32 %v11323, %v11357
    %11359 = vdwg.mxu0
    %11360 = vmatpush.msra.mxu0 0.0
    %11361 = vmatpush.msra.mxu0 0.0
    %11362 = vmatpush.msra.mxu0 0.0
    %11363 = vmatpush.msra.mxu0 0.0
    %11364 = vmatpush.msra.mxu0 0.0
    %11365 = vmatpush.msra.mxu0 0.0
    %11366 = vmatpush.msra.mxu0 0.0
    %11367 = vmatpush.msra.mxu0 0.0
    %11368 = vmatpush.msra.mxu0 0.0
    %11369 = vmatpush.msra.mxu0 0.0
    %11370 = vmatpush.msra.mxu0 0.0
    %11371 = vmatpush.msra.mxu0 0.0
    %v11372 = vand.u32 %v10146, 4294901760
    %11373 = vmatpush.msra.mxu0 %v11372
    %v11374 = vand.u32 %v10138, 4294901760
    %11375 = vmatpush.msra.mxu0 %v11374
    %v11376 = vand.u32 %v10130, 4294901760
    %11377 = vmatpush.msra.mxu0 %v11376
    %v11378 = vand.u32 %v10122, 4294901760
    %11379 = vmatpush.msra.mxu0 %v11378
    %v11380 = vand.u32 %v10159, 4294901760
    %v11381 = vsub.f32 %v10159, %v11380
    %v11382 = vand.u32 %v11381, 4294901760
    %11383 = vmatmul.f32.gmra.mxu0 %v11382
    %v11384 = vpop.f32.mrf.mxu0
    %v11385 = vadd.f32 %v11353, %v11384
    %v11386 = vand.u32 %v10161, 4294901760
    %v11387 = vsub.f32 %v10161, %v11386
    %v11388 = vand.u32 %v11387, 4294901760
    %11389 = vmatmul.f32.gmra.mxu0 %v11388
    %v11390 = vpop.f32.mrf.mxu0
    %v11391 = vadd.f32 %v11358, %v11390
    %11392 = vdwg.mxu0
    %11393 = vmatpush.msra.mxu0 0.0
    %11394 = vmatpush.msra.mxu0 0.0
    %11395 = vmatpush.msra.mxu0 0.0
    %11396 = vmatpush.msra.mxu0 0.0
    %11397 = vmatpush.msra.mxu0 0.0
    %11398 = vmatpush.msra.mxu0 0.0
    %11399 = vmatpush.msra.mxu0 0.0
    %11400 = vmatpush.msra.mxu0 0.0
    %11401 = vmatpush.msra.mxu0 0.0
    %11402 = vmatpush.msra.mxu0 0.0
    %11403 = vmatpush.msra.mxu0 0.0
    %11404 = vmatpush.msra.mxu0 0.0
    %v11405 = vand.u32 %v10146, 4294901760
    %v11406 = vsub.f32 %v10146, %v11405
    %v11407 = vand.u32 %v11406, 4294901760
    %11408 = vmatpush.msra.mxu0 %v11407
    %v11409 = vand.u32 %v10138, 4294901760
    %v11410 = vsub.f32 %v10138, %v11409
    %v11411 = vand.u32 %v11410, 4294901760
    %11412 = vmatpush.msra.mxu0 %v11411
    %v11413 = vand.u32 %v10130, 4294901760
    %v11414 = vsub.f32 %v10130, %v11413
    %v11415 = vand.u32 %v11414, 4294901760
    %11416 = vmatpush.msra.mxu0 %v11415
    %v11417 = vand.u32 %v10122, 4294901760
    %v11418 = vsub.f32 %v10122, %v11417
    %v11419 = vand.u32 %v11418, 4294901760
    %11420 = vmatpush.msra.mxu0 %v11419
    %v11421 = vand.u32 %v10159, 4294901760
    %11422 = vmatmul.f32.gmra.mxu0 %v11421
    %v11423 = vpop.f32.mrf.mxu0
    %v11424 = vadd.f32 %v11385, %v11423
    %v11425 = vand.u32 %v10161, 4294901760
    %11426 = vmatmul.f32.gmra.mxu0 %v11425
    %v11427 = vpop.f32.mrf.mxu0
    %v11428 = vadd.f32 %v11391, %v11427
    %11429 = vdwg.mxu0
    %11430 = vmatpush.msra.mxu0 0.0
    %11431 = vmatpush.msra.mxu0 0.0
    %11432 = vmatpush.msra.mxu0 0.0
    %11433 = vmatpush.msra.mxu0 0.0
    %11434 = vmatpush.msra.mxu0 0.0
    %11435 = vmatpush.msra.mxu0 0.0
    %11436 = vmatpush.msra.mxu0 0.0
    %11437 = vmatpush.msra.mxu0 0.0
    %11438 = vmatpush.msra.mxu0 0.0
    %11439 = vmatpush.msra.mxu0 0.0
    %11440 = vmatpush.msra.mxu0 0.0
    %11441 = vmatpush.msra.mxu0 0.0
    %v11442 = vand.u32 %v10146, 4294901760
    %11443 = vmatpush.msra.mxu0 %v11442
    %v11444 = vand.u32 %v10138, 4294901760
    %11445 = vmatpush.msra.mxu0 %v11444
    %v11446 = vand.u32 %v10130, 4294901760
    %11447 = vmatpush.msra.mxu0 %v11446
    %v11448 = vand.u32 %v10122, 4294901760
    %11449 = vmatpush.msra.mxu0 %v11448
    %v11450 = vand.u32 %v10159, 4294901760
    %11451 = vmatmul.f32.gmra.mxu0 %v11450
    %v11452 = vpop.f32.mrf.mxu0
    %v11453 = vadd.f32 %v11424, %v11452
    %v11454 = vand.u32 %v10161, 4294901760
    %11455 = vmatmul.f32.gmra.mxu0 %v11454
    %v11456 = vpop.f32.mrf.mxu0
    %v11457 = vadd.f32 %v11428, %v11456
    %11458 = vdwg.mxu0
    %11459 = vmatpush.msra.mxu0 0.0
    %11460 = vmatpush.msra.mxu0 0.0
    %11461 = vmatpush.msra.mxu0 0.0
    %11462 = vmatpush.msra.mxu0 0.0
    %11463 = vmatpush.msra.mxu0 0.0
    %11464 = vmatpush.msra.mxu0 0.0
    %11465 = vmatpush.msra.mxu0 0.0
    %11466 = vmatpush.msra.mxu0 0.0
    %11467 = vmatpush.msra.mxu0 0.0
    %11468 = vmatpush.msra.mxu0 0.0
    %11469 = vmatpush.msra.mxu0 0.0
    %11470 = vmatpush.msra.mxu0 0.0
    %v11471 = vand.u32 %v10147, 4294901760
    %11472 = vmatpush.msra.mxu0 %v11471
    %v11473 = vand.u32 %v10139, 4294901760
    %11474 = vmatpush.msra.mxu0 %v11473
    %v11475 = vand.u32 %v10131, 4294901760
    %11476 = vmatpush.msra.mxu0 %v11475
    %v11477 = vand.u32 %v10123, 4294901760
    %11478 = vmatpush.msra.mxu0 %v11477
    %v11479 = vand.u32 %v10159, 4294901760
    %v11480 = vsub.f32 %v10159, %v11479
    %v11481 = vand.u32 %v11480, 4294901760
    %v11482 = vsub.f32 %v11480, %v11481
    %v11483 = vand.u32 %v11482, 4294901760
    %11484 = vmatmul.f32.gmra.mxu0 %v11483
    %v11485 = vpop.f32.mrf.mxu0
    %v11486 = vadd.f32 %v10152, %v11485
    %v11487 = vand.u32 %v10161, 4294901760
    %v11488 = vsub.f32 %v10161, %v11487
    %v11489 = vand.u32 %v11488, 4294901760
    %v11490 = vsub.f32 %v11488, %v11489
    %v11491 = vand.u32 %v11490, 4294901760
    %11492 = vmatmul.f32.gmra.mxu0 %v11491
    %v11493 = vpop.f32.mrf.mxu0
    %v11494 = vadd.f32 %v10157, %v11493
    %11495 = vdwg.mxu0
    %11496 = vmatpush.msra.mxu0 0.0
    %11497 = vmatpush.msra.mxu0 0.0
    %11498 = vmatpush.msra.mxu0 0.0
    %11499 = vmatpush.msra.mxu0 0.0
    %11500 = vmatpush.msra.mxu0 0.0
    %11501 = vmatpush.msra.mxu0 0.0
    %11502 = vmatpush.msra.mxu0 0.0
    %11503 = vmatpush.msra.mxu0 0.0
    %11504 = vmatpush.msra.mxu0 0.0
    %11505 = vmatpush.msra.mxu0 0.0
    %11506 = vmatpush.msra.mxu0 0.0
    %11507 = vmatpush.msra.mxu0 0.0
    %v11508 = vand.u32 %v10147, 4294901760
    %v11509 = vsub.f32 %v10147, %v11508
    %v11510 = vand.u32 %v11509, 4294901760
    %v11511 = vsub.f32 %v11509, %v11510
    %v11512 = vand.u32 %v11511, 4294901760
    %11513 = vmatpush.msra.mxu0 %v11512
    %v11514 = vand.u32 %v10139, 4294901760
    %v11515 = vsub.f32 %v10139, %v11514
    %v11516 = vand.u32 %v11515, 4294901760
    %v11517 = vsub.f32 %v11515, %v11516
    %v11518 = vand.u32 %v11517, 4294901760
    %11519 = vmatpush.msra.mxu0 %v11518
    %v11520 = vand.u32 %v10131, 4294901760
    %v11521 = vsub.f32 %v10131, %v11520
    %v11522 = vand.u32 %v11521, 4294901760
    %v11523 = vsub.f32 %v11521, %v11522
    %v11524 = vand.u32 %v11523, 4294901760
    %11525 = vmatpush.msra.mxu0 %v11524
    %v11526 = vand.u32 %v10123, 4294901760
    %v11527 = vsub.f32 %v10123, %v11526
    %v11528 = vand.u32 %v11527, 4294901760
    %v11529 = vsub.f32 %v11527, %v11528
    %v11530 = vand.u32 %v11529, 4294901760
    %11531 = vmatpush.msra.mxu0 %v11530
    %v11532 = vand.u32 %v10159, 4294901760
    %11533 = vmatmul.f32.gmra.mxu0 %v11532
    %v11534 = vpop.f32.mrf.mxu0
    %v11535 = vadd.f32 %v11486, %v11534
    %v11536 = vand.u32 %v10161, 4294901760
    %11537 = vmatmul.f32.gmra.mxu0 %v11536
    %v11538 = vpop.f32.mrf.mxu0
    %v11539 = vadd.f32 %v11494, %v11538
    %11540 = vdwg.mxu0
    %11541 = vmatpush.msra.mxu0 0.0
    %11542 = vmatpush.msra.mxu0 0.0
    %11543 = vmatpush.msra.mxu0 0.0
    %11544 = vmatpush.msra.mxu0 0.0
    %11545 = vmatpush.msra.mxu0 0.0
    %11546 = vmatpush.msra.mxu0 0.0
    %11547 = vmatpush.msra.mxu0 0.0
    %11548 = vmatpush.msra.mxu0 0.0
    %11549 = vmatpush.msra.mxu0 0.0
    %11550 = vmatpush.msra.mxu0 0.0
    %11551 = vmatpush.msra.mxu0 0.0
    %11552 = vmatpush.msra.mxu0 0.0
    %v11553 = vand.u32 %v10147, 4294901760
    %v11554 = vsub.f32 %v10147, %v11553
    %11555 = vmatpush.msra.mxu0 %v11554
    %v11556 = vand.u32 %v10139, 4294901760
    %v11557 = vsub.f32 %v10139, %v11556
    %11558 = vmatpush.msra.mxu0 %v11557
    %v11559 = vand.u32 %v10131, 4294901760
    %v11560 = vsub.f32 %v10131, %v11559
    %11561 = vmatpush.msra.mxu0 %v11560
    %v11562 = vand.u32 %v10123, 4294901760
    %v11563 = vsub.f32 %v10123, %v11562
    %11564 = vmatpush.msra.mxu0 %v11563
    %v11565 = vand.u32 %v10159, 4294901760
    %v11566 = vsub.f32 %v10159, %v11565
    %11567 = vmatmul.f32.gmra.mxu0 %v11566
    %v11568 = vpop.f32.mrf.mxu0
    %v11569 = vadd.f32 %v11535, %v11568
    %v11570 = vand.u32 %v10161, 4294901760
    %v11571 = vsub.f32 %v10161, %v11570
    %11572 = vmatmul.f32.gmra.mxu0 %v11571
    %v11573 = vpop.f32.mrf.mxu0
    %v11574 = vadd.f32 %v11539, %v11573
    %11575 = vdwg.mxu0
    %11576 = vmatpush.msra.mxu0 0.0
    %11577 = vmatpush.msra.mxu0 0.0
    %11578 = vmatpush.msra.mxu0 0.0
    %11579 = vmatpush.msra.mxu0 0.0
    %11580 = vmatpush.msra.mxu0 0.0
    %11581 = vmatpush.msra.mxu0 0.0
    %11582 = vmatpush.msra.mxu0 0.0
    %11583 = vmatpush.msra.mxu0 0.0
    %11584 = vmatpush.msra.mxu0 0.0
    %11585 = vmatpush.msra.mxu0 0.0
    %11586 = vmatpush.msra.mxu0 0.0
    %11587 = vmatpush.msra.mxu0 0.0
    %v11588 = vand.u32 %v10147, 4294901760
    %11589 = vmatpush.msra.mxu0 %v11588
    %v11590 = vand.u32 %v10139, 4294901760
    %11591 = vmatpush.msra.mxu0 %v11590
    %v11592 = vand.u32 %v10131, 4294901760
    %11593 = vmatpush.msra.mxu0 %v11592
    %v11594 = vand.u32 %v10123, 4294901760
    %11595 = vmatpush.msra.mxu0 %v11594
    %v11596 = vand.u32 %v10159, 4294901760
    %v11597 = vsub.f32 %v10159, %v11596
    %v11598 = vand.u32 %v11597, 4294901760
    %11599 = vmatmul.f32.gmra.mxu0 %v11598
    %v11600 = vpop.f32.mrf.mxu0
    %v11601 = vadd.f32 %v11569, %v11600
    %v11602 = vand.u32 %v10161, 4294901760
    %v11603 = vsub.f32 %v10161, %v11602
    %v11604 = vand.u32 %v11603, 4294901760
    %11605 = vmatmul.f32.gmra.mxu0 %v11604
    %v11606 = vpop.f32.mrf.mxu0
    %v11607 = vadd.f32 %v11574, %v11606
    %11608 = vdwg.mxu0
    %11609 = vmatpush.msra.mxu0 0.0
    %11610 = vmatpush.msra.mxu0 0.0
    %11611 = vmatpush.msra.mxu0 0.0
    %11612 = vmatpush.msra.mxu0 0.0
    %11613 = vmatpush.msra.mxu0 0.0
    %11614 = vmatpush.msra.mxu0 0.0
    %11615 = vmatpush.msra.mxu0 0.0
    %11616 = vmatpush.msra.mxu0 0.0
    %11617 = vmatpush.msra.mxu0 0.0
    %11618 = vmatpush.msra.mxu0 0.0
    %11619 = vmatpush.msra.mxu0 0.0
    %11620 = vmatpush.msra.mxu0 0.0
    %v11621 = vand.u32 %v10147, 4294901760
    %v11622 = vsub.f32 %v10147, %v11621
    %v11623 = vand.u32 %v11622, 4294901760
    %11624 = vmatpush.msra.mxu0 %v11623
    %v11625 = vand.u32 %v10139, 4294901760
    %v11626 = vsub.f32 %v10139, %v11625
    %v11627 = vand.u32 %v11626, 4294901760
    %11628 = vmatpush.msra.mxu0 %v11627
    %v11629 = vand.u32 %v10131, 4294901760
    %v11630 = vsub.f32 %v10131, %v11629
    %v11631 = vand.u32 %v11630, 4294901760
    %11632 = vmatpush.msra.mxu0 %v11631
    %v11633 = vand.u32 %v10123, 4294901760
    %v11634 = vsub.f32 %v10123, %v11633
    %v11635 = vand.u32 %v11634, 4294901760
    %11636 = vmatpush.msra.mxu0 %v11635
    %v11637 = vand.u32 %v10159, 4294901760
    %11638 = vmatmul.f32.gmra.mxu0 %v11637
    %v11639 = vpop.f32.mrf.mxu0
    %v11640 = vadd.f32 %v11601, %v11639
    %v11641 = vand.u32 %v10161, 4294901760
    %11642 = vmatmul.f32.gmra.mxu0 %v11641
    %v11643 = vpop.f32.mrf.mxu0
    %v11644 = vadd.f32 %v11607, %v11643
    %11645 = vdwg.mxu0
    %11646 = vmatpush.msra.mxu0 0.0
    %11647 = vmatpush.msra.mxu0 0.0
    %11648 = vmatpush.msra.mxu0 0.0
    %11649 = vmatpush.msra.mxu0 0.0
    %11650 = vmatpush.msra.mxu0 0.0
    %11651 = vmatpush.msra.mxu0 0.0
    %11652 = vmatpush.msra.mxu0 0.0
    %11653 = vmatpush.msra.mxu0 0.0
    %11654 = vmatpush.msra.mxu0 0.0
    %11655 = vmatpush.msra.mxu0 0.0
    %11656 = vmatpush.msra.mxu0 0.0
    %11657 = vmatpush.msra.mxu0 0.0
    %v11658 = vand.u32 %v10147, 4294901760
    %11659 = vmatpush.msra.mxu0 %v11658
    %v11660 = vand.u32 %v10139, 4294901760
    %11661 = vmatpush.msra.mxu0 %v11660
    %v11662 = vand.u32 %v10131, 4294901760
    %11663 = vmatpush.msra.mxu0 %v11662
    %v11664 = vand.u32 %v10123, 4294901760
    %11665 = vmatpush.msra.mxu0 %v11664
    %v11666 = vand.u32 %v10159, 4294901760
    %11667 = vmatmul.f32.gmra.mxu0 %v11666
    %v11668 = vpop.f32.mrf.mxu0
    %v11669 = vadd.f32 %v11640, %v11668
    %v11670 = vand.u32 %v10161, 4294901760
    %11671 = vmatmul.f32.gmra.mxu0 %v11670
    %v11672 = vpop.f32.mrf.mxu0
    %v11673 = vadd.f32 %v11644, %v11672
    %11674 = vdwg.mxu0
    %11675 = vmatpush.msra.mxu0 0.0
    %11676 = vmatpush.msra.mxu0 0.0
    %11677 = vmatpush.msra.mxu0 0.0
    %11678 = vmatpush.msra.mxu0 0.0
    %11679 = vmatpush.msra.mxu0 0.0
    %11680 = vmatpush.msra.mxu0 0.0
    %11681 = vmatpush.msra.mxu0 0.0
    %11682 = vmatpush.msra.mxu0 0.0
    %11683 = vmatpush.msra.mxu0 0.0
    %11684 = vmatpush.msra.mxu0 0.0
    %11685 = vmatpush.msra.mxu0 0.0
    %11686 = vmatpush.msra.mxu0 0.0
    %v11687 = vand.u32 %v10148, 4294901760
    %11688 = vmatpush.msra.mxu0 %v11687
    %v11689 = vand.u32 %v10140, 4294901760
    %11690 = vmatpush.msra.mxu0 %v11689
    %v11691 = vand.u32 %v10132, 4294901760
    %11692 = vmatpush.msra.mxu0 %v11691
    %v11693 = vand.u32 %v10124, 4294901760
    %11694 = vmatpush.msra.mxu0 %v11693
    %v11695 = vand.u32 %v10159, 4294901760
    %v11696 = vsub.f32 %v10159, %v11695
    %v11697 = vand.u32 %v11696, 4294901760
    %v11698 = vsub.f32 %v11696, %v11697
    %v11699 = vand.u32 %v11698, 4294901760
    %11700 = vmatmul.f32.gmra.mxu0 %v11699
    %v11701 = vpop.f32.mrf.mxu0
    %v11702 = vadd.f32 %v10152, %v11701
    %v11703 = vand.u32 %v10161, 4294901760
    %v11704 = vsub.f32 %v10161, %v11703
    %v11705 = vand.u32 %v11704, 4294901760
    %v11706 = vsub.f32 %v11704, %v11705
    %v11707 = vand.u32 %v11706, 4294901760
    %11708 = vmatmul.f32.gmra.mxu0 %v11707
    %v11709 = vpop.f32.mrf.mxu0
    %v11710 = vadd.f32 %v10157, %v11709
    %11711 = vdwg.mxu0
    %11712 = vmatpush.msra.mxu0 0.0
    %11713 = vmatpush.msra.mxu0 0.0
    %11714 = vmatpush.msra.mxu0 0.0
    %11715 = vmatpush.msra.mxu0 0.0
    %11716 = vmatpush.msra.mxu0 0.0
    %11717 = vmatpush.msra.mxu0 0.0
    %11718 = vmatpush.msra.mxu0 0.0
    %11719 = vmatpush.msra.mxu0 0.0
    %11720 = vmatpush.msra.mxu0 0.0
    %11721 = vmatpush.msra.mxu0 0.0
    %11722 = vmatpush.msra.mxu0 0.0
    %11723 = vmatpush.msra.mxu0 0.0
    %v11724 = vand.u32 %v10148, 4294901760
    %v11725 = vsub.f32 %v10148, %v11724
    %v11726 = vand.u32 %v11725, 4294901760
    %v11727 = vsub.f32 %v11725, %v11726
    %v11728 = vand.u32 %v11727, 4294901760
    %11729 = vmatpush.msra.mxu0 %v11728
    %v11730 = vand.u32 %v10140, 4294901760
    %v11731 = vsub.f32 %v10140, %v11730
    %v11732 = vand.u32 %v11731, 4294901760
    %v11733 = vsub.f32 %v11731, %v11732
    %v11734 = vand.u32 %v11733, 4294901760
    %11735 = vmatpush.msra.mxu0 %v11734
    %v11736 = vand.u32 %v10132, 4294901760
    %v11737 = vsub.f32 %v10132, %v11736
    %v11738 = vand.u32 %v11737, 4294901760
    %v11739 = vsub.f32 %v11737, %v11738
    %v11740 = vand.u32 %v11739, 4294901760
    %11741 = vmatpush.msra.mxu0 %v11740
    %v11742 = vand.u32 %v10124, 4294901760
    %v11743 = vsub.f32 %v10124, %v11742
    %v11744 = vand.u32 %v11743, 4294901760
    %v11745 = vsub.f32 %v11743, %v11744
    %v11746 = vand.u32 %v11745, 4294901760
    %11747 = vmatpush.msra.mxu0 %v11746
    %v11748 = vand.u32 %v10159, 4294901760
    %11749 = vmatmul.f32.gmra.mxu0 %v11748
    %v11750 = vpop.f32.mrf.mxu0
    %v11751 = vadd.f32 %v11702, %v11750
    %v11752 = vand.u32 %v10161, 4294901760
    %11753 = vmatmul.f32.gmra.mxu0 %v11752
    %v11754 = vpop.f32.mrf.mxu0
    %v11755 = vadd.f32 %v11710, %v11754
    %11756 = vdwg.mxu0
    %11757 = vmatpush.msra.mxu0 0.0
    %11758 = vmatpush.msra.mxu0 0.0
    %11759 = vmatpush.msra.mxu0 0.0
    %11760 = vmatpush.msra.mxu0 0.0
    %11761 = vmatpush.msra.mxu0 0.0
    %11762 = vmatpush.msra.mxu0 0.0
    %11763 = vmatpush.msra.mxu0 0.0
    %11764 = vmatpush.msra.mxu0 0.0
    %11765 = vmatpush.msra.mxu0 0.0
    %11766 = vmatpush.msra.mxu0 0.0
    %11767 = vmatpush.msra.mxu0 0.0
    %11768 = vmatpush.msra.mxu0 0.0
    %v11769 = vand.u32 %v10148, 4294901760
    %v11770 = vsub.f32 %v10148, %v11769
    %11771 = vmatpush.msra.mxu0 %v11770
    %v11772 = vand.u32 %v10140, 4294901760
    %v11773 = vsub.f32 %v10140, %v11772
    %11774 = vmatpush.msra.mxu0 %v11773
    %v11775 = vand.u32 %v10132, 4294901760
    %v11776 = vsub.f32 %v10132, %v11775
    %11777 = vmatpush.msra.mxu0 %v11776
    %v11778 = vand.u32 %v10124, 4294901760
    %v11779 = vsub.f32 %v10124, %v11778
    %11780 = vmatpush.msra.mxu0 %v11779
    %v11781 = vand.u32 %v10159, 4294901760
    %v11782 = vsub.f32 %v10159, %v11781
    %11783 = vmatmul.f32.gmra.mxu0 %v11782
    %v11784 = vpop.f32.mrf.mxu0
    %v11785 = vadd.f32 %v11751, %v11784
    %v11786 = vand.u32 %v10161, 4294901760
    %v11787 = vsub.f32 %v10161, %v11786
    %11788 = vmatmul.f32.gmra.mxu0 %v11787
    %v11789 = vpop.f32.mrf.mxu0
    %v11790 = vadd.f32 %v11755, %v11789
    %11791 = vdwg.mxu0
    %11792 = vmatpush.msra.mxu0 0.0
    %11793 = vmatpush.msra.mxu0 0.0
    %11794 = vmatpush.msra.mxu0 0.0
    %11795 = vmatpush.msra.mxu0 0.0
    %11796 = vmatpush.msra.mxu0 0.0
    %11797 = vmatpush.msra.mxu0 0.0
    %11798 = vmatpush.msra.mxu0 0.0
    %11799 = vmatpush.msra.mxu0 0.0
    %11800 = vmatpush.msra.mxu0 0.0
    %11801 = vmatpush.msra.mxu0 0.0
    %11802 = vmatpush.msra.mxu0 0.0
    %11803 = vmatpush.msra.mxu0 0.0
    %v11804 = vand.u32 %v10148, 4294901760
    %11805 = vmatpush.msra.mxu0 %v11804
    %v11806 = vand.u32 %v10140, 4294901760
    %11807 = vmatpush.msra.mxu0 %v11806
    %v11808 = vand.u32 %v10132, 4294901760
    %11809 = vmatpush.msra.mxu0 %v11808
    %v11810 = vand.u32 %v10124, 4294901760
    %11811 = vmatpush.msra.mxu0 %v11810
    %v11812 = vand.u32 %v10159, 4294901760
    %v11813 = vsub.f32 %v10159, %v11812
    %v11814 = vand.u32 %v11813, 4294901760
    %11815 = vmatmul.f32.gmra.mxu0 %v11814
    %v11816 = vpop.f32.mrf.mxu0
    %v11817 = vadd.f32 %v11785, %v11816
    %v11818 = vand.u32 %v10161, 4294901760
    %v11819 = vsub.f32 %v10161, %v11818
    %v11820 = vand.u32 %v11819, 4294901760
    %11821 = vmatmul.f32.gmra.mxu0 %v11820
    %v11822 = vpop.f32.mrf.mxu0
    %v11823 = vadd.f32 %v11790, %v11822
    %11824 = vdwg.mxu0
    %11825 = vmatpush.msra.mxu0 0.0
    %11826 = vmatpush.msra.mxu0 0.0
    %11827 = vmatpush.msra.mxu0 0.0
    %11828 = vmatpush.msra.mxu0 0.0
    %11829 = vmatpush.msra.mxu0 0.0
    %11830 = vmatpush.msra.mxu0 0.0
    %11831 = vmatpush.msra.mxu0 0.0
    %11832 = vmatpush.msra.mxu0 0.0
    %11833 = vmatpush.msra.mxu0 0.0
    %11834 = vmatpush.msra.mxu0 0.0
    %11835 = vmatpush.msra.mxu0 0.0
    %11836 = vmatpush.msra.mxu0 0.0
    %v11837 = vand.u32 %v10148, 4294901760
    %v11838 = vsub.f32 %v10148, %v11837
    %v11839 = vand.u32 %v11838, 4294901760
    %11840 = vmatpush.msra.mxu0 %v11839
    %v11841 = vand.u32 %v10140, 4294901760
    %v11842 = vsub.f32 %v10140, %v11841
    %v11843 = vand.u32 %v11842, 4294901760
    %11844 = vmatpush.msra.mxu0 %v11843
    %v11845 = vand.u32 %v10132, 4294901760
    %v11846 = vsub.f32 %v10132, %v11845
    %v11847 = vand.u32 %v11846, 4294901760
    %11848 = vmatpush.msra.mxu0 %v11847
    %v11849 = vand.u32 %v10124, 4294901760
    %v11850 = vsub.f32 %v10124, %v11849
    %v11851 = vand.u32 %v11850, 4294901760
    %11852 = vmatpush.msra.mxu0 %v11851
    %v11853 = vand.u32 %v10159, 4294901760
    %11854 = vmatmul.f32.gmra.mxu0 %v11853
    %v11855 = vpop.f32.mrf.mxu0
    %v11856 = vadd.f32 %v11817, %v11855
    %v11857 = vand.u32 %v10161, 4294901760
    %11858 = vmatmul.f32.gmra.mxu0 %v11857
    %v11859 = vpop.f32.mrf.mxu0
    %v11860 = vadd.f32 %v11823, %v11859
    %11861 = vdwg.mxu0
    %11862 = vmatpush.msra.mxu0 0.0
    %11863 = vmatpush.msra.mxu0 0.0
    %11864 = vmatpush.msra.mxu0 0.0
    %11865 = vmatpush.msra.mxu0 0.0
    %11866 = vmatpush.msra.mxu0 0.0
    %11867 = vmatpush.msra.mxu0 0.0
    %11868 = vmatpush.msra.mxu0 0.0
    %11869 = vmatpush.msra.mxu0 0.0
    %11870 = vmatpush.msra.mxu0 0.0
    %11871 = vmatpush.msra.mxu0 0.0
    %11872 = vmatpush.msra.mxu0 0.0
    %11873 = vmatpush.msra.mxu0 0.0
    %v11874 = vand.u32 %v10148, 4294901760
    %11875 = vmatpush.msra.mxu0 %v11874
    %v11876 = vand.u32 %v10140, 4294901760
    %11877 = vmatpush.msra.mxu0 %v11876
    %v11878 = vand.u32 %v10132, 4294901760
    %11879 = vmatpush.msra.mxu0 %v11878
    %v11880 = vand.u32 %v10124, 4294901760
    %11881 = vmatpush.msra.mxu0 %v11880
    %v11882 = vand.u32 %v10159, 4294901760
    %11883 = vmatmul.f32.gmra.mxu0 %v11882
    %v11884 = vpop.f32.mrf.mxu0
    %v11885 = vadd.f32 %v11856, %v11884
    %v11886 = vand.u32 %v10161, 4294901760
    %11887 = vmatmul.f32.gmra.mxu0 %v11886
    %v11888 = vpop.f32.mrf.mxu0
    %v11889 = vadd.f32 %v11860, %v11888
    %11890 = vdwg.mxu0
    %11891 = vst [vmem:[#allocation8] sm:$0xff] %v10373
    %11892 = vst [vmem:[#allocation8 + $0x8] sm:$0xff] %v10589
    %11893 = vst [vmem:[#allocation8 + $0x10] sm:$0xff] %v10805
    %11894 = vst [vmem:[#allocation8 + $0x18] sm:$0xff] %v11021
    %11895 = vst [vmem:[#allocation8 + $0x20] sm:$0xff] %v11237
    %11896 = vst [vmem:[#allocation8 + $0x28] sm:$0xff] %v11453
    %11897 = vst [vmem:[#allocation8 + $0x30] sm:$0xff] %v11669
    %11898 = vst [vmem:[#allocation8 + $0x38] sm:$0xff] %v11885
    %11899 = vst [vmem:[#allocation8 + $0x40] sm:$0xff] %v10377
    %11900 = vst [vmem:[#allocation8 + $0x48] sm:$0xff] %v10593
    %11901 = vst [vmem:[#allocation8 + $0x50] sm:$0xff] %v10809
    %11902 = vst [vmem:[#allocation8 + $0x58] sm:$0xff] %v11025
    %11903 = vst [vmem:[#allocation8 + $0x60] sm:$0xff] %v11241
    %11904 = vst [vmem:[#allocation8 + $0x68] sm:$0xff] %v11457
    %11905 = vst [vmem:[#allocation8 + $0x70] sm:$0xff] %v11673
    %11906 = vst [vmem:[#allocation8 + $0x78] sm:$0xff] %v11889
    // Predicated region
    $region18: #{tpu_custom_call.1} parent=1 // pred_check
      _
    $region19: #{tpu_custom_call.1} parent=1 // pred_check_branch
      %11908 = sbr.rel (0) target = $region21
    $region20: #{tpu_custom_call.1} parent=1 // pred_region
      %11910 = vsyncadd [#allocation5], 0
      %s11911 = sshll.u32 [#allocation8], 4
      %s11912 = int_to_ptr.vmem [resolvable:$true] %s11911
      %s11913 = sshll.u32 %s2, 4
      %s11914 = int_to_ptr.hbm [resolvable:$true] %s11913
      %11919 = dma.vmem_to_hbm [thread:$0]  %s11912, 2048, %s11914, [#allocation5], 1024, 1024, 64
    $region21: #{tpu_custom_call.1} parent=1 // pred_fallthru
      _
    // Predicated region
    $region22: #{tpu_custom_call.1} parent=1 // pred_check
      _
    $region23: #{tpu_custom_call.1} parent=1 // pred_check_branch
      %11921 = sbr.rel (0) target = $region25
    $region24: #{tpu_custom_call.1} parent=1 // pred_region
      %11923 = dma.done [#allocation5], 2048
    $region25: #{tpu_custom_call.1} parent=1 // pred_fallthru
      _
    %11924 = vsyncpa [#allocation4], 1
    %11925 = vsyncpa [#allocation7], 1
    %11926 = vsyncpa [#allocation5], 1

</llo_original>
